<compile_context>
chip_gen: v6e
topology: v6e:2x2x1
jax: 0.10.0
libtpu: 0.0.40
codegen_flags: <defaults>
</compile_context>

<pallas_src>
import functools

import jax
import jax.numpy as jnp
from jax import lax
from jax.experimental import pallas as pl
from jax.experimental.pallas import tpu as pltpu

BN_EPS = 1e-5
_LANE = 128
_SUBLANE = 8
_VMEM_LIMIT = 48 * 1024 * 1024   # leave headroom on v7x's 64 MiB/core VMEM


def _round_up(x, m):
    return ((x + m - 1) // m) * m


def _cdiv(a, b):
    return (a + b - 1) // b


# ---------------------------------------------------------------------------
# Tile pickers
# ---------------------------------------------------------------------------
def _pick_tm(m, unit):
    """M tile: a multiple of `unit` (itself a multiple of 8); big enough to
    amortize per-step overhead but keeping >= 2 tiles when possible so both
    v7x TensorCores get work."""
    if m >= 2 * 1024:
        target = 1024
    elif m >= 2 * 512:
        target = 512
    else:
        target = max(unit, _round_up(_cdiv(m, 2), _SUBLANE))
    return _round_up(target, unit)


def _pick_tn(n_pad):
    """N tile: the full padded C_out when it fits (nn == 1 -> activations are
    never re-read per output-channel tile); otherwise a >=256 divisor for the
    256-wide v6e/v7x MXU."""
    if n_pad <= 512:
        return n_pad
    for cand in (512, 384, 256, 128):
        if n_pad % cand == 0:
            return cand
    return _LANE


# ---------------------------------------------------------------------------
# Kernel 1a (stride == 1): implicit-im2col conv + per-channel sum / sum^2
# ---------------------------------------------------------------------------
def _conv_bn_stats_s1_kernel(x_ref, xh_ref, w_ref, mask_ref,
                             y_ref, psum_ref, psumsq_ref,
                             xcat_ref, *, kh, kw, wp, tm):
    # Stitch the main M-tile and its halo rows into one VMEM buffer so every
    # (ki, kj) tap becomes a static sublane-offset slice (no HBM re-read).
    halo = xh_ref.shape[0]
    xcat_ref[0:tm, :] = x_ref[...]
    xcat_ref[tm:tm + halo, :] = xh_ref[...]

    acc = jnp.zeros(y_ref.shape, jnp.float32)
    for ki in range(kh):
        for kj in range(kw):
            shift = ki * wp + kj
            lhs = xcat_ref[shift:shift + tm, :]
            acc = acc + jnp.dot(lhs, w_ref[ki * kw + kj],
                                preferred_element_type=jnp.float32)

    # Conv intermediate in bf16/gemm dtype (halves the HBM traffic between
    # kernel 1 and kernel 2); BN stats below use the f32 accumulator.
    y_ref[...] = acc.astype(y_ref.dtype)

    # Partial BatchNorm statistics over valid output rows only: the flattened
    # grid covers the *padded* spatial extent, so rows with i >= H_out or
    # j >= W_out (and the M-padding rows) are excluded via a precomputed mask.
    maskf = mask_ref[...]                         # (tm, 1), 1.0 on valid rows
    am = acc * maskf
    psum_ref[...] = jnp.broadcast_to(jnp.sum(am, axis=0, keepdims=True),
                                     psum_ref.shape)
    psumsq_ref[...] = jnp.broadcast_to(jnp.sum(am * acc, axis=0, keepdims=True),
                                       psumsq_ref.shape)


def _conv_stats_s1(x, weight, *, padding, gemm_dtype):
    """stride-1 conv via implicit im2col.  Returns (y2d, psum, psumsq, geom);
    y2d rows cover the padded (n, hp, wp) grid (invalid rows cropped later)."""
    n, c_in, h, w = x.shape
    c_out, _, kh, kw = weight.shape
    hp, wp = h + 2 * padding, w + 2 * padding
    ho, wo = hp - kh + 1, wp - kw + 1

    c_in_p = _round_up(c_in, _SUBLANE)
    n_pad = _round_up(c_out, _LANE)
    tn = _pick_tn(n_pad)
    nn = n_pad // tn

    m_flat = n * hp * wp
    halo = (kh - 1) * wp + (kw - 1)
    halo_pad = max(_SUBLANE, _round_up(halo, _SUBLANE))
    tm = _pick_tm(m_flat, halo_pad)          # tm is a multiple of halo_pad
    nm = _cdiv(m_flat, tm)
    m_pad = nm * tm
    blk_per_tm = tm // halo_pad

    # NCHW -> padded NHWC -> (rows, channels); extra zero rows at the end
    # cover the last tile's halo reads.
    x_nhwc = jnp.transpose(x, (0, 2, 3, 1)).astype(gemm_dtype)
    x_nhwc = jnp.pad(x_nhwc, ((0, 0), (padding, padding), (padding, padding),
                              (0, c_in_p - c_in)))
    x2d = x_nhwc.reshape(m_flat, c_in_p)
    x2d = jnp.pad(x2d, ((0, m_pad + halo_pad - m_flat), (0, 0)))

    # (C_out, C_in, kh, kw) -> (kh*kw, C_in_p, n_pad), matching the tap order.
    w3d = jnp.transpose(weight, (2, 3, 1, 0)).reshape(kh * kw, c_in, c_out)
    w3d = jnp.pad(w3d, ((0, 0), (0, c_in_p - c_in), (0, n_pad - c_out)))
    w3d = w3d.astype(gemm_dtype)

    # Row-validity mask (1.0 where (i < ho) & (j < wo), 0.0 elsewhere incl.
    # the M-padding rows) so BN statistics ignore garbage rows.
    ii = (jnp.arange(hp) < ho)
    jj = (jnp.arange(wp) < wo)
    mask_img = (ii[:, None] & jj[None, :]).astype(jnp.float32)      # (hp, wp)
    rowmask = jnp.tile(mask_img.reshape(-1), (n,)).reshape(m_flat, 1)
    rowmask = jnp.pad(rowmask, ((0, m_pad - m_flat), (0, 0)))

    kernel = functools.partial(_conv_bn_stats_s1_kernel,
                               kh=kh, kw=kw, wp=wp, tm=tm)

    item = jnp.dtype(gemm_dtype).itemsize
    cost = pl.CostEstimate(
        flops=2 * m_pad * (kh * kw * c_in_p) * n_pad,
        transcendentals=0,
        bytes_accessed=(x2d.size * item + nm * halo_pad * c_in_p * item
                        + nn * w3d.size * item
                        + m_pad * n_pad * item
                        + 2 * nm * _SUBLANE * n_pad * 4 + m_pad * 4))

    y2d, psum, psumsq = pl.pallas_call(
        kernel,
        out_shape=(
            jax.ShapeDtypeStruct((m_pad, n_pad), gemm_dtype),
            jax.ShapeDtypeStruct((nm * _SUBLANE, n_pad), jnp.float32),
            jax.ShapeDtypeStruct((nm * _SUBLANE, n_pad), jnp.float32),
        ),
        grid_spec=pltpu.PrefetchScalarGridSpec(
            num_scalar_prefetch=0,
            grid=(nm, nn),
            in_specs=[
                pl.BlockSpec((tm, c_in_p), lambda i, j: (i, 0)),
                pl.BlockSpec((halo_pad, c_in_p),
                             lambda i, j: ((i + 1) * blk_per_tm, 0)),
                pl.BlockSpec((kh * kw, c_in_p, tn), lambda i, j: (0, 0, j)),
                pl.BlockSpec((tm, 1), lambda i, j: (i, 0)),
            ],
            out_specs=(
                pl.BlockSpec((tm, tn), lambda i, j: (i, j)),
                pl.BlockSpec((_SUBLANE, tn), lambda i, j: (i, j)),
                pl.BlockSpec((_SUBLANE, tn), lambda i, j: (i, j)),
            ),
            scratch_shapes=[pltpu.VMEM((tm + halo_pad, c_in_p), gemm_dtype)],
        ),
        compiler_params=pltpu.CompilerParams(
            dimension_semantics=("parallel", "parallel"),
            vmem_limit_bytes=_VMEM_LIMIT,
        ),
        cost_estimate=cost,
    )(x2d, x2d, w3d, rowmask)

    geom = dict(nm=nm, nn=nn, tm=tm, tn=tn, m_pad=m_pad, n_pad=n_pad,
                ho=ho, wo=wo, hp=hp, wp=wp)
    return y2d, psum, psumsq, geom


# ---------------------------------------------------------------------------
# Kernel 1b (stride != 1): host-im2col GEMM + per-channel sum / sum^2
# ---------------------------------------------------------------------------
def _gemm_stats_kernel(p_ref, w_ref, y_ref, psum_ref, psumsq_ref, acc_ref):
    k = pl.program_id(2)

    @pl.when(k == 0)
    def _():
        acc_ref[...] = jnp.zeros_like(acc_ref)

    acc_ref[...] += jnp.dot(p_ref[...], w_ref[...],
                            preferred_element_type=jnp.float32)

    @pl.when(k == pl.num_programs(2) - 1)
    def _():
        a = acc_ref[...]
        y_ref[...] = a.astype(y_ref.dtype)
        s = jnp.sum(a, axis=0, keepdims=True)        # padded rows are zero
        s2 = jnp.sum(a * a, axis=0, keepdims=True)
        psum_ref[...] = jnp.broadcast_to(s, psum_ref.shape)
        psumsq_ref[...] = jnp.broadcast_to(s2, psumsq_ref.shape)


def _im2col_nhwc(x_nhwc, kh, kw, stride, padding):
    n, h, w, c = x_nhwc.shape
    xp = jnp.pad(x_nhwc, ((0, 0), (padding, padding), (padding, padding), (0, 0)))
    ho = (h + 2 * padding - kh) // stride + 1
    wo = (w + 2 * padding - kw) // stride + 1
    cols = []
    for ki in range(kh):
        for kj in range(kw):
            cols.append(xp[:, ki:ki + ho * stride:stride,
                           kj:kj + wo * stride:stride, :])
    patches = jnp.concatenate(cols, axis=-1)                  # (n, ho, wo, kh*kw*c)
    return patches.reshape(n * ho * wo, kh * kw * c), ho, wo


def _conv_stats_im2col(x, weight, *, stride, padding, gemm_dtype):
    # TODO(synk): stride > 1 still materializes im2col patches host-side
    # (kh*kw read amplification); only the stride==1 path uses implicit im2col.
    n, c_in, h, w = x.shape
    c_out, _, kh, kw = weight.shape
    x_nhwc = jnp.transpose(x, (0, 2, 3, 1)).astype(gemm_dtype)
    patches, ho, wo = _im2col_nhwc(x_nhwc, kh, kw, stride, padding)
    m, kdim = patches.shape

    w2d = jnp.transpose(weight, (2, 3, 1, 0)).reshape(kdim, c_out).astype(gemm_dtype)

    k_pad = _round_up(kdim, _LANE)
    n_pad = _round_up(c_out, _LANE)
    tn = _pick_tn(n_pad)
    nn = n_pad // tn
    if k_pad <= 512:
        tk = k_pad                                   # collapse the K grid
    elif k_pad % 512 == 0:
        tk = 512
    elif k_pad % 256 == 0:
        tk = 256
    else:
        tk = _LANE
    nk = k_pad // tk
    tm = _pick_tm(m, _SUBLANE)
    nm = _cdiv(m, tm)
    m_pad = nm * tm

    patches = jnp.pad(patches, ((0, m_pad - m), (0, k_pad - kdim)))
    w2d = jnp.pad(w2d, ((0, k_pad - kdim), (0, n_pad - c_out)))

    item = jnp.dtype(gemm_dtype).itemsize
    cost = pl.CostEstimate(
        flops=2 * m_pad * k_pad * n_pad, transcendentals=0,
        bytes_accessed=(patches.size * item + nn * w2d.size * item
                        + m_pad * n_pad * item + 2 * nm * _SUBLANE * n_pad * 4))

    y2d, psum, psumsq = pl.pallas_call(
        _gemm_stats_kernel,
        out_shape=(
            jax.ShapeDtypeStruct((m_pad, n_pad), gemm_dtype),
            jax.ShapeDtypeStruct((nm * _SUBLANE, n_pad), jnp.float32),
            jax.ShapeDtypeStruct((nm * _SUBLANE, n_pad), jnp.float32),
        ),
        grid_spec=pltpu.PrefetchScalarGridSpec(
            num_scalar_prefetch=0,
            grid=(nm, nn, nk),
            in_specs=[
                pl.BlockSpec((tm, tk), lambda i, j, k: (i, k)),
                pl.BlockSpec((tk, tn), lambda i, j, k: (k, j)),
            ],
            out_specs=(
                pl.BlockSpec((tm, tn), lambda i, j, k: (i, j)),
                pl.BlockSpec((_SUBLANE, tn), lambda i, j, k: (i, j)),
                pl.BlockSpec((_SUBLANE, tn), lambda i, j, k: (i, j)),
            ),
            scratch_shapes=[pltpu.VMEM((tm, tn), jnp.float32)],
        ),
        compiler_params=pltpu.CompilerParams(
            dimension_semantics=("parallel", "parallel", "arbitrary"),
            vmem_limit_bytes=_VMEM_LIMIT,
        ),
        cost_estimate=cost,
    )(patches, w2d)

    geom = dict(nm=nm, nn=nn, tm=tm, tn=tn, m_pad=m_pad, n_pad=n_pad,
                ho=ho, wo=wo, hp=None, wp=None)
    return y2d, psum, psumsq, geom


# ---------------------------------------------------------------------------
# Kernel 2: fused per-channel scale/shift (folded BatchNorm) + ReLU
# ---------------------------------------------------------------------------
def _scale_shift_relu_kernel(y_ref, scale_ref, shift_ref, o_ref, *, tn):
    j = pl.program_id(1)
    off = pl.multiple_of(j * tn, _LANE)
    sc = scale_ref[:, pl.ds(off, tn)]                 # resident (1, n_pad) vecs
    sh = shift_ref[:, pl.ds(off, tn)]
    y = y_ref[...].astype(jnp.float32)
    o_ref[...] = jnp.maximum(y * sc + sh, 0.0).astype(o_ref.dtype)


def _bn_relu_apply(y2d, scale, shift, *, nm, nn, tm, tn, out_dtype):
    m_pad, n_pad = y2d.shape
    io_alias = {0: 0} if y2d.dtype == jnp.dtype(out_dtype) else {}
    kernel = functools.partial(_scale_shift_relu_kernel, tn=tn)
    return pl.pallas_call(
        kernel,
        out_shape=jax.ShapeDtypeStruct((m_pad, n_pad), out_dtype),
        grid_spec=pltpu.PrefetchScalarGridSpec(
            num_scalar_prefetch=0,
            grid=(nm, nn),
            in_specs=[
                pl.BlockSpec((tm, tn), lambda i, j: (i, j)),
                pl.BlockSpec((1, n_pad), lambda i, j: (0, 0)),
                pl.BlockSpec((1, n_pad), lambda i, j: (0, 0)),
            ],
            out_specs=pl.BlockSpec((tm, tn), lambda i, j: (i, j)),
        ),
        compiler_params=pltpu.CompilerParams(
            dimension_semantics=("parallel", "parallel"),
            vmem_limit_bytes=_VMEM_LIMIT,
        ),
        input_output_aliases=io_alias,
    )(y2d, scale, shift)


def _bn_fold(psum, psumsq, gamma, beta, *, count, nm, n_pad, c_out):
    """Tiny host-side reduction of per-tile partial sums, then fold BN into a
    single per-channel scale & shift."""
    col_sum = psum.reshape(nm, _SUBLANE, n_pad)[:, 0, :].sum(axis=0)
    col_sumsq = psumsq.reshape(nm, _SUBLANE, n_pad)[:, 0, :].sum(axis=0)
    mean = col_sum / count
    # TODO(synk): E[x^2] - mean^2 can lose precision at very large batch*spatial;
    # a shifted/two-pass variance would be more robust at scale.
    var = jnp.maximum(col_sumsq / count - mean * mean, 0.0)
    inv = lax.rsqrt(var + BN_EPS)
    gamma_p = jnp.pad(gamma.astype(jnp.float32), (0, n_pad - c_out),
                      constant_values=1.0)
    beta_p = jnp.pad(beta.astype(jnp.float32), (0, n_pad - c_out))
    scale = (gamma_p * inv).reshape(1, n_pad)
    shift = (beta_p - mean * gamma_p * inv).reshape(1, n_pad)
    return scale, shift


# ---------------------------------------------------------------------------
# Public forward: Conv2d(bias=False, groups=1) + BatchNorm2d(batch stats) + ReLU
# ---------------------------------------------------------------------------
@functools.partial(jax.jit, static_argnames=("stride", "padding", "gemm_dtype"))
def conv_layer_forward(x, weight, gamma, beta, *, stride=1, padding=0,
                       gemm_dtype=jnp.bfloat16):
    """x: (N, C_in, H, W), weight: (C_out, C_in, kh, kw), gamma/beta: (C_out,).
    Returns (N, C_out, H_out, W_out) in x.dtype."""
    n, c_in, h, w = x.shape
    c_out, c_in_w, kh, kw = weight.shape
    assert c_in == c_in_w, "groups > 1 not supported"
    out_dtype = x.dtype

    if stride == 1:
        y2d, psum, psumsq, geom = _conv_stats_s1(
            x, weight, padding=padding, gemm_dtype=gemm_dtype)
    else:
        y2d, psum, psumsq, geom = _conv_stats_im2col(
            x, weight, stride=stride, padding=padding, gemm_dtype=gemm_dtype)

    ho, wo = geom["ho"], geom["wo"]
    count = n * ho * wo
    scale, shift = _bn_fold(psum, psumsq, gamma, beta, count=count,
                            nm=geom["nm"], n_pad=geom["n_pad"], c_out=c_out)

    out2d = _bn_relu_apply(y2d, scale, shift, nm=geom["nm"], nn=geom["nn"],
                           tm=geom["tm"], tn=geom["tn"], out_dtype=out_dtype)

    if stride == 1:
        hp, wp = geom["hp"], geom["wp"]
        out = out2d[:n * hp * wp].reshape(n, hp, wp, geom["n_pad"])
        out = out[:, :ho, :wo, :c_out]
    else:
        out = out2d[:count, :c_out].reshape(n, ho, wo, c_out)
    # TODO(synk): keep activations NHWC between layers to drop this transpose.
    return jnp.transpose(out, (0, 3, 1, 2))


# ---------------------------------------------------------------------------
# Pure-JAX reference (Conv2d + training-mode BatchNorm2d + ReLU)
# ---------------------------------------------------------------------------
def _reference(x, weight, gamma, beta, *, stride=1, padding=0):
    y = lax.conv_general_dilated(
        x, weight, window_strides=(stride, stride),
        padding=[(padding, padding), (padding, padding)],
        dimension_numbers=("NCHW", "OIHW", "NCHW"))
    mean = jnp.mean(y, axis=(0, 2, 3), keepdims=True)
    var = jnp.mean((y - mean) ** 2, axis=(0, 2, 3), keepdims=True)
    yn = (y - mean) * lax.rsqrt(var + BN_EPS)
    yn = yn * gamma.reshape(1, -1, 1, 1) + beta.reshape(1, -1, 1, 1)
    return jnp.maximum(yn, 0.0)


if __name__ == "__main__":
    # ConvLayer(in_channels=4, out_channels=8, kernel_size=3, stride=1, padding=1)
    N, C_IN, H, W = 2, 4, 16, 16
    C_OUT, KS = 8, 3

    key = jax.random.PRNGKey(0)
    kx, kw_, kg, kb = jax.random.split(key, 4)
    x = jax.random.normal(kx, (N, C_IN, H, W), dtype=jnp.float32)
    weight = jax.random.normal(kw_, (C_OUT, C_IN, KS, KS), dtype=jnp.float32) * 0.1
    gamma = 1.0 + 0.1 * jax.random.normal(kg, (C_OUT,), dtype=jnp.float32)
    beta = 0.1 * jax.random.normal(kb, (C_OUT,), dtype=jnp.float32)

    # stride=1: implicit-im2col path. f32 GEMM for a tight logic check ...
    ref = _reference(x, weight, gamma, beta, stride=1, padding=1)
    out_f32 = jax.block_until_ready(conv_layer_forward(
        x, weight, gamma, beta, stride=1, padding=1, gemm_dtype=jnp.float32))
    if not jnp.allclose(out_f32, ref, atol=2e-3, rtol=2e-3):
        raise AssertionError("Pallas ConvLayer (implicit im2col, f32) mismatch")

    # ... and bf16 (default performance path) with a looser tolerance.
    out_bf16 = jax.block_until_ready(conv_layer_forward(
        x, weight, gamma, beta, stride=1, padding=1, gemm_dtype=jnp.bfloat16))
    if not jnp.allclose(out_bf16, ref, atol=5e-2, rtol=5e-2):
        raise AssertionError("Pallas ConvLayer (implicit im2col, bf16) mismatch")

    # stride=2: host-im2col fallback path (e.g. OSNet's 7x7/s2 stem style).
    ref_s2 = _reference(x, weight, gamma, beta, stride=2, padding=1)
    out_s2 = jax.block_until_ready(conv_layer_forward(
        x, weight, gamma, beta, stride=2, padding=1, gemm_dtype=jnp.float32))
    if not jnp.allclose(out_s2, ref_s2, atol=2e-3, rtol=2e-3):
        raise AssertionError("Pallas ConvLayer (im2col fallback, stride 2) mismatch")

    print("KERNEL_OK")
</pallas_src>

<mosaic_0001>
module attributes {stable_mosaic.version = 11 : i64} {
  func.func @_conv_bn_stats_s1_kernel(%arg0: i32, %arg1: i32, %arg2: memref<360x8xf32, #tpu.memory_space<vmem>>, %arg3: memref<40x8xf32, #tpu.memory_space<vmem>>, %arg4: memref<9x8x128xf32, #tpu.memory_space<vmem>>, %arg5: memref<360x1xf32, #tpu.memory_space<vmem>>, %arg6: memref<360x128xf32, #tpu.memory_space<vmem>>, %arg7: memref<8x128xf32, #tpu.memory_space<vmem>>, %arg8: memref<8x128xf32, #tpu.memory_space<vmem>>, %arg9: memref<400x8xf32, #tpu.memory_space<vmem>>) attributes {dimension_semantics = [#tpu.dimension_semantics<parallel>, #tpu.dimension_semantics<parallel>], iteration_bounds = array<i64: 2, 1>, scalar_prefetch = 0 : i64, scratch_operands = 1 : i64, tpu.core_type = #tpu.core_type<tc>, window_params = [{transform_indices = @transform_0, window_bounds = array<i64: 360, 8>}, {transform_indices = @transform_1, window_bounds = array<i64: 40, 8>}, {transform_indices = @transform_2, window_bounds = array<i64: 9, 8, 128>}, {transform_indices = @transform_3, window_bounds = array<i64: 360, 1>}, {transform_indices = @transform_4, window_bounds = array<i64: 360, 128>}, {transform_indices = @transform_5, window_bounds = array<i64: 8, 128>}, {transform_indices = @transform_6, window_bounds = array<i64: 8, 128>}]} {
    %c0 = arith.constant 0 : index
    %c0_0 = arith.constant 0 : index
    %0 = vector.load %arg2[%c0, %c0_0] : memref<360x8xf32, #tpu.memory_space<vmem>>, vector<360x8xf32>
    %c0_1 = arith.constant 0 : index
    %c0_2 = arith.constant 0 : index
    %1 = vector.load %arg9[%c0_1, %c0_2] : memref<400x8xf32, #tpu.memory_space<vmem>>, vector<360x8xf32>
    tpu.vector_store %arg9[%c0_1, %c0_2], %0 {strides = array<i32>} : memref<400x8xf32, #tpu.memory_space<vmem>>, vector<360x8xf32>,
    %c0_3 = arith.constant 0 : index
    %c0_4 = arith.constant 0 : index
    %2 = vector.load %arg3[%c0_3, %c0_4] : memref<40x8xf32, #tpu.memory_space<vmem>>, vector<40x8xf32>
    %c360 = arith.constant 360 : index
    %c0_5 = arith.constant 0 : index
    %3 = vector.load %arg9[%c360, %c0_5] : memref<400x8xf32, #tpu.memory_space<vmem>>, vector<40x8xf32>
    tpu.vector_store %arg9[%c360, %c0_5], %2 {strides = array<i32>} : memref<400x8xf32, #tpu.memory_space<vmem>>, vector<40x8xf32>,
    %cst = arith.constant 0.000000e+00 : f32
    %4 = vector.broadcast %cst : f32 to vector<360x128xf32>
    %c0_6 = arith.constant 0 : index
    %c0_7 = arith.constant 0 : index
    %5 = vector.load %arg9[%c0_6, %c0_7] : memref<400x8xf32, #tpu.memory_space<vmem>>, vector<360x8xf32>
    %c0_8 = arith.constant 0 : index
    %c0_9 = arith.constant 0 : index
    %c0_10 = arith.constant 0 : index
    %6 = vector.load %arg4[%c0_8, %c0_9, %c0_10] : memref<9x8x128xf32, #tpu.memory_space<vmem>>, vector<1x8x128xf32>
    %7 = vector.shape_cast %6 : vector<1x8x128xf32> to vector<8x128xf32>
    %cst_11 = arith.constant dense<0.000000e+00> : vector<360x128xf32>
    %8 = tpu.matmul %5, %7, %cst_11 {dimension_numbers = #tpu.dot_dimension_numbers<[1], [0], [0], [1], [0, 0, 1, 1], [], []>} : vector<360x8xf32>, vector<8x128xf32>, vector<360x128xf32> -> vector<360x128xf32>
    %9 = arith.addf %4, %8 : vector<360x128xf32>
    %c1 = arith.constant 1 : index
    %c0_12 = arith.constant 0 : index
    %10 = vector.load %arg9[%c1, %c0_12] : memref<400x8xf32, #tpu.memory_space<vmem>>, vector<360x8xf32>
    %c1_13 = arith.constant 1 : index
    %c0_14 = arith.constant 0 : index
    %c0_15 = arith.constant 0 : index
    %11 = vector.load %arg4[%c1_13, %c0_14, %c0_15] : memref<9x8x128xf32, #tpu.memory_space<vmem>>, vector<1x8x128xf32>
    %12 = vector.shape_cast %11 : vector<1x8x128xf32> to vector<8x128xf32>
    %cst_16 = arith.constant dense<0.000000e+00> : vector<360x128xf32>
    %13 = tpu.matmul %10, %12, %cst_16 {dimension_numbers = #tpu.dot_dimension_numbers<[1], [0], [0], [1], [0, 0, 1, 1], [], []>} : vector<360x8xf32>, vector<8x128xf32>, vector<360x128xf32> -> vector<360x128xf32>
    %14 = arith.addf %9, %13 : vector<360x128xf32>
    %c2 = arith.constant 2 : index
    %c0_17 = arith.constant 0 : index
    %15 = vector.load %arg9[%c2, %c0_17] : memref<400x8xf32, #tpu.memory_space<vmem>>, vector<360x8xf32>
    %c2_18 = arith.constant 2 : index
    %c0_19 = arith.constant 0 : index
    %c0_20 = arith.constant 0 : index
    %16 = vector.load %arg4[%c2_18, %c0_19, %c0_20] : memref<9x8x128xf32, #tpu.memory_space<vmem>>, vector<1x8x128xf32>
    %17 = vector.shape_cast %16 : vector<1x8x128xf32> to vector<8x128xf32>
    %cst_21 = arith.constant dense<0.000000e+00> : vector<360x128xf32>
    %18 = tpu.matmul %15, %17, %cst_21 {dimension_numbers = #tpu.dot_dimension_numbers<[1], [0], [0], [1], [0, 0, 1, 1], [], []>} : vector<360x8xf32>, vector<8x128xf32>, vector<360x128xf32> -> vector<360x128xf32>
    %19 = arith.addf %14, %18 : vector<360x128xf32>
    %c18 = arith.constant 18 : index
    %c0_22 = arith.constant 0 : index
    %20 = vector.load %arg9[%c18, %c0_22] : memref<400x8xf32, #tpu.memory_space<vmem>>, vector<360x8xf32>
    %c3 = arith.constant 3 : index
    %c0_23 = arith.constant 0 : index
    %c0_24 = arith.constant 0 : index
    %21 = vector.load %arg4[%c3, %c0_23, %c0_24] : memref<9x8x128xf32, #tpu.memory_space<vmem>>, vector<1x8x128xf32>
    %22 = vector.shape_cast %21 : vector<1x8x128xf32> to vector<8x128xf32>
    %cst_25 = arith.constant dense<0.000000e+00> : vector<360x128xf32>
    %23 = tpu.matmul %20, %22, %cst_25 {dimension_numbers = #tpu.dot_dimension_numbers<[1], [0], [0], [1], [0, 0, 1, 1], [], []>} : vector<360x8xf32>, vector<8x128xf32>, vector<360x128xf32> -> vector<360x128xf32>
    %24 = arith.addf %19, %23 : vector<360x128xf32>
    %c19 = arith.constant 19 : index
    %c0_26 = arith.constant 0 : index
    %25 = vector.load %arg9[%c19, %c0_26] : memref<400x8xf32, #tpu.memory_space<vmem>>, vector<360x8xf32>
    %c4 = arith.constant 4 : index
    %c0_27 = arith.constant 0 : index
    %c0_28 = arith.constant 0 : index
    %26 = vector.load %arg4[%c4, %c0_27, %c0_28] : memref<9x8x128xf32, #tpu.memory_space<vmem>>, vector<1x8x128xf32>
    %27 = vector.shape_cast %26 : vector<1x8x128xf32> to vector<8x128xf32>
    %cst_29 = arith.constant dense<0.000000e+00> : vector<360x128xf32>
    %28 = tpu.matmul %25, %27, %cst_29 {dimension_numbers = #tpu.dot_dimension_numbers<[1], [0], [0], [1], [0, 0, 1, 1], [], []>} : vector<360x8xf32>, vector<8x128xf32>, vector<360x128xf32> -> vector<360x128xf32>
    %29 = arith.addf %24, %28 : vector<360x128xf32>
    %c20 = arith.constant 20 : index
    %c0_30 = arith.constant 0 : index
    %30 = vector.load %arg9[%c20, %c0_30] : memref<400x8xf32, #tpu.memory_space<vmem>>, vector<360x8xf32>
    %c5 = arith.constant 5 : index
    %c0_31 = arith.constant 0 : index
    %c0_32 = arith.constant 0 : index
    %31 = vector.load %arg4[%c5, %c0_31, %c0_32] : memref<9x8x128xf32, #tpu.memory_space<vmem>>, vector<1x8x128xf32>
    %32 = vector.shape_cast %31 : vector<1x8x128xf32> to vector<8x128xf32>
    %cst_33 = arith.constant dense<0.000000e+00> : vector<360x128xf32>
    %33 = tpu.matmul %30, %32, %cst_33 {dimension_numbers = #tpu.dot_dimension_numbers<[1], [0], [0], [1], [0, 0, 1, 1], [], []>} : vector<360x8xf32>, vector<8x128xf32>, vector<360x128xf32> -> vector<360x128xf32>
    %34 = arith.addf %29, %33 : vector<360x128xf32>
    %c36 = arith.constant 36 : index
    %c0_34 = arith.constant 0 : index
    %35 = vector.load %arg9[%c36, %c0_34] : memref<400x8xf32, #tpu.memory_space<vmem>>, vector<360x8xf32>
    %c6 = arith.constant 6 : index
    %c0_35 = arith.constant 0 : index
    %c0_36 = arith.constant 0 : index
    %36 = vector.load %arg4[%c6, %c0_35, %c0_36] : memref<9x8x128xf32, #tpu.memory_space<vmem>>, vector<1x8x128xf32>
    %37 = vector.shape_cast %36 : vector<1x8x128xf32> to vector<8x128xf32>
    %cst_37 = arith.constant dense<0.000000e+00> : vector<360x128xf32>
    %38 = tpu.matmul %35, %37, %cst_37 {dimension_numbers = #tpu.dot_dimension_numbers<[1], [0], [0], [1], [0, 0, 1, 1], [], []>} : vector<360x8xf32>, vector<8x128xf32>, vector<360x128xf32> -> vector<360x128xf32>
    %39 = arith.addf %34, %38 : vector<360x128xf32>
    %c37 = arith.constant 37 : index
    %c0_38 = arith.constant 0 : index
    %40 = vector.load %arg9[%c37, %c0_38] : memref<400x8xf32, #tpu.memory_space<vmem>>, vector<360x8xf32>
    %c7 = arith.constant 7 : index
    %c0_39 = arith.constant 0 : index
    %c0_40 = arith.constant 0 : index
    %41 = vector.load %arg4[%c7, %c0_39, %c0_40] : memref<9x8x128xf32, #tpu.memory_space<vmem>>, vector<1x8x128xf32>
    %42 = vector.shape_cast %41 : vector<1x8x128xf32> to vector<8x128xf32>
    %cst_41 = arith.constant dense<0.000000e+00> : vector<360x128xf32>
    %43 = tpu.matmul %40, %42, %cst_41 {dimension_numbers = #tpu.dot_dimension_numbers<[1], [0], [0], [1], [0, 0, 1, 1], [], []>} : vector<360x8xf32>, vector<8x128xf32>, vector<360x128xf32> -> vector<360x128xf32>
    %44 = arith.addf %39, %43 : vector<360x128xf32>
    %c38 = arith.constant 38 : index
    %c0_42 = arith.constant 0 : index
    %45 = vector.load %arg9[%c38, %c0_42] : memref<400x8xf32, #tpu.memory_space<vmem>>, vector<360x8xf32>
    %c8 = arith.constant 8 : index
    %c0_43 = arith.constant 0 : index
    %c0_44 = arith.constant 0 : index
    %46 = vector.load %arg4[%c8, %c0_43, %c0_44] : memref<9x8x128xf32, #tpu.memory_space<vmem>>, vector<1x8x128xf32>
    %47 = vector.shape_cast %46 : vector<1x8x128xf32> to vector<8x128xf32>
    %cst_45 = arith.constant dense<0.000000e+00> : vector<360x128xf32>
    %48 = tpu.matmul %45, %47, %cst_45 {dimension_numbers = #tpu.dot_dimension_numbers<[1], [0], [0], [1], [0, 0, 1, 1], [], []>} : vector<360x8xf32>, vector<8x128xf32>, vector<360x128xf32> -> vector<360x128xf32>
    %49 = arith.addf %44, %48 : vector<360x128xf32>
    %c0_46 = arith.constant 0 : index
    %c0_47 = arith.constant 0 : index
    %50 = vector.load %arg6[%c0_46, %c0_47] : memref<360x128xf32, #tpu.memory_space<vmem>>, vector<360x128xf32>
    tpu.vector_store %arg6[%c0_46, %c0_47], %49 {strides = array<i32>} : memref<360x128xf32, #tpu.memory_space<vmem>>, vector<360x128xf32>,
    %c0_48 = arith.constant 0 : index
    %c0_49 = arith.constant 0 : index
    %51 = vector.load %arg5[%c0_48, %c0_49] : memref<360x1xf32, #tpu.memory_space<vmem>>, vector<360x1xf32>
    %52 = vector.broadcast %51 : vector<360x1xf32> to vector<360x128xf32>
    %53 = arith.mulf %49, %52 : vector<360x128xf32>
    %cst_50 = arith.constant dense<0.000000e+00> : vector<128xf32>
    %54 = vector.multi_reduction <add>, %53, %cst_50 [0] : vector<360x128xf32> to vector<128xf32>
    %55 = vector.shape_cast %54 : vector<128xf32> to vector<1x128xf32>
    %56 = vector.shape_cast %55 : vector<1x128xf32> to vector<1x128xf32>
    %57 = vector.broadcast %56 : vector<1x128xf32> to vector<8x128xf32>
    %c0_51 = arith.constant 0 : index
    %c0_52 = arith.constant 0 : index
    %58 = vector.load %arg7[%c0_51, %c0_52] : memref<8x128xf32, #tpu.memory_space<vmem>>, vector<8x128xf32>
    tpu.vector_store %arg7[%c0_51, %c0_52], %57 {strides = array<i32>} : memref<8x128xf32, #tpu.memory_space<vmem>>, vector<8x128xf32>,
    %59 = arith.mulf %53, %49 : vector<360x128xf32>
    %cst_53 = arith.constant dense<0.000000e+00> : vector<128xf32>
    %60 = vector.multi_reduction <add>, %59, %cst_53 [0] : vector<360x128xf32> to vector<128xf32>
    %61 = vector.shape_cast %60 : vector<128xf32> to vector<1x128xf32>
    %62 = vector.shape_cast %61 : vector<1x128xf32> to vector<1x128xf32>
    %63 = vector.broadcast %62 : vector<1x128xf32> to vector<8x128xf32>
    %c0_54 = arith.constant 0 : index
    %c0_55 = arith.constant 0 : index
    %64 = vector.load %arg8[%c0_54, %c0_55] : memref<8x128xf32, #tpu.memory_space<vmem>>, vector<8x128xf32>
    tpu.vector_store %arg8[%c0_54, %c0_55], %63 {strides = array<i32>} : memref<8x128xf32, #tpu.memory_space<vmem>>, vector<8x128xf32>,
    return
  }
  func.func @transform_0(%arg0: i32, %arg1: i32) -> (i32, i32) {
    %c0_i32 = arith.constant 0 : i32
    %c0_i32_0 = arith.constant 0 : i32
    return %arg0, %c0_i32 : i32, i32
  }
  func.func @transform_1(%arg0: i32, %arg1: i32) -> (i32, i32) {
    %c1_i32 = arith.constant 1 : i32
    %0 = arith.addi %arg0, %c1_i32 : i32
    %c9_i32 = arith.constant 9 : i32
    %1 = arith.muli %0, %c9_i32 : i32
    %c0_i32 = arith.constant 0 : i32
    %c0_i32_0 = arith.constant 0 : i32
    return %1, %c0_i32 : i32, i32
  }
  func.func @transform_2(%arg0: i32, %arg1: i32) -> (i32, i32, i32) {
    %c0_i32 = arith.constant 0 : i32
    %c0_i32_0 = arith.constant 0 : i32
    %c0_i32_1 = arith.constant 0 : i32
    return %c0_i32, %c0_i32_0, %arg1 : i32, i32, i32
  }
  func.func @transform_3(%arg0: i32, %arg1: i32) -> (i32, i32) {
    %c0_i32 = arith.constant 0 : i32
    %c0_i32_0 = arith.constant 0 : i32
    return %arg0, %c0_i32 : i32, i32
  }
  func.func @transform_4(%arg0: i32, %arg1: i32) -> (i32, i32) {
    %c0_i32 = arith.constant 0 : i32
    return %arg0, %arg1 : i32, i32
  }
  func.func @transform_5(%arg0: i32, %arg1: i32) -> (i32, i32) {
    %c0_i32 = arith.constant 0 : i32
    return %arg0, %arg1 : i32, i32
  }
  func.func @transform_6(%arg0: i32, %arg1: i32) -> (i32, i32) {
    %c0_i32 = arith.constant 0 : i32
    return %arg0, %arg1 : i32, i32
  }
}

module attributes {stable_mosaic.version = 11 : i64} {
  func.func @_scale_shift_relu_kernel(%arg0: i32, %arg1: i32, %arg2: memref<360x128xf32, #tpu.memory_space<vmem>>, %arg3: memref<1x128xf32, #tpu.memory_space<vmem>>, %arg4: memref<1x128xf32, #tpu.memory_space<vmem>>, %arg5: memref<360x128xf32, #tpu.memory_space<vmem>>) attributes {dimension_semantics = [#tpu.dimension_semantics<parallel>, #tpu.dimension_semantics<parallel>], iteration_bounds = array<i64: 2, 1>, scalar_prefetch = 0 : i64, scratch_operands = 0 : i64, tpu.core_type = #tpu.core_type<tc>, window_params = [{transform_indices = @transform_0, window_bounds = array<i64: 360, 128>}, {pipeline_mode = #tpu.pipeline_mode<synchronous>, transform_indices = @transform_1, window_bounds = array<i64: 1, 128>}, {pipeline_mode = #tpu.pipeline_mode<synchronous>, transform_indices = @transform_2, window_bounds = array<i64: 1, 128>}, {transform_indices = @transform_3, window_bounds = array<i64: 360, 128>}]} {
    %c128_i32 = arith.constant 128 : i32
    %0 = arith.muli %arg1, %c128_i32 : i32
    %1 = tpu.assume_multiple %0, 128 : i32
    %c0 = arith.constant 0 : index
    %2 = arith.index_cast %1 : i32 to index
    %3 = vector.load %arg3[%c0, %2] : memref<1x128xf32, #tpu.memory_space<vmem>>, vector<1x128xf32>
    %c0_0 = arith.constant 0 : index
    %4 = arith.index_cast %1 : i32 to index
    %5 = vector.load %arg4[%c0_0, %4] : memref<1x128xf32, #tpu.memory_space<vmem>>, vector<1x128xf32>
    %c0_1 = arith.constant 0 : index
    %c0_2 = arith.constant 0 : index
    %6 = vector.load %arg2[%c0_1, %c0_2] : memref<360x128xf32, #tpu.memory_space<vmem>>, vector<360x128xf32>
    %7 = vector.broadcast %3 : vector<1x128xf32> to vector<360x128xf32>
    %8 = arith.mulf %6, %7 : vector<360x128xf32>
    %9 = vector.broadcast %5 : vector<1x128xf32> to vector<360x128xf32>
    %10 = arith.addf %8, %9 : vector<360x128xf32>
    %cst = arith.constant 0.000000e+00 : f32
    %11 = vector.broadcast %cst : f32 to vector<360x128xf32>
    %12 = arith.maximumf %10, %11 : vector<360x128xf32>
    %c0_3 = arith.constant 0 : index
    %c0_4 = arith.constant 0 : index
    %13 = vector.load %arg5[%c0_3, %c0_4] : memref<360x128xf32, #tpu.memory_space<vmem>>, vector<360x128xf32>
    tpu.vector_store %arg5[%c0_3, %c0_4], %12 {strides = array<i32>} : memref<360x128xf32, #tpu.memory_space<vmem>>, vector<360x128xf32>,
    return
  }
  func.func @transform_0(%arg0: i32, %arg1: i32) -> (i32, i32) {
    %c0_i32 = arith.constant 0 : i32
    return %arg0, %arg1 : i32, i32
  }
  func.func @transform_1(%arg0: i32, %arg1: i32) -> (i32, i32) {
    %c0_i32 = arith.constant 0 : i32
    %c0_i32_0 = arith.constant 0 : i32
    %c0_i32_1 = arith.constant 0 : i32
    return %c0_i32, %c0_i32_0 : i32, i32
  }
  func.func @transform_2(%arg0: i32, %arg1: i32) -> (i32, i32) {
    %c0_i32 = arith.constant 0 : i32
    %c0_i32_0 = arith.constant 0 : i32
    %c0_i32_1 = arith.constant 0 : i32
    return %c0_i32, %c0_i32_0 : i32, i32
  }
  func.func @transform_3(%arg0: i32, %arg1: i32) -> (i32, i32) {
    %c0_i32 = arith.constant 0 : i32
    return %arg0, %arg1 : i32, i32
  }
}

</mosaic_0001>

<llo_original>
// kernel: tile.6
$region0: #{tile.6}
  #allocation0 [shape = 's32[1]{0}', space=sflag, size = 0x4, scoped, tag = 'scoped memory for tile.6']
  %s0 = inlined_call_operand.vmem [shape: f32[324], index: 0, kind: input, shape index: {}]
  %s1 = inlined_call_operand.vmem [shape: f32[2,324], index: 1, kind: output, shape index: {}]
  // Predicated region
  $region2: #{tile.6} parent=0 // pred_check
    _
  $region3: #{tile.6} parent=0 // pred_check_branch
    %3 = sbr.rel (0) target = $region5
  $region4: #{tile.6} parent=0 // pred_region
    _
  $region5: #{tile.6} parent=0 // pred_fallthru
    _
  %v4 = vld [vmem:[%s0] ss:$0 sm:$0xff]
  %5 = vst [vmem:[%s1] sm:$0x3] %v4
  %s6 = scalar_lea.vmem %s0, 1
  %v7 = vld [vmem:[%s6] ss:$0 sm:$0xff]
  %s8 = scalar_lea.vmem %s1, 2
  %9 = vst [vmem:[%s8] sm:$0x3] %v7
  %s10 = scalar_lea.vmem %s0, 2
  %v11 = vld [vmem:[%s10] ss:$0 sm:$0xff]
  %s12 = scalar_lea.vmem %s1, 4
  %13 = vst [vmem:[%s12] sm:$0x3] %v11

// kernel: tile.0
$region0: #{tile.0}
  %s0 = inlined_call_operand.vmem [shape: f32[2,324], index: 0, kind: input, shape index: {}]
  %s1 = inlined_call_operand.vmem [shape: f32[648,1], index: 1, kind: output, shape index: {}]
  $region1: #{tile.0} parent=0
    #allocation0 [shape = 'u8[12288]{0}', space=vmem, size = 0x3000, scoped, tag = 'scoped mem for input reshape']
    %s3 = sshll.u32 1, 2
    %s4 = ssub.s32 %s3, 1
    %s5 = smul.addr 2, 2
    %s6 = scalar_lea.vmem %s0, %s5
    %v7 = vld [vmem:[%s6] sm:%s4]
    %s8 = scalar_lea.vmem [#allocation0], 16
    %9 = vst [vmem:[%s8] sm:%s4] %v7
    %s10 = scalar_lea.vmem %s0, 2
    %v11 = vld [vmem:[%s10] sm:%s4]
    %s12 = scalar_lea.vmem [#allocation0], 8
    %13 = vst [vmem:[%s12] sm:%s4] %v11
    %v14 = vld [vmem:[%s0] sm:%s4]
    %15 = vst [vmem:[#allocation0] sm:%s4] %v14
    %v16 = vld [vmem:[#allocation0] sm:$0x3]
    %vm17 = vcmask 7168
    %18 = vst.msk [vmem:[%s1] ss:$324 sm:$0x3] %vm17, %v16
    %s19 = scalar_lea.vmem [#allocation0], 8
    %v20 = vld [vmem:[%s19] sm:$0x3]
    %vm21 = vcmask 7168
    %s22 = scalar_lea.vmem %s1, 128
    %23 = vst.msk [vmem:[%s22] ss:$324 sm:$0x3] %vm21, %v20
    %s24 = scalar_lea.vmem [#allocation0], 16
    %v25 = vld [vmem:[%s24] sm:$0x3]
    %vm26 = vcmask 7168
    %s27 = scalar_lea.vmem %s1, 256
    %28 = vst.msk [vmem:[%s27] ss:$324 sm:$0x3] %vm26, %v25
    %v29 = vld.sshfl [vmem:[#allocation0] sm:$0xff pattern:$0x99999810]
    %s30 = scalar_lea.vmem [#allocation0], 12
    %v31 = vld [vmem:[%s30] sm:$0x30]
    %vm32 = vcmask 1045508
    %v33 = vsel %vm32, %v31, %v29
    %34 = vrot.lane.b32.xlu0 %v33, 127
    %v35 = vpop.permute.xlu0 %34
    %vm36 = vcmask 7168
    %s37 = scalar_lea.vmem %s1, 1
    %38 = vst.msk [vmem:[%s37] ss:$324 sm:$0x3] %vm36, %v35
    %s39 = scalar_lea.vmem %s1, 4294966777
    %40 = vst.msk [vmem:[%s39] ss:$324 sm:$0xc] %vm36, %v35
    %s41 = scalar_lea.vmem %s1, 4294966257
    %42 = vst.msk [vmem:[%s41] ss:$324 sm:$0x30] %vm36, %v35
    %v43 = vld.sshfl [vmem:[#allocation0] sm:$0xff pattern:$0x99999810]
    %s44 = scalar_lea.vmem [#allocation0], 12
    %v45 = vld [vmem:[%s44] sm:$0x30]
    %vm46 = vcmask 1045508
    %v47 = vsel %vm46, %v45, %v43
    %48 = vrot.lane.b32.xlu0 %v47, 126
    %v49 = vpop.permute.xlu0 %48
    %vm50 = vcmask 7168
    %s51 = scalar_lea.vmem %s1, 2
    %52 = vst.msk [vmem:[%s51] ss:$324 sm:$0x3] %vm50, %v49
    %s53 = scalar_lea.vmem %s1, 4294966778
    %54 = vst.msk [vmem:[%s53] ss:$324 sm:$0xc] %vm50, %v49
    %s55 = scalar_lea.vmem %s1, 4294966258
    %56 = vst.msk [vmem:[%s55] ss:$324 sm:$0x30] %vm50, %v49
    %v57 = vld.sshfl [vmem:[#allocation0] sm:$0xff pattern:$0x99999810]
    %s58 = scalar_lea.vmem [#allocation0], 12
    %v59 = vld [vmem:[%s58] sm:$0x30]
    %vm60 = vcmask 1045508
    %v61 = vsel %vm60, %v59, %v57
    %62 = vrot.lane.b32.xlu0 %v61, 125
    %v63 = vpop.permute.xlu0 %62
    %vm64 = vcmask 7168
    %s65 = scalar_lea.vmem %s1, 3
    %66 = vst.msk [vmem:[%s65] ss:$324 sm:$0x3] %vm64, %v63
    %s67 = scalar_lea.vmem %s1, 4294966779
    %68 = vst.msk [vmem:[%s67] ss:$324 sm:$0xc] %vm64, %v63
    %s69 = scalar_lea.vmem %s1, 4294966259
    %70 = vst.msk [vmem:[%s69] ss:$324 sm:$0x30] %vm64, %v63
    %v71 = vld.sshfl [vmem:[#allocation0] sm:$0xff pattern:$0x99999810]
    %s72 = scalar_lea.vmem [#allocation0], 12
    %v73 = vld [vmem:[%s72] sm:$0x30]
    %vm74 = vcmask 1045508
    %v75 = vsel %vm74, %v73, %v71
    %76 = vrot.lane.b32.xlu0 %v75, 124
    %v77 = vpop.permute.xlu0 %76
    %vm78 = vcmask 7168
    %s79 = scalar_lea.vmem %s1, 4
    %80 = vst.msk [vmem:[%s79] ss:$324 sm:$0x3] %vm78, %v77
    %s81 = scalar_lea.vmem %s1, 4294966780
    %82 = vst.msk [vmem:[%s81] ss:$324 sm:$0xc] %vm78, %v77
    %s83 = scalar_lea.vmem %s1, 4294966260
    %84 = vst.msk [vmem:[%s83] ss:$324 sm:$0x30] %vm78, %v77
    %v85 = vld.sshfl [vmem:[#allocation0] sm:$0xff pattern:$0x99999810]
    %s86 = scalar_lea.vmem [#allocation0], 12
    %v87 = vld [vmem:[%s86] sm:$0x30]
    %vm88 = vcmask 1045508
    %v89 = vsel %vm88, %v87, %v85
    %90 = vrot.lane.b32.xlu0 %v89, 123
    %v91 = vpop.permute.xlu0 %90
    %vm92 = vcmask 7168
    %s93 = scalar_lea.vmem %s1, 5
    %94 = vst.msk [vmem:[%s93] ss:$324 sm:$0x3] %vm92, %v91
    %s95 = scalar_lea.vmem %s1, 4294966781
    %96 = vst.msk [vmem:[%s95] ss:$324 sm:$0xc] %vm92, %v91
    %s97 = scalar_lea.vmem %s1, 4294966261
    %98 = vst.msk [vmem:[%s97] ss:$324 sm:$0x30] %vm92, %v91
    %v99 = vld.sshfl [vmem:[#allocation0] sm:$0xff pattern:$0x99999810]
    %s100 = scalar_lea.vmem [#allocation0], 12
    %v101 = vld [vmem:[%s100] sm:$0x30]
    %vm102 = vcmask 1045508
    %v103 = vsel %vm102, %v101, %v99
    %104 = vrot.lane.b32.xlu0 %v103, 122
    %v105 = vpop.permute.xlu0 %104
    %vm106 = vcmask 7168
    %s107 = scalar_lea.vmem %s1, 6
    %108 = vst.msk [vmem:[%s107] ss:$324 sm:$0x3] %vm106, %v105
    %s109 = scalar_lea.vmem %s1, 4294966782
    %110 = vst.msk [vmem:[%s109] ss:$324 sm:$0xc] %vm106, %v105
    %s111 = scalar_lea.vmem %s1, 4294966262
    %112 = vst.msk [vmem:[%s111] ss:$324 sm:$0x30] %vm106, %v105
    %v113 = vld.sshfl [vmem:[#allocation0] sm:$0xff pattern:$0x99999810]
    %s114 = scalar_lea.vmem [#allocation0], 12
    %v115 = vld [vmem:[%s114] sm:$0x30]
    %vm116 = vcmask 1045508
    %v117 = vsel %vm116, %v115, %v113
    %118 = vrot.lane.b32.xlu0 %v117, 121
    %v119 = vpop.permute.xlu0 %118
    %vm120 = vcmask 7168
    %s121 = scalar_lea.vmem %s1, 7
    %122 = vst.msk [vmem:[%s121] ss:$324 sm:$0x3] %vm120, %v119
    %s123 = scalar_lea.vmem %s1, 4294966783
    %124 = vst.msk [vmem:[%s123] ss:$324 sm:$0xc] %vm120, %v119
    %s125 = scalar_lea.vmem %s1, 4294966263
    %126 = vst.msk [vmem:[%s125] ss:$324 sm:$0x30] %vm120, %v119
    %v127 = vld.sshfl [vmem:[#allocation0] sm:$0xff pattern:$0x99999810]
    %s128 = scalar_lea.vmem [#allocation0], 12
    %v129 = vld [vmem:[%s128] sm:$0x30]
    %vm130 = vcmask 1045508
    %v131 = vsel %vm130, %v129, %v127
    %132 = vrot.lane.b32.xlu0 %v131, 120
    %v133 = vpop.permute.xlu0 %132
    %vm134 = vcmask 7168
    %s135 = scalar_lea.vmem %s1, 8
    %136 = vst.msk [vmem:[%s135] ss:$324 sm:$0x3] %vm134, %v133
    %s137 = scalar_lea.vmem %s1, 4294966784
    %138 = vst.msk [vmem:[%s137] ss:$324 sm:$0xc] %vm134, %v133
    %s139 = scalar_lea.vmem %s1, 4294966264
    %140 = vst.msk [vmem:[%s139] ss:$324 sm:$0x30] %vm134, %v133
    %v141 = vld.sshfl [vmem:[#allocation0] sm:$0xff pattern:$0x99999810]
    %s142 = scalar_lea.vmem [#allocation0], 12
    %v143 = vld [vmem:[%s142] sm:$0x30]
    %vm144 = vcmask 1045508
    %v145 = vsel %vm144, %v143, %v141
    %146 = vrot.lane.b32.xlu0 %v145, 119
    %v147 = vpop.permute.xlu0 %146
    %vm148 = vcmask 7168
    %s149 = scalar_lea.vmem %s1, 9
    %150 = vst.msk [vmem:[%s149] ss:$324 sm:$0x3] %vm148, %v147
    %s151 = scalar_lea.vmem %s1, 4294966785
    %152 = vst.msk [vmem:[%s151] ss:$324 sm:$0xc] %vm148, %v147
    %s153 = scalar_lea.vmem %s1, 4294966265
    %154 = vst.msk [vmem:[%s153] ss:$324 sm:$0x30] %vm148, %v147
    %v155 = vld.sshfl [vmem:[#allocation0] sm:$0xff pattern:$0x99999810]
    %s156 = scalar_lea.vmem [#allocation0], 12
    %v157 = vld [vmem:[%s156] sm:$0x30]
    %vm158 = vcmask 1045508
    %v159 = vsel %vm158, %v157, %v155
    %160 = vrot.lane.b32.xlu0 %v159, 118
    %v161 = vpop.permute.xlu0 %160
    %vm162 = vcmask 7168
    %s163 = scalar_lea.vmem %s1, 10
    %164 = vst.msk [vmem:[%s163] ss:$324 sm:$0x3] %vm162, %v161
    %s165 = scalar_lea.vmem %s1, 4294966786
    %166 = vst.msk [vmem:[%s165] ss:$324 sm:$0xc] %vm162, %v161
    %s167 = scalar_lea.vmem %s1, 4294966266
    %168 = vst.msk [vmem:[%s167] ss:$324 sm:$0x30] %vm162, %v161
    %v169 = vld.sshfl [vmem:[#allocation0] sm:$0xff pattern:$0x99999810]
    %s170 = scalar_lea.vmem [#allocation0], 12
    %v171 = vld [vmem:[%s170] sm:$0x30]
    %vm172 = vcmask 1045508
    %v173 = vsel %vm172, %v171, %v169
    %174 = vrot.lane.b32.xlu0 %v173, 117
    %v175 = vpop.permute.xlu0 %174
    %vm176 = vcmask 7168
    %s177 = scalar_lea.vmem %s1, 11
    %178 = vst.msk [vmem:[%s177] ss:$324 sm:$0x3] %vm176, %v175
    %s179 = scalar_lea.vmem %s1, 4294966787
    %180 = vst.msk [vmem:[%s179] ss:$324 sm:$0xc] %vm176, %v175
    %s181 = scalar_lea.vmem %s1, 4294966267
    %182 = vst.msk [vmem:[%s181] ss:$324 sm:$0x30] %vm176, %v175
    %v183 = vld.sshfl [vmem:[#allocation0] sm:$0xff pattern:$0x99999810]
    %s184 = scalar_lea.vmem [#allocation0], 12
    %v185 = vld [vmem:[%s184] sm:$0x30]
    %vm186 = vcmask 1045508
    %v187 = vsel %vm186, %v185, %v183
    %188 = vrot.lane.b32.xlu0 %v187, 116
    %v189 = vpop.permute.xlu0 %188
    %vm190 = vcmask 7168
    %s191 = scalar_lea.vmem %s1, 12
    %192 = vst.msk [vmem:[%s191] ss:$324 sm:$0x3] %vm190, %v189
    %s193 = scalar_lea.vmem %s1, 4294966788
    %194 = vst.msk [vmem:[%s193] ss:$324 sm:$0xc] %vm190, %v189
    %s195 = scalar_lea.vmem %s1, 4294966268
    %196 = vst.msk [vmem:[%s195] ss:$324 sm:$0x30] %vm190, %v189
    %v197 = vld.sshfl [vmem:[#allocation0] sm:$0xff pattern:$0x99999810]
    %s198 = scalar_lea.vmem [#allocation0], 12
    %v199 = vld [vmem:[%s198] sm:$0x30]
    %vm200 = vcmask 1045508
    %v201 = vsel %vm200, %v199, %v197
    %202 = vrot.lane.b32.xlu0 %v201, 115
    %v203 = vpop.permute.xlu0 %202
    %vm204 = vcmask 7168
    %s205 = scalar_lea.vmem %s1, 13
    %206 = vst.msk [vmem:[%s205] ss:$324 sm:$0x3] %vm204, %v203
    %s207 = scalar_lea.vmem %s1, 4294966789
    %208 = vst.msk [vmem:[%s207] ss:$324 sm:$0xc] %vm204, %v203
    %s209 = scalar_lea.vmem %s1, 4294966269
    %210 = vst.msk [vmem:[%s209] ss:$324 sm:$0x30] %vm204, %v203
    %v211 = vld.sshfl [vmem:[#allocation0] sm:$0xff pattern:$0x99999810]
    %s212 = scalar_lea.vmem [#allocation0], 12
    %v213 = vld [vmem:[%s212] sm:$0x30]
    %vm214 = vcmask 1045508
    %v215 = vsel %vm214, %v213, %v211
    %216 = vrot.lane.b32.xlu0 %v215, 114
    %v217 = vpop.permute.xlu0 %216
    %vm218 = vcmask 7168
    %s219 = scalar_lea.vmem %s1, 14
    %220 = vst.msk [vmem:[%s219] ss:$324 sm:$0x3] %vm218, %v217
    %s221 = scalar_lea.vmem %s1, 4294966790
    %222 = vst.msk [vmem:[%s221] ss:$324 sm:$0xc] %vm218, %v217
    %s223 = scalar_lea.vmem %s1, 4294966270
    %224 = vst.msk [vmem:[%s223] ss:$324 sm:$0x30] %vm218, %v217
    %v225 = vld.sshfl [vmem:[#allocation0] sm:$0xff pattern:$0x99999810]
    %s226 = scalar_lea.vmem [#allocation0], 12
    %v227 = vld [vmem:[%s226] sm:$0x30]
    %vm228 = vcmask 1045508
    %v229 = vsel %vm228, %v227, %v225
    %230 = vrot.lane.b32.xlu0 %v229, 113
    %v231 = vpop.permute.xlu0 %230
    %vm232 = vcmask 7168
    %s233 = scalar_lea.vmem %s1, 15
    %234 = vst.msk [vmem:[%s233] ss:$324 sm:$0x3] %vm232, %v231
    %s235 = scalar_lea.vmem %s1, 4294966791
    %236 = vst.msk [vmem:[%s235] ss:$324 sm:$0xc] %vm232, %v231
    %s237 = scalar_lea.vmem %s1, 4294966271
    %238 = vst.msk [vmem:[%s237] ss:$324 sm:$0x30] %vm232, %v231
    %v239 = vld.sshfl [vmem:[#allocation0] sm:$0xff pattern:$0x99999810]
    %s240 = scalar_lea.vmem [#allocation0], 12
    %v241 = vld [vmem:[%s240] sm:$0x30]
    %vm242 = vcmask 1045508
    %v243 = vsel %vm242, %v241, %v239
    %244 = vrot.lane.b32.xlu0 %v243, 112
    %v245 = vpop.permute.xlu0 %244
    %vm246 = vcmask 7168
    %s247 = scalar_lea.vmem %s1, 16
    %248 = vst.msk [vmem:[%s247] ss:$324 sm:$0x3] %vm246, %v245
    %s249 = scalar_lea.vmem %s1, 4294966792
    %250 = vst.msk [vmem:[%s249] ss:$324 sm:$0xc] %vm246, %v245
    %s251 = scalar_lea.vmem %s1, 4294966272
    %252 = vst.msk [vmem:[%s251] ss:$324 sm:$0x30] %vm246, %v245
    %v253 = vld.sshfl [vmem:[#allocation0] sm:$0xff pattern:$0x99999810]
    %s254 = scalar_lea.vmem [#allocation0], 12
    %v255 = vld [vmem:[%s254] sm:$0x30]
    %vm256 = vcmask 1045508
    %v257 = vsel %vm256, %v255, %v253
    %258 = vrot.lane.b32.xlu0 %v257, 111
    %v259 = vpop.permute.xlu0 %258
    %vm260 = vcmask 7168
    %s261 = scalar_lea.vmem %s1, 17
    %262 = vst.msk [vmem:[%s261] ss:$324 sm:$0x3] %vm260, %v259
    %s263 = scalar_lea.vmem %s1, 4294966793
    %264 = vst.msk [vmem:[%s263] ss:$324 sm:$0xc] %vm260, %v259
    %s265 = scalar_lea.vmem %s1, 4294966273
    %266 = vst.msk [vmem:[%s265] ss:$324 sm:$0x30] %vm260, %v259
    %v267 = vld.sshfl [vmem:[#allocation0] sm:$0xff pattern:$0x99999810]
    %s268 = scalar_lea.vmem [#allocation0], 12
    %v269 = vld [vmem:[%s268] sm:$0x30]
    %vm270 = vcmask 1045508
    %v271 = vsel %vm270, %v269, %v267
    %272 = vrot.lane.b32.xlu0 %v271, 110
    %v273 = vpop.permute.xlu0 %272
    %vm274 = vcmask 7168
    %s275 = scalar_lea.vmem %s1, 18
    %276 = vst.msk [vmem:[%s275] ss:$324 sm:$0x3] %vm274, %v273
    %s277 = scalar_lea.vmem %s1, 4294966794
    %278 = vst.msk [vmem:[%s277] ss:$324 sm:$0xc] %vm274, %v273
    %s279 = scalar_lea.vmem %s1, 4294966274
    %280 = vst.msk [vmem:[%s279] ss:$324 sm:$0x30] %vm274, %v273
    %v281 = vld.sshfl [vmem:[#allocation0] sm:$0xff pattern:$0x99999810]
    %s282 = scalar_lea.vmem [#allocation0], 12
    %v283 = vld [vmem:[%s282] sm:$0x30]
    %vm284 = vcmask 1045508
    %v285 = vsel %vm284, %v283, %v281
    %286 = vrot.lane.b32.xlu0 %v285, 109
    %v287 = vpop.permute.xlu0 %286
    %vm288 = vcmask 7168
    %s289 = scalar_lea.vmem %s1, 19
    %290 = vst.msk [vmem:[%s289] ss:$324 sm:$0x3] %vm288, %v287
    %s291 = scalar_lea.vmem %s1, 4294966795
    %292 = vst.msk [vmem:[%s291] ss:$324 sm:$0xc] %vm288, %v287
    %s293 = scalar_lea.vmem %s1, 4294966275
    %294 = vst.msk [vmem:[%s293] ss:$324 sm:$0x30] %vm288, %v287
    %v295 = vld.sshfl [vmem:[#allocation0] sm:$0xff pattern:$0x99999810]
    %s296 = scalar_lea.vmem [#allocation0], 12
    %v297 = vld [vmem:[%s296] sm:$0x30]
    %vm298 = vcmask 1045508
    %v299 = vsel %vm298, %v297, %v295
    %300 = vrot.lane.b32.xlu0 %v299, 108
    %v301 = vpop.permute.xlu0 %300
    %vm302 = vcmask 7168
    %s303 = scalar_lea.vmem %s1, 20
    %304 = vst.msk [vmem:[%s303] ss:$324 sm:$0x3] %vm302, %v301
    %s305 = scalar_lea.vmem %s1, 4294966796
    %306 = vst.msk [vmem:[%s305] ss:$324 sm:$0xc] %vm302, %v301
    %s307 = scalar_lea.vmem %s1, 4294966276
    %308 = vst.msk [vmem:[%s307] ss:$324 sm:$0x30] %vm302, %v301
    %v309 = vld.sshfl [vmem:[#allocation0] sm:$0xff pattern:$0x99999810]
    %s310 = scalar_lea.vmem [#allocation0], 12
    %v311 = vld [vmem:[%s310] sm:$0x30]
    %vm312 = vcmask 1045508
    %v313 = vsel %vm312, %v311, %v309
    %314 = vrot.lane.b32.xlu0 %v313, 107
    %v315 = vpop.permute.xlu0 %314
    %vm316 = vcmask 7168
    %s317 = scalar_lea.vmem %s1, 21
    %318 = vst.msk [vmem:[%s317] ss:$324 sm:$0x3] %vm316, %v315
    %s319 = scalar_lea.vmem %s1, 4294966797
    %320 = vst.msk [vmem:[%s319] ss:$324 sm:$0xc] %vm316, %v315
    %s321 = scalar_lea.vmem %s1, 4294966277
    %322 = vst.msk [vmem:[%s321] ss:$324 sm:$0x30] %vm316, %v315
    %v323 = vld.sshfl [vmem:[#allocation0] sm:$0xff pattern:$0x99999810]
    %s324 = scalar_lea.vmem [#allocation0], 12
    %v325 = vld [vmem:[%s324] sm:$0x30]
    %vm326 = vcmask 1045508
    %v327 = vsel %vm326, %v325, %v323
    %328 = vrot.lane.b32.xlu0 %v327, 106
    %v329 = vpop.permute.xlu0 %328
    %vm330 = vcmask 7168
    %s331 = scalar_lea.vmem %s1, 22
    %332 = vst.msk [vmem:[%s331] ss:$324 sm:$0x3] %vm330, %v329
    %s333 = scalar_lea.vmem %s1, 4294966798
    %334 = vst.msk [vmem:[%s333] ss:$324 sm:$0xc] %vm330, %v329
    %s335 = scalar_lea.vmem %s1, 4294966278
    %336 = vst.msk [vmem:[%s335] ss:$324 sm:$0x30] %vm330, %v329
    %v337 = vld.sshfl [vmem:[#allocation0] sm:$0xff pattern:$0x99999810]
    %s338 = scalar_lea.vmem [#allocation0], 12
    %v339 = vld [vmem:[%s338] sm:$0x30]
    %vm340 = vcmask 1045508
    %v341 = vsel %vm340, %v339, %v337
    %342 = vrot.lane.b32.xlu0 %v341, 105
    %v343 = vpop.permute.xlu0 %342
    %vm344 = vcmask 7168
    %s345 = scalar_lea.vmem %s1, 23
    %346 = vst.msk [vmem:[%s345] ss:$324 sm:$0x3] %vm344, %v343
    %s347 = scalar_lea.vmem %s1, 4294966799
    %348 = vst.msk [vmem:[%s347] ss:$324 sm:$0xc] %vm344, %v343
    %s349 = scalar_lea.vmem %s1, 4294966279
    %350 = vst.msk [vmem:[%s349] ss:$324 sm:$0x30] %vm344, %v343
    %v351 = vld.sshfl [vmem:[#allocation0] sm:$0xff pattern:$0x99999810]
    %s352 = scalar_lea.vmem [#allocation0], 12
    %v353 = vld [vmem:[%s352] sm:$0x30]
    %vm354 = vcmask 1045508
    %v355 = vsel %vm354, %v353, %v351
    %356 = vrot.lane.b32.xlu0 %v355, 104
    %v357 = vpop.permute.xlu0 %356
    %vm358 = vcmask 7168
    %s359 = scalar_lea.vmem %s1, 24
    %360 = vst.msk [vmem:[%s359] ss:$324 sm:$0x3] %vm358, %v357
    %s361 = scalar_lea.vmem %s1, 4294966800
    %362 = vst.msk [vmem:[%s361] ss:$324 sm:$0xc] %vm358, %v357
    %s363 = scalar_lea.vmem %s1, 4294966280
    %364 = vst.msk [vmem:[%s363] ss:$324 sm:$0x30] %vm358, %v357
    %v365 = vld.sshfl [vmem:[#allocation0] sm:$0xff pattern:$0x99999810]
    %s366 = scalar_lea.vmem [#allocation0], 12
    %v367 = vld [vmem:[%s366] sm:$0x30]
    %vm368 = vcmask 1045508
    %v369 = vsel %vm368, %v367, %v365
    %370 = vrot.lane.b32.xlu0 %v369, 103
    %v371 = vpop.permute.xlu0 %370
    %vm372 = vcmask 7168
    %s373 = scalar_lea.vmem %s1, 25
    %374 = vst.msk [vmem:[%s373] ss:$324 sm:$0x3] %vm372, %v371
    %s375 = scalar_lea.vmem %s1, 4294966801
    %376 = vst.msk [vmem:[%s375] ss:$324 sm:$0xc] %vm372, %v371
    %s377 = scalar_lea.vmem %s1, 4294966281
    %378 = vst.msk [vmem:[%s377] ss:$324 sm:$0x30] %vm372, %v371
    %v379 = vld.sshfl [vmem:[#allocation0] sm:$0xff pattern:$0x99999810]
    %s380 = scalar_lea.vmem [#allocation0], 12
    %v381 = vld [vmem:[%s380] sm:$0x30]
    %vm382 = vcmask 1045508
    %v383 = vsel %vm382, %v381, %v379
    %384 = vrot.lane.b32.xlu0 %v383, 102
    %v385 = vpop.permute.xlu0 %384
    %vm386 = vcmask 7168
    %s387 = scalar_lea.vmem %s1, 26
    %388 = vst.msk [vmem:[%s387] ss:$324 sm:$0x3] %vm386, %v385
    %s389 = scalar_lea.vmem %s1, 4294966802
    %390 = vst.msk [vmem:[%s389] ss:$324 sm:$0xc] %vm386, %v385
    %s391 = scalar_lea.vmem %s1, 4294966282
    %392 = vst.msk [vmem:[%s391] ss:$324 sm:$0x30] %vm386, %v385
    %v393 = vld.sshfl [vmem:[#allocation0] sm:$0xff pattern:$0x99999810]
    %s394 = scalar_lea.vmem [#allocation0], 12
    %v395 = vld [vmem:[%s394] sm:$0x30]
    %vm396 = vcmask 1045508
    %v397 = vsel %vm396, %v395, %v393
    %398 = vrot.lane.b32.xlu0 %v397, 101
    %v399 = vpop.permute.xlu0 %398
    %vm400 = vcmask 7168
    %s401 = scalar_lea.vmem %s1, 27
    %402 = vst.msk [vmem:[%s401] ss:$324 sm:$0x3] %vm400, %v399
    %s403 = scalar_lea.vmem %s1, 4294966803
    %404 = vst.msk [vmem:[%s403] ss:$324 sm:$0xc] %vm400, %v399
    %s405 = scalar_lea.vmem %s1, 4294966283
    %406 = vst.msk [vmem:[%s405] ss:$324 sm:$0x30] %vm400, %v399
    %v407 = vld.sshfl [vmem:[#allocation0] sm:$0xff pattern:$0x88888901]
    %s408 = scalar_lea.vmem [#allocation0], 21
    %s409 = smov 48
    %v410 = vld [vmem:[%s408] ss:$-1 sm:%s409]
    %vm411 = vcmask 1045508
    %v412 = vsel %vm411, %v410, %v407
    %413 = vrot.lane.b32.xlu0 %v412, 100
    %v414 = vpop.permute.xlu0 %413
    %vm415 = vcmask 7168
    %s416 = scalar_lea.vmem %s1, 352
    %417 = vst.msk [vmem:[%s416] ss:$-324 sm:$0x3] %vm415, %v414
    %s418 = scalar_lea.vmem %s1, 1128
    %419 = vst.msk [vmem:[%s418] ss:$-324 sm:$0xc] %vm415, %v414
    %s420 = scalar_lea.vmem %s1, 1904
    %421 = vst.msk [vmem:[%s420] ss:$-324 sm:$0x30] %vm415, %v414
    %v422 = vld.sshfl [vmem:[#allocation0] sm:$0xff pattern:$0x88888901]
    %s423 = scalar_lea.vmem [#allocation0], 21
    %s424 = smov 48
    %v425 = vld [vmem:[%s423] ss:$-1 sm:%s424]
    %vm426 = vcmask 1045508
    %v427 = vsel %vm426, %v425, %v422
    %428 = vrot.lane.b32.xlu0 %v427, 99
    %v429 = vpop.permute.xlu0 %428
    %vm430 = vcmask 7168
    %s431 = scalar_lea.vmem %s1, 353
    %432 = vst.msk [vmem:[%s431] ss:$-324 sm:$0x3] %vm430, %v429
    %s433 = scalar_lea.vmem %s1, 1129
    %434 = vst.msk [vmem:[%s433] ss:$-324 sm:$0xc] %vm430, %v429
    %s435 = scalar_lea.vmem %s1, 1905
    %436 = vst.msk [vmem:[%s435] ss:$-324 sm:$0x30] %vm430, %v429
    %v437 = vld.sshfl [vmem:[#allocation0] sm:$0xff pattern:$0x88888901]
    %s438 = scalar_lea.vmem [#allocation0], 21
    %s439 = smov 48
    %v440 = vld [vmem:[%s438] ss:$-1 sm:%s439]
    %vm441 = vcmask 1045508
    %v442 = vsel %vm441, %v440, %v437
    %443 = vrot.lane.b32.xlu0 %v442, 98
    %v444 = vpop.permute.xlu0 %443
    %vm445 = vcmask 7168
    %s446 = scalar_lea.vmem %s1, 354
    %447 = vst.msk [vmem:[%s446] ss:$-324 sm:$0x3] %vm445, %v444
    %s448 = scalar_lea.vmem %s1, 1130
    %449 = vst.msk [vmem:[%s448] ss:$-324 sm:$0xc] %vm445, %v444
    %s450 = scalar_lea.vmem %s1, 1906
    %451 = vst.msk [vmem:[%s450] ss:$-324 sm:$0x30] %vm445, %v444
    %v452 = vld.sshfl [vmem:[#allocation0] sm:$0xff pattern:$0x88888901]
    %s453 = scalar_lea.vmem [#allocation0], 21
    %s454 = smov 48
    %v455 = vld [vmem:[%s453] ss:$-1 sm:%s454]
    %vm456 = vcmask 1045508
    %v457 = vsel %vm456, %v455, %v452
    %458 = vrot.lane.b32.xlu0 %v457, 97
    %v459 = vpop.permute.xlu0 %458
    %vm460 = vcmask 7168
    %s461 = scalar_lea.vmem %s1, 355
    %462 = vst.msk [vmem:[%s461] ss:$-324 sm:$0x3] %vm460, %v459
    %s463 = scalar_lea.vmem %s1, 1131
    %464 = vst.msk [vmem:[%s463] ss:$-324 sm:$0xc] %vm460, %v459
    %s465 = scalar_lea.vmem %s1, 1907
    %466 = vst.msk [vmem:[%s465] ss:$-324 sm:$0x30] %vm460, %v459
    %v467 = vld.sshfl [vmem:[#allocation0] sm:$0xff pattern:$0x99999810]
    %s468 = scalar_lea.vmem [#allocation0], 12
    %v469 = vld [vmem:[%s468] sm:$0x30]
    %vm470 = vcmask 1045508
    %v471 = vsel %vm470, %v469, %v467
    %472 = vrot.lane.b32.xlu0 %v471, 96
    %v473 = vpop.permute.xlu0 %472
    %vm474 = vcmask 7168
    %s475 = scalar_lea.vmem %s1, 32
    %476 = vst.msk [vmem:[%s475] ss:$324 sm:$0x3] %vm474, %v473
    %s477 = scalar_lea.vmem %s1, 4294966808
    %478 = vst.msk [vmem:[%s477] ss:$324 sm:$0xc] %vm474, %v473
    %s479 = scalar_lea.vmem %s1, 4294966288
    %480 = vst.msk [vmem:[%s479] ss:$324 sm:$0x30] %vm474, %v473
    %v481 = vld.sshfl [vmem:[#allocation0] sm:$0xff pattern:$0x99999810]
    %s482 = scalar_lea.vmem [#allocation0], 12
    %v483 = vld [vmem:[%s482] sm:$0x30]
    %vm484 = vcmask 1045508
    %v485 = vsel %vm484, %v483, %v481
    %486 = vrot.lane.b32.xlu0 %v485, 95
    %v487 = vpop.permute.xlu0 %486
    %vm488 = vcmask 7168
    %s489 = scalar_lea.vmem %s1, 33
    %490 = vst.msk [vmem:[%s489] ss:$324 sm:$0x3] %vm488, %v487
    %s491 = scalar_lea.vmem %s1, 4294966809
    %492 = vst.msk [vmem:[%s491] ss:$324 sm:$0xc] %vm488, %v487
    %s493 = scalar_lea.vmem %s1, 4294966289
    %494 = vst.msk [vmem:[%s493] ss:$324 sm:$0x30] %vm488, %v487
    %v495 = vld.sshfl [vmem:[#allocation0] sm:$0xff pattern:$0x99999810]
    %s496 = scalar_lea.vmem [#allocation0], 12
    %v497 = vld [vmem:[%s496] sm:$0x30]
    %vm498 = vcmask 1045508
    %v499 = vsel %vm498, %v497, %v495
    %500 = vrot.lane.b32.xlu0 %v499, 94
    %v501 = vpop.permute.xlu0 %500
    %vm502 = vcmask 7168
    %s503 = scalar_lea.vmem %s1, 34
    %504 = vst.msk [vmem:[%s503] ss:$324 sm:$0x3] %vm502, %v501
    %s505 = scalar_lea.vmem %s1, 4294966810
    %506 = vst.msk [vmem:[%s505] ss:$324 sm:$0xc] %vm502, %v501
    %s507 = scalar_lea.vmem %s1, 4294966290
    %508 = vst.msk [vmem:[%s507] ss:$324 sm:$0x30] %vm502, %v501
    %v509 = vld.sshfl [vmem:[#allocation0] sm:$0xff pattern:$0x99999810]
    %s510 = scalar_lea.vmem [#allocation0], 12
    %v511 = vld [vmem:[%s510] sm:$0x30]
    %vm512 = vcmask 1045508
    %v513 = vsel %vm512, %v511, %v509
    %514 = vrot.lane.b32.xlu0 %v513, 93
    %v515 = vpop.permute.xlu0 %514
    %vm516 = vcmask 7168
    %s517 = scalar_lea.vmem %s1, 35
    %518 = vst.msk [vmem:[%s517] ss:$324 sm:$0x3] %vm516, %v515
    %s519 = scalar_lea.vmem %s1, 4294966811
    %520 = vst.msk [vmem:[%s519] ss:$324 sm:$0xc] %vm516, %v515
    %s521 = scalar_lea.vmem %s1, 4294966291
    %522 = vst.msk [vmem:[%s521] ss:$324 sm:$0x30] %vm516, %v515
    %v523 = vld.sshfl [vmem:[#allocation0] sm:$0xff pattern:$0x99999810]
    %s524 = scalar_lea.vmem [#allocation0], 12
    %v525 = vld [vmem:[%s524] sm:$0x30]
    %vm526 = vcmask 1045508
    %v527 = vsel %vm526, %v525, %v523
    %528 = vrot.lane.b32.xlu0 %v527, 92
    %v529 = vpop.permute.xlu0 %528
    %vm530 = vcmask 7168
    %s531 = scalar_lea.vmem %s1, 36
    %532 = vst.msk [vmem:[%s531] ss:$324 sm:$0x3] %vm530, %v529
    %s533 = scalar_lea.vmem %s1, 4294966812
    %534 = vst.msk [vmem:[%s533] ss:$324 sm:$0xc] %vm530, %v529
    %s535 = scalar_lea.vmem %s1, 4294966292
    %536 = vst.msk [vmem:[%s535] ss:$324 sm:$0x30] %vm530, %v529
    %v537 = vld.sshfl [vmem:[#allocation0] sm:$0xff pattern:$0x99999810]
    %s538 = scalar_lea.vmem [#allocation0], 12
    %v539 = vld [vmem:[%s538] sm:$0x30]
    %vm540 = vcmask 1045508
    %v541 = vsel %vm540, %v539, %v537
    %542 = vrot.lane.b32.xlu0 %v541, 91
    %v543 = vpop.permute.xlu0 %542
    %vm544 = vcmask 7168
    %s545 = scalar_lea.vmem %s1, 37
    %546 = vst.msk [vmem:[%s545] ss:$324 sm:$0x3] %vm544, %v543
    %s547 = scalar_lea.vmem %s1, 4294966813
    %548 = vst.msk [vmem:[%s547] ss:$324 sm:$0xc] %vm544, %v543
    %s549 = scalar_lea.vmem %s1, 4294966293
    %550 = vst.msk [vmem:[%s549] ss:$324 sm:$0x30] %vm544, %v543
    %v551 = vld.sshfl [vmem:[#allocation0] sm:$0xff pattern:$0x99999810]
    %s552 = scalar_lea.vmem [#allocation0], 12
    %v553 = vld [vmem:[%s552] sm:$0x30]
    %vm554 = vcmask 1045508
    %v555 = vsel %vm554, %v553, %v551
    %556 = vrot.lane.b32.xlu0 %v555, 90
    %v557 = vpop.permute.xlu0 %556
    %vm558 = vcmask 7168
    %s559 = scalar_lea.vmem %s1, 38
    %560 = vst.msk [vmem:[%s559] ss:$324 sm:$0x3] %vm558, %v557
    %s561 = scalar_lea.vmem %s1, 4294966814
    %562 = vst.msk [vmem:[%s561] ss:$324 sm:$0xc] %vm558, %v557
    %s563 = scalar_lea.vmem %s1, 4294966294
    %564 = vst.msk [vmem:[%s563] ss:$324 sm:$0x30] %vm558, %v557
    %v565 = vld.sshfl [vmem:[#allocation0] sm:$0xff pattern:$0x99999810]
    %s566 = scalar_lea.vmem [#allocation0], 12
    %v567 = vld [vmem:[%s566] sm:$0x30]
    %vm568 = vcmask 1045508
    %v569 = vsel %vm568, %v567, %v565
    %570 = vrot.lane.b32.xlu0 %v569, 89
    %v571 = vpop.permute.xlu0 %570
    %vm572 = vcmask 7168
    %s573 = scalar_lea.vmem %s1, 39
    %574 = vst.msk [vmem:[%s573] ss:$324 sm:$0x3] %vm572, %v571
    %s575 = scalar_lea.vmem %s1, 4294966815
    %576 = vst.msk [vmem:[%s575] ss:$324 sm:$0xc] %vm572, %v571
    %s577 = scalar_lea.vmem %s1, 4294966295
    %578 = vst.msk [vmem:[%s577] ss:$324 sm:$0x30] %vm572, %v571
    %v579 = vld.sshfl [vmem:[#allocation0] sm:$0xff pattern:$0x99999810]
    %s580 = scalar_lea.vmem [#allocation0], 12
    %v581 = vld [vmem:[%s580] sm:$0x30]
    %vm582 = vcmask 1045508
    %v583 = vsel %vm582, %v581, %v579
    %584 = vrot.lane.b32.xlu0 %v583, 88
    %v585 = vpop.permute.xlu0 %584
    %vm586 = vcmask 7168
    %s587 = scalar_lea.vmem %s1, 40
    %588 = vst.msk [vmem:[%s587] ss:$324 sm:$0x3] %vm586, %v585
    %s589 = scalar_lea.vmem %s1, 4294966816
    %590 = vst.msk [vmem:[%s589] ss:$324 sm:$0xc] %vm586, %v585
    %s591 = scalar_lea.vmem %s1, 4294966296
    %592 = vst.msk [vmem:[%s591] ss:$324 sm:$0x30] %vm586, %v585
    %v593 = vld.sshfl [vmem:[#allocation0] sm:$0xff pattern:$0x99999810]
    %s594 = scalar_lea.vmem [#allocation0], 12
    %v595 = vld [vmem:[%s594] sm:$0x30]
    %vm596 = vcmask 1045508
    %v597 = vsel %vm596, %v595, %v593
    %598 = vrot.lane.b32.xlu0 %v597, 87
    %v599 = vpop.permute.xlu0 %598
    %vm600 = vcmask 7168
    %s601 = scalar_lea.vmem %s1, 41
    %602 = vst.msk [vmem:[%s601] ss:$324 sm:$0x3] %vm600, %v599
    %s603 = scalar_lea.vmem %s1, 4294966817
    %604 = vst.msk [vmem:[%s603] ss:$324 sm:$0xc] %vm600, %v599
    %s605 = scalar_lea.vmem %s1, 4294966297
    %606 = vst.msk [vmem:[%s605] ss:$324 sm:$0x30] %vm600, %v599
    %v607 = vld.sshfl [vmem:[#allocation0] sm:$0xff pattern:$0x99999810]
    %s608 = scalar_lea.vmem [#allocation0], 12
    %v609 = vld [vmem:[%s608] sm:$0x30]
    %vm610 = vcmask 1045508
    %v611 = vsel %vm610, %v609, %v607
    %612 = vrot.lane.b32.xlu0 %v611, 86
    %v613 = vpop.permute.xlu0 %612
    %vm614 = vcmask 7168
    %s615 = scalar_lea.vmem %s1, 42
    %616 = vst.msk [vmem:[%s615] ss:$324 sm:$0x3] %vm614, %v613
    %s617 = scalar_lea.vmem %s1, 4294966818
    %618 = vst.msk [vmem:[%s617] ss:$324 sm:$0xc] %vm614, %v613
    %s619 = scalar_lea.vmem %s1, 4294966298
    %620 = vst.msk [vmem:[%s619] ss:$324 sm:$0x30] %vm614, %v613
    %v621 = vld.sshfl [vmem:[#allocation0] sm:$0xff pattern:$0x99999810]
    %s622 = scalar_lea.vmem [#allocation0], 12
    %v623 = vld [vmem:[%s622] sm:$0x30]
    %vm624 = vcmask 1045508
    %v625 = vsel %vm624, %v623, %v621
    %626 = vrot.lane.b32.xlu0 %v625, 85
    %v627 = vpop.permute.xlu0 %626
    %vm628 = vcmask 7168
    %s629 = scalar_lea.vmem %s1, 43
    %630 = vst.msk [vmem:[%s629] ss:$324 sm:$0x3] %vm628, %v627
    %s631 = scalar_lea.vmem %s1, 4294966819
    %632 = vst.msk [vmem:[%s631] ss:$324 sm:$0xc] %vm628, %v627
    %s633 = scalar_lea.vmem %s1, 4294966299
    %634 = vst.msk [vmem:[%s633] ss:$324 sm:$0x30] %vm628, %v627
    %v635 = vld.sshfl [vmem:[#allocation0] sm:$0xff pattern:$0x99999810]
    %s636 = scalar_lea.vmem [#allocation0], 12
    %v637 = vld [vmem:[%s636] sm:$0x30]
    %vm638 = vcmask 1045508
    %v639 = vsel %vm638, %v637, %v635
    %640 = vrot.lane.b32.xlu0 %v639, 84
    %v641 = vpop.permute.xlu0 %640
    %vm642 = vcmask 7168
    %s643 = scalar_lea.vmem %s1, 44
    %644 = vst.msk [vmem:[%s643] ss:$324 sm:$0x3] %vm642, %v641
    %s645 = scalar_lea.vmem %s1, 4294966820
    %646 = vst.msk [vmem:[%s645] ss:$324 sm:$0xc] %vm642, %v641
    %s647 = scalar_lea.vmem %s1, 4294966300
    %648 = vst.msk [vmem:[%s647] ss:$324 sm:$0x30] %vm642, %v641
    %v649 = vld.sshfl [vmem:[#allocation0] sm:$0xff pattern:$0x99999810]
    %s650 = scalar_lea.vmem [#allocation0], 12
    %v651 = vld [vmem:[%s650] sm:$0x30]
    %vm652 = vcmask 1045508
    %v653 = vsel %vm652, %v651, %v649
    %654 = vrot.lane.b32.xlu0 %v653, 83
    %v655 = vpop.permute.xlu0 %654
    %vm656 = vcmask 7168
    %s657 = scalar_lea.vmem %s1, 45
    %658 = vst.msk [vmem:[%s657] ss:$324 sm:$0x3] %vm656, %v655
    %s659 = scalar_lea.vmem %s1, 4294966821
    %660 = vst.msk [vmem:[%s659] ss:$324 sm:$0xc] %vm656, %v655
    %s661 = scalar_lea.vmem %s1, 4294966301
    %662 = vst.msk [vmem:[%s661] ss:$324 sm:$0x30] %vm656, %v655
    %v663 = vld.sshfl [vmem:[#allocation0] sm:$0xff pattern:$0x99999810]
    %s664 = scalar_lea.vmem [#allocation0], 12
    %v665 = vld [vmem:[%s664] sm:$0x30]
    %vm666 = vcmask 1045508
    %v667 = vsel %vm666, %v665, %v663
    %668 = vrot.lane.b32.xlu0 %v667, 82
    %v669 = vpop.permute.xlu0 %668
    %vm670 = vcmask 7168
    %s671 = scalar_lea.vmem %s1, 46
    %672 = vst.msk [vmem:[%s671] ss:$324 sm:$0x3] %vm670, %v669
    %s673 = scalar_lea.vmem %s1, 4294966822
    %674 = vst.msk [vmem:[%s673] ss:$324 sm:$0xc] %vm670, %v669
    %s675 = scalar_lea.vmem %s1, 4294966302
    %676 = vst.msk [vmem:[%s675] ss:$324 sm:$0x30] %vm670, %v669
    %v677 = vld.sshfl [vmem:[#allocation0] sm:$0xff pattern:$0x99999810]
    %s678 = scalar_lea.vmem [#allocation0], 12
    %v679 = vld [vmem:[%s678] sm:$0x30]
    %vm680 = vcmask 1045508
    %v681 = vsel %vm680, %v679, %v677
    %682 = vrot.lane.b32.xlu0 %v681, 81
    %v683 = vpop.permute.xlu0 %682
    %vm684 = vcmask 7168
    %s685 = scalar_lea.vmem %s1, 47
    %686 = vst.msk [vmem:[%s685] ss:$324 sm:$0x3] %vm684, %v683
    %s687 = scalar_lea.vmem %s1, 4294966823
    %688 = vst.msk [vmem:[%s687] ss:$324 sm:$0xc] %vm684, %v683
    %s689 = scalar_lea.vmem %s1, 4294966303
    %690 = vst.msk [vmem:[%s689] ss:$324 sm:$0x30] %vm684, %v683
    %v691 = vld.sshfl [vmem:[#allocation0] sm:$0xff pattern:$0x99999810]
    %s692 = scalar_lea.vmem [#allocation0], 12
    %v693 = vld [vmem:[%s692] sm:$0x30]
    %vm694 = vcmask 1045508
    %v695 = vsel %vm694, %v693, %v691
    %696 = vrot.lane.b32.xlu0 %v695, 80
    %v697 = vpop.permute.xlu0 %696
    %vm698 = vcmask 7168
    %s699 = scalar_lea.vmem %s1, 48
    %700 = vst.msk [vmem:[%s699] ss:$324 sm:$0x3] %vm698, %v697
    %s701 = scalar_lea.vmem %s1, 4294966824
    %702 = vst.msk [vmem:[%s701] ss:$324 sm:$0xc] %vm698, %v697
    %s703 = scalar_lea.vmem %s1, 4294966304
    %704 = vst.msk [vmem:[%s703] ss:$324 sm:$0x30] %vm698, %v697
    %v705 = vld.sshfl [vmem:[#allocation0] sm:$0xff pattern:$0x99999810]
    %s706 = scalar_lea.vmem [#allocation0], 12
    %v707 = vld [vmem:[%s706] sm:$0x30]
    %vm708 = vcmask 1045508
    %v709 = vsel %vm708, %v707, %v705
    %710 = vrot.lane.b32.xlu0 %v709, 79
    %v711 = vpop.permute.xlu0 %710
    %vm712 = vcmask 7168
    %s713 = scalar_lea.vmem %s1, 49
    %714 = vst.msk [vmem:[%s713] ss:$324 sm:$0x3] %vm712, %v711
    %s715 = scalar_lea.vmem %s1, 4294966825
    %716 = vst.msk [vmem:[%s715] ss:$324 sm:$0xc] %vm712, %v711
    %s717 = scalar_lea.vmem %s1, 4294966305
    %718 = vst.msk [vmem:[%s717] ss:$324 sm:$0x30] %vm712, %v711
    %v719 = vld.sshfl [vmem:[#allocation0] sm:$0xff pattern:$0x99999810]
    %s720 = scalar_lea.vmem [#allocation0], 12
    %v721 = vld [vmem:[%s720] sm:$0x30]
    %vm722 = vcmask 1045508
    %v723 = vsel %vm722, %v721, %v719
    %724 = vrot.lane.b32.xlu0 %v723, 78
    %v725 = vpop.permute.xlu0 %724
    %vm726 = vcmask 7168
    %s727 = scalar_lea.vmem %s1, 50
    %728 = vst.msk [vmem:[%s727] ss:$324 sm:$0x3] %vm726, %v725
    %s729 = scalar_lea.vmem %s1, 4294966826
    %730 = vst.msk [vmem:[%s729] ss:$324 sm:$0xc] %vm726, %v725
    %s731 = scalar_lea.vmem %s1, 4294966306
    %732 = vst.msk [vmem:[%s731] ss:$324 sm:$0x30] %vm726, %v725
    %v733 = vld.sshfl [vmem:[#allocation0] sm:$0xff pattern:$0x99999810]
    %s734 = scalar_lea.vmem [#allocation0], 12
    %v735 = vld [vmem:[%s734] sm:$0x30]
    %vm736 = vcmask 1045508
    %v737 = vsel %vm736, %v735, %v733
    %738 = vrot.lane.b32.xlu0 %v737, 77
    %v739 = vpop.permute.xlu0 %738
    %vm740 = vcmask 7168
    %s741 = scalar_lea.vmem %s1, 51
    %742 = vst.msk [vmem:[%s741] ss:$324 sm:$0x3] %vm740, %v739
    %s743 = scalar_lea.vmem %s1, 4294966827
    %744 = vst.msk [vmem:[%s743] ss:$324 sm:$0xc] %vm740, %v739
    %s745 = scalar_lea.vmem %s1, 4294966307
    %746 = vst.msk [vmem:[%s745] ss:$324 sm:$0x30] %vm740, %v739
    %v747 = vld.sshfl [vmem:[#allocation0] sm:$0xff pattern:$0x99999810]
    %s748 = scalar_lea.vmem [#allocation0], 12
    %v749 = vld [vmem:[%s748] sm:$0x30]
    %vm750 = vcmask 1045508
    %v751 = vsel %vm750, %v749, %v747
    %752 = vrot.lane.b32.xlu0 %v751, 76
    %v753 = vpop.permute.xlu0 %752
    %vm754 = vcmask 7168
    %s755 = scalar_lea.vmem %s1, 52
    %756 = vst.msk [vmem:[%s755] ss:$324 sm:$0x3] %vm754, %v753
    %s757 = scalar_lea.vmem %s1, 4294966828
    %758 = vst.msk [vmem:[%s757] ss:$324 sm:$0xc] %vm754, %v753
    %s759 = scalar_lea.vmem %s1, 4294966308
    %760 = vst.msk [vmem:[%s759] ss:$324 sm:$0x30] %vm754, %v753
    %v761 = vld.sshfl [vmem:[#allocation0] sm:$0xff pattern:$0x99999810]
    %s762 = scalar_lea.vmem [#allocation0], 12
    %v763 = vld [vmem:[%s762] sm:$0x30]
    %vm764 = vcmask 1045508
    %v765 = vsel %vm764, %v763, %v761
    %766 = vrot.lane.b32.xlu0 %v765, 75
    %v767 = vpop.permute.xlu0 %766
    %vm768 = vcmask 7168
    %s769 = scalar_lea.vmem %s1, 53
    %770 = vst.msk [vmem:[%s769] ss:$324 sm:$0x3] %vm768, %v767
    %s771 = scalar_lea.vmem %s1, 4294966829
    %772 = vst.msk [vmem:[%s771] ss:$324 sm:$0xc] %vm768, %v767
    %s773 = scalar_lea.vmem %s1, 4294966309
    %774 = vst.msk [vmem:[%s773] ss:$324 sm:$0x30] %vm768, %v767
    %v775 = vld.sshfl [vmem:[#allocation0] sm:$0xff pattern:$0x99999810]
    %s776 = scalar_lea.vmem [#allocation0], 12
    %v777 = vld [vmem:[%s776] sm:$0x30]
    %vm778 = vcmask 1045508
    %v779 = vsel %vm778, %v777, %v775
    %780 = vrot.lane.b32.xlu0 %v779, 74
    %v781 = vpop.permute.xlu0 %780
    %vm782 = vcmask 7168
    %s783 = scalar_lea.vmem %s1, 54
    %784 = vst.msk [vmem:[%s783] ss:$324 sm:$0x3] %vm782, %v781
    %s785 = scalar_lea.vmem %s1, 4294966830
    %786 = vst.msk [vmem:[%s785] ss:$324 sm:$0xc] %vm782, %v781
    %s787 = scalar_lea.vmem %s1, 4294966310
    %788 = vst.msk [vmem:[%s787] ss:$324 sm:$0x30] %vm782, %v781
    %v789 = vld.sshfl [vmem:[#allocation0] sm:$0xff pattern:$0x99999810]
    %s790 = scalar_lea.vmem [#allocation0], 12
    %v791 = vld [vmem:[%s790] sm:$0x30]
    %vm792 = vcmask 1045508
    %v793 = vsel %vm792, %v791, %v789
    %794 = vrot.lane.b32.xlu0 %v793, 73
    %v795 = vpop.permute.xlu0 %794
    %vm796 = vcmask 7168
    %s797 = scalar_lea.vmem %s1, 55
    %798 = vst.msk [vmem:[%s797] ss:$324 sm:$0x3] %vm796, %v795
    %s799 = scalar_lea.vmem %s1, 4294966831
    %800 = vst.msk [vmem:[%s799] ss:$324 sm:$0xc] %vm796, %v795
    %s801 = scalar_lea.vmem %s1, 4294966311
    %802 = vst.msk [vmem:[%s801] ss:$324 sm:$0x30] %vm796, %v795
    %v803 = vld.sshfl [vmem:[#allocation0] sm:$0xff pattern:$0x99999810]
    %s804 = scalar_lea.vmem [#allocation0], 12
    %v805 = vld [vmem:[%s804] sm:$0x30]
    %vm806 = vcmask 1045508
    %v807 = vsel %vm806, %v805, %v803
    %808 = vrot.lane.b32.xlu0 %v807, 72
    %v809 = vpop.permute.xlu0 %808
    %vm810 = vcmask 7168
    %s811 = scalar_lea.vmem %s1, 56
    %812 = vst.msk [vmem:[%s811] ss:$324 sm:$0x3] %vm810, %v809
    %s813 = scalar_lea.vmem %s1, 4294966832
    %814 = vst.msk [vmem:[%s813] ss:$324 sm:$0xc] %vm810, %v809
    %s815 = scalar_lea.vmem %s1, 4294966312
    %816 = vst.msk [vmem:[%s815] ss:$324 sm:$0x30] %vm810, %v809
    %v817 = vld.sshfl [vmem:[#allocation0] sm:$0xff pattern:$0x99999810]
    %s818 = scalar_lea.vmem [#allocation0], 12
    %v819 = vld [vmem:[%s818] sm:$0x30]
    %vm820 = vcmask 1045508
    %v821 = vsel %vm820, %v819, %v817
    %822 = vrot.lane.b32.xlu0 %v821, 71
    %v823 = vpop.permute.xlu0 %822
    %vm824 = vcmask 7168
    %s825 = scalar_lea.vmem %s1, 57
    %826 = vst.msk [vmem:[%s825] ss:$324 sm:$0x3] %vm824, %v823
    %s827 = scalar_lea.vmem %s1, 4294966833
    %828 = vst.msk [vmem:[%s827] ss:$324 sm:$0xc] %vm824, %v823
    %s829 = scalar_lea.vmem %s1, 4294966313
    %830 = vst.msk [vmem:[%s829] ss:$324 sm:$0x30] %vm824, %v823
    %v831 = vld.sshfl [vmem:[#allocation0] sm:$0xff pattern:$0x99999810]
    %s832 = scalar_lea.vmem [#allocation0], 12
    %v833 = vld [vmem:[%s832] sm:$0x30]
    %vm834 = vcmask 1045508
    %v835 = vsel %vm834, %v833, %v831
    %836 = vrot.lane.b32.xlu0 %v835, 70
    %v837 = vpop.permute.xlu0 %836
    %vm838 = vcmask 7168
    %s839 = scalar_lea.vmem %s1, 58
    %840 = vst.msk [vmem:[%s839] ss:$324 sm:$0x3] %vm838, %v837
    %s841 = scalar_lea.vmem %s1, 4294966834
    %842 = vst.msk [vmem:[%s841] ss:$324 sm:$0xc] %vm838, %v837
    %s843 = scalar_lea.vmem %s1, 4294966314
    %844 = vst.msk [vmem:[%s843] ss:$324 sm:$0x30] %vm838, %v837
    %v845 = vld.sshfl [vmem:[#allocation0] sm:$0xff pattern:$0x99999810]
    %s846 = scalar_lea.vmem [#allocation0], 12
    %v847 = vld [vmem:[%s846] sm:$0x30]
    %vm848 = vcmask 1045508
    %v849 = vsel %vm848, %v847, %v845
    %850 = vrot.lane.b32.xlu0 %v849, 69
    %v851 = vpop.permute.xlu0 %850
    %vm852 = vcmask 7168
    %s853 = scalar_lea.vmem %s1, 59
    %854 = vst.msk [vmem:[%s853] ss:$324 sm:$0x3] %vm852, %v851
    %s855 = scalar_lea.vmem %s1, 4294966835
    %856 = vst.msk [vmem:[%s855] ss:$324 sm:$0xc] %vm852, %v851
    %s857 = scalar_lea.vmem %s1, 4294966315
    %858 = vst.msk [vmem:[%s857] ss:$324 sm:$0x30] %vm852, %v851
    %v859 = vld.sshfl [vmem:[#allocation0] sm:$0xff pattern:$0x88888901]
    %s860 = scalar_lea.vmem [#allocation0], 21
    %s861 = smov 48
    %v862 = vld [vmem:[%s860] ss:$-1 sm:%s861]
    %vm863 = vcmask 1045508
    %v864 = vsel %vm863, %v862, %v859
    %865 = vrot.lane.b32.xlu0 %v864, 68
    %v866 = vpop.permute.xlu0 %865
    %vm867 = vcmask 7168
    %s868 = scalar_lea.vmem %s1, 384
    %869 = vst.msk [vmem:[%s868] ss:$-324 sm:$0x3] %vm867, %v866
    %s870 = scalar_lea.vmem %s1, 1160
    %871 = vst.msk [vmem:[%s870] ss:$-324 sm:$0xc] %vm867, %v866
    %s872 = scalar_lea.vmem %s1, 1936
    %873 = vst.msk [vmem:[%s872] ss:$-324 sm:$0x30] %vm867, %v866
    %v874 = vld.sshfl [vmem:[#allocation0] sm:$0xff pattern:$0x88888901]
    %s875 = scalar_lea.vmem [#allocation0], 21
    %s876 = smov 48
    %v877 = vld [vmem:[%s875] ss:$-1 sm:%s876]
    %vm878 = vcmask 1045508
    %v879 = vsel %vm878, %v877, %v874
    %880 = vrot.lane.b32.xlu0 %v879, 67
    %v881 = vpop.permute.xlu0 %880
    %vm882 = vcmask 7168
    %s883 = scalar_lea.vmem %s1, 385
    %884 = vst.msk [vmem:[%s883] ss:$-324 sm:$0x3] %vm882, %v881
    %s885 = scalar_lea.vmem %s1, 1161
    %886 = vst.msk [vmem:[%s885] ss:$-324 sm:$0xc] %vm882, %v881
    %s887 = scalar_lea.vmem %s1, 1937
    %888 = vst.msk [vmem:[%s887] ss:$-324 sm:$0x30] %vm882, %v881
    %v889 = vld.sshfl [vmem:[#allocation0] sm:$0xff pattern:$0x88888901]
    %s890 = scalar_lea.vmem [#allocation0], 21
    %s891 = smov 48
    %v892 = vld [vmem:[%s890] ss:$-1 sm:%s891]
    %vm893 = vcmask 1045508
    %v894 = vsel %vm893, %v892, %v889
    %895 = vrot.lane.b32.xlu0 %v894, 66
    %v896 = vpop.permute.xlu0 %895
    %vm897 = vcmask 7168
    %s898 = scalar_lea.vmem %s1, 386
    %899 = vst.msk [vmem:[%s898] ss:$-324 sm:$0x3] %vm897, %v896
    %s900 = scalar_lea.vmem %s1, 1162
    %901 = vst.msk [vmem:[%s900] ss:$-324 sm:$0xc] %vm897, %v896
    %s902 = scalar_lea.vmem %s1, 1938
    %903 = vst.msk [vmem:[%s902] ss:$-324 sm:$0x30] %vm897, %v896
    %v904 = vld.sshfl [vmem:[#allocation0] sm:$0xff pattern:$0x88888901]
    %s905 = scalar_lea.vmem [#allocation0], 21
    %s906 = smov 48
    %v907 = vld [vmem:[%s905] ss:$-1 sm:%s906]
    %vm908 = vcmask 1045508
    %v909 = vsel %vm908, %v907, %v904
    %910 = vrot.lane.b32.xlu0 %v909, 65
    %v911 = vpop.permute.xlu0 %910
    %vm912 = vcmask 7168
    %s913 = scalar_lea.vmem %s1, 387
    %914 = vst.msk [vmem:[%s913] ss:$-324 sm:$0x3] %vm912, %v911
    %s915 = scalar_lea.vmem %s1, 1163
    %916 = vst.msk [vmem:[%s915] ss:$-324 sm:$0xc] %vm912, %v911
    %s917 = scalar_lea.vmem %s1, 1939
    %918 = vst.msk [vmem:[%s917] ss:$-324 sm:$0x30] %vm912, %v911
    %v919 = vld.sshfl [vmem:[#allocation0] sm:$0xff pattern:$0x99999810]
    %s920 = scalar_lea.vmem [#allocation0], 12
    %v921 = vld [vmem:[%s920] sm:$0x30]
    %vm922 = vcmask 1045508
    %v923 = vsel %vm922, %v921, %v919
    %924 = vrot.lane.b32.xlu0 %v923, 64
    %v925 = vpop.permute.xlu0 %924
    %vm926 = vcmask 7168
    %s927 = scalar_lea.vmem %s1, 64
    %928 = vst.msk [vmem:[%s927] ss:$324 sm:$0x3] %vm926, %v925
    %s929 = scalar_lea.vmem %s1, 4294966840
    %930 = vst.msk [vmem:[%s929] ss:$324 sm:$0xc] %vm926, %v925
    %s931 = scalar_lea.vmem %s1, 4294966320
    %932 = vst.msk [vmem:[%s931] ss:$324 sm:$0x30] %vm926, %v925
    %v933 = vld.sshfl [vmem:[#allocation0] sm:$0xff pattern:$0x99999810]
    %s934 = scalar_lea.vmem [#allocation0], 12
    %v935 = vld [vmem:[%s934] sm:$0x30]
    %vm936 = vcmask 1045508
    %v937 = vsel %vm936, %v935, %v933
    %938 = vrot.lane.b32.xlu0 %v937, 63
    %v939 = vpop.permute.xlu0 %938
    %vm940 = vcmask 7168
    %s941 = scalar_lea.vmem %s1, 65
    %942 = vst.msk [vmem:[%s941] ss:$324 sm:$0x3] %vm940, %v939
    %s943 = scalar_lea.vmem %s1, 4294966841
    %944 = vst.msk [vmem:[%s943] ss:$324 sm:$0xc] %vm940, %v939
    %s945 = scalar_lea.vmem %s1, 4294966321
    %946 = vst.msk [vmem:[%s945] ss:$324 sm:$0x30] %vm940, %v939
    %v947 = vld.sshfl [vmem:[#allocation0] sm:$0xff pattern:$0x99999810]
    %s948 = scalar_lea.vmem [#allocation0], 12
    %v949 = vld [vmem:[%s948] sm:$0x30]
    %vm950 = vcmask 1045508
    %v951 = vsel %vm950, %v949, %v947
    %952 = vrot.lane.b32.xlu0 %v951, 62
    %v953 = vpop.permute.xlu0 %952
    %vm954 = vcmask 7168
    %s955 = scalar_lea.vmem %s1, 66
    %956 = vst.msk [vmem:[%s955] ss:$324 sm:$0x3] %vm954, %v953
    %s957 = scalar_lea.vmem %s1, 4294966842
    %958 = vst.msk [vmem:[%s957] ss:$324 sm:$0xc] %vm954, %v953
    %s959 = scalar_lea.vmem %s1, 4294966322
    %960 = vst.msk [vmem:[%s959] ss:$324 sm:$0x30] %vm954, %v953
    %v961 = vld.sshfl [vmem:[#allocation0] sm:$0xff pattern:$0x99999810]
    %s962 = scalar_lea.vmem [#allocation0], 12
    %v963 = vld [vmem:[%s962] sm:$0x30]
    %vm964 = vcmask 1045508
    %v965 = vsel %vm964, %v963, %v961
    %966 = vrot.lane.b32.xlu0 %v965, 61
    %v967 = vpop.permute.xlu0 %966
    %vm968 = vcmask 7168
    %s969 = scalar_lea.vmem %s1, 67
    %970 = vst.msk [vmem:[%s969] ss:$324 sm:$0x3] %vm968, %v967
    %s971 = scalar_lea.vmem %s1, 4294966843
    %972 = vst.msk [vmem:[%s971] ss:$324 sm:$0xc] %vm968, %v967
    %s973 = scalar_lea.vmem %s1, 4294966323
    %974 = vst.msk [vmem:[%s973] ss:$324 sm:$0x30] %vm968, %v967
    %v975 = vld.sshfl [vmem:[#allocation0] sm:$0xff pattern:$0x99999810]
    %976 = vrot.lane.b32.xlu0 %v975, 60
    %v977 = vpop.permute.xlu0 %976
    %vm978 = vcmask 7168
    %s979 = scalar_lea.vmem %s1, 68
    %980 = vst.msk [vmem:[%s979] ss:$324 sm:$0x3] %vm978, %v977
    %s981 = scalar_lea.vmem %s1, 4294966844
    %982 = vst.msk [vmem:[%s981] ss:$324 sm:$0xc] %vm978, %v977
    %v983 = vld.sshfl [vmem:[#allocation0] sm:$0xff pattern:$0x99999810]
    %984 = vrot.lane.b32.xlu0 %v983, 59
    %v985 = vpop.permute.xlu0 %984
    %vm986 = vcmask 7168
    %s987 = scalar_lea.vmem %s1, 69
    %988 = vst.msk [vmem:[%s987] ss:$324 sm:$0x3] %vm986, %v985
    %s989 = scalar_lea.vmem %s1, 4294966845
    %990 = vst.msk [vmem:[%s989] ss:$324 sm:$0xc] %vm986, %v985
    %v991 = vld.sshfl [vmem:[#allocation0] sm:$0xff pattern:$0x99999810]
    %992 = vrot.lane.b32.xlu0 %v991, 58
    %v993 = vpop.permute.xlu0 %992
    %vm994 = vcmask 7168
    %s995 = scalar_lea.vmem %s1, 70
    %996 = vst.msk [vmem:[%s995] ss:$324 sm:$0x3] %vm994, %v993
    %s997 = scalar_lea.vmem %s1, 4294966846
    %998 = vst.msk [vmem:[%s997] ss:$324 sm:$0xc] %vm994, %v993
    %v999 = vld.sshfl [vmem:[#allocation0] sm:$0xff pattern:$0x99999810]
    %1000 = vrot.lane.b32.xlu0 %v999, 57
    %v1001 = vpop.permute.xlu0 %1000
    %vm1002 = vcmask 7168
    %s1003 = scalar_lea.vmem %s1, 71
    %1004 = vst.msk [vmem:[%s1003] ss:$324 sm:$0x3] %vm1002, %v1001
    %s1005 = scalar_lea.vmem %s1, 4294966847
    %1006 = vst.msk [vmem:[%s1005] ss:$324 sm:$0xc] %vm1002, %v1001
    %v1007 = vld.sshfl [vmem:[#allocation0] sm:$0xff pattern:$0x99999810]
    %1008 = vrot.lane.b32.xlu0 %v1007, 56
    %v1009 = vpop.permute.xlu0 %1008
    %vm1010 = vcmask 7168
    %s1011 = scalar_lea.vmem %s1, 72
    %1012 = vst.msk [vmem:[%s1011] ss:$324 sm:$0x3] %vm1010, %v1009
    %s1013 = scalar_lea.vmem %s1, 4294966848
    %1014 = vst.msk [vmem:[%s1013] ss:$324 sm:$0xc] %vm1010, %v1009
    %v1015 = vld.sshfl [vmem:[#allocation0] sm:$0xff pattern:$0x99999810]
    %1016 = vrot.lane.b32.xlu0 %v1015, 55
    %v1017 = vpop.permute.xlu0 %1016
    %vm1018 = vcmask 7168
    %s1019 = scalar_lea.vmem %s1, 73
    %1020 = vst.msk [vmem:[%s1019] ss:$324 sm:$0x3] %vm1018, %v1017
    %s1021 = scalar_lea.vmem %s1, 4294966849
    %1022 = vst.msk [vmem:[%s1021] ss:$324 sm:$0xc] %vm1018, %v1017
    %v1023 = vld.sshfl [vmem:[#allocation0] sm:$0xff pattern:$0x99999810]
    %1024 = vrot.lane.b32.xlu0 %v1023, 54
    %v1025 = vpop.permute.xlu0 %1024
    %vm1026 = vcmask 7168
    %s1027 = scalar_lea.vmem %s1, 74
    %1028 = vst.msk [vmem:[%s1027] ss:$324 sm:$0x3] %vm1026, %v1025
    %s1029 = scalar_lea.vmem %s1, 4294966850
    %1030 = vst.msk [vmem:[%s1029] ss:$324 sm:$0xc] %vm1026, %v1025
    %v1031 = vld.sshfl [vmem:[#allocation0] sm:$0xff pattern:$0x99999810]
    %1032 = vrot.lane.b32.xlu0 %v1031, 53
    %v1033 = vpop.permute.xlu0 %1032
    %vm1034 = vcmask 7168
    %s1035 = scalar_lea.vmem %s1, 75
    %1036 = vst.msk [vmem:[%s1035] ss:$324 sm:$0x3] %vm1034, %v1033
    %s1037 = scalar_lea.vmem %s1, 4294966851
    %1038 = vst.msk [vmem:[%s1037] ss:$324 sm:$0xc] %vm1034, %v1033
    %v1039 = vld.sshfl [vmem:[#allocation0] sm:$0xff pattern:$0x99999810]
    %1040 = vrot.lane.b32.xlu0 %v1039, 52
    %v1041 = vpop.permute.xlu0 %1040
    %vm1042 = vcmask 7168
    %s1043 = scalar_lea.vmem %s1, 76
    %1044 = vst.msk [vmem:[%s1043] ss:$324 sm:$0x3] %vm1042, %v1041
    %s1045 = scalar_lea.vmem %s1, 4294966852
    %1046 = vst.msk [vmem:[%s1045] ss:$324 sm:$0xc] %vm1042, %v1041
    %v1047 = vld.sshfl [vmem:[#allocation0] sm:$0xff pattern:$0x99999810]
    %1048 = vrot.lane.b32.xlu0 %v1047, 51
    %v1049 = vpop.permute.xlu0 %1048
    %vm1050 = vcmask 7168
    %s1051 = scalar_lea.vmem %s1, 77
    %1052 = vst.msk [vmem:[%s1051] ss:$324 sm:$0x3] %vm1050, %v1049
    %s1053 = scalar_lea.vmem %s1, 4294966853
    %1054 = vst.msk [vmem:[%s1053] ss:$324 sm:$0xc] %vm1050, %v1049
    %v1055 = vld.sshfl [vmem:[#allocation0] sm:$0xff pattern:$0x99999810]
    %1056 = vrot.lane.b32.xlu0 %v1055, 50
    %v1057 = vpop.permute.xlu0 %1056
    %vm1058 = vcmask 7168
    %s1059 = scalar_lea.vmem %s1, 78
    %1060 = vst.msk [vmem:[%s1059] ss:$324 sm:$0x3] %vm1058, %v1057
    %s1061 = scalar_lea.vmem %s1, 4294966854
    %1062 = vst.msk [vmem:[%s1061] ss:$324 sm:$0xc] %vm1058, %v1057
    %v1063 = vld.sshfl [vmem:[#allocation0] sm:$0xff pattern:$0x99999810]
    %1064 = vrot.lane.b32.xlu0 %v1063, 49
    %v1065 = vpop.permute.xlu0 %1064
    %vm1066 = vcmask 7168
    %s1067 = scalar_lea.vmem %s1, 79
    %1068 = vst.msk [vmem:[%s1067] ss:$324 sm:$0x3] %vm1066, %v1065
    %s1069 = scalar_lea.vmem %s1, 4294966855
    %1070 = vst.msk [vmem:[%s1069] ss:$324 sm:$0xc] %vm1066, %v1065
    %v1071 = vld.sshfl [vmem:[#allocation0] sm:$0xff pattern:$0x99999810]
    %1072 = vrot.lane.b32.xlu0 %v1071, 48
    %v1073 = vpop.permute.xlu0 %1072
    %vm1074 = vcmask 7168
    %s1075 = scalar_lea.vmem %s1, 80
    %1076 = vst.msk [vmem:[%s1075] ss:$324 sm:$0x3] %vm1074, %v1073
    %s1077 = scalar_lea.vmem %s1, 4294966856
    %1078 = vst.msk [vmem:[%s1077] ss:$324 sm:$0xc] %vm1074, %v1073
    %v1079 = vld.sshfl [vmem:[#allocation0] sm:$0xff pattern:$0x99999810]
    %1080 = vrot.lane.b32.xlu0 %v1079, 47
    %v1081 = vpop.permute.xlu0 %1080
    %vm1082 = vcmask 7168
    %s1083 = scalar_lea.vmem %s1, 81
    %1084 = vst.msk [vmem:[%s1083] ss:$324 sm:$0x3] %vm1082, %v1081
    %s1085 = scalar_lea.vmem %s1, 4294966857
    %1086 = vst.msk [vmem:[%s1085] ss:$324 sm:$0xc] %vm1082, %v1081
    %v1087 = vld.sshfl [vmem:[#allocation0] sm:$0xff pattern:$0x99999810]
    %1088 = vrot.lane.b32.xlu0 %v1087, 46
    %v1089 = vpop.permute.xlu0 %1088
    %vm1090 = vcmask 7168
    %s1091 = scalar_lea.vmem %s1, 82
    %1092 = vst.msk [vmem:[%s1091] ss:$324 sm:$0x3] %vm1090, %v1089
    %s1093 = scalar_lea.vmem %s1, 4294966858
    %1094 = vst.msk [vmem:[%s1093] ss:$324 sm:$0xc] %vm1090, %v1089
    %v1095 = vld.sshfl [vmem:[#allocation0] sm:$0xff pattern:$0x99999810]
    %1096 = vrot.lane.b32.xlu0 %v1095, 45
    %v1097 = vpop.permute.xlu0 %1096
    %vm1098 = vcmask 7168
    %s1099 = scalar_lea.vmem %s1, 83
    %1100 = vst.msk [vmem:[%s1099] ss:$324 sm:$0x3] %vm1098, %v1097
    %s1101 = scalar_lea.vmem %s1, 4294966859
    %1102 = vst.msk [vmem:[%s1101] ss:$324 sm:$0xc] %vm1098, %v1097
    %v1103 = vld.sshfl [vmem:[#allocation0] sm:$0xff pattern:$0x99999810]
    %1104 = vrot.lane.b32.xlu0 %v1103, 44
    %v1105 = vpop.permute.xlu0 %1104
    %vm1106 = vcmask 7168
    %s1107 = scalar_lea.vmem %s1, 84
    %1108 = vst.msk [vmem:[%s1107] ss:$324 sm:$0x3] %vm1106, %v1105
    %s1109 = scalar_lea.vmem %s1, 4294966860
    %1110 = vst.msk [vmem:[%s1109] ss:$324 sm:$0xc] %vm1106, %v1105
    %v1111 = vld.sshfl [vmem:[#allocation0] sm:$0xff pattern:$0x99999810]
    %1112 = vrot.lane.b32.xlu0 %v1111, 43
    %v1113 = vpop.permute.xlu0 %1112
    %vm1114 = vcmask 7168
    %s1115 = scalar_lea.vmem %s1, 85
    %1116 = vst.msk [vmem:[%s1115] ss:$324 sm:$0x3] %vm1114, %v1113
    %s1117 = scalar_lea.vmem %s1, 4294966861
    %1118 = vst.msk [vmem:[%s1117] ss:$324 sm:$0xc] %vm1114, %v1113
    %v1119 = vld.sshfl [vmem:[#allocation0] sm:$0xff pattern:$0x99999810]
    %1120 = vrot.lane.b32.xlu0 %v1119, 42
    %v1121 = vpop.permute.xlu0 %1120
    %vm1122 = vcmask 7168
    %s1123 = scalar_lea.vmem %s1, 86
    %1124 = vst.msk [vmem:[%s1123] ss:$324 sm:$0x3] %vm1122, %v1121
    %s1125 = scalar_lea.vmem %s1, 4294966862
    %1126 = vst.msk [vmem:[%s1125] ss:$324 sm:$0xc] %vm1122, %v1121
    %v1127 = vld.sshfl [vmem:[#allocation0] sm:$0xff pattern:$0x99999810]
    %1128 = vrot.lane.b32.xlu0 %v1127, 41
    %v1129 = vpop.permute.xlu0 %1128
    %vm1130 = vcmask 7168
    %s1131 = scalar_lea.vmem %s1, 87
    %1132 = vst.msk [vmem:[%s1131] ss:$324 sm:$0x3] %vm1130, %v1129
    %s1133 = scalar_lea.vmem %s1, 4294966863
    %1134 = vst.msk [vmem:[%s1133] ss:$324 sm:$0xc] %vm1130, %v1129
    %v1135 = vld.sshfl [vmem:[#allocation0] sm:$0xff pattern:$0x99999810]
    %1136 = vrot.lane.b32.xlu0 %v1135, 40
    %v1137 = vpop.permute.xlu0 %1136
    %vm1138 = vcmask 7168
    %s1139 = scalar_lea.vmem %s1, 88
    %1140 = vst.msk [vmem:[%s1139] ss:$324 sm:$0x3] %vm1138, %v1137
    %s1141 = scalar_lea.vmem %s1, 4294966864
    %1142 = vst.msk [vmem:[%s1141] ss:$324 sm:$0xc] %vm1138, %v1137
    %v1143 = vld.sshfl [vmem:[#allocation0] sm:$0xff pattern:$0x99999810]
    %1144 = vrot.lane.b32.xlu0 %v1143, 39
    %v1145 = vpop.permute.xlu0 %1144
    %vm1146 = vcmask 7168
    %s1147 = scalar_lea.vmem %s1, 89
    %1148 = vst.msk [vmem:[%s1147] ss:$324 sm:$0x3] %vm1146, %v1145
    %s1149 = scalar_lea.vmem %s1, 4294966865
    %1150 = vst.msk [vmem:[%s1149] ss:$324 sm:$0xc] %vm1146, %v1145
    %v1151 = vld.sshfl [vmem:[#allocation0] sm:$0xff pattern:$0x99999810]
    %1152 = vrot.lane.b32.xlu0 %v1151, 38
    %v1153 = vpop.permute.xlu0 %1152
    %vm1154 = vcmask 7168
    %s1155 = scalar_lea.vmem %s1, 90
    %1156 = vst.msk [vmem:[%s1155] ss:$324 sm:$0x3] %vm1154, %v1153
    %s1157 = scalar_lea.vmem %s1, 4294966866
    %1158 = vst.msk [vmem:[%s1157] ss:$324 sm:$0xc] %vm1154, %v1153
    %v1159 = vld.sshfl [vmem:[#allocation0] sm:$0xff pattern:$0x99999810]
    %1160 = vrot.lane.b32.xlu0 %v1159, 37
    %v1161 = vpop.permute.xlu0 %1160
    %vm1162 = vcmask 7168
    %s1163 = scalar_lea.vmem %s1, 91
    %1164 = vst.msk [vmem:[%s1163] ss:$324 sm:$0x3] %vm1162, %v1161
    %s1165 = scalar_lea.vmem %s1, 4294966867
    %1166 = vst.msk [vmem:[%s1165] ss:$324 sm:$0xc] %vm1162, %v1161
    %v1167 = vld.sshfl [vmem:[#allocation0] sm:$0xff pattern:$0x88888901]
    %1168 = vrot.lane.b32.xlu0 %v1167, 36
    %v1169 = vpop.permute.xlu0 %1168
    %vm1170 = vcmask 7168
    %s1171 = scalar_lea.vmem %s1, 416
    %1172 = vst.msk [vmem:[%s1171] ss:$-324 sm:$0x3] %vm1170, %v1169
    %s1173 = scalar_lea.vmem %s1, 1192
    %1174 = vst.msk [vmem:[%s1173] ss:$-324 sm:$0xc] %vm1170, %v1169
    %v1175 = vld.sshfl [vmem:[#allocation0] sm:$0xff pattern:$0x88888901]
    %1176 = vrot.lane.b32.xlu0 %v1175, 35
    %v1177 = vpop.permute.xlu0 %1176
    %vm1178 = vcmask 7168
    %s1179 = scalar_lea.vmem %s1, 417
    %1180 = vst.msk [vmem:[%s1179] ss:$-324 sm:$0x3] %vm1178, %v1177
    %s1181 = scalar_lea.vmem %s1, 1193
    %1182 = vst.msk [vmem:[%s1181] ss:$-324 sm:$0xc] %vm1178, %v1177
    %v1183 = vld.sshfl [vmem:[#allocation0] sm:$0xff pattern:$0x88888901]
    %1184 = vrot.lane.b32.xlu0 %v1183, 34
    %v1185 = vpop.permute.xlu0 %1184
    %vm1186 = vcmask 7168
    %s1187 = scalar_lea.vmem %s1, 418
    %1188 = vst.msk [vmem:[%s1187] ss:$-324 sm:$0x3] %vm1186, %v1185
    %s1189 = scalar_lea.vmem %s1, 1194
    %1190 = vst.msk [vmem:[%s1189] ss:$-324 sm:$0xc] %vm1186, %v1185
    %v1191 = vld.sshfl [vmem:[#allocation0] sm:$0xff pattern:$0x88888901]
    %1192 = vrot.lane.b32.xlu0 %v1191, 33
    %v1193 = vpop.permute.xlu0 %1192
    %vm1194 = vcmask 7168
    %s1195 = scalar_lea.vmem %s1, 419
    %1196 = vst.msk [vmem:[%s1195] ss:$-324 sm:$0x3] %vm1194, %v1193
    %s1197 = scalar_lea.vmem %s1, 1195
    %1198 = vst.msk [vmem:[%s1197] ss:$-324 sm:$0xc] %vm1194, %v1193
    %v1199 = vld.sshfl [vmem:[#allocation0] sm:$0xff pattern:$0x99999810]
    %1200 = vrot.lane.b32.xlu0 %v1199, 32
    %v1201 = vpop.permute.xlu0 %1200
    %vm1202 = vcmask 7168
    %s1203 = scalar_lea.vmem %s1, 96
    %1204 = vst.msk [vmem:[%s1203] ss:$324 sm:$0x3] %vm1202, %v1201
    %s1205 = scalar_lea.vmem %s1, 4294966872
    %1206 = vst.msk [vmem:[%s1205] ss:$324 sm:$0xc] %vm1202, %v1201
    %v1207 = vld.sshfl [vmem:[#allocation0] sm:$0xff pattern:$0x99999810]
    %1208 = vrot.lane.b32.xlu0 %v1207, 31
    %v1209 = vpop.permute.xlu0 %1208
    %vm1210 = vcmask 7168
    %s1211 = scalar_lea.vmem %s1, 97
    %1212 = vst.msk [vmem:[%s1211] ss:$324 sm:$0x3] %vm1210, %v1209
    %s1213 = scalar_lea.vmem %s1, 4294966873
    %1214 = vst.msk [vmem:[%s1213] ss:$324 sm:$0xc] %vm1210, %v1209
    %v1215 = vld.sshfl [vmem:[#allocation0] sm:$0xff pattern:$0x99999810]
    %1216 = vrot.lane.b32.xlu0 %v1215, 30
    %v1217 = vpop.permute.xlu0 %1216
    %vm1218 = vcmask 7168
    %s1219 = scalar_lea.vmem %s1, 98
    %1220 = vst.msk [vmem:[%s1219] ss:$324 sm:$0x3] %vm1218, %v1217
    %s1221 = scalar_lea.vmem %s1, 4294966874
    %1222 = vst.msk [vmem:[%s1221] ss:$324 sm:$0xc] %vm1218, %v1217
    %v1223 = vld.sshfl [vmem:[#allocation0] sm:$0xff pattern:$0x99999810]
    %1224 = vrot.lane.b32.xlu0 %v1223, 29
    %v1225 = vpop.permute.xlu0 %1224
    %vm1226 = vcmask 7168
    %s1227 = scalar_lea.vmem %s1, 99
    %1228 = vst.msk [vmem:[%s1227] ss:$324 sm:$0x3] %vm1226, %v1225
    %s1229 = scalar_lea.vmem %s1, 4294966875
    %1230 = vst.msk [vmem:[%s1229] ss:$324 sm:$0xc] %vm1226, %v1225
    %v1231 = vld.sshfl [vmem:[#allocation0] sm:$0xff pattern:$0x99999810]
    %1232 = vrot.lane.b32.xlu0 %v1231, 28
    %v1233 = vpop.permute.xlu0 %1232
    %vm1234 = vcmask 7168
    %s1235 = scalar_lea.vmem %s1, 100
    %1236 = vst.msk [vmem:[%s1235] ss:$324 sm:$0x3] %vm1234, %v1233
    %s1237 = scalar_lea.vmem %s1, 4294966876
    %1238 = vst.msk [vmem:[%s1237] ss:$324 sm:$0xc] %vm1234, %v1233
    %v1239 = vld.sshfl [vmem:[#allocation0] sm:$0xff pattern:$0x99999810]
    %1240 = vrot.lane.b32.xlu0 %v1239, 27
    %v1241 = vpop.permute.xlu0 %1240
    %vm1242 = vcmask 7168
    %s1243 = scalar_lea.vmem %s1, 101
    %1244 = vst.msk [vmem:[%s1243] ss:$324 sm:$0x3] %vm1242, %v1241
    %s1245 = scalar_lea.vmem %s1, 4294966877
    %1246 = vst.msk [vmem:[%s1245] ss:$324 sm:$0xc] %vm1242, %v1241
    %v1247 = vld.sshfl [vmem:[#allocation0] sm:$0xff pattern:$0x99999810]
    %1248 = vrot.lane.b32.xlu0 %v1247, 26
    %v1249 = vpop.permute.xlu0 %1248
    %vm1250 = vcmask 7168
    %s1251 = scalar_lea.vmem %s1, 102
    %1252 = vst.msk [vmem:[%s1251] ss:$324 sm:$0x3] %vm1250, %v1249
    %s1253 = scalar_lea.vmem %s1, 4294966878
    %1254 = vst.msk [vmem:[%s1253] ss:$324 sm:$0xc] %vm1250, %v1249
    %v1255 = vld.sshfl [vmem:[#allocation0] sm:$0xff pattern:$0x99999810]
    %1256 = vrot.lane.b32.xlu0 %v1255, 25
    %v1257 = vpop.permute.xlu0 %1256
    %vm1258 = vcmask 7168
    %s1259 = scalar_lea.vmem %s1, 103
    %1260 = vst.msk [vmem:[%s1259] ss:$324 sm:$0x3] %vm1258, %v1257
    %s1261 = scalar_lea.vmem %s1, 4294966879
    %1262 = vst.msk [vmem:[%s1261] ss:$324 sm:$0xc] %vm1258, %v1257
    %v1263 = vld.sshfl [vmem:[#allocation0] sm:$0xff pattern:$0x99999810]
    %1264 = vrot.lane.b32.xlu0 %v1263, 24
    %v1265 = vpop.permute.xlu0 %1264
    %vm1266 = vcmask 7168
    %s1267 = scalar_lea.vmem %s1, 104
    %1268 = vst.msk [vmem:[%s1267] ss:$324 sm:$0x3] %vm1266, %v1265
    %s1269 = scalar_lea.vmem %s1, 4294966880
    %1270 = vst.msk [vmem:[%s1269] ss:$324 sm:$0xc] %vm1266, %v1265
    %v1271 = vld.sshfl [vmem:[#allocation0] sm:$0xff pattern:$0x99999810]
    %1272 = vrot.lane.b32.xlu0 %v1271, 23
    %v1273 = vpop.permute.xlu0 %1272
    %vm1274 = vcmask 7168
    %s1275 = scalar_lea.vmem %s1, 105
    %1276 = vst.msk [vmem:[%s1275] ss:$324 sm:$0x3] %vm1274, %v1273
    %s1277 = scalar_lea.vmem %s1, 4294966881
    %1278 = vst.msk [vmem:[%s1277] ss:$324 sm:$0xc] %vm1274, %v1273
    %v1279 = vld.sshfl [vmem:[#allocation0] sm:$0xff pattern:$0x99999810]
    %1280 = vrot.lane.b32.xlu0 %v1279, 22
    %v1281 = vpop.permute.xlu0 %1280
    %vm1282 = vcmask 7168
    %s1283 = scalar_lea.vmem %s1, 106
    %1284 = vst.msk [vmem:[%s1283] ss:$324 sm:$0x3] %vm1282, %v1281
    %s1285 = scalar_lea.vmem %s1, 4294966882
    %1286 = vst.msk [vmem:[%s1285] ss:$324 sm:$0xc] %vm1282, %v1281
    %v1287 = vld.sshfl [vmem:[#allocation0] sm:$0xff pattern:$0x99999810]
    %1288 = vrot.lane.b32.xlu0 %v1287, 21
    %v1289 = vpop.permute.xlu0 %1288
    %vm1290 = vcmask 7168
    %s1291 = scalar_lea.vmem %s1, 107
    %1292 = vst.msk [vmem:[%s1291] ss:$324 sm:$0x3] %vm1290, %v1289
    %s1293 = scalar_lea.vmem %s1, 4294966883
    %1294 = vst.msk [vmem:[%s1293] ss:$324 sm:$0xc] %vm1290, %v1289
    %v1295 = vld.sshfl [vmem:[#allocation0] sm:$0xff pattern:$0x99999810]
    %1296 = vrot.lane.b32.xlu0 %v1295, 20
    %v1297 = vpop.permute.xlu0 %1296
    %vm1298 = vcmask 7168
    %s1299 = scalar_lea.vmem %s1, 108
    %1300 = vst.msk [vmem:[%s1299] ss:$324 sm:$0x3] %vm1298, %v1297
    %s1301 = scalar_lea.vmem %s1, 4294966884
    %1302 = vst.msk [vmem:[%s1301] ss:$324 sm:$0xc] %vm1298, %v1297
    %v1303 = vld.sshfl [vmem:[#allocation0] sm:$0xff pattern:$0x99999810]
    %1304 = vrot.lane.b32.xlu0 %v1303, 19
    %v1305 = vpop.permute.xlu0 %1304
    %vm1306 = vcmask 7168
    %s1307 = scalar_lea.vmem %s1, 109
    %1308 = vst.msk [vmem:[%s1307] ss:$324 sm:$0x3] %vm1306, %v1305
    %s1309 = scalar_lea.vmem %s1, 4294966885
    %1310 = vst.msk [vmem:[%s1309] ss:$324 sm:$0xc] %vm1306, %v1305
    %v1311 = vld.sshfl [vmem:[#allocation0] sm:$0xff pattern:$0x99999810]
    %1312 = vrot.lane.b32.xlu0 %v1311, 18
    %v1313 = vpop.permute.xlu0 %1312
    %vm1314 = vcmask 7168
    %s1315 = scalar_lea.vmem %s1, 110
    %1316 = vst.msk [vmem:[%s1315] ss:$324 sm:$0x3] %vm1314, %v1313
    %s1317 = scalar_lea.vmem %s1, 4294966886
    %1318 = vst.msk [vmem:[%s1317] ss:$324 sm:$0xc] %vm1314, %v1313
    %v1319 = vld.sshfl [vmem:[#allocation0] sm:$0xff pattern:$0x99999810]
    %1320 = vrot.lane.b32.xlu0 %v1319, 17
    %v1321 = vpop.permute.xlu0 %1320
    %vm1322 = vcmask 7168
    %s1323 = scalar_lea.vmem %s1, 111
    %1324 = vst.msk [vmem:[%s1323] ss:$324 sm:$0x3] %vm1322, %v1321
    %s1325 = scalar_lea.vmem %s1, 4294966887
    %1326 = vst.msk [vmem:[%s1325] ss:$324 sm:$0xc] %vm1322, %v1321
    %v1327 = vld.sshfl [vmem:[#allocation0] sm:$0xff pattern:$0x99999810]
    %1328 = vrot.lane.b32.xlu0 %v1327, 16
    %v1329 = vpop.permute.xlu0 %1328
    %vm1330 = vcmask 7168
    %s1331 = scalar_lea.vmem %s1, 112
    %1332 = vst.msk [vmem:[%s1331] ss:$324 sm:$0x3] %vm1330, %v1329
    %s1333 = scalar_lea.vmem %s1, 4294966888
    %1334 = vst.msk [vmem:[%s1333] ss:$324 sm:$0xc] %vm1330, %v1329
    %v1335 = vld.sshfl [vmem:[#allocation0] sm:$0xff pattern:$0x99999810]
    %1336 = vrot.lane.b32.xlu0 %v1335, 15
    %v1337 = vpop.permute.xlu0 %1336
    %vm1338 = vcmask 7168
    %s1339 = scalar_lea.vmem %s1, 113
    %1340 = vst.msk [vmem:[%s1339] ss:$324 sm:$0x3] %vm1338, %v1337
    %s1341 = scalar_lea.vmem %s1, 4294966889
    %1342 = vst.msk [vmem:[%s1341] ss:$324 sm:$0xc] %vm1338, %v1337
    %v1343 = vld.sshfl [vmem:[#allocation0] sm:$0xff pattern:$0x99999810]
    %1344 = vrot.lane.b32.xlu0 %v1343, 14
    %v1345 = vpop.permute.xlu0 %1344
    %vm1346 = vcmask 7168
    %s1347 = scalar_lea.vmem %s1, 114
    %1348 = vst.msk [vmem:[%s1347] ss:$324 sm:$0x3] %vm1346, %v1345
    %s1349 = scalar_lea.vmem %s1, 4294966890
    %1350 = vst.msk [vmem:[%s1349] ss:$324 sm:$0xc] %vm1346, %v1345
    %v1351 = vld.sshfl [vmem:[#allocation0] sm:$0xff pattern:$0x99999810]
    %1352 = vrot.lane.b32.xlu0 %v1351, 13
    %v1353 = vpop.permute.xlu0 %1352
    %vm1354 = vcmask 7168
    %s1355 = scalar_lea.vmem %s1, 115
    %1356 = vst.msk [vmem:[%s1355] ss:$324 sm:$0x3] %vm1354, %v1353
    %s1357 = scalar_lea.vmem %s1, 4294966891
    %1358 = vst.msk [vmem:[%s1357] ss:$324 sm:$0xc] %vm1354, %v1353
    %v1359 = vld.sshfl [vmem:[#allocation0] sm:$0xff pattern:$0x99999810]
    %1360 = vrot.lane.b32.xlu0 %v1359, 12
    %v1361 = vpop.permute.xlu0 %1360
    %vm1362 = vcmask 7168
    %s1363 = scalar_lea.vmem %s1, 116
    %1364 = vst.msk [vmem:[%s1363] ss:$324 sm:$0x3] %vm1362, %v1361
    %s1365 = scalar_lea.vmem %s1, 4294966892
    %1366 = vst.msk [vmem:[%s1365] ss:$324 sm:$0xc] %vm1362, %v1361
    %v1367 = vld.sshfl [vmem:[#allocation0] sm:$0xff pattern:$0x99999810]
    %1368 = vrot.lane.b32.xlu0 %v1367, 11
    %v1369 = vpop.permute.xlu0 %1368
    %vm1370 = vcmask 7168
    %s1371 = scalar_lea.vmem %s1, 117
    %1372 = vst.msk [vmem:[%s1371] ss:$324 sm:$0x3] %vm1370, %v1369
    %s1373 = scalar_lea.vmem %s1, 4294966893
    %1374 = vst.msk [vmem:[%s1373] ss:$324 sm:$0xc] %vm1370, %v1369
    %v1375 = vld.sshfl [vmem:[#allocation0] sm:$0xff pattern:$0x99999810]
    %1376 = vrot.lane.b32.xlu0 %v1375, 10
    %v1377 = vpop.permute.xlu0 %1376
    %vm1378 = vcmask 7168
    %s1379 = scalar_lea.vmem %s1, 118
    %1380 = vst.msk [vmem:[%s1379] ss:$324 sm:$0x3] %vm1378, %v1377
    %s1381 = scalar_lea.vmem %s1, 4294966894
    %1382 = vst.msk [vmem:[%s1381] ss:$324 sm:$0xc] %vm1378, %v1377
    %v1383 = vld.sshfl [vmem:[#allocation0] sm:$0xff pattern:$0x99999810]
    %1384 = vrot.lane.b32.xlu0 %v1383, 9
    %v1385 = vpop.permute.xlu0 %1384
    %vm1386 = vcmask 7168
    %s1387 = scalar_lea.vmem %s1, 119
    %1388 = vst.msk [vmem:[%s1387] ss:$324 sm:$0x3] %vm1386, %v1385
    %s1389 = scalar_lea.vmem %s1, 4294966895
    %1390 = vst.msk [vmem:[%s1389] ss:$324 sm:$0xc] %vm1386, %v1385
    %v1391 = vld.sshfl [vmem:[#allocation0] sm:$0xff pattern:$0x99999810]
    %1392 = vrot.lane.b32.xlu0 %v1391, 8
    %v1393 = vpop.permute.xlu0 %1392
    %vm1394 = vcmask 7168
    %s1395 = scalar_lea.vmem %s1, 120
    %1396 = vst.msk [vmem:[%s1395] ss:$324 sm:$0x3] %vm1394, %v1393
    %s1397 = scalar_lea.vmem %s1, 4294966896
    %1398 = vst.msk [vmem:[%s1397] ss:$324 sm:$0xc] %vm1394, %v1393
    %v1399 = vld.sshfl [vmem:[#allocation0] sm:$0xff pattern:$0x99999810]
    %1400 = vrot.lane.b32.xlu0 %v1399, 7
    %v1401 = vpop.permute.xlu0 %1400
    %vm1402 = vcmask 7168
    %s1403 = scalar_lea.vmem %s1, 121
    %1404 = vst.msk [vmem:[%s1403] ss:$324 sm:$0x3] %vm1402, %v1401
    %s1405 = scalar_lea.vmem %s1, 4294966897
    %1406 = vst.msk [vmem:[%s1405] ss:$324 sm:$0xc] %vm1402, %v1401
    %v1407 = vld.sshfl [vmem:[#allocation0] sm:$0xff pattern:$0x99999810]
    %1408 = vrot.lane.b32.xlu0 %v1407, 6
    %v1409 = vpop.permute.xlu0 %1408
    %vm1410 = vcmask 7168
    %s1411 = scalar_lea.vmem %s1, 122
    %1412 = vst.msk [vmem:[%s1411] ss:$324 sm:$0x3] %vm1410, %v1409
    %s1413 = scalar_lea.vmem %s1, 4294966898
    %1414 = vst.msk [vmem:[%s1413] ss:$324 sm:$0xc] %vm1410, %v1409
    %v1415 = vld.sshfl [vmem:[#allocation0] sm:$0xff pattern:$0x99999810]
    %1416 = vrot.lane.b32.xlu0 %v1415, 5
    %v1417 = vpop.permute.xlu0 %1416
    %vm1418 = vcmask 7168
    %s1419 = scalar_lea.vmem %s1, 123
    %1420 = vst.msk [vmem:[%s1419] ss:$324 sm:$0x3] %vm1418, %v1417
    %s1421 = scalar_lea.vmem %s1, 4294966899
    %1422 = vst.msk [vmem:[%s1421] ss:$324 sm:$0xc] %vm1418, %v1417
    %v1423 = vld.sshfl [vmem:[#allocation0] sm:$0xff pattern:$0x88888901]
    %1424 = vrot.lane.b32.xlu0 %v1423, 4
    %v1425 = vpop.permute.xlu0 %1424
    %vm1426 = vcmask 7168
    %s1427 = scalar_lea.vmem %s1, 448
    %1428 = vst.msk [vmem:[%s1427] ss:$-324 sm:$0x3] %vm1426, %v1425
    %s1429 = scalar_lea.vmem %s1, 1224
    %1430 = vst.msk [vmem:[%s1429] ss:$-324 sm:$0xc] %vm1426, %v1425
    %v1431 = vld.sshfl [vmem:[#allocation0] sm:$0xff pattern:$0x88888901]
    %1432 = vrot.lane.b32.xlu0 %v1431, 3
    %v1433 = vpop.permute.xlu0 %1432
    %vm1434 = vcmask 7168
    %s1435 = scalar_lea.vmem %s1, 449
    %1436 = vst.msk [vmem:[%s1435] ss:$-324 sm:$0x3] %vm1434, %v1433
    %s1437 = scalar_lea.vmem %s1, 1225
    %1438 = vst.msk [vmem:[%s1437] ss:$-324 sm:$0xc] %vm1434, %v1433
    %v1439 = vld.sshfl [vmem:[#allocation0] sm:$0xff pattern:$0x88888901]
    %1440 = vrot.lane.b32.xlu0 %v1439, 2
    %v1441 = vpop.permute.xlu0 %1440
    %vm1442 = vcmask 7168
    %s1443 = scalar_lea.vmem %s1, 450
    %1444 = vst.msk [vmem:[%s1443] ss:$-324 sm:$0x3] %vm1442, %v1441
    %s1445 = scalar_lea.vmem %s1, 1226
    %1446 = vst.msk [vmem:[%s1445] ss:$-324 sm:$0xc] %vm1442, %v1441
    %v1447 = vld.sshfl [vmem:[#allocation0] sm:$0xff pattern:$0x88888901]
    %1448 = vrot.lane.b32.xlu0 %v1447, 1
    %v1449 = vpop.permute.xlu0 %1448
    %vm1450 = vcmask 7168
    %s1451 = scalar_lea.vmem %s1, 451
    %1452 = vst.msk [vmem:[%s1451] ss:$-324 sm:$0x3] %vm1450, %v1449
    %s1453 = scalar_lea.vmem %s1, 1227
    %1454 = vst.msk [vmem:[%s1453] ss:$-324 sm:$0xc] %vm1450, %v1449

// kernel: conv_layer_forward.3
$region0: #{conv_layer_forward.3}
  #allocation0 [shape = 'u32[]', space=smem, size = 0x4, offset = 0x4, fixed_abs, tag = 'smem constant byte address 0x4 - core index']
  #allocation1 [shape = 'u32[144,128]{1,0:T(1,128)}', space=vmem, size = 0x12000, scoped, tag = 'internal scratch']
  %s0 = inlined_call_operand.vmem [shape: f32[720,128], index: 0, kind: input, shape index: {}, may-alias: {0,3}]
  %s1 = inlined_call_operand.vmem [shape: f32[1,128], index: 1, kind: input, shape index: {}]
  %s2 = inlined_call_operand.vmem [shape: f32[1,128], index: 2, kind: input, shape index: {}]
  %s3 = inlined_call_operand.vmem [shape: f32[720,128], index: 3, kind: output, shape index: {}, may-alias: {0,3}]
  %s4 = sld [smem:[#allocation0]]
  $region45: #{conv_layer_forward.3} parent=0
    _
  %s6 = ssub.s32 1, %s4
  %s7 = scalar_select 0, %s6, %s4
  loop: start=0, step=1, limit=4
  $region2: #{conv_layer_forward.3} parent=0 // loop_pre_header
    _
  $region3: #{conv_layer_forward.3} parent=0 // loop_header
    %s9 = sphi 0, %s13
    %p10 = scmp.ge.s32.totalorder %s9, 4
    %s16 = sphi 0, %s28
    %s17 = sphi 0, %s24
    %s18 = sphi 0, %s16
    %s19 = sphi 0, %s17
    %s20 = sphi 0, %s18
    %s21 = sphi 0, %s19
    %s33 = sphi 0, %s35
    %s36 = sphi 0, %s33
    %s37 = sphi 0, %s36
    %s53 = sphi 0, %s37
    %s57 = sphi 0, %s57
    %s59 = sphi 0, %s57
    %s60 = sphi 0, %s59
    %s74 = sphi 0, %s60
    %s78 = sphi 0, %s78
    %s80 = sphi 0, %s78
    %s81 = sphi 0, %s80
    %s95 = sphi 0, %s81
    %s103 = sphi 0, %s105
    %s106 = sphi 0, %s103
    %s107 = sphi 0, %s106
    %s123 = sphi 0, %s107
  $region4: #{conv_layer_forward.3} parent=0 // loop_header_branch
    %12 = sbr.rel (%p10) target = $region8
  $region5: #{conv_layer_forward.3} parent=0 // loop_body
    %s14 = ssub.s32 %s9, 1
    %s15 = ssub.s32 %s9, 2
    %s22 = sadd.s32 1, %s17
    %p23 = scmp.ge.s32.totalorder %s22, 1
    %s24 = scalar_select %p23, 0, %s22
    %s25 = sadd.s32 1, %s16
    %s26 = scalar_select %p23, %s25, %s16
    %p27 = scmp.ge.s32.totalorder %s26, 2
    %s28 = scalar_select %p27, 0, %s26
    %s29 = ssub.s32 %s16, %s28
    %s30 = ssub.s32 %s17, %s24
    %s31 = sor.u32 %s29, %s30
    %p32 = scmp.eq.s32.totalorder %s31, 0
    %s34 = sadd.s32 %s33, 1
    %s35 = scalar_select %p32, %s33, %s34
    %p38 = pneg %p32
    %p39 = scmp.eq.s32.totalorder %s9, 1
    %p40 = por %p38, %p39
    %p41 = scmp.ne.s32.totalorder %s33, %s36
    %p42 = scmp.eq.s32.totalorder %s9, 0
    %p43 = por %p41, %p42
    %p44 = scmp.ne.s32.totalorder %s33, %s36
    %p45 = scmp.eq.s32.totalorder %s14, 1
    %p46 = por %p44, %p45
    %p47 = scmp.ne.s32.totalorder %s36, %s37
    %p48 = scmp.eq.s32.totalorder %s14, 0
    %p49 = por %p47, %p48
    %p50 = scmp.ne.s32.totalorder %s36, %s37
    %p51 = scmp.eq.s32.totalorder %s15, 1
    %p52 = por %p50, %p51
    %p54 = scmp.ne.s32.totalorder %s37, %s53
    %p55 = scmp.eq.s32.totalorder %s15, 0
    %p56 = por %p54, %p55
    %s58 = sadd.s32 %s57, 1
    %p61 = scmp.eq.s32.totalorder %s9, 1
    %p62 = scmp.ne.s32.totalorder %s57, %s59
    %p63 = scmp.eq.s32.totalorder %s9, 0
    %p64 = por %p62, %p63
    %p65 = scmp.ne.s32.totalorder %s57, %s59
    %p66 = scmp.eq.s32.totalorder %s14, 1
    %p67 = por %p65, %p66
    %p68 = scmp.ne.s32.totalorder %s59, %s60
    %p69 = scmp.eq.s32.totalorder %s14, 0
    %p70 = por %p68, %p69
    %p71 = scmp.ne.s32.totalorder %s59, %s60
    %p72 = scmp.eq.s32.totalorder %s15, 1
    %p73 = por %p71, %p72
    %p75 = scmp.ne.s32.totalorder %s60, %s74
    %p76 = scmp.eq.s32.totalorder %s15, 0
    %p77 = por %p75, %p76
    %s79 = sadd.s32 %s78, 1
    %p82 = scmp.eq.s32.totalorder %s9, 1
    %p83 = scmp.ne.s32.totalorder %s78, %s80
    %p84 = scmp.eq.s32.totalorder %s9, 0
    %p85 = por %p83, %p84
    %p86 = scmp.ne.s32.totalorder %s78, %s80
    %p87 = scmp.eq.s32.totalorder %s14, 1
    %p88 = por %p86, %p87
    %p89 = scmp.ne.s32.totalorder %s80, %s81
    %p90 = scmp.eq.s32.totalorder %s14, 0
    %p91 = por %p89, %p90
    %p92 = scmp.ne.s32.totalorder %s80, %s81
    %p93 = scmp.eq.s32.totalorder %s15, 1
    %p94 = por %p92, %p93
    %p96 = scmp.ne.s32.totalorder %s81, %s95
    %p97 = scmp.eq.s32.totalorder %s15, 0
    %p98 = por %p96, %p97
    %s99 = ssub.s32 %s16, %s28
    %s100 = ssub.s32 %s17, %s24
    %s101 = sor.u32 %s99, %s100
    %p102 = scmp.eq.s32.totalorder %s101, 0
    %s104 = sadd.s32 %s103, 1
    %s105 = scalar_select %p102, %s103, %s104
    %p108 = pneg %p102
    %p109 = scmp.eq.s32.totalorder %s9, 1
    %p110 = por %p108, %p109
    %p111 = scmp.ne.s32.totalorder %s103, %s106
    %p112 = scmp.eq.s32.totalorder %s9, 0
    %p113 = por %p111, %p112
    %p114 = scmp.ne.s32.totalorder %s103, %s106
    %p115 = scmp.eq.s32.totalorder %s14, 1
    %p116 = por %p114, %p115
    %p117 = scmp.ne.s32.totalorder %s106, %s107
    %p118 = scmp.eq.s32.totalorder %s14, 0
    %p119 = por %p117, %p118
    %p120 = scmp.ne.s32.totalorder %s106, %s107
    %p121 = scmp.eq.s32.totalorder %s15, 1
    %p122 = por %p120, %p121
    %p124 = scmp.ne.s32.totalorder %s107, %s123
    %p125 = scmp.eq.s32.totalorder %s15, 0
    %p126 = por %p124, %p125
    %p127 = scmp.le.s32.totalorder 1, %s9
    %p128 = scmp.lt.s32.totalorder %s9, 3
    %p129 = pnand %p127, %p128
    %p130 = pneg %p129
    // Predicated region
    $region9: #{conv_layer_forward.3} parent=5 // pred_check
      _
    $region10: #{conv_layer_forward.3} parent=5 // pred_check_branch
      %132 = sbr.rel (%p129) target = $region12
    $region11: #{conv_layer_forward.3} parent=5 // pred_region
      %s133 = ssub.s32 %s9, 1
      // Predicated region
      $region13: #{conv_layer_forward.3} parent=11 // pred_check
        %p134 = pneg %p70
      $region14: #{conv_layer_forward.3} parent=11 // pred_check_branch
        %136 = sbr.rel (%p134) target = $region16
      $region15: #{conv_layer_forward.3} parent=11 // pred_region
        _
      $region16: #{conv_layer_forward.3} parent=11 // pred_fallthru
        _
      // Predicated region
      $region17: #{conv_layer_forward.3} parent=11 // pred_check
        %p137 = pneg %p91
      $region18: #{conv_layer_forward.3} parent=11 // pred_check_branch
        %139 = sbr.rel (%p137) target = $region20
      $region19: #{conv_layer_forward.3} parent=11 // pred_region
        _
      $region20: #{conv_layer_forward.3} parent=11 // pred_fallthru
        _
    $region12: #{conv_layer_forward.3} parent=5 // pred_fallthru
      _
    %p140 = scmp.lt.s32.totalorder %s9, 2
    // Predicated region
    $region21: #{conv_layer_forward.3} parent=5 // pred_check
      %p141 = pneg %p140
    $region22: #{conv_layer_forward.3} parent=5 // pred_check_branch
      %143 = sbr.rel (%p141) target = $region24
    $region23: #{conv_layer_forward.3} parent=5 // pred_region
      // Predicated region
      $region25: #{conv_layer_forward.3} parent=23 // pred_check
        %p144 = pneg %p43
      $region26: #{conv_layer_forward.3} parent=23 // pred_check_branch
        %146 = sbr.rel (%p144) target = $region28
      $region27: #{conv_layer_forward.3} parent=23 // pred_region
        %s147 = smul.u32 45, %s16
        %p148 = scmp.lt.s32.totalorder %s147, 89
        %s149 = scalar_select %p148, %s147, 89
        %p150 = scmp.lt.s32.totalorder %s17, 0
        %s151 = scalar_select %p150, %s17, 0
        %s152 = sadd.s32 %s151, %s149
        %s153 = smul.addr %s152, 8
        %s154 = scalar_lea.vmem %s0, %s153
        %s155 = smul.u32 45, %s16
      $region28: #{conv_layer_forward.3} parent=23 // pred_fallthru
        _
    $region24: #{conv_layer_forward.3} parent=5 // pred_fallthru
      _
    %p156 = scmp.le.s32.totalorder 1, %s9
    %p157 = scmp.lt.s32.totalorder %s9, 3
    %p158 = pnand %p156, %p157
    %p159 = pneg %p158
    // Predicated region
    $region29: #{conv_layer_forward.3} parent=5 // pred_check
      _
    $region30: #{conv_layer_forward.3} parent=5 // pred_check_branch
      %161 = sbr.rel (%p158) target = $region32
    $region31: #{conv_layer_forward.3} parent=5 // pred_region
      %s162 = ssub.s32 %s9, 1
      %s163 = smul.u32 45, %s18
      %p164 = scmp.lt.s32.totalorder %s163, 89
      %s165 = scalar_select %p164, %s163, 89
      %p166 = scmp.lt.s32.totalorder %s19, 0
      %s167 = scalar_select %p166, %s19, 0
      %s168 = sadd.s32 %s167, %s165
      %s169 = smul.addr %s168, 8
      %s170 = scalar_lea.vmem %s0, %s169
      %p171 = pneg %p49
      %p172 = pneg %p46
      %p173 = pneg %p70
      %p174 = pneg %p67
      %p175 = pneg %p91
      %p176 = pneg %p88
      %p177 = pneg %p119
      %p178 = pneg %p116
      %s179 = smul.u32 45, %s18
      %p180 = scmp.lt.s32.totalorder %s179, 89
      %s181 = scalar_select %p180, %s179, 89
      %p182 = scmp.lt.s32.totalorder %s19, 0
      %s183 = scalar_select %p182, %s19, 0
      %s184 = sadd.s32 %s183, %s181
      %s185 = smul.addr %s184, 8
      %s186 = scalar_lea.vmem %s3, %s185
      %s187 = smul.u32 45, %s18
      %p188 = scmp.lt.s32.totalorder %s187, 89
      %s189 = scalar_select %p188, %s187, 89
      %p190 = scmp.lt.s32.totalorder %s19, 0
      %s191 = scalar_select %p190, %s19, 0
      %s192 = sadd.s32 %s191, %s189
      %s193 = smul.addr %s192, 8
      %s194 = scalar_lea.vmem %s0, %s193
      %s195 = smul.u32 45, %s18
      %s196 = smul.u32 45, %s18
      %p197 = scmp.lt.s32.totalorder %s196, 89
      %s198 = scalar_select %p197, %s196, 89
      %p199 = scmp.lt.s32.totalorder %s19, 0
      %s200 = scalar_select %p199, %s19, 0
      %s201 = sadd.s32 %s200, %s198
      %s202 = smul.addr %s201, 8
      %s203 = scalar_lea.vmem %s3, %s202
      %s204 = smul.u32 45, %s18
      %s205 = smul.u32 %s19, 128
      %s206 = sshra.s32 %s205, 7
      %s207 = sand.u32 %s205, 127
      %s208 = scalar_lea.vmem %s1, %s206
      %v209 = vld [vmem:[%s208] sm:$0x1]
      %s210 = scalar_lea.vmem %s2, %s206
      %v211 = vld [vmem:[%s210] sm:$0x1]
      %v212 = vld [vmem:[%s194] sm:$0xff]
      %v213 = vld [vmem:[%s194 + $0x8] sm:$0xff]
      %v214 = vld [vmem:[%s194 + $0x10] sm:$0xff]
      %v215 = vld [vmem:[%s194 + $0x18] sm:$0xff]
      %v216 = vld [vmem:[%s194 + $0x20] sm:$0xff]
      %v217 = vld [vmem:[%s194 + $0x28] sm:$0xff]
      %v218 = vld [vmem:[%s194 + $0x30] sm:$0xff]
      %v219 = vld [vmem:[%s194 + $0x38] sm:$0xff]
      %v220 = vld [vmem:[%s194 + $0x40] sm:$0xff]
      %v221 = vld [vmem:[%s194 + $0x48] sm:$0xff]
      %v222 = vld [vmem:[%s194 + $0x50] sm:$0xff]
      %v223 = vld [vmem:[%s194 + $0x58] sm:$0xff]
      %v224 = vld [vmem:[%s194 + $0x60] sm:$0xff]
      %v225 = vld [vmem:[%s194 + $0x68] sm:$0xff]
      %v226 = vld [vmem:[%s194 + $0x70] sm:$0xff]
      %v227 = vld [vmem:[%s194 + $0x78] sm:$0xff]
      %v228 = vld [vmem:[%s194 + $0x80] sm:$0xff]
      %v229 = vld [vmem:[%s194 + $0x88] sm:$0xff]
      %v230 = vld [vmem:[%s194 + $0x90] sm:$0xff]
      %v231 = vld [vmem:[%s194 + $0x98] sm:$0xff]
      %v232 = vld [vmem:[%s194 + $0xa0] sm:$0xff]
      %v233 = vld [vmem:[%s194 + $0xa8] sm:$0xff]
      %v234 = vld [vmem:[%s194 + $0xb0] sm:$0xff]
      %v235 = vld [vmem:[%s194 + $0xb8] sm:$0xff]
      %v236 = vld [vmem:[%s194 + $0xc0] sm:$0xff]
      %v237 = vld [vmem:[%s194 + $0xc8] sm:$0xff]
      %v238 = vld [vmem:[%s194 + $0xd0] sm:$0xff]
      %v239 = vld [vmem:[%s194 + $0xd8] sm:$0xff]
      %v240 = vld [vmem:[%s194 + $0xe0] sm:$0xff]
      %v241 = vld [vmem:[%s194 + $0xe8] sm:$0xff]
      %v242 = vld [vmem:[%s194 + $0xf0] sm:$0xff]
      %v243 = vld [vmem:[%s194 + $0xf8] sm:$0xff]
      %v244 = vld [vmem:[%s194 + $0x100] sm:$0xff]
      %v245 = vld [vmem:[%s194 + $0x108] sm:$0xff]
      %v246 = vld [vmem:[%s194 + $0x110] sm:$0xff]
      %v247 = vld [vmem:[%s194 + $0x118] sm:$0xff]
      %v248 = vld [vmem:[%s194 + $0x120] sm:$0xff]
      %v249 = vld [vmem:[%s194 + $0x128] sm:$0xff]
      %v250 = vld [vmem:[%s194 + $0x130] sm:$0xff]
      %v251 = vld [vmem:[%s194 + $0x138] sm:$0xff]
      %v252 = vld [vmem:[%s194 + $0x140] sm:$0xff]
      %v253 = vld [vmem:[%s194 + $0x148] sm:$0xff]
      %v254 = vld [vmem:[%s194 + $0x150] sm:$0xff]
      %v255 = vld [vmem:[%s194 + $0x158] sm:$0xff]
      %v256 = vld [vmem:[%s194 + $0x160] sm:$0xff]
      %v258 = vlaneseq
      %v259 = vshrl.u32 %v258, 7
      %v260 = vsub.s32 0, %v259
      %v261 = vrot.slane %v209, %v260
      %v263 = vmul.f32 %v212, %v261
      %v264 = vmul.f32 %v213, %v261
      %v265 = vmul.f32 %v214, %v261
      %v266 = vmul.f32 %v215, %v261
      %v267 = vmul.f32 %v216, %v261
      %v268 = vmul.f32 %v217, %v261
      %v269 = vmul.f32 %v218, %v261
      %v270 = vmul.f32 %v219, %v261
      %v271 = vmul.f32 %v220, %v261
      %v272 = vmul.f32 %v221, %v261
      %v273 = vmul.f32 %v222, %v261
      %v274 = vmul.f32 %v223, %v261
      %v275 = vmul.f32 %v224, %v261
      %v276 = vmul.f32 %v225, %v261
      %v277 = vmul.f32 %v226, %v261
      %v278 = vmul.f32 %v227, %v261
      %v279 = vmul.f32 %v228, %v261
      %v280 = vmul.f32 %v229, %v261
      %v281 = vmul.f32 %v230, %v261
      %v282 = vmul.f32 %v231, %v261
      %v283 = vmul.f32 %v232, %v261
      %v284 = vmul.f32 %v233, %v261
      %v285 = vmul.f32 %v234, %v261
      %v286 = vmul.f32 %v235, %v261
      %v287 = vmul.f32 %v236, %v261
      %v288 = vmul.f32 %v237, %v261
      %v289 = vmul.f32 %v238, %v261
      %v290 = vmul.f32 %v239, %v261
      %v291 = vmul.f32 %v240, %v261
      %v292 = vmul.f32 %v241, %v261
      %v293 = vmul.f32 %v242, %v261
      %v294 = vmul.f32 %v243, %v261
      %v295 = vmul.f32 %v244, %v261
      %v296 = vmul.f32 %v245, %v261
      %v297 = vmul.f32 %v246, %v261
      %v298 = vmul.f32 %v247, %v261
      %v299 = vmul.f32 %v248, %v261
      %v300 = vmul.f32 %v249, %v261
      %v301 = vmul.f32 %v250, %v261
      %v302 = vmul.f32 %v251, %v261
      %v303 = vmul.f32 %v252, %v261
      %v304 = vmul.f32 %v253, %v261
      %v305 = vmul.f32 %v254, %v261
      %v306 = vmul.f32 %v255, %v261
      %v307 = vmul.f32 %v256, %v261
      %v309 = vlaneseq
      %v310 = vshrl.u32 %v309, 7
      %v311 = vsub.s32 0, %v310
      %v312 = vrot.slane %v211, %v311
      %v314 = vadd.f32 %v263, %v312
      %v315 = vadd.f32 %v264, %v312
      %v316 = vadd.f32 %v265, %v312
      %v317 = vadd.f32 %v266, %v312
      %v318 = vadd.f32 %v267, %v312
      %v319 = vadd.f32 %v268, %v312
      %v320 = vadd.f32 %v269, %v312
      %v321 = vadd.f32 %v270, %v312
      %v322 = vadd.f32 %v271, %v312
      %v323 = vadd.f32 %v272, %v312
      %v324 = vadd.f32 %v273, %v312
      %v325 = vadd.f32 %v274, %v312
      %v326 = vadd.f32 %v275, %v312
      %v327 = vadd.f32 %v276, %v312
      %v328 = vadd.f32 %v277, %v312
      %v329 = vadd.f32 %v278, %v312
      %v330 = vadd.f32 %v279, %v312
      %v331 = vadd.f32 %v280, %v312
      %v332 = vadd.f32 %v281, %v312
      %v333 = vadd.f32 %v282, %v312
      %v334 = vadd.f32 %v283, %v312
      %v335 = vadd.f32 %v284, %v312
      %v336 = vadd.f32 %v285, %v312
      %v337 = vadd.f32 %v286, %v312
      %v338 = vadd.f32 %v287, %v312
      %v339 = vadd.f32 %v288, %v312
      %v340 = vadd.f32 %v289, %v312
      %v341 = vadd.f32 %v290, %v312
      %v342 = vadd.f32 %v291, %v312
      %v343 = vadd.f32 %v292, %v312
      %v344 = vadd.f32 %v293, %v312
      %v345 = vadd.f32 %v294, %v312
      %v346 = vadd.f32 %v295, %v312
      %v347 = vadd.f32 %v296, %v312
      %v348 = vadd.f32 %v297, %v312
      %v349 = vadd.f32 %v298, %v312
      %v350 = vadd.f32 %v299, %v312
      %v351 = vadd.f32 %v300, %v312
      %v352 = vadd.f32 %v301, %v312
      %v353 = vadd.f32 %v302, %v312
      %v354 = vadd.f32 %v303, %v312
      %v355 = vadd.f32 %v304, %v312
      %v356 = vadd.f32 %v305, %v312
      %v357 = vadd.f32 %v306, %v312
      %v358 = vadd.f32 %v307, %v312
      %v359 = vmax.f32 %v314, 0.0
      %v360 = vmax.f32 %v315, 0.0
      %v361 = vmax.f32 %v316, 0.0
      %v362 = vmax.f32 %v317, 0.0
      %v363 = vmax.f32 %v318, 0.0
      %v364 = vmax.f32 %v319, 0.0
      %v365 = vmax.f32 %v320, 0.0
      %v366 = vmax.f32 %v321, 0.0
      %v367 = vmax.f32 %v322, 0.0
      %v368 = vmax.f32 %v323, 0.0
      %v369 = vmax.f32 %v324, 0.0
      %v370 = vmax.f32 %v325, 0.0
      %v371 = vmax.f32 %v326, 0.0
      %v372 = vmax.f32 %v327, 0.0
      %v373 = vmax.f32 %v328, 0.0
      %v374 = vmax.f32 %v329, 0.0
      %v375 = vmax.f32 %v330, 0.0
      %v376 = vmax.f32 %v331, 0.0
      %v377 = vmax.f32 %v332, 0.0
      %v378 = vmax.f32 %v333, 0.0
      %v379 = vmax.f32 %v334, 0.0
      %v380 = vmax.f32 %v335, 0.0
      %v381 = vmax.f32 %v336, 0.0
      %v382 = vmax.f32 %v337, 0.0
      %v383 = vmax.f32 %v338, 0.0
      %v384 = vmax.f32 %v339, 0.0
      %v385 = vmax.f32 %v340, 0.0
      %v386 = vmax.f32 %v341, 0.0
      %v387 = vmax.f32 %v342, 0.0
      %v388 = vmax.f32 %v343, 0.0
      %v389 = vmax.f32 %v344, 0.0
      %v390 = vmax.f32 %v345, 0.0
      %v391 = vmax.f32 %v346, 0.0
      %v392 = vmax.f32 %v347, 0.0
      %v393 = vmax.f32 %v348, 0.0
      %v394 = vmax.f32 %v349, 0.0
      %v395 = vmax.f32 %v350, 0.0
      %v396 = vmax.f32 %v351, 0.0
      %v397 = vmax.f32 %v352, 0.0
      %v398 = vmax.f32 %v353, 0.0
      %v399 = vmax.f32 %v354, 0.0
      %v400 = vmax.f32 %v355, 0.0
      %v401 = vmax.f32 %v356, 0.0
      %v402 = vmax.f32 %v357, 0.0
      %v403 = vmax.f32 %v358, 0.0
      %404 = vst [vmem:[%s203] sm:$0xff] %v359
      %405 = vst [vmem:[%s203 + $0x8] sm:$0xff] %v360
      %406 = vst [vmem:[%s203 + $0x10] sm:$0xff] %v361
      %407 = vst [vmem:[%s203 + $0x18] sm:$0xff] %v362
      %408 = vst [vmem:[%s203 + $0x20] sm:$0xff] %v363
      %409 = vst [vmem:[%s203 + $0x28] sm:$0xff] %v364
      %410 = vst [vmem:[%s203 + $0x30] sm:$0xff] %v365
      %411 = vst [vmem:[%s203 + $0x38] sm:$0xff] %v366
      %412 = vst [vmem:[%s203 + $0x40] sm:$0xff] %v367
      %413 = vst [vmem:[%s203 + $0x48] sm:$0xff] %v368
      %414 = vst [vmem:[%s203 + $0x50] sm:$0xff] %v369
      %415 = vst [vmem:[%s203 + $0x58] sm:$0xff] %v370
      %416 = vst [vmem:[%s203 + $0x60] sm:$0xff] %v371
      %417 = vst [vmem:[%s203 + $0x68] sm:$0xff] %v372
      %418 = vst [vmem:[%s203 + $0x70] sm:$0xff] %v373
      %419 = vst [vmem:[%s203 + $0x78] sm:$0xff] %v374
      %420 = vst [vmem:[%s203 + $0x80] sm:$0xff] %v375
      %421 = vst [vmem:[%s203 + $0x88] sm:$0xff] %v376
      %422 = vst [vmem:[%s203 + $0x90] sm:$0xff] %v377
      %423 = vst [vmem:[%s203 + $0x98] sm:$0xff] %v378
      %424 = vst [vmem:[%s203 + $0xa0] sm:$0xff] %v379
      %425 = vst [vmem:[%s203 + $0xa8] sm:$0xff] %v380
      %426 = vst [vmem:[%s203 + $0xb0] sm:$0xff] %v381
      %427 = vst [vmem:[%s203 + $0xb8] sm:$0xff] %v382
      %428 = vst [vmem:[%s203 + $0xc0] sm:$0xff] %v383
      %429 = vst [vmem:[%s203 + $0xc8] sm:$0xff] %v384
      %430 = vst [vmem:[%s203 + $0xd0] sm:$0xff] %v385
      %431 = vst [vmem:[%s203 + $0xd8] sm:$0xff] %v386
      %432 = vst [vmem:[%s203 + $0xe0] sm:$0xff] %v387
      %433 = vst [vmem:[%s203 + $0xe8] sm:$0xff] %v388
      %434 = vst [vmem:[%s203 + $0xf0] sm:$0xff] %v389
      %435 = vst [vmem:[%s203 + $0xf8] sm:$0xff] %v390
      %436 = vst [vmem:[%s203 + $0x100] sm:$0xff] %v391
      %437 = vst [vmem:[%s203 + $0x108] sm:$0xff] %v392
      %438 = vst [vmem:[%s203 + $0x110] sm:$0xff] %v393
      %439 = vst [vmem:[%s203 + $0x118] sm:$0xff] %v394
      %440 = vst [vmem:[%s203 + $0x120] sm:$0xff] %v395
      %441 = vst [vmem:[%s203 + $0x128] sm:$0xff] %v396
      %442 = vst [vmem:[%s203 + $0x130] sm:$0xff] %v397
      %443 = vst [vmem:[%s203 + $0x138] sm:$0xff] %v398
      %444 = vst [vmem:[%s203 + $0x140] sm:$0xff] %v399
      %445 = vst [vmem:[%s203 + $0x148] sm:$0xff] %v400
      %446 = vst [vmem:[%s203 + $0x150] sm:$0xff] %v401
      %447 = vst [vmem:[%s203 + $0x158] sm:$0xff] %v402
      %448 = vst [vmem:[%s203 + $0x160] sm:$0xff] %v403
      %s449 = smul.u32 45, %s18
      %p450 = scmp.lt.s32.totalorder %s449, 89
      %s451 = scalar_select %p450, %s449, 89
      %p452 = scmp.lt.s32.totalorder %s19, 0
      %s453 = scalar_select %p452, %s19, 0
      %s454 = sadd.s32 %s453, %s451
      %s455 = smul.addr %s454, 8
      %s456 = scalar_lea.vmem %s3, %s455
      // Predicated region
      $region33: #{conv_layer_forward.3} parent=31 // pred_check
        %p457 = pneg %p116
      $region34: #{conv_layer_forward.3} parent=31 // pred_check_branch
        %459 = sbr.rel (%p457) target = $region36
      $region35: #{conv_layer_forward.3} parent=31 // pred_region
        %s460 = smul.u32 45, %s18
      $region36: #{conv_layer_forward.3} parent=31 // pred_fallthru
        _
    $region32: #{conv_layer_forward.3} parent=5 // pred_fallthru
      _
    %p461 = scmp.le.s32.totalorder 2, %s9
    // Predicated region
    $region37: #{conv_layer_forward.3} parent=5 // pred_check
      %p462 = pneg %p461
    $region38: #{conv_layer_forward.3} parent=5 // pred_check_branch
      %464 = sbr.rel (%p462) target = $region40
    $region39: #{conv_layer_forward.3} parent=5 // pred_region
      %s465 = ssub.s32 %s9, 2
      // Predicated region
      $region41: #{conv_layer_forward.3} parent=39 // pred_check
        %p466 = pneg %p122
      $region42: #{conv_layer_forward.3} parent=39 // pred_check_branch
        %468 = sbr.rel (%p466) target = $region44
      $region43: #{conv_layer_forward.3} parent=39 // pred_region
        %s469 = smul.u32 45, %s20
        %p470 = scmp.lt.s32.totalorder %s469, 89
        %s471 = scalar_select %p470, %s469, 89
        %p472 = scmp.lt.s32.totalorder %s21, 0
        %s473 = scalar_select %p472, %s21, 0
        %s474 = sadd.s32 %s473, %s471
        %s475 = smul.addr %s474, 8
        %s476 = scalar_lea.vmem %s3, %s475
      $region44: #{conv_layer_forward.3} parent=39 // pred_fallthru
        _
    $region40: #{conv_layer_forward.3} parent=5 // pred_fallthru
      _
  $region6: #{conv_layer_forward.3} parent=0 // loop_footer
    %s13 = sadd.s32 1, %s9
  $region7: #{conv_layer_forward.3} parent=0 // loop_footer_branch
    %8 = sbr.rel target = $region3
  $region8: #{conv_layer_forward.3} parent=0 // loop_exit
    _

// kernel: conv_layer_forward.2
$region0: #{conv_layer_forward.2}
  #allocation0 [shape = 'u32[]', space=smem, size = 0x4, offset = 0x4, fixed_abs, tag = 'smem constant byte address 0x4 - core index']
  #allocation1 [shape = 'u32[144,128]{1,0:T(1,128)}', space=vmem, size = 0x12000, scoped, tag = 'internal scratch']
  #allocation2 [shape = 'f32[400,8]{1,0:T(8,128)}', space=vmem, size = 0x32000, scoped, tag = 'scratch operand']
  %s0 = inlined_call_operand.vmem [shape: f32[760,8], index: 0, kind: input, shape index: {}, may-alias: {0,1}]
  %s1 = inlined_call_operand.vmem [shape: f32[760,8], index: 1, kind: input, shape index: {}, may-alias: {0,1}]
  %s2 = inlined_call_operand.vmem [shape: f32[9,8,128], index: 2, kind: input, shape index: {}]
  %s3 = inlined_call_operand.vmem [shape: f32[720,1], index: 3, kind: input, shape index: {}]
  %s4 = inlined_call_operand.vmem [shape: f32[720,128], index: 4, kind: output, shape index: {0}]
  %s5 = inlined_call_operand.vmem [shape: f32[16,128], index: 5, kind: output, shape index: {1}]
  %s6 = inlined_call_operand.vmem [shape: f32[16,128], index: 6, kind: output, shape index: {2}]
  %7 = xla_tuple %s4, %s5, %s6
  %s8 = sld [smem:[#allocation0]]
  $region65: #{conv_layer_forward.2} parent=0
    _
  %s10 = ssub.s32 1, %s8
  %s11 = scalar_select 0, %s10, %s8
  loop: start=0, step=1, limit=4
  $region2: #{conv_layer_forward.2} parent=0 // loop_pre_header
    _
  $region3: #{conv_layer_forward.2} parent=0 // loop_header
    %s13 = sphi 0, %s17
    %p14 = scmp.ge.s32.totalorder %s13, 4
    %s20 = sphi 0, %s32
    %s21 = sphi 0, %s28
    %s22 = sphi 0, %s20
    %s23 = sphi 0, %s21
    %s24 = sphi 0, %s22
    %s25 = sphi 0, %s23
    %s35 = sphi 0, %s37
    %s38 = sphi 0, %s35
    %s39 = sphi 0, %s38
    %s55 = sphi 0, %s39
    %s65 = sphi 0, %s67
    %s68 = sphi 0, %s65
    %s69 = sphi 0, %s68
    %s85 = sphi 0, %s69
    %s91 = sphi 0, %s93
    %s94 = sphi 0, %s91
    %s95 = sphi 0, %s94
    %s111 = sphi 0, %s95
    %s117 = sphi 0, %s119
    %s120 = sphi 0, %s117
    %s121 = sphi 0, %s120
    %s137 = sphi 0, %s121
    %s145 = sphi 0, %s147
    %s148 = sphi 0, %s145
    %s149 = sphi 0, %s148
    %s165 = sphi 0, %s149
    %s173 = sphi 0, %s175
    %s176 = sphi 0, %s173
    %s177 = sphi 0, %s176
    %s193 = sphi 0, %s177
    %s201 = sphi 0, %s203
    %s204 = sphi 0, %s201
    %s205 = sphi 0, %s204
    %s221 = sphi 0, %s205
  $region4: #{conv_layer_forward.2} parent=0 // loop_header_branch
    %16 = sbr.rel (%p14) target = $region8
  $region5: #{conv_layer_forward.2} parent=0 // loop_body
    %s18 = ssub.s32 %s13, 1
    %s19 = ssub.s32 %s13, 2
    %s26 = sadd.s32 1, %s21
    %p27 = scmp.ge.s32.totalorder %s26, 1
    %s28 = scalar_select %p27, 0, %s26
    %s29 = sadd.s32 1, %s20
    %s30 = scalar_select %p27, %s29, %s20
    %p31 = scmp.ge.s32.totalorder %s30, 2
    %s32 = scalar_select %p31, 0, %s30
    %s33 = ssub.s32 %s20, %s32
    %p34 = scmp.eq.s32.totalorder %s33, 0
    %s36 = sadd.s32 %s35, 1
    %s37 = scalar_select %p34, %s35, %s36
    %p40 = pneg %p34
    %p41 = scmp.eq.s32.totalorder %s13, 1
    %p42 = por %p40, %p41
    %p43 = scmp.ne.s32.totalorder %s35, %s38
    %p44 = scmp.eq.s32.totalorder %s13, 0
    %p45 = por %p43, %p44
    %p46 = scmp.ne.s32.totalorder %s35, %s38
    %p47 = scmp.eq.s32.totalorder %s18, 1
    %p48 = por %p46, %p47
    %p49 = scmp.ne.s32.totalorder %s38, %s39
    %p50 = scmp.eq.s32.totalorder %s18, 0
    %p51 = por %p49, %p50
    %p52 = scmp.ne.s32.totalorder %s38, %s39
    %p53 = scmp.eq.s32.totalorder %s19, 1
    %p54 = por %p52, %p53
    %p56 = scmp.ne.s32.totalorder %s39, %s55
    %p57 = scmp.eq.s32.totalorder %s19, 0
    %p58 = por %p56, %p57
    %s59 = sadd.s32 %s20, 1
    %s60 = smul.u32 %s59, 9
    %s61 = sadd.s32 %s32, 1
    %s62 = smul.u32 %s61, 9
    %s63 = ssub.s32 %s60, %s62
    %p64 = scmp.eq.s32.totalorder %s63, 0
    %s66 = sadd.s32 %s65, 1
    %s67 = scalar_select %p64, %s65, %s66
    %p70 = pneg %p64
    %p71 = scmp.eq.s32.totalorder %s13, 1
    %p72 = por %p70, %p71
    %p73 = scmp.ne.s32.totalorder %s65, %s68
    %p74 = scmp.eq.s32.totalorder %s13, 0
    %p75 = por %p73, %p74
    %p76 = scmp.ne.s32.totalorder %s65, %s68
    %p77 = scmp.eq.s32.totalorder %s18, 1
    %p78 = por %p76, %p77
    %p79 = scmp.ne.s32.totalorder %s68, %s69
    %p80 = scmp.eq.s32.totalorder %s18, 0
    %p81 = por %p79, %p80
    %p82 = scmp.ne.s32.totalorder %s68, %s69
    %p83 = scmp.eq.s32.totalorder %s19, 1
    %p84 = por %p82, %p83
    %p86 = scmp.ne.s32.totalorder %s69, %s85
    %p87 = scmp.eq.s32.totalorder %s19, 0
    %p88 = por %p86, %p87
    %s89 = ssub.s32 %s21, %s28
    %p90 = scmp.eq.s32.totalorder %s89, 0
    %s92 = sadd.s32 %s91, 1
    %s93 = scalar_select %p90, %s91, %s92
    %p96 = pneg %p90
    %p97 = scmp.eq.s32.totalorder %s13, 1
    %p98 = por %p96, %p97
    %p99 = scmp.ne.s32.totalorder %s91, %s94
    %p100 = scmp.eq.s32.totalorder %s13, 0
    %p101 = por %p99, %p100
    %p102 = scmp.ne.s32.totalorder %s91, %s94
    %p103 = scmp.eq.s32.totalorder %s18, 1
    %p104 = por %p102, %p103
    %p105 = scmp.ne.s32.totalorder %s94, %s95
    %p106 = scmp.eq.s32.totalorder %s18, 0
    %p107 = por %p105, %p106
    %p108 = scmp.ne.s32.totalorder %s94, %s95
    %p109 = scmp.eq.s32.totalorder %s19, 1
    %p110 = por %p108, %p109
    %p112 = scmp.ne.s32.totalorder %s95, %s111
    %p113 = scmp.eq.s32.totalorder %s19, 0
    %p114 = por %p112, %p113
    %s115 = ssub.s32 %s20, %s32
    %p116 = scmp.eq.s32.totalorder %s115, 0
    %s118 = sadd.s32 %s117, 1
    %s119 = scalar_select %p116, %s117, %s118
    %p122 = pneg %p116
    %p123 = scmp.eq.s32.totalorder %s13, 1
    %p124 = por %p122, %p123
    %p125 = scmp.ne.s32.totalorder %s117, %s120
    %p126 = scmp.eq.s32.totalorder %s13, 0
    %p127 = por %p125, %p126
    %p128 = scmp.ne.s32.totalorder %s117, %s120
    %p129 = scmp.eq.s32.totalorder %s18, 1
    %p130 = por %p128, %p129
    %p131 = scmp.ne.s32.totalorder %s120, %s121
    %p132 = scmp.eq.s32.totalorder %s18, 0
    %p133 = por %p131, %p132
    %p134 = scmp.ne.s32.totalorder %s120, %s121
    %p135 = scmp.eq.s32.totalorder %s19, 1
    %p136 = por %p134, %p135
    %p138 = scmp.ne.s32.totalorder %s121, %s137
    %p139 = scmp.eq.s32.totalorder %s19, 0
    %p140 = por %p138, %p139
    %s141 = ssub.s32 %s20, %s32
    %s142 = ssub.s32 %s21, %s28
    %s143 = sor.u32 %s141, %s142
    %p144 = scmp.eq.s32.totalorder %s143, 0
    %s146 = sadd.s32 %s145, 1
    %s147 = scalar_select %p144, %s145, %s146
    %p150 = pneg %p144
    %p151 = scmp.eq.s32.totalorder %s13, 1
    %p152 = por %p150, %p151
    %p153 = scmp.ne.s32.totalorder %s145, %s148
    %p154 = scmp.eq.s32.totalorder %s13, 0
    %p155 = por %p153, %p154
    %p156 = scmp.ne.s32.totalorder %s145, %s148
    %p157 = scmp.eq.s32.totalorder %s18, 1
    %p158 = por %p156, %p157
    %p159 = scmp.ne.s32.totalorder %s148, %s149
    %p160 = scmp.eq.s32.totalorder %s18, 0
    %p161 = por %p159, %p160
    %p162 = scmp.ne.s32.totalorder %s148, %s149
    %p163 = scmp.eq.s32.totalorder %s19, 1
    %p164 = por %p162, %p163
    %p166 = scmp.ne.s32.totalorder %s149, %s165
    %p167 = scmp.eq.s32.totalorder %s19, 0
    %p168 = por %p166, %p167
    %s169 = ssub.s32 %s20, %s32
    %s170 = ssub.s32 %s21, %s28
    %s171 = sor.u32 %s169, %s170
    %p172 = scmp.eq.s32.totalorder %s171, 0
    %s174 = sadd.s32 %s173, 1
    %s175 = scalar_select %p172, %s173, %s174
    %p178 = pneg %p172
    %p179 = scmp.eq.s32.totalorder %s13, 1
    %p180 = por %p178, %p179
    %p181 = scmp.ne.s32.totalorder %s173, %s176
    %p182 = scmp.eq.s32.totalorder %s13, 0
    %p183 = por %p181, %p182
    %p184 = scmp.ne.s32.totalorder %s173, %s176
    %p185 = scmp.eq.s32.totalorder %s18, 1
    %p186 = por %p184, %p185
    %p187 = scmp.ne.s32.totalorder %s176, %s177
    %p188 = scmp.eq.s32.totalorder %s18, 0
    %p189 = por %p187, %p188
    %p190 = scmp.ne.s32.totalorder %s176, %s177
    %p191 = scmp.eq.s32.totalorder %s19, 1
    %p192 = por %p190, %p191
    %p194 = scmp.ne.s32.totalorder %s177, %s193
    %p195 = scmp.eq.s32.totalorder %s19, 0
    %p196 = por %p194, %p195
    %s197 = ssub.s32 %s20, %s32
    %s198 = ssub.s32 %s21, %s28
    %s199 = sor.u32 %s197, %s198
    %p200 = scmp.eq.s32.totalorder %s199, 0
    %s202 = sadd.s32 %s201, 1
    %s203 = scalar_select %p200, %s201, %s202
    %p206 = pneg %p200
    %p207 = scmp.eq.s32.totalorder %s13, 1
    %p208 = por %p206, %p207
    %p209 = scmp.ne.s32.totalorder %s201, %s204
    %p210 = scmp.eq.s32.totalorder %s13, 0
    %p211 = por %p209, %p210
    %p212 = scmp.ne.s32.totalorder %s201, %s204
    %p213 = scmp.eq.s32.totalorder %s18, 1
    %p214 = por %p212, %p213
    %p215 = scmp.ne.s32.totalorder %s204, %s205
    %p216 = scmp.eq.s32.totalorder %s18, 0
    %p217 = por %p215, %p216
    %p218 = scmp.ne.s32.totalorder %s204, %s205
    %p219 = scmp.eq.s32.totalorder %s19, 1
    %p220 = por %p218, %p219
    %p222 = scmp.ne.s32.totalorder %s205, %s221
    %p223 = scmp.eq.s32.totalorder %s19, 0
    %p224 = por %p222, %p223
    %p225 = scmp.le.s32.totalorder 1, %s13
    %p226 = scmp.lt.s32.totalorder %s13, 3
    %p227 = pnand %p225, %p226
    %p228 = pneg %p227
    // Predicated region
    $region9: #{conv_layer_forward.2} parent=5 // pred_check
      _
    $region10: #{conv_layer_forward.2} parent=5 // pred_check_branch
      %230 = sbr.rel (%p227) target = $region12
    $region11: #{conv_layer_forward.2} parent=5 // pred_region
      %s231 = ssub.s32 %s13, 1
      // Predicated region
      $region13: #{conv_layer_forward.2} parent=11 // pred_check
        %p232 = pneg %p107
      $region14: #{conv_layer_forward.2} parent=11 // pred_check_branch
        %234 = sbr.rel (%p232) target = $region16
      $region15: #{conv_layer_forward.2} parent=11 // pred_region
        %p235 = scmp.lt.s32.totalorder %s23, 0
        %s236 = scalar_select %p235, %s23, 0
        %s237 = smul.addr %s236, 8
        %s238 = scalar_lea.vmem %s2, %s237
      $region16: #{conv_layer_forward.2} parent=11 // pred_fallthru
        _
    $region12: #{conv_layer_forward.2} parent=5 // pred_fallthru
      _
    %p239 = scmp.lt.s32.totalorder %s13, 2
    // Predicated region
    $region17: #{conv_layer_forward.2} parent=5 // pred_check
      %p240 = pneg %p239
    $region18: #{conv_layer_forward.2} parent=5 // pred_check_branch
      %242 = sbr.rel (%p240) target = $region20
    $region19: #{conv_layer_forward.2} parent=5 // pred_region
      // Predicated region
      $region21: #{conv_layer_forward.2} parent=19 // pred_check
        %p243 = pneg %p45
      $region22: #{conv_layer_forward.2} parent=19 // pred_check_branch
        %245 = sbr.rel (%p243) target = $region24
      $region23: #{conv_layer_forward.2} parent=19 // pred_region
        %s246 = smul.u32 45, %s20
        %s247 = ssub.s32 95, %s246
        %p248 = scmp.lt.s32.totalorder %s247, 45
        %s249 = scalar_select %p248, %s247, 45
        %s250 = smul.u32 128, %s249
        %p251 = scmp.lt.s32.totalorder %s246, 94
        %s252 = scalar_select %p251, %s246, 94
        %s253 = smul.addr %s252, 8
        %s254 = scalar_lea.vmem %s0, %s253
        %s255 = smul.u32 45, %s20
        %s256 = ssub.s32 95, %s255
        %p257 = scmp.lt.s32.totalorder %s256, 45
        %s258 = scalar_select %p257, %s256, 45
        %s259 = smul.u32 128, %s258
      $region24: #{conv_layer_forward.2} parent=19 // pred_fallthru
        _
      // Predicated region
      $region25: #{conv_layer_forward.2} parent=19 // pred_check
        %p260 = pneg %p75
      $region26: #{conv_layer_forward.2} parent=19 // pred_check_branch
        %262 = sbr.rel (%p260) target = $region28
      $region27: #{conv_layer_forward.2} parent=19 // pred_region
        %s263 = sadd.s32 %s20, 1
        %s264 = smul.u32 %s263, 9
        %s265 = smul.u32 5, %s264
        %p266 = scmp.lt.s32.totalorder %s265, 94
        %s267 = scalar_select %p266, %s265, 94
        %s268 = smul.addr %s267, 8
        %s269 = scalar_lea.vmem %s1, %s268
        %s270 = sadd.s32 %s20, 1
        %s271 = smul.u32 %s270, 9
        %s272 = smul.u32 5, %s271
      $region28: #{conv_layer_forward.2} parent=19 // pred_fallthru
        _
      // Predicated region
      $region29: #{conv_layer_forward.2} parent=19 // pred_check
        %p273 = pneg %p127
      $region30: #{conv_layer_forward.2} parent=19 // pred_check_branch
        %275 = sbr.rel (%p273) target = $region32
      $region31: #{conv_layer_forward.2} parent=19 // pred_region
        %s276 = smul.u32 45, %s20
        %p277 = scmp.lt.s32.totalorder %s276, 89
        %s278 = scalar_select %p277, %s276, 89
        %s279 = smul.addr %s278, 8
        %s280 = scalar_lea.vmem %s3, %s279
        %s281 = smul.u32 45, %s20
      $region32: #{conv_layer_forward.2} parent=19 // pred_fallthru
        _
    $region20: #{conv_layer_forward.2} parent=5 // pred_fallthru
      _
    %p282 = scmp.le.s32.totalorder 1, %s13
    %p283 = scmp.lt.s32.totalorder %s13, 3
    %p284 = pnand %p282, %p283
    %p285 = pneg %p284
    // Predicated region
    $region33: #{conv_layer_forward.2} parent=5 // pred_check
      _
    $region34: #{conv_layer_forward.2} parent=5 // pred_check_branch
      %287 = sbr.rel (%p284) target = $region36
    $region35: #{conv_layer_forward.2} parent=5 // pred_region
      %s288 = ssub.s32 %s13, 1
      %s289 = smul.u32 45, %s22
      %s290 = ssub.s32 95, %s289
      %p291 = scmp.lt.s32.totalorder %s290, 45
      %s292 = scalar_select %p291, %s290, 45
      %s293 = smul.u32 128, %s292
      %p294 = scmp.lt.s32.totalorder %s289, 94
      %s295 = scalar_select %p294, %s289, 94
      %s296 = smul.addr %s295, 8
      %s297 = scalar_lea.vmem %s0, %s296
      %p298 = pneg %p51
      %p299 = pneg %p48
      %s300 = sadd.s32 %s22, 1
      %s301 = smul.u32 %s300, 9
      %s302 = smul.u32 5, %s301
      %p303 = scmp.lt.s32.totalorder %s302, 94
      %s304 = scalar_select %p303, %s302, 94
      %s305 = smul.addr %s304, 8
      %s306 = scalar_lea.vmem %s1, %s305
      %p307 = pneg %p81
      %p308 = pneg %p78
      %p309 = scmp.lt.s32.totalorder %s23, 0
      %s310 = scalar_select %p309, %s23, 0
      %s311 = smul.addr %s310, 8
      %s312 = scalar_lea.vmem %s2, %s311
      %p313 = pneg %p107
      %p314 = pneg %p104
      %s315 = smul.u32 45, %s22
      %p316 = scmp.lt.s32.totalorder %s315, 89
      %s317 = scalar_select %p316, %s315, 89
      %s318 = smul.addr %s317, 8
      %s319 = scalar_lea.vmem %s3, %s318
      %p320 = pneg %p133
      %p321 = pneg %p130
      %p322 = pneg %p161
      %p323 = pneg %p158
      %s324 = smul.u32 45, %s22
      %p325 = scmp.lt.s32.totalorder %s324, 89
      %s326 = scalar_select %p325, %s324, 89
      %p327 = scmp.lt.s32.totalorder %s23, 0
      %s328 = scalar_select %p327, %s23, 0
      %s329 = sadd.s32 %s328, %s326
      %s330 = smul.addr %s329, 8
      %s331 = scalar_lea.vmem %s4, %s330
      %p332 = pneg %p189
      %p333 = pneg %p186
      %p334 = scmp.lt.s32.totalorder %s22, 1
      %s335 = scalar_select %p334, %s22, 1
      %p336 = scmp.lt.s32.totalorder %s23, 0
      %s337 = scalar_select %p336, %s23, 0
      %s338 = sadd.s32 %s337, %s335
      %s339 = smul.addr %s338, 8
      %s340 = scalar_lea.vmem %s5, %s339
      %p341 = pneg %p217
      %p342 = pneg %p214
      %p343 = scmp.lt.s32.totalorder %s22, 1
      %s344 = scalar_select %p343, %s22, 1
      %p345 = scmp.lt.s32.totalorder %s23, 0
      %s346 = scalar_select %p345, %s23, 0
      %s347 = sadd.s32 %s346, %s344
      %s348 = smul.addr %s347, 8
      %s349 = scalar_lea.vmem %s6, %s348
      %s350 = smul.u32 45, %s22
      %s351 = ssub.s32 95, %s350
      %p352 = scmp.lt.s32.totalorder %s351, 45
      %s353 = scalar_select %p352, %s351, 45
      %s354 = smul.u32 128, %s353
      %p355 = scmp.lt.s32.totalorder %s350, 94
      %s356 = scalar_select %p355, %s350, 94
      %s357 = smul.addr %s356, 8
      %s358 = scalar_lea.vmem %s0, %s357
      %s359 = smul.u32 45, %s22
      %s360 = ssub.s32 95, %s359
      %p361 = scmp.lt.s32.totalorder %s360, 45
      %s362 = scalar_select %p361, %s360, 45
      %s363 = smul.u32 128, %s362
      %s364 = sadd.s32 %s22, 1
      %s365 = smul.u32 %s364, 9
      %s366 = smul.u32 5, %s365
      %p367 = scmp.lt.s32.totalorder %s366, 94
      %s368 = scalar_select %p367, %s366, 94
      %s369 = smul.addr %s368, 8
      %s370 = scalar_lea.vmem %s1, %s369
      %s371 = sadd.s32 %s22, 1
      %s372 = smul.u32 %s371, 9
      %s373 = smul.u32 5, %s372
      %p374 = scmp.lt.s32.totalorder %s23, 0
      %s375 = scalar_select %p374, %s23, 0
      %s376 = smul.addr %s375, 8
      %s377 = scalar_lea.vmem %s2, %s376
      %s378 = smul.u32 45, %s22
      %p379 = scmp.lt.s32.totalorder %s378, 89
      %s380 = scalar_select %p379, %s378, 89
      %s381 = smul.addr %s380, 8
      %s382 = scalar_lea.vmem %s3, %s381
      %s383 = smul.u32 45, %s22
      %s384 = smul.u32 45, %s22
      %p385 = scmp.lt.s32.totalorder %s384, 89
      %s386 = scalar_select %p385, %s384, 89
      %p387 = scmp.lt.s32.totalorder %s23, 0
      %s388 = scalar_select %p387, %s23, 0
      %s389 = sadd.s32 %s388, %s386
      %s390 = smul.addr %s389, 8
      %s391 = scalar_lea.vmem %s4, %s390
      %s392 = smul.u32 45, %s22
      %p393 = scmp.lt.s32.totalorder %s22, 1
      %s394 = scalar_select %p393, %s22, 1
      %p395 = scmp.lt.s32.totalorder %s23, 0
      %s396 = scalar_select %p395, %s23, 0
      %s397 = sadd.s32 %s396, %s394
      %s398 = smul.addr %s397, 8
      %s399 = scalar_lea.vmem %s5, %s398
      %p400 = scmp.lt.s32.totalorder %s22, 1
      %s401 = scalar_select %p400, %s22, 1
      %p402 = scmp.lt.s32.totalorder %s23, 0
      %s403 = scalar_select %p402, %s23, 0
      %s404 = sadd.s32 %s403, %s401
      %s405 = smul.addr %s404, 8
      %s406 = scalar_lea.vmem %s6, %s405
      %v407 = vld [vmem:[%s358] sm:$0xff]
      %v408 = vld [vmem:[%s358 + $0x8] sm:$0xff]
      %v409 = vld [vmem:[%s358 + $0x10] sm:$0xff]
      %v410 = vld [vmem:[%s358 + $0x18] sm:$0xff]
      %v411 = vld [vmem:[%s358 + $0x20] sm:$0xff]
      %v412 = vld [vmem:[%s358 + $0x28] sm:$0xff]
      %v413 = vld [vmem:[%s358 + $0x30] sm:$0xff]
      %v414 = vld [vmem:[%s358 + $0x38] sm:$0xff]
      %v415 = vld [vmem:[%s358 + $0x40] sm:$0xff]
      %v416 = vld [vmem:[%s358 + $0x48] sm:$0xff]
      %v417 = vld [vmem:[%s358 + $0x50] sm:$0xff]
      %v418 = vld [vmem:[%s358 + $0x58] sm:$0xff]
      %v419 = vld [vmem:[%s358 + $0x60] sm:$0xff]
      %v420 = vld [vmem:[%s358 + $0x68] sm:$0xff]
      %v421 = vld [vmem:[%s358 + $0x70] sm:$0xff]
      %v422 = vld [vmem:[%s358 + $0x78] sm:$0xff]
      %v423 = vld [vmem:[%s358 + $0x80] sm:$0xff]
      %v424 = vld [vmem:[%s358 + $0x88] sm:$0xff]
      %v425 = vld [vmem:[%s358 + $0x90] sm:$0xff]
      %v426 = vld [vmem:[%s358 + $0x98] sm:$0xff]
      %v427 = vld [vmem:[%s358 + $0xa0] sm:$0xff]
      %v428 = vld [vmem:[%s358 + $0xa8] sm:$0xff]
      %v429 = vld [vmem:[%s358 + $0xb0] sm:$0xff]
      %v430 = vld [vmem:[%s358 + $0xb8] sm:$0xff]
      %v431 = vld [vmem:[%s358 + $0xc0] sm:$0xff]
      %v432 = vld [vmem:[%s358 + $0xc8] sm:$0xff]
      %v433 = vld [vmem:[%s358 + $0xd0] sm:$0xff]
      %v434 = vld [vmem:[%s358 + $0xd8] sm:$0xff]
      %v435 = vld [vmem:[%s358 + $0xe0] sm:$0xff]
      %v436 = vld [vmem:[%s358 + $0xe8] sm:$0xff]
      %v437 = vld [vmem:[%s358 + $0xf0] sm:$0xff]
      %v438 = vld [vmem:[%s358 + $0xf8] sm:$0xff]
      %v439 = vld [vmem:[%s358 + $0x100] sm:$0xff]
      %v440 = vld [vmem:[%s358 + $0x108] sm:$0xff]
      %v441 = vld [vmem:[%s358 + $0x110] sm:$0xff]
      %v442 = vld [vmem:[%s358 + $0x118] sm:$0xff]
      %v443 = vld [vmem:[%s358 + $0x120] sm:$0xff]
      %v444 = vld [vmem:[%s358 + $0x128] sm:$0xff]
      %v445 = vld [vmem:[%s358 + $0x130] sm:$0xff]
      %v446 = vld [vmem:[%s358 + $0x138] sm:$0xff]
      %v447 = vld [vmem:[%s358 + $0x140] sm:$0xff]
      %v448 = vld [vmem:[%s358 + $0x148] sm:$0xff]
      %v449 = vld [vmem:[%s358 + $0x150] sm:$0xff]
      %v450 = vld [vmem:[%s358 + $0x158] sm:$0xff]
      %v451 = vld [vmem:[%s358 + $0x160] sm:$0xff]
      %vm452 = vcmask 64512
      %453 = vst.msk [vmem:[#allocation2] sm:$0xff] %vm452, %v407
      %454 = vst.msk [vmem:[#allocation2 + $0x8] sm:$0xff] %vm452, %v408
      %455 = vst.msk [vmem:[#allocation2 + $0x10] sm:$0xff] %vm452, %v409
      %456 = vst.msk [vmem:[#allocation2 + $0x18] sm:$0xff] %vm452, %v410
      %457 = vst.msk [vmem:[#allocation2 + $0x20] sm:$0xff] %vm452, %v411
      %458 = vst.msk [vmem:[#allocation2 + $0x28] sm:$0xff] %vm452, %v412
      %459 = vst.msk [vmem:[#allocation2 + $0x30] sm:$0xff] %vm452, %v413
      %460 = vst.msk [vmem:[#allocation2 + $0x38] sm:$0xff] %vm452, %v414
      %461 = vst.msk [vmem:[#allocation2 + $0x40] sm:$0xff] %vm452, %v415
      %462 = vst.msk [vmem:[#allocation2 + $0x48] sm:$0xff] %vm452, %v416
      %463 = vst.msk [vmem:[#allocation2 + $0x50] sm:$0xff] %vm452, %v417
      %464 = vst.msk [vmem:[#allocation2 + $0x58] sm:$0xff] %vm452, %v418
      %465 = vst.msk [vmem:[#allocation2 + $0x60] sm:$0xff] %vm452, %v419
      %466 = vst.msk [vmem:[#allocation2 + $0x68] sm:$0xff] %vm452, %v420
      %467 = vst.msk [vmem:[#allocation2 + $0x70] sm:$0xff] %vm452, %v421
      %468 = vst.msk [vmem:[#allocation2 + $0x78] sm:$0xff] %vm452, %v422
      %469 = vst.msk [vmem:[#allocation2 + $0x80] sm:$0xff] %vm452, %v423
      %470 = vst.msk [vmem:[#allocation2 + $0x88] sm:$0xff] %vm452, %v424
      %471 = vst.msk [vmem:[#allocation2 + $0x90] sm:$0xff] %vm452, %v425
      %472 = vst.msk [vmem:[#allocation2 + $0x98] sm:$0xff] %vm452, %v426
      %473 = vst.msk [vmem:[#allocation2 + $0xa0] sm:$0xff] %vm452, %v427
      %474 = vst.msk [vmem:[#allocation2 + $0xa8] sm:$0xff] %vm452, %v428
      %475 = vst.msk [vmem:[#allocation2 + $0xb0] sm:$0xff] %vm452, %v429
      %476 = vst.msk [vmem:[#allocation2 + $0xb8] sm:$0xff] %vm452, %v430
      %477 = vst.msk [vmem:[#allocation2 + $0xc0] sm:$0xff] %vm452, %v431
      %478 = vst.msk [vmem:[#allocation2 + $0xc8] sm:$0xff] %vm452, %v432
      %479 = vst.msk [vmem:[#allocation2 + $0xd0] sm:$0xff] %vm452, %v433
      %480 = vst.msk [vmem:[#allocation2 + $0xd8] sm:$0xff] %vm452, %v434
      %481 = vst.msk [vmem:[#allocation2 + $0xe0] sm:$0xff] %vm452, %v435
      %482 = vst.msk [vmem:[#allocation2 + $0xe8] sm:$0xff] %vm452, %v436
      %483 = vst.msk [vmem:[#allocation2 + $0xf0] sm:$0xff] %vm452, %v437
      %484 = vst.msk [vmem:[#allocation2 + $0xf8] sm:$0xff] %vm452, %v438
      %485 = vst.msk [vmem:[#allocation2 + $0x100] sm:$0xff] %vm452, %v439
      %486 = vst.msk [vmem:[#allocation2 + $0x108] sm:$0xff] %vm452, %v440
      %487 = vst.msk [vmem:[#allocation2 + $0x110] sm:$0xff] %vm452, %v441
      %488 = vst.msk [vmem:[#allocation2 + $0x118] sm:$0xff] %vm452, %v442
      %489 = vst.msk [vmem:[#allocation2 + $0x120] sm:$0xff] %vm452, %v443
      %490 = vst.msk [vmem:[#allocation2 + $0x128] sm:$0xff] %vm452, %v444
      %491 = vst.msk [vmem:[#allocation2 + $0x130] sm:$0xff] %vm452, %v445
      %492 = vst.msk [vmem:[#allocation2 + $0x138] sm:$0xff] %vm452, %v446
      %493 = vst.msk [vmem:[#allocation2 + $0x140] sm:$0xff] %vm452, %v447
      %494 = vst.msk [vmem:[#allocation2 + $0x148] sm:$0xff] %vm452, %v448
      %495 = vst.msk [vmem:[#allocation2 + $0x150] sm:$0xff] %vm452, %v449
      %496 = vst.msk [vmem:[#allocation2 + $0x158] sm:$0xff] %vm452, %v450
      %497 = vst.msk [vmem:[#allocation2 + $0x160] sm:$0xff] %vm452, %v451
      %v498 = vld [vmem:[%s370] sm:$0xff]
      %v499 = vld [vmem:[%s370 + $0x8] sm:$0xff]
      %v500 = vld [vmem:[%s370 + $0x10] sm:$0xff]
      %v501 = vld [vmem:[%s370 + $0x18] sm:$0xff]
      %v502 = vld [vmem:[%s370 + $0x20] sm:$0xff]
      %503 = vst.msk [vmem:[#allocation2 + $0x168] sm:$0xff] %vm452, %v498
      %504 = vst.msk [vmem:[#allocation2 + $0x170] sm:$0xff] %vm452, %v499
      %505 = vst.msk [vmem:[#allocation2 + $0x178] sm:$0xff] %vm452, %v500
      %506 = vst.msk [vmem:[#allocation2 + $0x180] sm:$0xff] %vm452, %v501
      %507 = vst.msk [vmem:[#allocation2 + $0x188] sm:$0xff] %vm452, %v502
      %v508 = vld [vmem:[#allocation2] sm:$0xff]
      %v509 = vld [vmem:[#allocation2 + $0x8] sm:$0xff]
      %v510 = vld [vmem:[#allocation2 + $0x10] sm:$0xff]
      %v511 = vld [vmem:[#allocation2 + $0x18] sm:$0xff]
      %v512 = vld [vmem:[#allocation2 + $0x20] sm:$0xff]
      %v513 = vld [vmem:[#allocation2 + $0x28] sm:$0xff]
      %v514 = vld [vmem:[#allocation2 + $0x30] sm:$0xff]
      %v515 = vld [vmem:[#allocation2 + $0x38] sm:$0xff]
      %v516 = vld [vmem:[#allocation2 + $0x40] sm:$0xff]
      %v517 = vld [vmem:[#allocation2 + $0x48] sm:$0xff]
      %v518 = vld [vmem:[#allocation2 + $0x50] sm:$0xff]
      %v519 = vld [vmem:[#allocation2 + $0x58] sm:$0xff]
      %v520 = vld [vmem:[#allocation2 + $0x60] sm:$0xff]
      %v521 = vld [vmem:[#allocation2 + $0x68] sm:$0xff]
      %v522 = vld [vmem:[#allocation2 + $0x70] sm:$0xff]
      %v523 = vld [vmem:[#allocation2 + $0x78] sm:$0xff]
      %v524 = vld [vmem:[#allocation2 + $0x80] sm:$0xff]
      %v525 = vld [vmem:[#allocation2 + $0x88] sm:$0xff]
      %v526 = vld [vmem:[#allocation2 + $0x90] sm:$0xff]
      %v527 = vld [vmem:[#allocation2 + $0x98] sm:$0xff]
      %v528 = vld [vmem:[#allocation2 + $0xa0] sm:$0xff]
      %v529 = vld [vmem:[#allocation2 + $0xa8] sm:$0xff]
      %v530 = vld [vmem:[#allocation2 + $0xb0] sm:$0xff]
      %v531 = vld [vmem:[#allocation2 + $0xb8] sm:$0xff]
      %v532 = vld [vmem:[#allocation2 + $0xc0] sm:$0xff]
      %v533 = vld [vmem:[#allocation2 + $0xc8] sm:$0xff]
      %v534 = vld [vmem:[#allocation2 + $0xd0] sm:$0xff]
      %v535 = vld [vmem:[#allocation2 + $0xd8] sm:$0xff]
      %v536 = vld [vmem:[#allocation2 + $0xe0] sm:$0xff]
      %v537 = vld [vmem:[#allocation2 + $0xe8] sm:$0xff]
      %v538 = vld [vmem:[#allocation2 + $0xf0] sm:$0xff]
      %v539 = vld [vmem:[#allocation2 + $0xf8] sm:$0xff]
      %v540 = vld [vmem:[#allocation2 + $0x100] sm:$0xff]
      %v541 = vld [vmem:[#allocation2 + $0x108] sm:$0xff]
      %v542 = vld [vmem:[#allocation2 + $0x110] sm:$0xff]
      %v543 = vld [vmem:[#allocation2 + $0x118] sm:$0xff]
      %v544 = vld [vmem:[#allocation2 + $0x120] sm:$0xff]
      %v545 = vld [vmem:[#allocation2 + $0x128] sm:$0xff]
      %v546 = vld [vmem:[#allocation2 + $0x130] sm:$0xff]
      %v547 = vld [vmem:[#allocation2 + $0x138] sm:$0xff]
      %v548 = vld [vmem:[#allocation2 + $0x140] sm:$0xff]
      %v549 = vld [vmem:[#allocation2 + $0x148] sm:$0xff]
      %v550 = vld [vmem:[#allocation2 + $0x150] sm:$0xff]
      %v551 = vld [vmem:[#allocation2 + $0x158] sm:$0xff]
      %v552 = vld [vmem:[#allocation2 + $0x160] sm:$0xff]
      %v553 = vld [vmem:[%s377] sm:$0xff]
      %v554 = vld [vmem:[#allocation2 + $0x1] sm:$0xff]
      %v555 = vld [vmem:[#allocation2 + $0x9] sm:$0xff]
      %v556 = vld [vmem:[#allocation2 + $0x11] sm:$0xff]
      %v557 = vld [vmem:[#allocation2 + $0x19] sm:$0xff]
      %v558 = vld [vmem:[#allocation2 + $0x21] sm:$0xff]
      %v559 = vld [vmem:[#allocation2 + $0x29] sm:$0xff]
      %v560 = vld [vmem:[#allocation2 + $0x31] sm:$0xff]
      %v561 = vld [vmem:[#allocation2 + $0x39] sm:$0xff]
      %v562 = vld [vmem:[#allocation2 + $0x41] sm:$0xff]
      %v563 = vld [vmem:[#allocation2 + $0x49] sm:$0xff]
      %v564 = vld [vmem:[#allocation2 + $0x51] sm:$0xff]
      %v565 = vld [vmem:[#allocation2 + $0x59] sm:$0xff]
      %v566 = vld [vmem:[#allocation2 + $0x61] sm:$0xff]
      %v567 = vld [vmem:[#allocation2 + $0x69] sm:$0xff]
      %v568 = vld [vmem:[#allocation2 + $0x71] sm:$0xff]
      %v569 = vld [vmem:[#allocation2 + $0x79] sm:$0xff]
      %v570 = vld [vmem:[#allocation2 + $0x81] sm:$0xff]
      %v571 = vld [vmem:[#allocation2 + $0x89] sm:$0xff]
      %v572 = vld [vmem:[#allocation2 + $0x91] sm:$0xff]
      %v573 = vld [vmem:[#allocation2 + $0x99] sm:$0xff]
      %v574 = vld [vmem:[#allocation2 + $0xa1] sm:$0xff]
      %v575 = vld [vmem:[#allocation2 + $0xa9] sm:$0xff]
      %v576 = vld [vmem:[#allocation2 + $0xb1] sm:$0xff]
      %v577 = vld [vmem:[#allocation2 + $0xb9] sm:$0xff]
      %v578 = vld [vmem:[#allocation2 + $0xc1] sm:$0xff]
      %v579 = vld [vmem:[#allocation2 + $0xc9] sm:$0xff]
      %v580 = vld [vmem:[#allocation2 + $0xd1] sm:$0xff]
      %v581 = vld [vmem:[#allocation2 + $0xd9] sm:$0xff]
      %v582 = vld [vmem:[#allocation2 + $0xe1] sm:$0xff]
      %v583 = vld [vmem:[#allocation2 + $0xe9] sm:$0xff]
      %v584 = vld [vmem:[#allocation2 + $0xf1] sm:$0xff]
      %v585 = vld [vmem:[#allocation2 + $0xf9] sm:$0xff]
      %v586 = vld [vmem:[#allocation2 + $0x101] sm:$0xff]
      %v587 = vld [vmem:[#allocation2 + $0x109] sm:$0xff]
      %v588 = vld [vmem:[#allocation2 + $0x111] sm:$0xff]
      %v589 = vld [vmem:[#allocation2 + $0x119] sm:$0xff]
      %v590 = vld [vmem:[#allocation2 + $0x121] sm:$0xff]
      %v591 = vld [vmem:[#allocation2 + $0x129] sm:$0xff]
      %v592 = vld [vmem:[#allocation2 + $0x131] sm:$0xff]
      %v593 = vld [vmem:[#allocation2 + $0x139] sm:$0xff]
      %v594 = vld [vmem:[#allocation2 + $0x141] sm:$0xff]
      %v595 = vld [vmem:[#allocation2 + $0x149] sm:$0xff]
      %v596 = vld [vmem:[#allocation2 + $0x151] sm:$0xff]
      %v597 = vld [vmem:[#allocation2 + $0x159] sm:$0xff]
      %v598 = vld [vmem:[#allocation2 + $0x161] sm:$0xff]
      %s599 = scalar_lea.vmem %s377, 8
      %v600 = vld [vmem:[%s599] sm:$0xff]
      %v602 = vsel %vm452, %v554, 0
      %v605 = vsel %vm452, %v555, 0
      %v608 = vsel %vm452, %v556, 0
      %v611 = vsel %vm452, %v557, 0
      %v614 = vsel %vm452, %v558, 0
      %v617 = vsel %vm452, %v559, 0
      %v620 = vsel %vm452, %v560, 0
      %v623 = vsel %vm452, %v561, 0
      %v626 = vsel %vm452, %v562, 0
      %v629 = vsel %vm452, %v563, 0
      %v632 = vsel %vm452, %v564, 0
      %v635 = vsel %vm452, %v565, 0
      %v638 = vsel %vm452, %v566, 0
      %v641 = vsel %vm452, %v567, 0
      %v644 = vsel %vm452, %v568, 0
      %v647 = vsel %vm452, %v569, 0
      %v650 = vsel %vm452, %v570, 0
      %v653 = vsel %vm452, %v571, 0
      %v656 = vsel %vm452, %v572, 0
      %v659 = vsel %vm452, %v573, 0
      %v662 = vsel %vm452, %v574, 0
      %v665 = vsel %vm452, %v575, 0
      %v668 = vsel %vm452, %v576, 0
      %v671 = vsel %vm452, %v577, 0
      %v674 = vsel %vm452, %v578, 0
      %v677 = vsel %vm452, %v579, 0
      %v680 = vsel %vm452, %v580, 0
      %v683 = vsel %vm452, %v581, 0
      %v686 = vsel %vm452, %v582, 0
      %v689 = vsel %vm452, %v583, 0
      %v692 = vsel %vm452, %v584, 0
      %v695 = vsel %vm452, %v585, 0
      %v698 = vsel %vm452, %v586, 0
      %v701 = vsel %vm452, %v587, 0
      %v704 = vsel %vm452, %v588, 0
      %v707 = vsel %vm452, %v589, 0
      %v710 = vsel %vm452, %v590, 0
      %v713 = vsel %vm452, %v591, 0
      %v716 = vsel %vm452, %v592, 0
      %v719 = vsel %vm452, %v593, 0
      %v722 = vsel %vm452, %v594, 0
      %v725 = vsel %vm452, %v595, 0
      %v728 = vsel %vm452, %v596, 0
      %v731 = vsel %vm452, %v597, 0
      %v734 = vsel %vm452, %v598, 0
      %736 = vmatprep.subr.mxu0 0.0
      %737 = vmatpush1.msra.mxu0 0.0
      %738 = vmatprep.subr.mxu0 0.0
      %739 = vmatpush1.msra.mxu0 0.0
      %740 = vmatprep.subr.mxu0 0.0
      %741 = vmatpush1.msra.mxu0 0.0
      %742 = vmatprep.subr.mxu0 0.0
      %743 = vmatpush1.msra.mxu0 0.0
      %744 = vmatprep.subr.mxu0 0.0
      %745 = vmatpush1.msra.mxu0 0.0
      %746 = vmatprep.subr.mxu0 0.0
      %747 = vmatpush1.msra.mxu0 0.0
      %748 = vmatprep.subr.mxu0 0.0
      %749 = vmatpush1.msra.mxu0 0.0
      %750 = vmatprep.subr.mxu0 0.0
      %751 = vmatpush1.msra.mxu0 0.0
      %752 = vmatprep.subr.mxu0 0.0
      %753 = vmatpush1.msra.mxu0 0.0
      %754 = vmatprep.subr.mxu0 0.0
      %755 = vmatpush1.msra.mxu0 0.0
      %756 = vmatprep.subr.mxu0 0.0
      %757 = vmatpush1.msra.mxu0 0.0
      %758 = vmatprep.subr.mxu0 0.0
      %759 = vmatpush1.msra.mxu0 0.0
      %760 = vmatprep.subr.mxu0 0.0
      %761 = vmatpush1.msra.mxu0 0.0
      %762 = vmatprep.subr.mxu0 0.0
      %763 = vmatpush1.msra.mxu0 0.0
      %764 = vmatprep.subr.mxu0 0.0
      %765 = vmatpush1.msra.mxu0 0.0
      %766 = vmatprep.subr.mxu0 0.0
      %767 = vmatpush1.msra.mxu0 %v600
      %768 = vmatprep.subr.mxu0 0.0
      %769 = vmatpush2.msra.mxu0 0.0
      %770 = vmatprep.subr.mxu0 0.0
      %771 = vmatpush2.msra.mxu0 0.0
      %772 = vmatprep.subr.mxu0 0.0
      %773 = vmatpush2.msra.mxu0 0.0
      %774 = vmatprep.subr.mxu0 0.0
      %775 = vmatpush2.msra.mxu0 0.0
      %776 = vmatprep.subr.mxu0 0.0
      %777 = vmatpush2.msra.mxu0 0.0
      %778 = vmatprep.subr.mxu0 0.0
      %779 = vmatpush2.msra.mxu0 0.0
      %780 = vmatprep.subr.mxu0 0.0
      %781 = vmatpush2.msra.mxu0 0.0
      %782 = vmatprep.subr.mxu0 0.0
      %783 = vmatpush2.msra.mxu0 0.0
      %784 = vmatprep.subr.mxu0 0.0
      %785 = vmatpush2.msra.mxu0 0.0
      %786 = vmatprep.subr.mxu0 0.0
      %787 = vmatpush2.msra.mxu0 0.0
      %788 = vmatprep.subr.mxu0 0.0
      %789 = vmatpush2.msra.mxu0 0.0
      %790 = vmatprep.subr.mxu0 0.0
      %791 = vmatpush2.msra.mxu0 0.0
      %792 = vmatprep.subr.mxu0 0.0
      %793 = vmatpush2.msra.mxu0 0.0
      %794 = vmatprep.subr.mxu0 0.0
      %795 = vmatpush2.msra.mxu0 0.0
      %796 = vmatprep.subr.mxu0 0.0
      %797 = vmatpush2.msra.mxu0 0.0
      %798 = vmatprep.subr.mxu0 0.0
      %799 = vmatpush2.msra.mxu0 0.0
      %800 = vmatprep.mubr.f32.mxu0 0.0
      %801 = vmatmul.mubr.f32.gmra.mxu0 %v602
      %v802 = vpop.f32.mrf.mxu0
      %v803 = vadd.f32 0.0, %v802
      %v804 = vpop.f32.mrf.mxu0
      %805 = vmatprep.mubr.f32.mxu0 0.0
      %806 = vmatmul.mubr.f32.gmra.mxu0 %v605
      %v807 = vpop.f32.mrf.mxu0
      %v808 = vadd.f32 0.0, %v807
      %v809 = vpop.f32.mrf.mxu0
      %810 = vmatprep.mubr.f32.mxu0 0.0
      %811 = vmatmul.mubr.f32.gmra.mxu0 %v608
      %v812 = vpop.f32.mrf.mxu0
      %v813 = vadd.f32 0.0, %v812
      %v814 = vpop.f32.mrf.mxu0
      %815 = vmatprep.mubr.f32.mxu0 0.0
      %816 = vmatmul.mubr.f32.gmra.mxu0 %v611
      %v817 = vpop.f32.mrf.mxu0
      %v818 = vadd.f32 0.0, %v817
      %v819 = vpop.f32.mrf.mxu0
      %820 = vmatprep.mubr.f32.mxu0 0.0
      %821 = vmatmul.mubr.f32.gmra.mxu0 %v614
      %v822 = vpop.f32.mrf.mxu0
      %v823 = vadd.f32 0.0, %v822
      %v824 = vpop.f32.mrf.mxu0
      %825 = vmatprep.mubr.f32.mxu0 0.0
      %826 = vmatmul.mubr.f32.gmra.mxu0 %v617
      %v827 = vpop.f32.mrf.mxu0
      %v828 = vadd.f32 0.0, %v827
      %v829 = vpop.f32.mrf.mxu0
      %830 = vmatprep.mubr.f32.mxu0 0.0
      %831 = vmatmul.mubr.f32.gmra.mxu0 %v620
      %v832 = vpop.f32.mrf.mxu0
      %v833 = vadd.f32 0.0, %v832
      %v834 = vpop.f32.mrf.mxu0
      %835 = vmatprep.mubr.f32.mxu0 0.0
      %836 = vmatmul.mubr.f32.gmra.mxu0 %v623
      %v837 = vpop.f32.mrf.mxu0
      %v838 = vadd.f32 0.0, %v837
      %v839 = vpop.f32.mrf.mxu0
      %840 = vmatprep.mubr.f32.mxu0 0.0
      %841 = vmatmul.mubr.f32.gmra.mxu0 %v626
      %v842 = vpop.f32.mrf.mxu0
      %v843 = vadd.f32 0.0, %v842
      %v844 = vpop.f32.mrf.mxu0
      %845 = vmatprep.mubr.f32.mxu0 0.0
      %846 = vmatmul.mubr.f32.gmra.mxu0 %v629
      %v847 = vpop.f32.mrf.mxu0
      %v848 = vadd.f32 0.0, %v847
      %v849 = vpop.f32.mrf.mxu0
      %850 = vmatprep.mubr.f32.mxu0 0.0
      %851 = vmatmul.mubr.f32.gmra.mxu0 %v632
      %v852 = vpop.f32.mrf.mxu0
      %v853 = vadd.f32 0.0, %v852
      %v854 = vpop.f32.mrf.mxu0
      %855 = vmatprep.mubr.f32.mxu0 0.0
      %856 = vmatmul.mubr.f32.gmra.mxu0 %v635
      %v857 = vpop.f32.mrf.mxu0
      %v858 = vadd.f32 0.0, %v857
      %v859 = vpop.f32.mrf.mxu0
      %860 = vmatprep.mubr.f32.mxu0 0.0
      %861 = vmatmul.mubr.f32.gmra.mxu0 %v638
      %v862 = vpop.f32.mrf.mxu0
      %v863 = vadd.f32 0.0, %v862
      %v864 = vpop.f32.mrf.mxu0
      %865 = vmatprep.mubr.f32.mxu0 0.0
      %866 = vmatmul.mubr.f32.gmra.mxu0 %v641
      %v867 = vpop.f32.mrf.mxu0
      %v868 = vadd.f32 0.0, %v867
      %v869 = vpop.f32.mrf.mxu0
      %870 = vmatprep.mubr.f32.mxu0 0.0
      %871 = vmatmul.mubr.f32.gmra.mxu0 %v644
      %v872 = vpop.f32.mrf.mxu0
      %v873 = vadd.f32 0.0, %v872
      %v874 = vpop.f32.mrf.mxu0
      %875 = vmatprep.mubr.f32.mxu0 0.0
      %876 = vmatmul.mubr.f32.gmra.mxu0 %v647
      %v877 = vpop.f32.mrf.mxu0
      %v878 = vadd.f32 0.0, %v877
      %v879 = vpop.f32.mrf.mxu0
      %880 = vmatprep.mubr.f32.mxu0 0.0
      %881 = vmatmul.mubr.f32.gmra.mxu0 %v650
      %v882 = vpop.f32.mrf.mxu0
      %v883 = vadd.f32 0.0, %v882
      %v884 = vpop.f32.mrf.mxu0
      %885 = vmatprep.mubr.f32.mxu0 0.0
      %886 = vmatmul.mubr.f32.gmra.mxu0 %v653
      %v887 = vpop.f32.mrf.mxu0
      %v888 = vadd.f32 0.0, %v887
      %v889 = vpop.f32.mrf.mxu0
      %890 = vmatprep.mubr.f32.mxu0 0.0
      %891 = vmatmul.mubr.f32.gmra.mxu0 %v656
      %v892 = vpop.f32.mrf.mxu0
      %v893 = vadd.f32 0.0, %v892
      %v894 = vpop.f32.mrf.mxu0
      %895 = vmatprep.mubr.f32.mxu0 0.0
      %896 = vmatmul.mubr.f32.gmra.mxu0 %v659
      %v897 = vpop.f32.mrf.mxu0
      %v898 = vadd.f32 0.0, %v897
      %v899 = vpop.f32.mrf.mxu0
      %900 = vmatprep.mubr.f32.mxu0 0.0
      %901 = vmatmul.mubr.f32.gmra.mxu0 %v662
      %v902 = vpop.f32.mrf.mxu0
      %v903 = vadd.f32 0.0, %v902
      %v904 = vpop.f32.mrf.mxu0
      %905 = vmatprep.mubr.f32.mxu0 0.0
      %906 = vmatmul.mubr.f32.gmra.mxu0 %v665
      %v907 = vpop.f32.mrf.mxu0
      %v908 = vadd.f32 0.0, %v907
      %v909 = vpop.f32.mrf.mxu0
      %910 = vmatprep.mubr.f32.mxu0 0.0
      %911 = vmatmul.mubr.f32.gmra.mxu0 %v668
      %v912 = vpop.f32.mrf.mxu0
      %v913 = vadd.f32 0.0, %v912
      %v914 = vpop.f32.mrf.mxu0
      %915 = vmatprep.mubr.f32.mxu0 0.0
      %916 = vmatmul.mubr.f32.gmra.mxu0 %v671
      %v917 = vpop.f32.mrf.mxu0
      %v918 = vadd.f32 0.0, %v917
      %v919 = vpop.f32.mrf.mxu0
      %920 = vmatprep.mubr.f32.mxu0 0.0
      %921 = vmatmul.mubr.f32.gmra.mxu0 %v674
      %v922 = vpop.f32.mrf.mxu0
      %v923 = vadd.f32 0.0, %v922
      %v924 = vpop.f32.mrf.mxu0
      %925 = vmatprep.mubr.f32.mxu0 0.0
      %926 = vmatmul.mubr.f32.gmra.mxu0 %v677
      %v927 = vpop.f32.mrf.mxu0
      %v928 = vadd.f32 0.0, %v927
      %v929 = vpop.f32.mrf.mxu0
      %930 = vmatprep.mubr.f32.mxu0 0.0
      %931 = vmatmul.mubr.f32.gmra.mxu0 %v680
      %v932 = vpop.f32.mrf.mxu0
      %v933 = vadd.f32 0.0, %v932
      %v934 = vpop.f32.mrf.mxu0
      %935 = vmatprep.mubr.f32.mxu0 0.0
      %936 = vmatmul.mubr.f32.gmra.mxu0 %v683
      %v937 = vpop.f32.mrf.mxu0
      %v938 = vadd.f32 0.0, %v937
      %v939 = vpop.f32.mrf.mxu0
      %940 = vmatprep.mubr.f32.mxu0 0.0
      %941 = vmatmul.mubr.f32.gmra.mxu0 %v686
      %v942 = vpop.f32.mrf.mxu0
      %v943 = vadd.f32 0.0, %v942
      %v944 = vpop.f32.mrf.mxu0
      %945 = vmatprep.mubr.f32.mxu0 0.0
      %946 = vmatmul.mubr.f32.gmra.mxu0 %v689
      %v947 = vpop.f32.mrf.mxu0
      %v948 = vadd.f32 0.0, %v947
      %v949 = vpop.f32.mrf.mxu0
      %950 = vmatprep.mubr.f32.mxu0 0.0
      %951 = vmatmul.mubr.f32.gmra.mxu0 %v692
      %v952 = vpop.f32.mrf.mxu0
      %v953 = vadd.f32 0.0, %v952
      %v954 = vpop.f32.mrf.mxu0
      %955 = vmatprep.mubr.f32.mxu0 0.0
      %956 = vmatmul.mubr.f32.gmra.mxu0 %v695
      %v957 = vpop.f32.mrf.mxu0
      %v958 = vadd.f32 0.0, %v957
      %v959 = vpop.f32.mrf.mxu0
      %960 = vmatprep.mubr.f32.mxu0 0.0
      %961 = vmatmul.mubr.f32.gmra.mxu0 %v698
      %v962 = vpop.f32.mrf.mxu0
      %v963 = vadd.f32 0.0, %v962
      %v964 = vpop.f32.mrf.mxu0
      %965 = vmatprep.mubr.f32.mxu0 0.0
      %966 = vmatmul.mubr.f32.gmra.mxu0 %v701
      %v967 = vpop.f32.mrf.mxu0
      %v968 = vadd.f32 0.0, %v967
      %v969 = vpop.f32.mrf.mxu0
      %970 = vmatprep.mubr.f32.mxu0 0.0
      %971 = vmatmul.mubr.f32.gmra.mxu0 %v704
      %v972 = vpop.f32.mrf.mxu0
      %v973 = vadd.f32 0.0, %v972
      %v974 = vpop.f32.mrf.mxu0
      %975 = vmatprep.mubr.f32.mxu0 0.0
      %976 = vmatmul.mubr.f32.gmra.mxu0 %v707
      %v977 = vpop.f32.mrf.mxu0
      %v978 = vadd.f32 0.0, %v977
      %v979 = vpop.f32.mrf.mxu0
      %980 = vmatprep.mubr.f32.mxu0 0.0
      %981 = vmatmul.mubr.f32.gmra.mxu0 %v710
      %v982 = vpop.f32.mrf.mxu0
      %v983 = vadd.f32 0.0, %v982
      %v984 = vpop.f32.mrf.mxu0
      %985 = vmatprep.mubr.f32.mxu0 0.0
      %986 = vmatmul.mubr.f32.gmra.mxu0 %v713
      %v987 = vpop.f32.mrf.mxu0
      %v988 = vadd.f32 0.0, %v987
      %v989 = vpop.f32.mrf.mxu0
      %990 = vmatprep.mubr.f32.mxu0 0.0
      %991 = vmatmul.mubr.f32.gmra.mxu0 %v716
      %v992 = vpop.f32.mrf.mxu0
      %v993 = vadd.f32 0.0, %v992
      %v994 = vpop.f32.mrf.mxu0
      %995 = vmatprep.mubr.f32.mxu0 0.0
      %996 = vmatmul.mubr.f32.gmra.mxu0 %v719
      %v997 = vpop.f32.mrf.mxu0
      %v998 = vadd.f32 0.0, %v997
      %v999 = vpop.f32.mrf.mxu0
      %1000 = vmatprep.mubr.f32.mxu0 0.0
      %1001 = vmatmul.mubr.f32.gmra.mxu0 %v722
      %v1002 = vpop.f32.mrf.mxu0
      %v1003 = vadd.f32 0.0, %v1002
      %v1004 = vpop.f32.mrf.mxu0
      %1005 = vmatprep.mubr.f32.mxu0 0.0
      %1006 = vmatmul.mubr.f32.gmra.mxu0 %v725
      %v1007 = vpop.f32.mrf.mxu0
      %v1008 = vadd.f32 0.0, %v1007
      %v1009 = vpop.f32.mrf.mxu0
      %1010 = vmatprep.mubr.f32.mxu0 0.0
      %1011 = vmatmul.mubr.f32.gmra.mxu0 %v728
      %v1012 = vpop.f32.mrf.mxu0
      %v1013 = vadd.f32 0.0, %v1012
      %v1014 = vpop.f32.mrf.mxu0
      %1015 = vmatprep.mubr.f32.mxu0 0.0
      %1016 = vmatmul.mubr.f32.gmra.mxu0 %v731
      %v1017 = vpop.f32.mrf.mxu0
      %v1018 = vadd.f32 0.0, %v1017
      %v1019 = vpop.f32.mrf.mxu0
      %1020 = vmatprep.mubr.f32.mxu0 0.0
      %1021 = vmatmul.mubr.f32.gmra.mxu0 %v734
      %v1022 = vpop.f32.mrf.mxu0
      %v1023 = vadd.f32 0.0, %v1022
      %v1024 = vpop.f32.mrf.mxu0
      %1025 = vdwg.mxu0
      %v1027 = vsel %vm452, %v508, 0
      %v1030 = vsel %vm452, %v509, 0
      %v1033 = vsel %vm452, %v510, 0
      %v1036 = vsel %vm452, %v511, 0
      %v1039 = vsel %vm452, %v512, 0
      %v1042 = vsel %vm452, %v513, 0
      %v1045 = vsel %vm452, %v514, 0
      %v1048 = vsel %vm452, %v515, 0
      %v1051 = vsel %vm452, %v516, 0
      %v1054 = vsel %vm452, %v517, 0
      %v1057 = vsel %vm452, %v518, 0
      %v1060 = vsel %vm452, %v519, 0
      %v1063 = vsel %vm452, %v520, 0
      %v1066 = vsel %vm452, %v521, 0
      %v1069 = vsel %vm452, %v522, 0
      %v1072 = vsel %vm452, %v523, 0
      %v1075 = vsel %vm452, %v524, 0
      %v1078 = vsel %vm452, %v525, 0
      %v1081 = vsel %vm452, %v526, 0
      %v1084 = vsel %vm452, %v527, 0
      %v1087 = vsel %vm452, %v528, 0
      %v1090 = vsel %vm452, %v529, 0
      %v1093 = vsel %vm452, %v530, 0
      %v1096 = vsel %vm452, %v531, 0
      %v1099 = vsel %vm452, %v532, 0
      %v1102 = vsel %vm452, %v533, 0
      %v1105 = vsel %vm452, %v534, 0
      %v1108 = vsel %vm452, %v535, 0
      %v1111 = vsel %vm452, %v536, 0
      %v1114 = vsel %vm452, %v537, 0
      %v1117 = vsel %vm452, %v538, 0
      %v1120 = vsel %vm452, %v539, 0
      %v1123 = vsel %vm452, %v540, 0
      %v1126 = vsel %vm452, %v541, 0
      %v1129 = vsel %vm452, %v542, 0
      %v1132 = vsel %vm452, %v543, 0
      %v1135 = vsel %vm452, %v544, 0
      %v1138 = vsel %vm452, %v545, 0
      %v1141 = vsel %vm452, %v546, 0
      %v1144 = vsel %vm452, %v547, 0
      %v1147 = vsel %vm452, %v548, 0
      %v1150 = vsel %vm452, %v549, 0
      %v1153 = vsel %vm452, %v550, 0
      %v1156 = vsel %vm452, %v551, 0
      %v1159 = vsel %vm452, %v552, 0
      %1161 = vmatprep.subr.mxu0 0.0
      %1162 = vmatpush1.msra.mxu0 0.0
      %1163 = vmatprep.subr.mxu0 0.0
      %1164 = vmatpush1.msra.mxu0 0.0
      %1165 = vmatprep.subr.mxu0 0.0
      %1166 = vmatpush1.msra.mxu0 0.0
      %1167 = vmatprep.subr.mxu0 0.0
      %1168 = vmatpush1.msra.mxu0 0.0
      %1169 = vmatprep.subr.mxu0 0.0
      %1170 = vmatpush1.msra.mxu0 0.0
      %1171 = vmatprep.subr.mxu0 0.0
      %1172 = vmatpush1.msra.mxu0 0.0
      %1173 = vmatprep.subr.mxu0 0.0
      %1174 = vmatpush1.msra.mxu0 0.0
      %1175 = vmatprep.subr.mxu0 0.0
      %1176 = vmatpush1.msra.mxu0 0.0
      %1177 = vmatprep.subr.mxu0 0.0
      %1178 = vmatpush1.msra.mxu0 0.0
      %1179 = vmatprep.subr.mxu0 0.0
      %1180 = vmatpush1.msra.mxu0 0.0
      %1181 = vmatprep.subr.mxu0 0.0
      %1182 = vmatpush1.msra.mxu0 0.0
      %1183 = vmatprep.subr.mxu0 0.0
      %1184 = vmatpush1.msra.mxu0 0.0
      %1185 = vmatprep.subr.mxu0 0.0
      %1186 = vmatpush1.msra.mxu0 0.0
      %1187 = vmatprep.subr.mxu0 0.0
      %1188 = vmatpush1.msra.mxu0 0.0
      %1189 = vmatprep.subr.mxu0 0.0
      %1190 = vmatpush1.msra.mxu0 0.0
      %1191 = vmatprep.subr.mxu0 0.0
      %1192 = vmatpush1.msra.mxu0 %v553
      %1193 = vmatprep.subr.mxu0 0.0
      %1194 = vmatpush2.msra.mxu0 0.0
      %1195 = vmatprep.subr.mxu0 0.0
      %1196 = vmatpush2.msra.mxu0 0.0
      %1197 = vmatprep.subr.mxu0 0.0
      %1198 = vmatpush2.msra.mxu0 0.0
      %1199 = vmatprep.subr.mxu0 0.0
      %1200 = vmatpush2.msra.mxu0 0.0
      %1201 = vmatprep.subr.mxu0 0.0
      %1202 = vmatpush2.msra.mxu0 0.0
      %1203 = vmatprep.subr.mxu0 0.0
      %1204 = vmatpush2.msra.mxu0 0.0
      %1205 = vmatprep.subr.mxu0 0.0
      %1206 = vmatpush2.msra.mxu0 0.0
      %1207 = vmatprep.subr.mxu0 0.0
      %1208 = vmatpush2.msra.mxu0 0.0
      %1209 = vmatprep.subr.mxu0 0.0
      %1210 = vmatpush2.msra.mxu0 0.0
      %1211 = vmatprep.subr.mxu0 0.0
      %1212 = vmatpush2.msra.mxu0 0.0
      %1213 = vmatprep.subr.mxu0 0.0
      %1214 = vmatpush2.msra.mxu0 0.0
      %1215 = vmatprep.subr.mxu0 0.0
      %1216 = vmatpush2.msra.mxu0 0.0
      %1217 = vmatprep.subr.mxu0 0.0
      %1218 = vmatpush2.msra.mxu0 0.0
      %1219 = vmatprep.subr.mxu0 0.0
      %1220 = vmatpush2.msra.mxu0 0.0
      %1221 = vmatprep.subr.mxu0 0.0
      %1222 = vmatpush2.msra.mxu0 0.0
      %1223 = vmatprep.subr.mxu0 0.0
      %1224 = vmatpush2.msra.mxu0 0.0
      %1225 = vmatprep.mubr.f32.mxu0 0.0
      %1226 = vmatmul.mubr.f32.gmra.mxu0 %v1027
      %v1227 = vpop.f32.mrf.mxu0
      %v1228 = vadd.f32 %v803, %v1227
      %v1229 = vpop.f32.mrf.mxu0
      %1230 = vmatprep.mubr.f32.mxu0 0.0
      %1231 = vmatmul.mubr.f32.gmra.mxu0 %v1030
      %v1232 = vpop.f32.mrf.mxu0
      %v1233 = vadd.f32 %v808, %v1232
      %v1234 = vpop.f32.mrf.mxu0
      %1235 = vmatprep.mubr.f32.mxu0 0.0
      %1236 = vmatmul.mubr.f32.gmra.mxu0 %v1033
      %v1237 = vpop.f32.mrf.mxu0
      %v1238 = vadd.f32 %v813, %v1237
      %v1239 = vpop.f32.mrf.mxu0
      %1240 = vmatprep.mubr.f32.mxu0 0.0
      %1241 = vmatmul.mubr.f32.gmra.mxu0 %v1036
      %v1242 = vpop.f32.mrf.mxu0
      %v1243 = vadd.f32 %v818, %v1242
      %v1244 = vpop.f32.mrf.mxu0
      %1245 = vmatprep.mubr.f32.mxu0 0.0
      %1246 = vmatmul.mubr.f32.gmra.mxu0 %v1039
      %v1247 = vpop.f32.mrf.mxu0
      %v1248 = vadd.f32 %v823, %v1247
      %v1249 = vpop.f32.mrf.mxu0
      %1250 = vmatprep.mubr.f32.mxu0 0.0
      %1251 = vmatmul.mubr.f32.gmra.mxu0 %v1042
      %v1252 = vpop.f32.mrf.mxu0
      %v1253 = vadd.f32 %v828, %v1252
      %v1254 = vpop.f32.mrf.mxu0
      %1255 = vmatprep.mubr.f32.mxu0 0.0
      %1256 = vmatmul.mubr.f32.gmra.mxu0 %v1045
      %v1257 = vpop.f32.mrf.mxu0
      %v1258 = vadd.f32 %v833, %v1257
      %v1259 = vpop.f32.mrf.mxu0
      %1260 = vmatprep.mubr.f32.mxu0 0.0
      %1261 = vmatmul.mubr.f32.gmra.mxu0 %v1048
      %v1262 = vpop.f32.mrf.mxu0
      %v1263 = vadd.f32 %v838, %v1262
      %v1264 = vpop.f32.mrf.mxu0
      %1265 = vmatprep.mubr.f32.mxu0 0.0
      %1266 = vmatmul.mubr.f32.gmra.mxu0 %v1051
      %v1267 = vpop.f32.mrf.mxu0
      %v1268 = vadd.f32 %v843, %v1267
      %v1269 = vpop.f32.mrf.mxu0
      %1270 = vmatprep.mubr.f32.mxu0 0.0
      %1271 = vmatmul.mubr.f32.gmra.mxu0 %v1054
      %v1272 = vpop.f32.mrf.mxu0
      %v1273 = vadd.f32 %v848, %v1272
      %v1274 = vpop.f32.mrf.mxu0
      %1275 = vmatprep.mubr.f32.mxu0 0.0
      %1276 = vmatmul.mubr.f32.gmra.mxu0 %v1057
      %v1277 = vpop.f32.mrf.mxu0
      %v1278 = vadd.f32 %v853, %v1277
      %v1279 = vpop.f32.mrf.mxu0
      %1280 = vmatprep.mubr.f32.mxu0 0.0
      %1281 = vmatmul.mubr.f32.gmra.mxu0 %v1060
      %v1282 = vpop.f32.mrf.mxu0
      %v1283 = vadd.f32 %v858, %v1282
      %v1284 = vpop.f32.mrf.mxu0
      %1285 = vmatprep.mubr.f32.mxu0 0.0
      %1286 = vmatmul.mubr.f32.gmra.mxu0 %v1063
      %v1287 = vpop.f32.mrf.mxu0
      %v1288 = vadd.f32 %v863, %v1287
      %v1289 = vpop.f32.mrf.mxu0
      %1290 = vmatprep.mubr.f32.mxu0 0.0
      %1291 = vmatmul.mubr.f32.gmra.mxu0 %v1066
      %v1292 = vpop.f32.mrf.mxu0
      %v1293 = vadd.f32 %v868, %v1292
      %v1294 = vpop.f32.mrf.mxu0
      %1295 = vmatprep.mubr.f32.mxu0 0.0
      %1296 = vmatmul.mubr.f32.gmra.mxu0 %v1069
      %v1297 = vpop.f32.mrf.mxu0
      %v1298 = vadd.f32 %v873, %v1297
      %v1299 = vpop.f32.mrf.mxu0
      %1300 = vmatprep.mubr.f32.mxu0 0.0
      %1301 = vmatmul.mubr.f32.gmra.mxu0 %v1072
      %v1302 = vpop.f32.mrf.mxu0
      %v1303 = vadd.f32 %v878, %v1302
      %v1304 = vpop.f32.mrf.mxu0
      %1305 = vmatprep.mubr.f32.mxu0 0.0
      %1306 = vmatmul.mubr.f32.gmra.mxu0 %v1075
      %v1307 = vpop.f32.mrf.mxu0
      %v1308 = vadd.f32 %v883, %v1307
      %v1309 = vpop.f32.mrf.mxu0
      %1310 = vmatprep.mubr.f32.mxu0 0.0
      %1311 = vmatmul.mubr.f32.gmra.mxu0 %v1078
      %v1312 = vpop.f32.mrf.mxu0
      %v1313 = vadd.f32 %v888, %v1312
      %v1314 = vpop.f32.mrf.mxu0
      %1315 = vmatprep.mubr.f32.mxu0 0.0
      %1316 = vmatmul.mubr.f32.gmra.mxu0 %v1081
      %v1317 = vpop.f32.mrf.mxu0
      %v1318 = vadd.f32 %v893, %v1317
      %v1319 = vpop.f32.mrf.mxu0
      %1320 = vmatprep.mubr.f32.mxu0 0.0
      %1321 = vmatmul.mubr.f32.gmra.mxu0 %v1084
      %v1322 = vpop.f32.mrf.mxu0
      %v1323 = vadd.f32 %v898, %v1322
      %v1324 = vpop.f32.mrf.mxu0
      %1325 = vmatprep.mubr.f32.mxu0 0.0
      %1326 = vmatmul.mubr.f32.gmra.mxu0 %v1087
      %v1327 = vpop.f32.mrf.mxu0
      %v1328 = vadd.f32 %v903, %v1327
      %v1329 = vpop.f32.mrf.mxu0
      %1330 = vmatprep.mubr.f32.mxu0 0.0
      %1331 = vmatmul.mubr.f32.gmra.mxu0 %v1090
      %v1332 = vpop.f32.mrf.mxu0
      %v1333 = vadd.f32 %v908, %v1332
      %v1334 = vpop.f32.mrf.mxu0
      %1335 = vmatprep.mubr.f32.mxu0 0.0
      %1336 = vmatmul.mubr.f32.gmra.mxu0 %v1093
      %v1337 = vpop.f32.mrf.mxu0
      %v1338 = vadd.f32 %v913, %v1337
      %v1339 = vpop.f32.mrf.mxu0
      %1340 = vmatprep.mubr.f32.mxu0 0.0
      %1341 = vmatmul.mubr.f32.gmra.mxu0 %v1096
      %v1342 = vpop.f32.mrf.mxu0
      %v1343 = vadd.f32 %v918, %v1342
      %v1344 = vpop.f32.mrf.mxu0
      %1345 = vmatprep.mubr.f32.mxu0 0.0
      %1346 = vmatmul.mubr.f32.gmra.mxu0 %v1099
      %v1347 = vpop.f32.mrf.mxu0
      %v1348 = vadd.f32 %v923, %v1347
      %v1349 = vpop.f32.mrf.mxu0
      %1350 = vmatprep.mubr.f32.mxu0 0.0
      %1351 = vmatmul.mubr.f32.gmra.mxu0 %v1102
      %v1352 = vpop.f32.mrf.mxu0
      %v1353 = vadd.f32 %v928, %v1352
      %v1354 = vpop.f32.mrf.mxu0
      %1355 = vmatprep.mubr.f32.mxu0 0.0
      %1356 = vmatmul.mubr.f32.gmra.mxu0 %v1105
      %v1357 = vpop.f32.mrf.mxu0
      %v1358 = vadd.f32 %v933, %v1357
      %v1359 = vpop.f32.mrf.mxu0
      %1360 = vmatprep.mubr.f32.mxu0 0.0
      %1361 = vmatmul.mubr.f32.gmra.mxu0 %v1108
      %v1362 = vpop.f32.mrf.mxu0
      %v1363 = vadd.f32 %v938, %v1362
      %v1364 = vpop.f32.mrf.mxu0
      %1365 = vmatprep.mubr.f32.mxu0 0.0
      %1366 = vmatmul.mubr.f32.gmra.mxu0 %v1111
      %v1367 = vpop.f32.mrf.mxu0
      %v1368 = vadd.f32 %v943, %v1367
      %v1369 = vpop.f32.mrf.mxu0
      %1370 = vmatprep.mubr.f32.mxu0 0.0
      %1371 = vmatmul.mubr.f32.gmra.mxu0 %v1114
      %v1372 = vpop.f32.mrf.mxu0
      %v1373 = vadd.f32 %v948, %v1372
      %v1374 = vpop.f32.mrf.mxu0
      %1375 = vmatprep.mubr.f32.mxu0 0.0
      %1376 = vmatmul.mubr.f32.gmra.mxu0 %v1117
      %v1377 = vpop.f32.mrf.mxu0
      %v1378 = vadd.f32 %v953, %v1377
      %v1379 = vpop.f32.mrf.mxu0
      %1380 = vmatprep.mubr.f32.mxu0 0.0
      %1381 = vmatmul.mubr.f32.gmra.mxu0 %v1120
      %v1382 = vpop.f32.mrf.mxu0
      %v1383 = vadd.f32 %v958, %v1382
      %v1384 = vpop.f32.mrf.mxu0
      %1385 = vmatprep.mubr.f32.mxu0 0.0
      %1386 = vmatmul.mubr.f32.gmra.mxu0 %v1123
      %v1387 = vpop.f32.mrf.mxu0
      %v1388 = vadd.f32 %v963, %v1387
      %v1389 = vpop.f32.mrf.mxu0
      %1390 = vmatprep.mubr.f32.mxu0 0.0
      %1391 = vmatmul.mubr.f32.gmra.mxu0 %v1126
      %v1392 = vpop.f32.mrf.mxu0
      %v1393 = vadd.f32 %v968, %v1392
      %v1394 = vpop.f32.mrf.mxu0
      %1395 = vmatprep.mubr.f32.mxu0 0.0
      %1396 = vmatmul.mubr.f32.gmra.mxu0 %v1129
      %v1397 = vpop.f32.mrf.mxu0
      %v1398 = vadd.f32 %v973, %v1397
      %v1399 = vpop.f32.mrf.mxu0
      %1400 = vmatprep.mubr.f32.mxu0 0.0
      %1401 = vmatmul.mubr.f32.gmra.mxu0 %v1132
      %v1402 = vpop.f32.mrf.mxu0
      %v1403 = vadd.f32 %v978, %v1402
      %v1404 = vpop.f32.mrf.mxu0
      %1405 = vmatprep.mubr.f32.mxu0 0.0
      %1406 = vmatmul.mubr.f32.gmra.mxu0 %v1135
      %v1407 = vpop.f32.mrf.mxu0
      %v1408 = vadd.f32 %v983, %v1407
      %v1409 = vpop.f32.mrf.mxu0
      %1410 = vmatprep.mubr.f32.mxu0 0.0
      %1411 = vmatmul.mubr.f32.gmra.mxu0 %v1138
      %v1412 = vpop.f32.mrf.mxu0
      %v1413 = vadd.f32 %v988, %v1412
      %v1414 = vpop.f32.mrf.mxu0
      %1415 = vmatprep.mubr.f32.mxu0 0.0
      %1416 = vmatmul.mubr.f32.gmra.mxu0 %v1141
      %v1417 = vpop.f32.mrf.mxu0
      %v1418 = vadd.f32 %v993, %v1417
      %v1419 = vpop.f32.mrf.mxu0
      %1420 = vmatprep.mubr.f32.mxu0 0.0
      %1421 = vmatmul.mubr.f32.gmra.mxu0 %v1144
      %v1422 = vpop.f32.mrf.mxu0
      %v1423 = vadd.f32 %v998, %v1422
      %v1424 = vpop.f32.mrf.mxu0
      %1425 = vmatprep.mubr.f32.mxu0 0.0
      %1426 = vmatmul.mubr.f32.gmra.mxu0 %v1147
      %v1427 = vpop.f32.mrf.mxu0
      %v1428 = vadd.f32 %v1003, %v1427
      %v1429 = vpop.f32.mrf.mxu0
      %1430 = vmatprep.mubr.f32.mxu0 0.0
      %1431 = vmatmul.mubr.f32.gmra.mxu0 %v1150
      %v1432 = vpop.f32.mrf.mxu0
      %v1433 = vadd.f32 %v1008, %v1432
      %v1434 = vpop.f32.mrf.mxu0
      %1435 = vmatprep.mubr.f32.mxu0 0.0
      %1436 = vmatmul.mubr.f32.gmra.mxu0 %v1153
      %v1437 = vpop.f32.mrf.mxu0
      %v1438 = vadd.f32 %v1013, %v1437
      %v1439 = vpop.f32.mrf.mxu0
      %1440 = vmatprep.mubr.f32.mxu0 0.0
      %1441 = vmatmul.mubr.f32.gmra.mxu0 %v1156
      %v1442 = vpop.f32.mrf.mxu0
      %v1443 = vadd.f32 %v1018, %v1442
      %v1444 = vpop.f32.mrf.mxu0
      %1445 = vmatprep.mubr.f32.mxu0 0.0
      %1446 = vmatmul.mubr.f32.gmra.mxu0 %v1159
      %v1447 = vpop.f32.mrf.mxu0
      %v1448 = vadd.f32 %v1023, %v1447
      %v1449 = vpop.f32.mrf.mxu0
      %1450 = vdwg.mxu0
      %v1451 = vld [vmem:[#allocation2 + $0x2] sm:$0xff]
      %v1452 = vld [vmem:[#allocation2 + $0xa] sm:$0xff]
      %v1453 = vld [vmem:[#allocation2 + $0x12] sm:$0xff]
      %v1454 = vld [vmem:[#allocation2 + $0x1a] sm:$0xff]
      %v1455 = vld [vmem:[#allocation2 + $0x22] sm:$0xff]
      %v1456 = vld [vmem:[#allocation2 + $0x2a] sm:$0xff]
      %v1457 = vld [vmem:[#allocation2 + $0x32] sm:$0xff]
      %v1458 = vld [vmem:[#allocation2 + $0x3a] sm:$0xff]
      %v1459 = vld [vmem:[#allocation2 + $0x42] sm:$0xff]
      %v1460 = vld [vmem:[#allocation2 + $0x4a] sm:$0xff]
      %v1461 = vld [vmem:[#allocation2 + $0x52] sm:$0xff]
      %v1462 = vld [vmem:[#allocation2 + $0x5a] sm:$0xff]
      %v1463 = vld [vmem:[#allocation2 + $0x62] sm:$0xff]
      %v1464 = vld [vmem:[#allocation2 + $0x6a] sm:$0xff]
      %v1465 = vld [vmem:[#allocation2 + $0x72] sm:$0xff]
      %v1466 = vld [vmem:[#allocation2 + $0x7a] sm:$0xff]
      %v1467 = vld [vmem:[#allocation2 + $0x82] sm:$0xff]
      %v1468 = vld [vmem:[#allocation2 + $0x8a] sm:$0xff]
      %v1469 = vld [vmem:[#allocation2 + $0x92] sm:$0xff]
      %v1470 = vld [vmem:[#allocation2 + $0x9a] sm:$0xff]
      %v1471 = vld [vmem:[#allocation2 + $0xa2] sm:$0xff]
      %v1472 = vld [vmem:[#allocation2 + $0xaa] sm:$0xff]
      %v1473 = vld [vmem:[#allocation2 + $0xb2] sm:$0xff]
      %v1474 = vld [vmem:[#allocation2 + $0xba] sm:$0xff]
      %v1475 = vld [vmem:[#allocation2 + $0xc2] sm:$0xff]
      %v1476 = vld [vmem:[#allocation2 + $0xca] sm:$0xff]
      %v1477 = vld [vmem:[#allocation2 + $0xd2] sm:$0xff]
      %v1478 = vld [vmem:[#allocation2 + $0xda] sm:$0xff]
      %v1479 = vld [vmem:[#allocation2 + $0xe2] sm:$0xff]
      %v1480 = vld [vmem:[#allocation2 + $0xea] sm:$0xff]
      %v1481 = vld [vmem:[#allocation2 + $0xf2] sm:$0xff]
      %v1482 = vld [vmem:[#allocation2 + $0xfa] sm:$0xff]
      %v1483 = vld [vmem:[#allocation2 + $0x102] sm:$0xff]
      %v1484 = vld [vmem:[#allocation2 + $0x10a] sm:$0xff]
      %v1485 = vld [vmem:[#allocation2 + $0x112] sm:$0xff]
      %v1486 = vld [vmem:[#allocation2 + $0x11a] sm:$0xff]
      %v1487 = vld [vmem:[#allocation2 + $0x122] sm:$0xff]
      %v1488 = vld [vmem:[#allocation2 + $0x12a] sm:$0xff]
      %v1489 = vld [vmem:[#allocation2 + $0x132] sm:$0xff]
      %v1490 = vld [vmem:[#allocation2 + $0x13a] sm:$0xff]
      %v1491 = vld [vmem:[#allocation2 + $0x142] sm:$0xff]
      %v1492 = vld [vmem:[#allocation2 + $0x14a] sm:$0xff]
      %v1493 = vld [vmem:[#allocation2 + $0x152] sm:$0xff]
      %v1494 = vld [vmem:[#allocation2 + $0x15a] sm:$0xff]
      %v1495 = vld [vmem:[#allocation2 + $0x162] sm:$0xff]
      %s1496 = scalar_lea.vmem %s377, 16
      %v1497 = vld [vmem:[%s1496] sm:$0xff]
      %v1499 = vsel %vm452, %v1451, 0
      %v1502 = vsel %vm452, %v1452, 0
      %v1505 = vsel %vm452, %v1453, 0
      %v1508 = vsel %vm452, %v1454, 0
      %v1511 = vsel %vm452, %v1455, 0
      %v1514 = vsel %vm452, %v1456, 0
      %v1517 = vsel %vm452, %v1457, 0
      %v1520 = vsel %vm452, %v1458, 0
      %v1523 = vsel %vm452, %v1459, 0
      %v1526 = vsel %vm452, %v1460, 0
      %v1529 = vsel %vm452, %v1461, 0
      %v1532 = vsel %vm452, %v1462, 0
      %v1535 = vsel %vm452, %v1463, 0
      %v1538 = vsel %vm452, %v1464, 0
      %v1541 = vsel %vm452, %v1465, 0
      %v1544 = vsel %vm452, %v1466, 0
      %v1547 = vsel %vm452, %v1467, 0
      %v1550 = vsel %vm452, %v1468, 0
      %v1553 = vsel %vm452, %v1469, 0
      %v1556 = vsel %vm452, %v1470, 0
      %v1559 = vsel %vm452, %v1471, 0
      %v1562 = vsel %vm452, %v1472, 0
      %v1565 = vsel %vm452, %v1473, 0
      %v1568 = vsel %vm452, %v1474, 0
      %v1571 = vsel %vm452, %v1475, 0
      %v1574 = vsel %vm452, %v1476, 0
      %v1577 = vsel %vm452, %v1477, 0
      %v1580 = vsel %vm452, %v1478, 0
      %v1583 = vsel %vm452, %v1479, 0
      %v1586 = vsel %vm452, %v1480, 0
      %v1589 = vsel %vm452, %v1481, 0
      %v1592 = vsel %vm452, %v1482, 0
      %v1595 = vsel %vm452, %v1483, 0
      %v1598 = vsel %vm452, %v1484, 0
      %v1601 = vsel %vm452, %v1485, 0
      %v1604 = vsel %vm452, %v1486, 0
      %v1607 = vsel %vm452, %v1487, 0
      %v1610 = vsel %vm452, %v1488, 0
      %v1613 = vsel %vm452, %v1489, 0
      %v1616 = vsel %vm452, %v1490, 0
      %v1619 = vsel %vm452, %v1491, 0
      %v1622 = vsel %vm452, %v1492, 0
      %v1625 = vsel %vm452, %v1493, 0
      %v1628 = vsel %vm452, %v1494, 0
      %v1631 = vsel %vm452, %v1495, 0
      %1633 = vmatprep.subr.mxu0 0.0
      %1634 = vmatpush1.msra.mxu0 0.0
      %1635 = vmatprep.subr.mxu0 0.0
      %1636 = vmatpush1.msra.mxu0 0.0
      %1637 = vmatprep.subr.mxu0 0.0
      %1638 = vmatpush1.msra.mxu0 0.0
      %1639 = vmatprep.subr.mxu0 0.0
      %1640 = vmatpush1.msra.mxu0 0.0
      %1641 = vmatprep.subr.mxu0 0.0
      %1642 = vmatpush1.msra.mxu0 0.0
      %1643 = vmatprep.subr.mxu0 0.0
      %1644 = vmatpush1.msra.mxu0 0.0
      %1645 = vmatprep.subr.mxu0 0.0
      %1646 = vmatpush1.msra.mxu0 0.0
      %1647 = vmatprep.subr.mxu0 0.0
      %1648 = vmatpush1.msra.mxu0 0.0
      %1649 = vmatprep.subr.mxu0 0.0
      %1650 = vmatpush1.msra.mxu0 0.0
      %1651 = vmatprep.subr.mxu0 0.0
      %1652 = vmatpush1.msra.mxu0 0.0
      %1653 = vmatprep.subr.mxu0 0.0
      %1654 = vmatpush1.msra.mxu0 0.0
      %1655 = vmatprep.subr.mxu0 0.0
      %1656 = vmatpush1.msra.mxu0 0.0
      %1657 = vmatprep.subr.mxu0 0.0
      %1658 = vmatpush1.msra.mxu0 0.0
      %1659 = vmatprep.subr.mxu0 0.0
      %1660 = vmatpush1.msra.mxu0 0.0
      %1661 = vmatprep.subr.mxu0 0.0
      %1662 = vmatpush1.msra.mxu0 0.0
      %1663 = vmatprep.subr.mxu0 0.0
      %1664 = vmatpush1.msra.mxu0 %v1497
      %1665 = vmatprep.subr.mxu0 0.0
      %1666 = vmatpush2.msra.mxu0 0.0
      %1667 = vmatprep.subr.mxu0 0.0
      %1668 = vmatpush2.msra.mxu0 0.0
      %1669 = vmatprep.subr.mxu0 0.0
      %1670 = vmatpush2.msra.mxu0 0.0
      %1671 = vmatprep.subr.mxu0 0.0
      %1672 = vmatpush2.msra.mxu0 0.0
      %1673 = vmatprep.subr.mxu0 0.0
      %1674 = vmatpush2.msra.mxu0 0.0
      %1675 = vmatprep.subr.mxu0 0.0
      %1676 = vmatpush2.msra.mxu0 0.0
      %1677 = vmatprep.subr.mxu0 0.0
      %1678 = vmatpush2.msra.mxu0 0.0
      %1679 = vmatprep.subr.mxu0 0.0
      %1680 = vmatpush2.msra.mxu0 0.0
      %1681 = vmatprep.subr.mxu0 0.0
      %1682 = vmatpush2.msra.mxu0 0.0
      %1683 = vmatprep.subr.mxu0 0.0
      %1684 = vmatpush2.msra.mxu0 0.0
      %1685 = vmatprep.subr.mxu0 0.0
      %1686 = vmatpush2.msra.mxu0 0.0
      %1687 = vmatprep.subr.mxu0 0.0
      %1688 = vmatpush2.msra.mxu0 0.0
      %1689 = vmatprep.subr.mxu0 0.0
      %1690 = vmatpush2.msra.mxu0 0.0
      %1691 = vmatprep.subr.mxu0 0.0
      %1692 = vmatpush2.msra.mxu0 0.0
      %1693 = vmatprep.subr.mxu0 0.0
      %1694 = vmatpush2.msra.mxu0 0.0
      %1695 = vmatprep.subr.mxu0 0.0
      %1696 = vmatpush2.msra.mxu0 0.0
      %1697 = vmatprep.mubr.f32.mxu0 0.0
      %1698 = vmatmul.mubr.f32.gmra.mxu0 %v1499
      %v1699 = vpop.f32.mrf.mxu0
      %v1700 = vadd.f32 0.0, %v1699
      %v1701 = vpop.f32.mrf.mxu0
      %1702 = vmatprep.mubr.f32.mxu0 0.0
      %1703 = vmatmul.mubr.f32.gmra.mxu0 %v1502
      %v1704 = vpop.f32.mrf.mxu0
      %v1705 = vadd.f32 0.0, %v1704
      %v1706 = vpop.f32.mrf.mxu0
      %1707 = vmatprep.mubr.f32.mxu0 0.0
      %1708 = vmatmul.mubr.f32.gmra.mxu0 %v1505
      %v1709 = vpop.f32.mrf.mxu0
      %v1710 = vadd.f32 0.0, %v1709
      %v1711 = vpop.f32.mrf.mxu0
      %1712 = vmatprep.mubr.f32.mxu0 0.0
      %1713 = vmatmul.mubr.f32.gmra.mxu0 %v1508
      %v1714 = vpop.f32.mrf.mxu0
      %v1715 = vadd.f32 0.0, %v1714
      %v1716 = vpop.f32.mrf.mxu0
      %1717 = vmatprep.mubr.f32.mxu0 0.0
      %1718 = vmatmul.mubr.f32.gmra.mxu0 %v1511
      %v1719 = vpop.f32.mrf.mxu0
      %v1720 = vadd.f32 0.0, %v1719
      %v1721 = vpop.f32.mrf.mxu0
      %1722 = vmatprep.mubr.f32.mxu0 0.0
      %1723 = vmatmul.mubr.f32.gmra.mxu0 %v1514
      %v1724 = vpop.f32.mrf.mxu0
      %v1725 = vadd.f32 0.0, %v1724
      %v1726 = vpop.f32.mrf.mxu0
      %1727 = vmatprep.mubr.f32.mxu0 0.0
      %1728 = vmatmul.mubr.f32.gmra.mxu0 %v1517
      %v1729 = vpop.f32.mrf.mxu0
      %v1730 = vadd.f32 0.0, %v1729
      %v1731 = vpop.f32.mrf.mxu0
      %1732 = vmatprep.mubr.f32.mxu0 0.0
      %1733 = vmatmul.mubr.f32.gmra.mxu0 %v1520
      %v1734 = vpop.f32.mrf.mxu0
      %v1735 = vadd.f32 0.0, %v1734
      %v1736 = vpop.f32.mrf.mxu0
      %1737 = vmatprep.mubr.f32.mxu0 0.0
      %1738 = vmatmul.mubr.f32.gmra.mxu0 %v1523
      %v1739 = vpop.f32.mrf.mxu0
      %v1740 = vadd.f32 0.0, %v1739
      %v1741 = vpop.f32.mrf.mxu0
      %1742 = vmatprep.mubr.f32.mxu0 0.0
      %1743 = vmatmul.mubr.f32.gmra.mxu0 %v1526
      %v1744 = vpop.f32.mrf.mxu0
      %v1745 = vadd.f32 0.0, %v1744
      %v1746 = vpop.f32.mrf.mxu0
      %1747 = vmatprep.mubr.f32.mxu0 0.0
      %1748 = vmatmul.mubr.f32.gmra.mxu0 %v1529
      %v1749 = vpop.f32.mrf.mxu0
      %v1750 = vadd.f32 0.0, %v1749
      %v1751 = vpop.f32.mrf.mxu0
      %1752 = vmatprep.mubr.f32.mxu0 0.0
      %1753 = vmatmul.mubr.f32.gmra.mxu0 %v1532
      %v1754 = vpop.f32.mrf.mxu0
      %v1755 = vadd.f32 0.0, %v1754
      %v1756 = vpop.f32.mrf.mxu0
      %1757 = vmatprep.mubr.f32.mxu0 0.0
      %1758 = vmatmul.mubr.f32.gmra.mxu0 %v1535
      %v1759 = vpop.f32.mrf.mxu0
      %v1760 = vadd.f32 0.0, %v1759
      %v1761 = vpop.f32.mrf.mxu0
      %1762 = vmatprep.mubr.f32.mxu0 0.0
      %1763 = vmatmul.mubr.f32.gmra.mxu0 %v1538
      %v1764 = vpop.f32.mrf.mxu0
      %v1765 = vadd.f32 0.0, %v1764
      %v1766 = vpop.f32.mrf.mxu0
      %1767 = vmatprep.mubr.f32.mxu0 0.0
      %1768 = vmatmul.mubr.f32.gmra.mxu0 %v1541
      %v1769 = vpop.f32.mrf.mxu0
      %v1770 = vadd.f32 0.0, %v1769
      %v1771 = vpop.f32.mrf.mxu0
      %1772 = vmatprep.mubr.f32.mxu0 0.0
      %1773 = vmatmul.mubr.f32.gmra.mxu0 %v1544
      %v1774 = vpop.f32.mrf.mxu0
      %v1775 = vadd.f32 0.0, %v1774
      %v1776 = vpop.f32.mrf.mxu0
      %1777 = vmatprep.mubr.f32.mxu0 0.0
      %1778 = vmatmul.mubr.f32.gmra.mxu0 %v1547
      %v1779 = vpop.f32.mrf.mxu0
      %v1780 = vadd.f32 0.0, %v1779
      %v1781 = vpop.f32.mrf.mxu0
      %1782 = vmatprep.mubr.f32.mxu0 0.0
      %1783 = vmatmul.mubr.f32.gmra.mxu0 %v1550
      %v1784 = vpop.f32.mrf.mxu0
      %v1785 = vadd.f32 0.0, %v1784
      %v1786 = vpop.f32.mrf.mxu0
      %1787 = vmatprep.mubr.f32.mxu0 0.0
      %1788 = vmatmul.mubr.f32.gmra.mxu0 %v1553
      %v1789 = vpop.f32.mrf.mxu0
      %v1790 = vadd.f32 0.0, %v1789
      %v1791 = vpop.f32.mrf.mxu0
      %1792 = vmatprep.mubr.f32.mxu0 0.0
      %1793 = vmatmul.mubr.f32.gmra.mxu0 %v1556
      %v1794 = vpop.f32.mrf.mxu0
      %v1795 = vadd.f32 0.0, %v1794
      %v1796 = vpop.f32.mrf.mxu0
      %1797 = vmatprep.mubr.f32.mxu0 0.0
      %1798 = vmatmul.mubr.f32.gmra.mxu0 %v1559
      %v1799 = vpop.f32.mrf.mxu0
      %v1800 = vadd.f32 0.0, %v1799
      %v1801 = vpop.f32.mrf.mxu0
      %1802 = vmatprep.mubr.f32.mxu0 0.0
      %1803 = vmatmul.mubr.f32.gmra.mxu0 %v1562
      %v1804 = vpop.f32.mrf.mxu0
      %v1805 = vadd.f32 0.0, %v1804
      %v1806 = vpop.f32.mrf.mxu0
      %1807 = vmatprep.mubr.f32.mxu0 0.0
      %1808 = vmatmul.mubr.f32.gmra.mxu0 %v1565
      %v1809 = vpop.f32.mrf.mxu0
      %v1810 = vadd.f32 0.0, %v1809
      %v1811 = vpop.f32.mrf.mxu0
      %1812 = vmatprep.mubr.f32.mxu0 0.0
      %1813 = vmatmul.mubr.f32.gmra.mxu0 %v1568
      %v1814 = vpop.f32.mrf.mxu0
      %v1815 = vadd.f32 0.0, %v1814
      %v1816 = vpop.f32.mrf.mxu0
      %1817 = vmatprep.mubr.f32.mxu0 0.0
      %1818 = vmatmul.mubr.f32.gmra.mxu0 %v1571
      %v1819 = vpop.f32.mrf.mxu0
      %v1820 = vadd.f32 0.0, %v1819
      %v1821 = vpop.f32.mrf.mxu0
      %1822 = vmatprep.mubr.f32.mxu0 0.0
      %1823 = vmatmul.mubr.f32.gmra.mxu0 %v1574
      %v1824 = vpop.f32.mrf.mxu0
      %v1825 = vadd.f32 0.0, %v1824
      %v1826 = vpop.f32.mrf.mxu0
      %1827 = vmatprep.mubr.f32.mxu0 0.0
      %1828 = vmatmul.mubr.f32.gmra.mxu0 %v1577
      %v1829 = vpop.f32.mrf.mxu0
      %v1830 = vadd.f32 0.0, %v1829
      %v1831 = vpop.f32.mrf.mxu0
      %1832 = vmatprep.mubr.f32.mxu0 0.0
      %1833 = vmatmul.mubr.f32.gmra.mxu0 %v1580
      %v1834 = vpop.f32.mrf.mxu0
      %v1835 = vadd.f32 0.0, %v1834
      %v1836 = vpop.f32.mrf.mxu0
      %1837 = vmatprep.mubr.f32.mxu0 0.0
      %1838 = vmatmul.mubr.f32.gmra.mxu0 %v1583
      %v1839 = vpop.f32.mrf.mxu0
      %v1840 = vadd.f32 0.0, %v1839
      %v1841 = vpop.f32.mrf.mxu0
      %1842 = vmatprep.mubr.f32.mxu0 0.0
      %1843 = vmatmul.mubr.f32.gmra.mxu0 %v1586
      %v1844 = vpop.f32.mrf.mxu0
      %v1845 = vadd.f32 0.0, %v1844
      %v1846 = vpop.f32.mrf.mxu0
      %1847 = vmatprep.mubr.f32.mxu0 0.0
      %1848 = vmatmul.mubr.f32.gmra.mxu0 %v1589
      %v1849 = vpop.f32.mrf.mxu0
      %v1850 = vadd.f32 0.0, %v1849
      %v1851 = vpop.f32.mrf.mxu0
      %1852 = vmatprep.mubr.f32.mxu0 0.0
      %1853 = vmatmul.mubr.f32.gmra.mxu0 %v1592
      %v1854 = vpop.f32.mrf.mxu0
      %v1855 = vadd.f32 0.0, %v1854
      %v1856 = vpop.f32.mrf.mxu0
      %1857 = vmatprep.mubr.f32.mxu0 0.0
      %1858 = vmatmul.mubr.f32.gmra.mxu0 %v1595
      %v1859 = vpop.f32.mrf.mxu0
      %v1860 = vadd.f32 0.0, %v1859
      %v1861 = vpop.f32.mrf.mxu0
      %1862 = vmatprep.mubr.f32.mxu0 0.0
      %1863 = vmatmul.mubr.f32.gmra.mxu0 %v1598
      %v1864 = vpop.f32.mrf.mxu0
      %v1865 = vadd.f32 0.0, %v1864
      %v1866 = vpop.f32.mrf.mxu0
      %1867 = vmatprep.mubr.f32.mxu0 0.0
      %1868 = vmatmul.mubr.f32.gmra.mxu0 %v1601
      %v1869 = vpop.f32.mrf.mxu0
      %v1870 = vadd.f32 0.0, %v1869
      %v1871 = vpop.f32.mrf.mxu0
      %1872 = vmatprep.mubr.f32.mxu0 0.0
      %1873 = vmatmul.mubr.f32.gmra.mxu0 %v1604
      %v1874 = vpop.f32.mrf.mxu0
      %v1875 = vadd.f32 0.0, %v1874
      %v1876 = vpop.f32.mrf.mxu0
      %1877 = vmatprep.mubr.f32.mxu0 0.0
      %1878 = vmatmul.mubr.f32.gmra.mxu0 %v1607
      %v1879 = vpop.f32.mrf.mxu0
      %v1880 = vadd.f32 0.0, %v1879
      %v1881 = vpop.f32.mrf.mxu0
      %1882 = vmatprep.mubr.f32.mxu0 0.0
      %1883 = vmatmul.mubr.f32.gmra.mxu0 %v1610
      %v1884 = vpop.f32.mrf.mxu0
      %v1885 = vadd.f32 0.0, %v1884
      %v1886 = vpop.f32.mrf.mxu0
      %1887 = vmatprep.mubr.f32.mxu0 0.0
      %1888 = vmatmul.mubr.f32.gmra.mxu0 %v1613
      %v1889 = vpop.f32.mrf.mxu0
      %v1890 = vadd.f32 0.0, %v1889
      %v1891 = vpop.f32.mrf.mxu0
      %1892 = vmatprep.mubr.f32.mxu0 0.0
      %1893 = vmatmul.mubr.f32.gmra.mxu0 %v1616
      %v1894 = vpop.f32.mrf.mxu0
      %v1895 = vadd.f32 0.0, %v1894
      %v1896 = vpop.f32.mrf.mxu0
      %1897 = vmatprep.mubr.f32.mxu0 0.0
      %1898 = vmatmul.mubr.f32.gmra.mxu0 %v1619
      %v1899 = vpop.f32.mrf.mxu0
      %v1900 = vadd.f32 0.0, %v1899
      %v1901 = vpop.f32.mrf.mxu0
      %1902 = vmatprep.mubr.f32.mxu0 0.0
      %1903 = vmatmul.mubr.f32.gmra.mxu0 %v1622
      %v1904 = vpop.f32.mrf.mxu0
      %v1905 = vadd.f32 0.0, %v1904
      %v1906 = vpop.f32.mrf.mxu0
      %1907 = vmatprep.mubr.f32.mxu0 0.0
      %1908 = vmatmul.mubr.f32.gmra.mxu0 %v1625
      %v1909 = vpop.f32.mrf.mxu0
      %v1910 = vadd.f32 0.0, %v1909
      %v1911 = vpop.f32.mrf.mxu0
      %1912 = vmatprep.mubr.f32.mxu0 0.0
      %1913 = vmatmul.mubr.f32.gmra.mxu0 %v1628
      %v1914 = vpop.f32.mrf.mxu0
      %v1915 = vadd.f32 0.0, %v1914
      %v1916 = vpop.f32.mrf.mxu0
      %1917 = vmatprep.mubr.f32.mxu0 0.0
      %1918 = vmatmul.mubr.f32.gmra.mxu0 %v1631
      %v1919 = vpop.f32.mrf.mxu0
      %v1920 = vadd.f32 0.0, %v1919
      %v1921 = vpop.f32.mrf.mxu0
      %1922 = vdwg.mxu0
      %v1923 = vadd.f32 %v1228, %v1700
      %v1924 = vadd.f32 %v1233, %v1705
      %v1925 = vadd.f32 %v1238, %v1710
      %v1926 = vadd.f32 %v1243, %v1715
      %v1927 = vadd.f32 %v1248, %v1720
      %v1928 = vadd.f32 %v1253, %v1725
      %v1929 = vadd.f32 %v1258, %v1730
      %v1930 = vadd.f32 %v1263, %v1735
      %v1931 = vadd.f32 %v1268, %v1740
      %v1932 = vadd.f32 %v1273, %v1745
      %v1933 = vadd.f32 %v1278, %v1750
      %v1934 = vadd.f32 %v1283, %v1755
      %v1935 = vadd.f32 %v1288, %v1760
      %v1936 = vadd.f32 %v1293, %v1765
      %v1937 = vadd.f32 %v1298, %v1770
      %v1938 = vadd.f32 %v1303, %v1775
      %v1939 = vadd.f32 %v1308, %v1780
      %v1940 = vadd.f32 %v1313, %v1785
      %v1941 = vadd.f32 %v1318, %v1790
      %v1942 = vadd.f32 %v1323, %v1795
      %v1943 = vadd.f32 %v1328, %v1800
      %v1944 = vadd.f32 %v1333, %v1805
      %v1945 = vadd.f32 %v1338, %v1810
      %v1946 = vadd.f32 %v1343, %v1815
      %v1947 = vadd.f32 %v1348, %v1820
      %v1948 = vadd.f32 %v1353, %v1825
      %v1949 = vadd.f32 %v1358, %v1830
      %v1950 = vadd.f32 %v1363, %v1835
      %v1951 = vadd.f32 %v1368, %v1840
      %v1952 = vadd.f32 %v1373, %v1845
      %v1953 = vadd.f32 %v1378, %v1850
      %v1954 = vadd.f32 %v1383, %v1855
      %v1955 = vadd.f32 %v1388, %v1860
      %v1956 = vadd.f32 %v1393, %v1865
      %v1957 = vadd.f32 %v1398, %v1870
      %v1958 = vadd.f32 %v1403, %v1875
      %v1959 = vadd.f32 %v1408, %v1880
      %v1960 = vadd.f32 %v1413, %v1885
      %v1961 = vadd.f32 %v1418, %v1890
      %v1962 = vadd.f32 %v1423, %v1895
      %v1963 = vadd.f32 %v1428, %v1900
      %v1964 = vadd.f32 %v1433, %v1905
      %v1965 = vadd.f32 %v1438, %v1910
      %v1966 = vadd.f32 %v1443, %v1915
      %v1967 = vadd.f32 %v1448, %v1920
      %v1968 = vld [vmem:[#allocation2 + $0x12] sm:$0xff]
      %v1969 = vld [vmem:[#allocation2 + $0x1a] sm:$0xff]
      %v1970 = vld [vmem:[#allocation2 + $0x22] sm:$0xff]
      %v1971 = vld [vmem:[#allocation2 + $0x2a] sm:$0xff]
      %v1972 = vld [vmem:[#allocation2 + $0x32] sm:$0xff]
      %v1973 = vld [vmem:[#allocation2 + $0x3a] sm:$0xff]
      %v1974 = vld [vmem:[#allocation2 + $0x42] sm:$0xff]
      %v1975 = vld [vmem:[#allocation2 + $0x4a] sm:$0xff]
      %v1976 = vld [vmem:[#allocation2 + $0x52] sm:$0xff]
      %v1977 = vld [vmem:[#allocation2 + $0x5a] sm:$0xff]
      %v1978 = vld [vmem:[#allocation2 + $0x62] sm:$0xff]
      %v1979 = vld [vmem:[#allocation2 + $0x6a] sm:$0xff]
      %v1980 = vld [vmem:[#allocation2 + $0x72] sm:$0xff]
      %v1981 = vld [vmem:[#allocation2 + $0x7a] sm:$0xff]
      %v1982 = vld [vmem:[#allocation2 + $0x82] sm:$0xff]
      %v1983 = vld [vmem:[#allocation2 + $0x8a] sm:$0xff]
      %v1984 = vld [vmem:[#allocation2 + $0x92] sm:$0xff]
      %v1985 = vld [vmem:[#allocation2 + $0x9a] sm:$0xff]
      %v1986 = vld [vmem:[#allocation2 + $0xa2] sm:$0xff]
      %v1987 = vld [vmem:[#allocation2 + $0xaa] sm:$0xff]
      %v1988 = vld [vmem:[#allocation2 + $0xb2] sm:$0xff]
      %v1989 = vld [vmem:[#allocation2 + $0xba] sm:$0xff]
      %v1990 = vld [vmem:[#allocation2 + $0xc2] sm:$0xff]
      %v1991 = vld [vmem:[#allocation2 + $0xca] sm:$0xff]
      %v1992 = vld [vmem:[#allocation2 + $0xd2] sm:$0xff]
      %v1993 = vld [vmem:[#allocation2 + $0xda] sm:$0xff]
      %v1994 = vld [vmem:[#allocation2 + $0xe2] sm:$0xff]
      %v1995 = vld [vmem:[#allocation2 + $0xea] sm:$0xff]
      %v1996 = vld [vmem:[#allocation2 + $0xf2] sm:$0xff]
      %v1997 = vld [vmem:[#allocation2 + $0xfa] sm:$0xff]
      %v1998 = vld [vmem:[#allocation2 + $0x102] sm:$0xff]
      %v1999 = vld [vmem:[#allocation2 + $0x10a] sm:$0xff]
      %v2000 = vld [vmem:[#allocation2 + $0x112] sm:$0xff]
      %v2001 = vld [vmem:[#allocation2 + $0x11a] sm:$0xff]
      %v2002 = vld [vmem:[#allocation2 + $0x122] sm:$0xff]
      %v2003 = vld [vmem:[#allocation2 + $0x12a] sm:$0xff]
      %v2004 = vld [vmem:[#allocation2 + $0x132] sm:$0xff]
      %v2005 = vld [vmem:[#allocation2 + $0x13a] sm:$0xff]
      %v2006 = vld [vmem:[#allocation2 + $0x142] sm:$0xff]
      %v2007 = vld [vmem:[#allocation2 + $0x14a] sm:$0xff]
      %v2008 = vld [vmem:[#allocation2 + $0x152] sm:$0xff]
      %v2009 = vld [vmem:[#allocation2 + $0x15a] sm:$0xff]
      %v2010 = vld [vmem:[#allocation2 + $0x162] sm:$0xff]
      %v2011 = vld [vmem:[#allocation2 + $0x16a] sm:$0xff]
      %v2012 = vld [vmem:[#allocation2 + $0x172] sm:$0xff]
      %s2013 = scalar_lea.vmem %s377, 24
      %v2014 = vld [vmem:[%s2013] sm:$0xff]
      %v2016 = vsel %vm452, %v1968, 0
      %v2019 = vsel %vm452, %v1969, 0
      %v2022 = vsel %vm452, %v1970, 0
      %v2025 = vsel %vm452, %v1971, 0
      %v2028 = vsel %vm452, %v1972, 0
      %v2031 = vsel %vm452, %v1973, 0
      %v2034 = vsel %vm452, %v1974, 0
      %v2037 = vsel %vm452, %v1975, 0
      %v2040 = vsel %vm452, %v1976, 0
      %v2043 = vsel %vm452, %v1977, 0
      %v2046 = vsel %vm452, %v1978, 0
      %v2049 = vsel %vm452, %v1979, 0
      %v2052 = vsel %vm452, %v1980, 0
      %v2055 = vsel %vm452, %v1981, 0
      %v2058 = vsel %vm452, %v1982, 0
      %v2061 = vsel %vm452, %v1983, 0
      %v2064 = vsel %vm452, %v1984, 0
      %v2067 = vsel %vm452, %v1985, 0
      %v2070 = vsel %vm452, %v1986, 0
      %v2073 = vsel %vm452, %v1987, 0
      %v2076 = vsel %vm452, %v1988, 0
      %v2079 = vsel %vm452, %v1989, 0
      %v2082 = vsel %vm452, %v1990, 0
      %v2085 = vsel %vm452, %v1991, 0
      %v2088 = vsel %vm452, %v1992, 0
      %v2091 = vsel %vm452, %v1993, 0
      %v2094 = vsel %vm452, %v1994, 0
      %v2097 = vsel %vm452, %v1995, 0
      %v2100 = vsel %vm452, %v1996, 0
      %v2103 = vsel %vm452, %v1997, 0
      %v2106 = vsel %vm452, %v1998, 0
      %v2109 = vsel %vm452, %v1999, 0
      %v2112 = vsel %vm452, %v2000, 0
      %v2115 = vsel %vm452, %v2001, 0
      %v2118 = vsel %vm452, %v2002, 0
      %v2121 = vsel %vm452, %v2003, 0
      %v2124 = vsel %vm452, %v2004, 0
      %v2127 = vsel %vm452, %v2005, 0
      %v2130 = vsel %vm452, %v2006, 0
      %v2133 = vsel %vm452, %v2007, 0
      %v2136 = vsel %vm452, %v2008, 0
      %v2139 = vsel %vm452, %v2009, 0
      %v2142 = vsel %vm452, %v2010, 0
      %v2145 = vsel %vm452, %v2011, 0
      %v2148 = vsel %vm452, %v2012, 0
      %2150 = vmatprep.subr.mxu0 0.0
      %2151 = vmatpush1.msra.mxu0 0.0
      %2152 = vmatprep.subr.mxu0 0.0
      %2153 = vmatpush1.msra.mxu0 0.0
      %2154 = vmatprep.subr.mxu0 0.0
      %2155 = vmatpush1.msra.mxu0 0.0
      %2156 = vmatprep.subr.mxu0 0.0
      %2157 = vmatpush1.msra.mxu0 0.0
      %2158 = vmatprep.subr.mxu0 0.0
      %2159 = vmatpush1.msra.mxu0 0.0
      %2160 = vmatprep.subr.mxu0 0.0
      %2161 = vmatpush1.msra.mxu0 0.0
      %2162 = vmatprep.subr.mxu0 0.0
      %2163 = vmatpush1.msra.mxu0 0.0
      %2164 = vmatprep.subr.mxu0 0.0
      %2165 = vmatpush1.msra.mxu0 0.0
      %2166 = vmatprep.subr.mxu0 0.0
      %2167 = vmatpush1.msra.mxu0 0.0
      %2168 = vmatprep.subr.mxu0 0.0
      %2169 = vmatpush1.msra.mxu0 0.0
      %2170 = vmatprep.subr.mxu0 0.0
      %2171 = vmatpush1.msra.mxu0 0.0
      %2172 = vmatprep.subr.mxu0 0.0
      %2173 = vmatpush1.msra.mxu0 0.0
      %2174 = vmatprep.subr.mxu0 0.0
      %2175 = vmatpush1.msra.mxu0 0.0
      %2176 = vmatprep.subr.mxu0 0.0
      %2177 = vmatpush1.msra.mxu0 0.0
      %2178 = vmatprep.subr.mxu0 0.0
      %2179 = vmatpush1.msra.mxu0 0.0
      %2180 = vmatprep.subr.mxu0 0.0
      %2181 = vmatpush1.msra.mxu0 %v2014
      %2182 = vmatprep.subr.mxu0 0.0
      %2183 = vmatpush2.msra.mxu0 0.0
      %2184 = vmatprep.subr.mxu0 0.0
      %2185 = vmatpush2.msra.mxu0 0.0
      %2186 = vmatprep.subr.mxu0 0.0
      %2187 = vmatpush2.msra.mxu0 0.0
      %2188 = vmatprep.subr.mxu0 0.0
      %2189 = vmatpush2.msra.mxu0 0.0
      %2190 = vmatprep.subr.mxu0 0.0
      %2191 = vmatpush2.msra.mxu0 0.0
      %2192 = vmatprep.subr.mxu0 0.0
      %2193 = vmatpush2.msra.mxu0 0.0
      %2194 = vmatprep.subr.mxu0 0.0
      %2195 = vmatpush2.msra.mxu0 0.0
      %2196 = vmatprep.subr.mxu0 0.0
      %2197 = vmatpush2.msra.mxu0 0.0
      %2198 = vmatprep.subr.mxu0 0.0
      %2199 = vmatpush2.msra.mxu0 0.0
      %2200 = vmatprep.subr.mxu0 0.0
      %2201 = vmatpush2.msra.mxu0 0.0
      %2202 = vmatprep.subr.mxu0 0.0
      %2203 = vmatpush2.msra.mxu0 0.0
      %2204 = vmatprep.subr.mxu0 0.0
      %2205 = vmatpush2.msra.mxu0 0.0
      %2206 = vmatprep.subr.mxu0 0.0
      %2207 = vmatpush2.msra.mxu0 0.0
      %2208 = vmatprep.subr.mxu0 0.0
      %2209 = vmatpush2.msra.mxu0 0.0
      %2210 = vmatprep.subr.mxu0 0.0
      %2211 = vmatpush2.msra.mxu0 0.0
      %2212 = vmatprep.subr.mxu0 0.0
      %2213 = vmatpush2.msra.mxu0 0.0
      %2214 = vmatprep.mubr.f32.mxu0 0.0
      %2215 = vmatmul.mubr.f32.gmra.mxu0 %v2016
      %v2216 = vpop.f32.mrf.mxu0
      %v2217 = vadd.f32 0.0, %v2216
      %v2218 = vpop.f32.mrf.mxu0
      %2219 = vmatprep.mubr.f32.mxu0 0.0
      %2220 = vmatmul.mubr.f32.gmra.mxu0 %v2019
      %v2221 = vpop.f32.mrf.mxu0
      %v2222 = vadd.f32 0.0, %v2221
      %v2223 = vpop.f32.mrf.mxu0
      %2224 = vmatprep.mubr.f32.mxu0 0.0
      %2225 = vmatmul.mubr.f32.gmra.mxu0 %v2022
      %v2226 = vpop.f32.mrf.mxu0
      %v2227 = vadd.f32 0.0, %v2226
      %v2228 = vpop.f32.mrf.mxu0
      %2229 = vmatprep.mubr.f32.mxu0 0.0
      %2230 = vmatmul.mubr.f32.gmra.mxu0 %v2025
      %v2231 = vpop.f32.mrf.mxu0
      %v2232 = vadd.f32 0.0, %v2231
      %v2233 = vpop.f32.mrf.mxu0
      %2234 = vmatprep.mubr.f32.mxu0 0.0
      %2235 = vmatmul.mubr.f32.gmra.mxu0 %v2028
      %v2236 = vpop.f32.mrf.mxu0
      %v2237 = vadd.f32 0.0, %v2236
      %v2238 = vpop.f32.mrf.mxu0
      %2239 = vmatprep.mubr.f32.mxu0 0.0
      %2240 = vmatmul.mubr.f32.gmra.mxu0 %v2031
      %v2241 = vpop.f32.mrf.mxu0
      %v2242 = vadd.f32 0.0, %v2241
      %v2243 = vpop.f32.mrf.mxu0
      %2244 = vmatprep.mubr.f32.mxu0 0.0
      %2245 = vmatmul.mubr.f32.gmra.mxu0 %v2034
      %v2246 = vpop.f32.mrf.mxu0
      %v2247 = vadd.f32 0.0, %v2246
      %v2248 = vpop.f32.mrf.mxu0
      %2249 = vmatprep.mubr.f32.mxu0 0.0
      %2250 = vmatmul.mubr.f32.gmra.mxu0 %v2037
      %v2251 = vpop.f32.mrf.mxu0
      %v2252 = vadd.f32 0.0, %v2251
      %v2253 = vpop.f32.mrf.mxu0
      %2254 = vmatprep.mubr.f32.mxu0 0.0
      %2255 = vmatmul.mubr.f32.gmra.mxu0 %v2040
      %v2256 = vpop.f32.mrf.mxu0
      %v2257 = vadd.f32 0.0, %v2256
      %v2258 = vpop.f32.mrf.mxu0
      %2259 = vmatprep.mubr.f32.mxu0 0.0
      %2260 = vmatmul.mubr.f32.gmra.mxu0 %v2043
      %v2261 = vpop.f32.mrf.mxu0
      %v2262 = vadd.f32 0.0, %v2261
      %v2263 = vpop.f32.mrf.mxu0
      %2264 = vmatprep.mubr.f32.mxu0 0.0
      %2265 = vmatmul.mubr.f32.gmra.mxu0 %v2046
      %v2266 = vpop.f32.mrf.mxu0
      %v2267 = vadd.f32 0.0, %v2266
      %v2268 = vpop.f32.mrf.mxu0
      %2269 = vmatprep.mubr.f32.mxu0 0.0
      %2270 = vmatmul.mubr.f32.gmra.mxu0 %v2049
      %v2271 = vpop.f32.mrf.mxu0
      %v2272 = vadd.f32 0.0, %v2271
      %v2273 = vpop.f32.mrf.mxu0
      %2274 = vmatprep.mubr.f32.mxu0 0.0
      %2275 = vmatmul.mubr.f32.gmra.mxu0 %v2052
      %v2276 = vpop.f32.mrf.mxu0
      %v2277 = vadd.f32 0.0, %v2276
      %v2278 = vpop.f32.mrf.mxu0
      %2279 = vmatprep.mubr.f32.mxu0 0.0
      %2280 = vmatmul.mubr.f32.gmra.mxu0 %v2055
      %v2281 = vpop.f32.mrf.mxu0
      %v2282 = vadd.f32 0.0, %v2281
      %v2283 = vpop.f32.mrf.mxu0
      %2284 = vmatprep.mubr.f32.mxu0 0.0
      %2285 = vmatmul.mubr.f32.gmra.mxu0 %v2058
      %v2286 = vpop.f32.mrf.mxu0
      %v2287 = vadd.f32 0.0, %v2286
      %v2288 = vpop.f32.mrf.mxu0
      %2289 = vmatprep.mubr.f32.mxu0 0.0
      %2290 = vmatmul.mubr.f32.gmra.mxu0 %v2061
      %v2291 = vpop.f32.mrf.mxu0
      %v2292 = vadd.f32 0.0, %v2291
      %v2293 = vpop.f32.mrf.mxu0
      %2294 = vmatprep.mubr.f32.mxu0 0.0
      %2295 = vmatmul.mubr.f32.gmra.mxu0 %v2064
      %v2296 = vpop.f32.mrf.mxu0
      %v2297 = vadd.f32 0.0, %v2296
      %v2298 = vpop.f32.mrf.mxu0
      %2299 = vmatprep.mubr.f32.mxu0 0.0
      %2300 = vmatmul.mubr.f32.gmra.mxu0 %v2067
      %v2301 = vpop.f32.mrf.mxu0
      %v2302 = vadd.f32 0.0, %v2301
      %v2303 = vpop.f32.mrf.mxu0
      %2304 = vmatprep.mubr.f32.mxu0 0.0
      %2305 = vmatmul.mubr.f32.gmra.mxu0 %v2070
      %v2306 = vpop.f32.mrf.mxu0
      %v2307 = vadd.f32 0.0, %v2306
      %v2308 = vpop.f32.mrf.mxu0
      %2309 = vmatprep.mubr.f32.mxu0 0.0
      %2310 = vmatmul.mubr.f32.gmra.mxu0 %v2073
      %v2311 = vpop.f32.mrf.mxu0
      %v2312 = vadd.f32 0.0, %v2311
      %v2313 = vpop.f32.mrf.mxu0
      %2314 = vmatprep.mubr.f32.mxu0 0.0
      %2315 = vmatmul.mubr.f32.gmra.mxu0 %v2076
      %v2316 = vpop.f32.mrf.mxu0
      %v2317 = vadd.f32 0.0, %v2316
      %v2318 = vpop.f32.mrf.mxu0
      %2319 = vmatprep.mubr.f32.mxu0 0.0
      %2320 = vmatmul.mubr.f32.gmra.mxu0 %v2079
      %v2321 = vpop.f32.mrf.mxu0
      %v2322 = vadd.f32 0.0, %v2321
      %v2323 = vpop.f32.mrf.mxu0
      %2324 = vmatprep.mubr.f32.mxu0 0.0
      %2325 = vmatmul.mubr.f32.gmra.mxu0 %v2082
      %v2326 = vpop.f32.mrf.mxu0
      %v2327 = vadd.f32 0.0, %v2326
      %v2328 = vpop.f32.mrf.mxu0
      %2329 = vmatprep.mubr.f32.mxu0 0.0
      %2330 = vmatmul.mubr.f32.gmra.mxu0 %v2085
      %v2331 = vpop.f32.mrf.mxu0
      %v2332 = vadd.f32 0.0, %v2331
      %v2333 = vpop.f32.mrf.mxu0
      %2334 = vmatprep.mubr.f32.mxu0 0.0
      %2335 = vmatmul.mubr.f32.gmra.mxu0 %v2088
      %v2336 = vpop.f32.mrf.mxu0
      %v2337 = vadd.f32 0.0, %v2336
      %v2338 = vpop.f32.mrf.mxu0
      %2339 = vmatprep.mubr.f32.mxu0 0.0
      %2340 = vmatmul.mubr.f32.gmra.mxu0 %v2091
      %v2341 = vpop.f32.mrf.mxu0
      %v2342 = vadd.f32 0.0, %v2341
      %v2343 = vpop.f32.mrf.mxu0
      %2344 = vmatprep.mubr.f32.mxu0 0.0
      %2345 = vmatmul.mubr.f32.gmra.mxu0 %v2094
      %v2346 = vpop.f32.mrf.mxu0
      %v2347 = vadd.f32 0.0, %v2346
      %v2348 = vpop.f32.mrf.mxu0
      %2349 = vmatprep.mubr.f32.mxu0 0.0
      %2350 = vmatmul.mubr.f32.gmra.mxu0 %v2097
      %v2351 = vpop.f32.mrf.mxu0
      %v2352 = vadd.f32 0.0, %v2351
      %v2353 = vpop.f32.mrf.mxu0
      %2354 = vmatprep.mubr.f32.mxu0 0.0
      %2355 = vmatmul.mubr.f32.gmra.mxu0 %v2100
      %v2356 = vpop.f32.mrf.mxu0
      %v2357 = vadd.f32 0.0, %v2356
      %v2358 = vpop.f32.mrf.mxu0
      %2359 = vmatprep.mubr.f32.mxu0 0.0
      %2360 = vmatmul.mubr.f32.gmra.mxu0 %v2103
      %v2361 = vpop.f32.mrf.mxu0
      %v2362 = vadd.f32 0.0, %v2361
      %v2363 = vpop.f32.mrf.mxu0
      %2364 = vmatprep.mubr.f32.mxu0 0.0
      %2365 = vmatmul.mubr.f32.gmra.mxu0 %v2106
      %v2366 = vpop.f32.mrf.mxu0
      %v2367 = vadd.f32 0.0, %v2366
      %v2368 = vpop.f32.mrf.mxu0
      %2369 = vmatprep.mubr.f32.mxu0 0.0
      %2370 = vmatmul.mubr.f32.gmra.mxu0 %v2109
      %v2371 = vpop.f32.mrf.mxu0
      %v2372 = vadd.f32 0.0, %v2371
      %v2373 = vpop.f32.mrf.mxu0
      %2374 = vmatprep.mubr.f32.mxu0 0.0
      %2375 = vmatmul.mubr.f32.gmra.mxu0 %v2112
      %v2376 = vpop.f32.mrf.mxu0
      %v2377 = vadd.f32 0.0, %v2376
      %v2378 = vpop.f32.mrf.mxu0
      %2379 = vmatprep.mubr.f32.mxu0 0.0
      %2380 = vmatmul.mubr.f32.gmra.mxu0 %v2115
      %v2381 = vpop.f32.mrf.mxu0
      %v2382 = vadd.f32 0.0, %v2381
      %v2383 = vpop.f32.mrf.mxu0
      %2384 = vmatprep.mubr.f32.mxu0 0.0
      %2385 = vmatmul.mubr.f32.gmra.mxu0 %v2118
      %v2386 = vpop.f32.mrf.mxu0
      %v2387 = vadd.f32 0.0, %v2386
      %v2388 = vpop.f32.mrf.mxu0
      %2389 = vmatprep.mubr.f32.mxu0 0.0
      %2390 = vmatmul.mubr.f32.gmra.mxu0 %v2121
      %v2391 = vpop.f32.mrf.mxu0
      %v2392 = vadd.f32 0.0, %v2391
      %v2393 = vpop.f32.mrf.mxu0
      %2394 = vmatprep.mubr.f32.mxu0 0.0
      %2395 = vmatmul.mubr.f32.gmra.mxu0 %v2124
      %v2396 = vpop.f32.mrf.mxu0
      %v2397 = vadd.f32 0.0, %v2396
      %v2398 = vpop.f32.mrf.mxu0
      %2399 = vmatprep.mubr.f32.mxu0 0.0
      %2400 = vmatmul.mubr.f32.gmra.mxu0 %v2127
      %v2401 = vpop.f32.mrf.mxu0
      %v2402 = vadd.f32 0.0, %v2401
      %v2403 = vpop.f32.mrf.mxu0
      %2404 = vmatprep.mubr.f32.mxu0 0.0
      %2405 = vmatmul.mubr.f32.gmra.mxu0 %v2130
      %v2406 = vpop.f32.mrf.mxu0
      %v2407 = vadd.f32 0.0, %v2406
      %v2408 = vpop.f32.mrf.mxu0
      %2409 = vmatprep.mubr.f32.mxu0 0.0
      %2410 = vmatmul.mubr.f32.gmra.mxu0 %v2133
      %v2411 = vpop.f32.mrf.mxu0
      %v2412 = vadd.f32 0.0, %v2411
      %v2413 = vpop.f32.mrf.mxu0
      %2414 = vmatprep.mubr.f32.mxu0 0.0
      %2415 = vmatmul.mubr.f32.gmra.mxu0 %v2136
      %v2416 = vpop.f32.mrf.mxu0
      %v2417 = vadd.f32 0.0, %v2416
      %v2418 = vpop.f32.mrf.mxu0
      %2419 = vmatprep.mubr.f32.mxu0 0.0
      %2420 = vmatmul.mubr.f32.gmra.mxu0 %v2139
      %v2421 = vpop.f32.mrf.mxu0
      %v2422 = vadd.f32 0.0, %v2421
      %v2423 = vpop.f32.mrf.mxu0
      %2424 = vmatprep.mubr.f32.mxu0 0.0
      %2425 = vmatmul.mubr.f32.gmra.mxu0 %v2142
      %v2426 = vpop.f32.mrf.mxu0
      %v2427 = vadd.f32 0.0, %v2426
      %v2428 = vpop.f32.mrf.mxu0
      %2429 = vmatprep.mubr.f32.mxu0 0.0
      %2430 = vmatmul.mubr.f32.gmra.mxu0 %v2145
      %v2431 = vpop.f32.mrf.mxu0
      %v2432 = vadd.f32 0.0, %v2431
      %v2433 = vpop.f32.mrf.mxu0
      %2434 = vmatprep.mubr.f32.mxu0 0.0
      %2435 = vmatmul.mubr.f32.gmra.mxu0 %v2148
      %v2436 = vpop.f32.mrf.mxu0
      %v2437 = vadd.f32 0.0, %v2436
      %v2438 = vpop.f32.mrf.mxu0
      %2439 = vdwg.mxu0
      %v2440 = vadd.f32 %v1923, %v2217
      %v2441 = vadd.f32 %v1924, %v2222
      %v2442 = vadd.f32 %v1925, %v2227
      %v2443 = vadd.f32 %v1926, %v2232
      %v2444 = vadd.f32 %v1927, %v2237
      %v2445 = vadd.f32 %v1928, %v2242
      %v2446 = vadd.f32 %v1929, %v2247
      %v2447 = vadd.f32 %v1930, %v2252
      %v2448 = vadd.f32 %v1931, %v2257
      %v2449 = vadd.f32 %v1932, %v2262
      %v2450 = vadd.f32 %v1933, %v2267
      %v2451 = vadd.f32 %v1934, %v2272
      %v2452 = vadd.f32 %v1935, %v2277
      %v2453 = vadd.f32 %v1936, %v2282
      %v2454 = vadd.f32 %v1937, %v2287
      %v2455 = vadd.f32 %v1938, %v2292
      %v2456 = vadd.f32 %v1939, %v2297
      %v2457 = vadd.f32 %v1940, %v2302
      %v2458 = vadd.f32 %v1941, %v2307
      %v2459 = vadd.f32 %v1942, %v2312
      %v2460 = vadd.f32 %v1943, %v2317
      %v2461 = vadd.f32 %v1944, %v2322
      %v2462 = vadd.f32 %v1945, %v2327
      %v2463 = vadd.f32 %v1946, %v2332
      %v2464 = vadd.f32 %v1947, %v2337
      %v2465 = vadd.f32 %v1948, %v2342
      %v2466 = vadd.f32 %v1949, %v2347
      %v2467 = vadd.f32 %v1950, %v2352
      %v2468 = vadd.f32 %v1951, %v2357
      %v2469 = vadd.f32 %v1952, %v2362
      %v2470 = vadd.f32 %v1953, %v2367
      %v2471 = vadd.f32 %v1954, %v2372
      %v2472 = vadd.f32 %v1955, %v2377
      %v2473 = vadd.f32 %v1956, %v2382
      %v2474 = vadd.f32 %v1957, %v2387
      %v2475 = vadd.f32 %v1958, %v2392
      %v2476 = vadd.f32 %v1959, %v2397
      %v2477 = vadd.f32 %v1960, %v2402
      %v2478 = vadd.f32 %v1961, %v2407
      %v2479 = vadd.f32 %v1962, %v2412
      %v2480 = vadd.f32 %v1963, %v2417
      %v2481 = vadd.f32 %v1964, %v2422
      %v2482 = vadd.f32 %v1965, %v2427
      %v2483 = vadd.f32 %v1966, %v2432
      %v2484 = vadd.f32 %v1967, %v2437
      %v2485 = vld [vmem:[#allocation2 + $0x13] sm:$0xff]
      %v2486 = vld [vmem:[#allocation2 + $0x1b] sm:$0xff]
      %v2487 = vld [vmem:[#allocation2 + $0x23] sm:$0xff]
      %v2488 = vld [vmem:[#allocation2 + $0x2b] sm:$0xff]
      %v2489 = vld [vmem:[#allocation2 + $0x33] sm:$0xff]
      %v2490 = vld [vmem:[#allocation2 + $0x3b] sm:$0xff]
      %v2491 = vld [vmem:[#allocation2 + $0x43] sm:$0xff]
      %v2492 = vld [vmem:[#allocation2 + $0x4b] sm:$0xff]
      %v2493 = vld [vmem:[#allocation2 + $0x53] sm:$0xff]
      %v2494 = vld [vmem:[#allocation2 + $0x5b] sm:$0xff]
      %v2495 = vld [vmem:[#allocation2 + $0x63] sm:$0xff]
      %v2496 = vld [vmem:[#allocation2 + $0x6b] sm:$0xff]
      %v2497 = vld [vmem:[#allocation2 + $0x73] sm:$0xff]
      %v2498 = vld [vmem:[#allocation2 + $0x7b] sm:$0xff]
      %v2499 = vld [vmem:[#allocation2 + $0x83] sm:$0xff]
      %v2500 = vld [vmem:[#allocation2 + $0x8b] sm:$0xff]
      %v2501 = vld [vmem:[#allocation2 + $0x93] sm:$0xff]
      %v2502 = vld [vmem:[#allocation2 + $0x9b] sm:$0xff]
      %v2503 = vld [vmem:[#allocation2 + $0xa3] sm:$0xff]
      %v2504 = vld [vmem:[#allocation2 + $0xab] sm:$0xff]
      %v2505 = vld [vmem:[#allocation2 + $0xb3] sm:$0xff]
      %v2506 = vld [vmem:[#allocation2 + $0xbb] sm:$0xff]
      %v2507 = vld [vmem:[#allocation2 + $0xc3] sm:$0xff]
      %v2508 = vld [vmem:[#allocation2 + $0xcb] sm:$0xff]
      %v2509 = vld [vmem:[#allocation2 + $0xd3] sm:$0xff]
      %v2510 = vld [vmem:[#allocation2 + $0xdb] sm:$0xff]
      %v2511 = vld [vmem:[#allocation2 + $0xe3] sm:$0xff]
      %v2512 = vld [vmem:[#allocation2 + $0xeb] sm:$0xff]
      %v2513 = vld [vmem:[#allocation2 + $0xf3] sm:$0xff]
      %v2514 = vld [vmem:[#allocation2 + $0xfb] sm:$0xff]
      %v2515 = vld [vmem:[#allocation2 + $0x103] sm:$0xff]
      %v2516 = vld [vmem:[#allocation2 + $0x10b] sm:$0xff]
      %v2517 = vld [vmem:[#allocation2 + $0x113] sm:$0xff]
      %v2518 = vld [vmem:[#allocation2 + $0x11b] sm:$0xff]
      %v2519 = vld [vmem:[#allocation2 + $0x123] sm:$0xff]
      %v2520 = vld [vmem:[#allocation2 + $0x12b] sm:$0xff]
      %v2521 = vld [vmem:[#allocation2 + $0x133] sm:$0xff]
      %v2522 = vld [vmem:[#allocation2 + $0x13b] sm:$0xff]
      %v2523 = vld [vmem:[#allocation2 + $0x143] sm:$0xff]
      %v2524 = vld [vmem:[#allocation2 + $0x14b] sm:$0xff]
      %v2525 = vld [vmem:[#allocation2 + $0x153] sm:$0xff]
      %v2526 = vld [vmem:[#allocation2 + $0x15b] sm:$0xff]
      %v2527 = vld [vmem:[#allocation2 + $0x163] sm:$0xff]
      %v2528 = vld [vmem:[#allocation2 + $0x16b] sm:$0xff]
      %v2529 = vld [vmem:[#allocation2 + $0x173] sm:$0xff]
      %s2530 = scalar_lea.vmem %s377, 32
      %v2531 = vld [vmem:[%s2530] sm:$0xff]
      %v2533 = vsel %vm452, %v2485, 0
      %v2536 = vsel %vm452, %v2486, 0
      %v2539 = vsel %vm452, %v2487, 0
      %v2542 = vsel %vm452, %v2488, 0
      %v2545 = vsel %vm452, %v2489, 0
      %v2548 = vsel %vm452, %v2490, 0
      %v2551 = vsel %vm452, %v2491, 0
      %v2554 = vsel %vm452, %v2492, 0
      %v2557 = vsel %vm452, %v2493, 0
      %v2560 = vsel %vm452, %v2494, 0
      %v2563 = vsel %vm452, %v2495, 0
      %v2566 = vsel %vm452, %v2496, 0
      %v2569 = vsel %vm452, %v2497, 0
      %v2572 = vsel %vm452, %v2498, 0
      %v2575 = vsel %vm452, %v2499, 0
      %v2578 = vsel %vm452, %v2500, 0
      %v2581 = vsel %vm452, %v2501, 0
      %v2584 = vsel %vm452, %v2502, 0
      %v2587 = vsel %vm452, %v2503, 0
      %v2590 = vsel %vm452, %v2504, 0
      %v2593 = vsel %vm452, %v2505, 0
      %v2596 = vsel %vm452, %v2506, 0
      %v2599 = vsel %vm452, %v2507, 0
      %v2602 = vsel %vm452, %v2508, 0
      %v2605 = vsel %vm452, %v2509, 0
      %v2608 = vsel %vm452, %v2510, 0
      %v2611 = vsel %vm452, %v2511, 0
      %v2614 = vsel %vm452, %v2512, 0
      %v2617 = vsel %vm452, %v2513, 0
      %v2620 = vsel %vm452, %v2514, 0
      %v2623 = vsel %vm452, %v2515, 0
      %v2626 = vsel %vm452, %v2516, 0
      %v2629 = vsel %vm452, %v2517, 0
      %v2632 = vsel %vm452, %v2518, 0
      %v2635 = vsel %vm452, %v2519, 0
      %v2638 = vsel %vm452, %v2520, 0
      %v2641 = vsel %vm452, %v2521, 0
      %v2644 = vsel %vm452, %v2522, 0
      %v2647 = vsel %vm452, %v2523, 0
      %v2650 = vsel %vm452, %v2524, 0
      %v2653 = vsel %vm452, %v2525, 0
      %v2656 = vsel %vm452, %v2526, 0
      %v2659 = vsel %vm452, %v2527, 0
      %v2662 = vsel %vm452, %v2528, 0
      %v2665 = vsel %vm452, %v2529, 0
      %2667 = vmatprep.subr.mxu0 0.0
      %2668 = vmatpush1.msra.mxu0 0.0
      %2669 = vmatprep.subr.mxu0 0.0
      %2670 = vmatpush1.msra.mxu0 0.0
      %2671 = vmatprep.subr.mxu0 0.0
      %2672 = vmatpush1.msra.mxu0 0.0
      %2673 = vmatprep.subr.mxu0 0.0
      %2674 = vmatpush1.msra.mxu0 0.0
      %2675 = vmatprep.subr.mxu0 0.0
      %2676 = vmatpush1.msra.mxu0 0.0
      %2677 = vmatprep.subr.mxu0 0.0
      %2678 = vmatpush1.msra.mxu0 0.0
      %2679 = vmatprep.subr.mxu0 0.0
      %2680 = vmatpush1.msra.mxu0 0.0
      %2681 = vmatprep.subr.mxu0 0.0
      %2682 = vmatpush1.msra.mxu0 0.0
      %2683 = vmatprep.subr.mxu0 0.0
      %2684 = vmatpush1.msra.mxu0 0.0
      %2685 = vmatprep.subr.mxu0 0.0
      %2686 = vmatpush1.msra.mxu0 0.0
      %2687 = vmatprep.subr.mxu0 0.0
      %2688 = vmatpush1.msra.mxu0 0.0
      %2689 = vmatprep.subr.mxu0 0.0
      %2690 = vmatpush1.msra.mxu0 0.0
      %2691 = vmatprep.subr.mxu0 0.0
      %2692 = vmatpush1.msra.mxu0 0.0
      %2693 = vmatprep.subr.mxu0 0.0
      %2694 = vmatpush1.msra.mxu0 0.0
      %2695 = vmatprep.subr.mxu0 0.0
      %2696 = vmatpush1.msra.mxu0 0.0
      %2697 = vmatprep.subr.mxu0 0.0
      %2698 = vmatpush1.msra.mxu0 %v2531
      %2699 = vmatprep.subr.mxu0 0.0
      %2700 = vmatpush2.msra.mxu0 0.0
      %2701 = vmatprep.subr.mxu0 0.0
      %2702 = vmatpush2.msra.mxu0 0.0
      %2703 = vmatprep.subr.mxu0 0.0
      %2704 = vmatpush2.msra.mxu0 0.0
      %2705 = vmatprep.subr.mxu0 0.0
      %2706 = vmatpush2.msra.mxu0 0.0
      %2707 = vmatprep.subr.mxu0 0.0
      %2708 = vmatpush2.msra.mxu0 0.0
      %2709 = vmatprep.subr.mxu0 0.0
      %2710 = vmatpush2.msra.mxu0 0.0
      %2711 = vmatprep.subr.mxu0 0.0
      %2712 = vmatpush2.msra.mxu0 0.0
      %2713 = vmatprep.subr.mxu0 0.0
      %2714 = vmatpush2.msra.mxu0 0.0
      %2715 = vmatprep.subr.mxu0 0.0
      %2716 = vmatpush2.msra.mxu0 0.0
      %2717 = vmatprep.subr.mxu0 0.0
      %2718 = vmatpush2.msra.mxu0 0.0
      %2719 = vmatprep.subr.mxu0 0.0
      %2720 = vmatpush2.msra.mxu0 0.0
      %2721 = vmatprep.subr.mxu0 0.0
      %2722 = vmatpush2.msra.mxu0 0.0
      %2723 = vmatprep.subr.mxu0 0.0
      %2724 = vmatpush2.msra.mxu0 0.0
      %2725 = vmatprep.subr.mxu0 0.0
      %2726 = vmatpush2.msra.mxu0 0.0
      %2727 = vmatprep.subr.mxu0 0.0
      %2728 = vmatpush2.msra.mxu0 0.0
      %2729 = vmatprep.subr.mxu0 0.0
      %2730 = vmatpush2.msra.mxu0 0.0
      %2731 = vmatprep.mubr.f32.mxu0 0.0
      %2732 = vmatmul.mubr.f32.gmra.mxu0 %v2533
      %v2733 = vpop.f32.mrf.mxu0
      %v2734 = vadd.f32 0.0, %v2733
      %v2735 = vpop.f32.mrf.mxu0
      %2736 = vmatprep.mubr.f32.mxu0 0.0
      %2737 = vmatmul.mubr.f32.gmra.mxu0 %v2536
      %v2738 = vpop.f32.mrf.mxu0
      %v2739 = vadd.f32 0.0, %v2738
      %v2740 = vpop.f32.mrf.mxu0
      %2741 = vmatprep.mubr.f32.mxu0 0.0
      %2742 = vmatmul.mubr.f32.gmra.mxu0 %v2539
      %v2743 = vpop.f32.mrf.mxu0
      %v2744 = vadd.f32 0.0, %v2743
      %v2745 = vpop.f32.mrf.mxu0
      %2746 = vmatprep.mubr.f32.mxu0 0.0
      %2747 = vmatmul.mubr.f32.gmra.mxu0 %v2542
      %v2748 = vpop.f32.mrf.mxu0
      %v2749 = vadd.f32 0.0, %v2748
      %v2750 = vpop.f32.mrf.mxu0
      %2751 = vmatprep.mubr.f32.mxu0 0.0
      %2752 = vmatmul.mubr.f32.gmra.mxu0 %v2545
      %v2753 = vpop.f32.mrf.mxu0
      %v2754 = vadd.f32 0.0, %v2753
      %v2755 = vpop.f32.mrf.mxu0
      %2756 = vmatprep.mubr.f32.mxu0 0.0
      %2757 = vmatmul.mubr.f32.gmra.mxu0 %v2548
      %v2758 = vpop.f32.mrf.mxu0
      %v2759 = vadd.f32 0.0, %v2758
      %v2760 = vpop.f32.mrf.mxu0
      %2761 = vmatprep.mubr.f32.mxu0 0.0
      %2762 = vmatmul.mubr.f32.gmra.mxu0 %v2551
      %v2763 = vpop.f32.mrf.mxu0
      %v2764 = vadd.f32 0.0, %v2763
      %v2765 = vpop.f32.mrf.mxu0
      %2766 = vmatprep.mubr.f32.mxu0 0.0
      %2767 = vmatmul.mubr.f32.gmra.mxu0 %v2554
      %v2768 = vpop.f32.mrf.mxu0
      %v2769 = vadd.f32 0.0, %v2768
      %v2770 = vpop.f32.mrf.mxu0
      %2771 = vmatprep.mubr.f32.mxu0 0.0
      %2772 = vmatmul.mubr.f32.gmra.mxu0 %v2557
      %v2773 = vpop.f32.mrf.mxu0
      %v2774 = vadd.f32 0.0, %v2773
      %v2775 = vpop.f32.mrf.mxu0
      %2776 = vmatprep.mubr.f32.mxu0 0.0
      %2777 = vmatmul.mubr.f32.gmra.mxu0 %v2560
      %v2778 = vpop.f32.mrf.mxu0
      %v2779 = vadd.f32 0.0, %v2778
      %v2780 = vpop.f32.mrf.mxu0
      %2781 = vmatprep.mubr.f32.mxu0 0.0
      %2782 = vmatmul.mubr.f32.gmra.mxu0 %v2563
      %v2783 = vpop.f32.mrf.mxu0
      %v2784 = vadd.f32 0.0, %v2783
      %v2785 = vpop.f32.mrf.mxu0
      %2786 = vmatprep.mubr.f32.mxu0 0.0
      %2787 = vmatmul.mubr.f32.gmra.mxu0 %v2566
      %v2788 = vpop.f32.mrf.mxu0
      %v2789 = vadd.f32 0.0, %v2788
      %v2790 = vpop.f32.mrf.mxu0
      %2791 = vmatprep.mubr.f32.mxu0 0.0
      %2792 = vmatmul.mubr.f32.gmra.mxu0 %v2569
      %v2793 = vpop.f32.mrf.mxu0
      %v2794 = vadd.f32 0.0, %v2793
      %v2795 = vpop.f32.mrf.mxu0
      %2796 = vmatprep.mubr.f32.mxu0 0.0
      %2797 = vmatmul.mubr.f32.gmra.mxu0 %v2572
      %v2798 = vpop.f32.mrf.mxu0
      %v2799 = vadd.f32 0.0, %v2798
      %v2800 = vpop.f32.mrf.mxu0
      %2801 = vmatprep.mubr.f32.mxu0 0.0
      %2802 = vmatmul.mubr.f32.gmra.mxu0 %v2575
      %v2803 = vpop.f32.mrf.mxu0
      %v2804 = vadd.f32 0.0, %v2803
      %v2805 = vpop.f32.mrf.mxu0
      %2806 = vmatprep.mubr.f32.mxu0 0.0
      %2807 = vmatmul.mubr.f32.gmra.mxu0 %v2578
      %v2808 = vpop.f32.mrf.mxu0
      %v2809 = vadd.f32 0.0, %v2808
      %v2810 = vpop.f32.mrf.mxu0
      %2811 = vmatprep.mubr.f32.mxu0 0.0
      %2812 = vmatmul.mubr.f32.gmra.mxu0 %v2581
      %v2813 = vpop.f32.mrf.mxu0
      %v2814 = vadd.f32 0.0, %v2813
      %v2815 = vpop.f32.mrf.mxu0
      %2816 = vmatprep.mubr.f32.mxu0 0.0
      %2817 = vmatmul.mubr.f32.gmra.mxu0 %v2584
      %v2818 = vpop.f32.mrf.mxu0
      %v2819 = vadd.f32 0.0, %v2818
      %v2820 = vpop.f32.mrf.mxu0
      %2821 = vmatprep.mubr.f32.mxu0 0.0
      %2822 = vmatmul.mubr.f32.gmra.mxu0 %v2587
      %v2823 = vpop.f32.mrf.mxu0
      %v2824 = vadd.f32 0.0, %v2823
      %v2825 = vpop.f32.mrf.mxu0
      %2826 = vmatprep.mubr.f32.mxu0 0.0
      %2827 = vmatmul.mubr.f32.gmra.mxu0 %v2590
      %v2828 = vpop.f32.mrf.mxu0
      %v2829 = vadd.f32 0.0, %v2828
      %v2830 = vpop.f32.mrf.mxu0
      %2831 = vmatprep.mubr.f32.mxu0 0.0
      %2832 = vmatmul.mubr.f32.gmra.mxu0 %v2593
      %v2833 = vpop.f32.mrf.mxu0
      %v2834 = vadd.f32 0.0, %v2833
      %v2835 = vpop.f32.mrf.mxu0
      %2836 = vmatprep.mubr.f32.mxu0 0.0
      %2837 = vmatmul.mubr.f32.gmra.mxu0 %v2596
      %v2838 = vpop.f32.mrf.mxu0
      %v2839 = vadd.f32 0.0, %v2838
      %v2840 = vpop.f32.mrf.mxu0
      %2841 = vmatprep.mubr.f32.mxu0 0.0
      %2842 = vmatmul.mubr.f32.gmra.mxu0 %v2599
      %v2843 = vpop.f32.mrf.mxu0
      %v2844 = vadd.f32 0.0, %v2843
      %v2845 = vpop.f32.mrf.mxu0
      %2846 = vmatprep.mubr.f32.mxu0 0.0
      %2847 = vmatmul.mubr.f32.gmra.mxu0 %v2602
      %v2848 = vpop.f32.mrf.mxu0
      %v2849 = vadd.f32 0.0, %v2848
      %v2850 = vpop.f32.mrf.mxu0
      %2851 = vmatprep.mubr.f32.mxu0 0.0
      %2852 = vmatmul.mubr.f32.gmra.mxu0 %v2605
      %v2853 = vpop.f32.mrf.mxu0
      %v2854 = vadd.f32 0.0, %v2853
      %v2855 = vpop.f32.mrf.mxu0
      %2856 = vmatprep.mubr.f32.mxu0 0.0
      %2857 = vmatmul.mubr.f32.gmra.mxu0 %v2608
      %v2858 = vpop.f32.mrf.mxu0
      %v2859 = vadd.f32 0.0, %v2858
      %v2860 = vpop.f32.mrf.mxu0
      %2861 = vmatprep.mubr.f32.mxu0 0.0
      %2862 = vmatmul.mubr.f32.gmra.mxu0 %v2611
      %v2863 = vpop.f32.mrf.mxu0
      %v2864 = vadd.f32 0.0, %v2863
      %v2865 = vpop.f32.mrf.mxu0
      %2866 = vmatprep.mubr.f32.mxu0 0.0
      %2867 = vmatmul.mubr.f32.gmra.mxu0 %v2614
      %v2868 = vpop.f32.mrf.mxu0
      %v2869 = vadd.f32 0.0, %v2868
      %v2870 = vpop.f32.mrf.mxu0
      %2871 = vmatprep.mubr.f32.mxu0 0.0
      %2872 = vmatmul.mubr.f32.gmra.mxu0 %v2617
      %v2873 = vpop.f32.mrf.mxu0
      %v2874 = vadd.f32 0.0, %v2873
      %v2875 = vpop.f32.mrf.mxu0
      %2876 = vmatprep.mubr.f32.mxu0 0.0
      %2877 = vmatmul.mubr.f32.gmra.mxu0 %v2620
      %v2878 = vpop.f32.mrf.mxu0
      %v2879 = vadd.f32 0.0, %v2878
      %v2880 = vpop.f32.mrf.mxu0
      %2881 = vmatprep.mubr.f32.mxu0 0.0
      %2882 = vmatmul.mubr.f32.gmra.mxu0 %v2623
      %v2883 = vpop.f32.mrf.mxu0
      %v2884 = vadd.f32 0.0, %v2883
      %v2885 = vpop.f32.mrf.mxu0
      %2886 = vmatprep.mubr.f32.mxu0 0.0
      %2887 = vmatmul.mubr.f32.gmra.mxu0 %v2626
      %v2888 = vpop.f32.mrf.mxu0
      %v2889 = vadd.f32 0.0, %v2888
      %v2890 = vpop.f32.mrf.mxu0
      %2891 = vmatprep.mubr.f32.mxu0 0.0
      %2892 = vmatmul.mubr.f32.gmra.mxu0 %v2629
      %v2893 = vpop.f32.mrf.mxu0
      %v2894 = vadd.f32 0.0, %v2893
      %v2895 = vpop.f32.mrf.mxu0
      %2896 = vmatprep.mubr.f32.mxu0 0.0
      %2897 = vmatmul.mubr.f32.gmra.mxu0 %v2632
      %v2898 = vpop.f32.mrf.mxu0
      %v2899 = vadd.f32 0.0, %v2898
      %v2900 = vpop.f32.mrf.mxu0
      %2901 = vmatprep.mubr.f32.mxu0 0.0
      %2902 = vmatmul.mubr.f32.gmra.mxu0 %v2635
      %v2903 = vpop.f32.mrf.mxu0
      %v2904 = vadd.f32 0.0, %v2903
      %v2905 = vpop.f32.mrf.mxu0
      %2906 = vmatprep.mubr.f32.mxu0 0.0
      %2907 = vmatmul.mubr.f32.gmra.mxu0 %v2638
      %v2908 = vpop.f32.mrf.mxu0
      %v2909 = vadd.f32 0.0, %v2908
      %v2910 = vpop.f32.mrf.mxu0
      %2911 = vmatprep.mubr.f32.mxu0 0.0
      %2912 = vmatmul.mubr.f32.gmra.mxu0 %v2641
      %v2913 = vpop.f32.mrf.mxu0
      %v2914 = vadd.f32 0.0, %v2913
      %v2915 = vpop.f32.mrf.mxu0
      %2916 = vmatprep.mubr.f32.mxu0 0.0
      %2917 = vmatmul.mubr.f32.gmra.mxu0 %v2644
      %v2918 = vpop.f32.mrf.mxu0
      %v2919 = vadd.f32 0.0, %v2918
      %v2920 = vpop.f32.mrf.mxu0
      %2921 = vmatprep.mubr.f32.mxu0 0.0
      %2922 = vmatmul.mubr.f32.gmra.mxu0 %v2647
      %v2923 = vpop.f32.mrf.mxu0
      %v2924 = vadd.f32 0.0, %v2923
      %v2925 = vpop.f32.mrf.mxu0
      %2926 = vmatprep.mubr.f32.mxu0 0.0
      %2927 = vmatmul.mubr.f32.gmra.mxu0 %v2650
      %v2928 = vpop.f32.mrf.mxu0
      %v2929 = vadd.f32 0.0, %v2928
      %v2930 = vpop.f32.mrf.mxu0
      %2931 = vmatprep.mubr.f32.mxu0 0.0
      %2932 = vmatmul.mubr.f32.gmra.mxu0 %v2653
      %v2933 = vpop.f32.mrf.mxu0
      %v2934 = vadd.f32 0.0, %v2933
      %v2935 = vpop.f32.mrf.mxu0
      %2936 = vmatprep.mubr.f32.mxu0 0.0
      %2937 = vmatmul.mubr.f32.gmra.mxu0 %v2656
      %v2938 = vpop.f32.mrf.mxu0
      %v2939 = vadd.f32 0.0, %v2938
      %v2940 = vpop.f32.mrf.mxu0
      %2941 = vmatprep.mubr.f32.mxu0 0.0
      %2942 = vmatmul.mubr.f32.gmra.mxu0 %v2659
      %v2943 = vpop.f32.mrf.mxu0
      %v2944 = vadd.f32 0.0, %v2943
      %v2945 = vpop.f32.mrf.mxu0
      %2946 = vmatprep.mubr.f32.mxu0 0.0
      %2947 = vmatmul.mubr.f32.gmra.mxu0 %v2662
      %v2948 = vpop.f32.mrf.mxu0
      %v2949 = vadd.f32 0.0, %v2948
      %v2950 = vpop.f32.mrf.mxu0
      %2951 = vmatprep.mubr.f32.mxu0 0.0
      %2952 = vmatmul.mubr.f32.gmra.mxu0 %v2665
      %v2953 = vpop.f32.mrf.mxu0
      %v2954 = vadd.f32 0.0, %v2953
      %v2955 = vpop.f32.mrf.mxu0
      %2956 = vdwg.mxu0
      %v2957 = vadd.f32 %v2440, %v2734
      %v2958 = vadd.f32 %v2441, %v2739
      %v2959 = vadd.f32 %v2442, %v2744
      %v2960 = vadd.f32 %v2443, %v2749
      %v2961 = vadd.f32 %v2444, %v2754
      %v2962 = vadd.f32 %v2445, %v2759
      %v2963 = vadd.f32 %v2446, %v2764
      %v2964 = vadd.f32 %v2447, %v2769
      %v2965 = vadd.f32 %v2448, %v2774
      %v2966 = vadd.f32 %v2449, %v2779
      %v2967 = vadd.f32 %v2450, %v2784
      %v2968 = vadd.f32 %v2451, %v2789
      %v2969 = vadd.f32 %v2452, %v2794
      %v2970 = vadd.f32 %v2453, %v2799
      %v2971 = vadd.f32 %v2454, %v2804
      %v2972 = vadd.f32 %v2455, %v2809
      %v2973 = vadd.f32 %v2456, %v2814
      %v2974 = vadd.f32 %v2457, %v2819
      %v2975 = vadd.f32 %v2458, %v2824
      %v2976 = vadd.f32 %v2459, %v2829
      %v2977 = vadd.f32 %v2460, %v2834
      %v2978 = vadd.f32 %v2461, %v2839
      %v2979 = vadd.f32 %v2462, %v2844
      %v2980 = vadd.f32 %v2463, %v2849
      %v2981 = vadd.f32 %v2464, %v2854
      %v2982 = vadd.f32 %v2465, %v2859
      %v2983 = vadd.f32 %v2466, %v2864
      %v2984 = vadd.f32 %v2467, %v2869
      %v2985 = vadd.f32 %v2468, %v2874
      %v2986 = vadd.f32 %v2469, %v2879
      %v2987 = vadd.f32 %v2470, %v2884
      %v2988 = vadd.f32 %v2471, %v2889
      %v2989 = vadd.f32 %v2472, %v2894
      %v2990 = vadd.f32 %v2473, %v2899
      %v2991 = vadd.f32 %v2474, %v2904
      %v2992 = vadd.f32 %v2475, %v2909
      %v2993 = vadd.f32 %v2476, %v2914
      %v2994 = vadd.f32 %v2477, %v2919
      %v2995 = vadd.f32 %v2478, %v2924
      %v2996 = vadd.f32 %v2479, %v2929
      %v2997 = vadd.f32 %v2480, %v2934
      %v2998 = vadd.f32 %v2481, %v2939
      %v2999 = vadd.f32 %v2482, %v2944
      %v3000 = vadd.f32 %v2483, %v2949
      %v3001 = vadd.f32 %v2484, %v2954
      %v3002 = vld [vmem:[#allocation2 + $0x14] sm:$0xff]
      %v3003 = vld [vmem:[#allocation2 + $0x1c] sm:$0xff]
      %v3004 = vld [vmem:[#allocation2 + $0x24] sm:$0xff]
      %v3005 = vld [vmem:[#allocation2 + $0x2c] sm:$0xff]
      %v3006 = vld [vmem:[#allocation2 + $0x34] sm:$0xff]
      %v3007 = vld [vmem:[#allocation2 + $0x3c] sm:$0xff]
      %v3008 = vld [vmem:[#allocation2 + $0x44] sm:$0xff]
      %v3009 = vld [vmem:[#allocation2 + $0x4c] sm:$0xff]
      %v3010 = vld [vmem:[#allocation2 + $0x54] sm:$0xff]
      %v3011 = vld [vmem:[#allocation2 + $0x5c] sm:$0xff]
      %v3012 = vld [vmem:[#allocation2 + $0x64] sm:$0xff]
      %v3013 = vld [vmem:[#allocation2 + $0x6c] sm:$0xff]
      %v3014 = vld [vmem:[#allocation2 + $0x74] sm:$0xff]
      %v3015 = vld [vmem:[#allocation2 + $0x7c] sm:$0xff]
      %v3016 = vld [vmem:[#allocation2 + $0x84] sm:$0xff]
      %v3017 = vld [vmem:[#allocation2 + $0x8c] sm:$0xff]
      %v3018 = vld [vmem:[#allocation2 + $0x94] sm:$0xff]
      %v3019 = vld [vmem:[#allocation2 + $0x9c] sm:$0xff]
      %v3020 = vld [vmem:[#allocation2 + $0xa4] sm:$0xff]
      %v3021 = vld [vmem:[#allocation2 + $0xac] sm:$0xff]
      %v3022 = vld [vmem:[#allocation2 + $0xb4] sm:$0xff]
      %v3023 = vld [vmem:[#allocation2 + $0xbc] sm:$0xff]
      %v3024 = vld [vmem:[#allocation2 + $0xc4] sm:$0xff]
      %v3025 = vld [vmem:[#allocation2 + $0xcc] sm:$0xff]
      %v3026 = vld [vmem:[#allocation2 + $0xd4] sm:$0xff]
      %v3027 = vld [vmem:[#allocation2 + $0xdc] sm:$0xff]
      %v3028 = vld [vmem:[#allocation2 + $0xe4] sm:$0xff]
      %v3029 = vld [vmem:[#allocation2 + $0xec] sm:$0xff]
      %v3030 = vld [vmem:[#allocation2 + $0xf4] sm:$0xff]
      %v3031 = vld [vmem:[#allocation2 + $0xfc] sm:$0xff]
      %v3032 = vld [vmem:[#allocation2 + $0x104] sm:$0xff]
      %v3033 = vld [vmem:[#allocation2 + $0x10c] sm:$0xff]
      %v3034 = vld [vmem:[#allocation2 + $0x114] sm:$0xff]
      %v3035 = vld [vmem:[#allocation2 + $0x11c] sm:$0xff]
      %v3036 = vld [vmem:[#allocation2 + $0x124] sm:$0xff]
      %v3037 = vld [vmem:[#allocation2 + $0x12c] sm:$0xff]
      %v3038 = vld [vmem:[#allocation2 + $0x134] sm:$0xff]
      %v3039 = vld [vmem:[#allocation2 + $0x13c] sm:$0xff]
      %v3040 = vld [vmem:[#allocation2 + $0x144] sm:$0xff]
      %v3041 = vld [vmem:[#allocation2 + $0x14c] sm:$0xff]
      %v3042 = vld [vmem:[#allocation2 + $0x154] sm:$0xff]
      %v3043 = vld [vmem:[#allocation2 + $0x15c] sm:$0xff]
      %v3044 = vld [vmem:[#allocation2 + $0x164] sm:$0xff]
      %v3045 = vld [vmem:[#allocation2 + $0x16c] sm:$0xff]
      %v3046 = vld [vmem:[#allocation2 + $0x174] sm:$0xff]
      %s3047 = scalar_lea.vmem %s377, 40
      %v3048 = vld [vmem:[%s3047] sm:$0xff]
      %v3050 = vsel %vm452, %v3002, 0
      %v3053 = vsel %vm452, %v3003, 0
      %v3056 = vsel %vm452, %v3004, 0
      %v3059 = vsel %vm452, %v3005, 0
      %v3062 = vsel %vm452, %v3006, 0
      %v3065 = vsel %vm452, %v3007, 0
      %v3068 = vsel %vm452, %v3008, 0
      %v3071 = vsel %vm452, %v3009, 0
      %v3074 = vsel %vm452, %v3010, 0
      %v3077 = vsel %vm452, %v3011, 0
      %v3080 = vsel %vm452, %v3012, 0
      %v3083 = vsel %vm452, %v3013, 0
      %v3086 = vsel %vm452, %v3014, 0
      %v3089 = vsel %vm452, %v3015, 0
      %v3092 = vsel %vm452, %v3016, 0
      %v3095 = vsel %vm452, %v3017, 0
      %v3098 = vsel %vm452, %v3018, 0
      %v3101 = vsel %vm452, %v3019, 0
      %v3104 = vsel %vm452, %v3020, 0
      %v3107 = vsel %vm452, %v3021, 0
      %v3110 = vsel %vm452, %v3022, 0
      %v3113 = vsel %vm452, %v3023, 0
      %v3116 = vsel %vm452, %v3024, 0
      %v3119 = vsel %vm452, %v3025, 0
      %v3122 = vsel %vm452, %v3026, 0
      %v3125 = vsel %vm452, %v3027, 0
      %v3128 = vsel %vm452, %v3028, 0
      %v3131 = vsel %vm452, %v3029, 0
      %v3134 = vsel %vm452, %v3030, 0
      %v3137 = vsel %vm452, %v3031, 0
      %v3140 = vsel %vm452, %v3032, 0
      %v3143 = vsel %vm452, %v3033, 0
      %v3146 = vsel %vm452, %v3034, 0
      %v3149 = vsel %vm452, %v3035, 0
      %v3152 = vsel %vm452, %v3036, 0
      %v3155 = vsel %vm452, %v3037, 0
      %v3158 = vsel %vm452, %v3038, 0
      %v3161 = vsel %vm452, %v3039, 0
      %v3164 = vsel %vm452, %v3040, 0
      %v3167 = vsel %vm452, %v3041, 0
      %v3170 = vsel %vm452, %v3042, 0
      %v3173 = vsel %vm452, %v3043, 0
      %v3176 = vsel %vm452, %v3044, 0
      %v3179 = vsel %vm452, %v3045, 0
      %v3182 = vsel %vm452, %v3046, 0
      %3184 = vmatprep.subr.mxu0 0.0
      %3185 = vmatpush1.msra.mxu0 0.0
      %3186 = vmatprep.subr.mxu0 0.0
      %3187 = vmatpush1.msra.mxu0 0.0
      %3188 = vmatprep.subr.mxu0 0.0
      %3189 = vmatpush1.msra.mxu0 0.0
      %3190 = vmatprep.subr.mxu0 0.0
      %3191 = vmatpush1.msra.mxu0 0.0
      %3192 = vmatprep.subr.mxu0 0.0
      %3193 = vmatpush1.msra.mxu0 0.0
      %3194 = vmatprep.subr.mxu0 0.0
      %3195 = vmatpush1.msra.mxu0 0.0
      %3196 = vmatprep.subr.mxu0 0.0
      %3197 = vmatpush1.msra.mxu0 0.0
      %3198 = vmatprep.subr.mxu0 0.0
      %3199 = vmatpush1.msra.mxu0 0.0
      %3200 = vmatprep.subr.mxu0 0.0
      %3201 = vmatpush1.msra.mxu0 0.0
      %3202 = vmatprep.subr.mxu0 0.0
      %3203 = vmatpush1.msra.mxu0 0.0
      %3204 = vmatprep.subr.mxu0 0.0
      %3205 = vmatpush1.msra.mxu0 0.0
      %3206 = vmatprep.subr.mxu0 0.0
      %3207 = vmatpush1.msra.mxu0 0.0
      %3208 = vmatprep.subr.mxu0 0.0
      %3209 = vmatpush1.msra.mxu0 0.0
      %3210 = vmatprep.subr.mxu0 0.0
      %3211 = vmatpush1.msra.mxu0 0.0
      %3212 = vmatprep.subr.mxu0 0.0
      %3213 = vmatpush1.msra.mxu0 0.0
      %3214 = vmatprep.subr.mxu0 0.0
      %3215 = vmatpush1.msra.mxu0 %v3048
      %3216 = vmatprep.subr.mxu0 0.0
      %3217 = vmatpush2.msra.mxu0 0.0
      %3218 = vmatprep.subr.mxu0 0.0
      %3219 = vmatpush2.msra.mxu0 0.0
      %3220 = vmatprep.subr.mxu0 0.0
      %3221 = vmatpush2.msra.mxu0 0.0
      %3222 = vmatprep.subr.mxu0 0.0
      %3223 = vmatpush2.msra.mxu0 0.0
      %3224 = vmatprep.subr.mxu0 0.0
      %3225 = vmatpush2.msra.mxu0 0.0
      %3226 = vmatprep.subr.mxu0 0.0
      %3227 = vmatpush2.msra.mxu0 0.0
      %3228 = vmatprep.subr.mxu0 0.0
      %3229 = vmatpush2.msra.mxu0 0.0
      %3230 = vmatprep.subr.mxu0 0.0
      %3231 = vmatpush2.msra.mxu0 0.0
      %3232 = vmatprep.subr.mxu0 0.0
      %3233 = vmatpush2.msra.mxu0 0.0
      %3234 = vmatprep.subr.mxu0 0.0
      %3235 = vmatpush2.msra.mxu0 0.0
      %3236 = vmatprep.subr.mxu0 0.0
      %3237 = vmatpush2.msra.mxu0 0.0
      %3238 = vmatprep.subr.mxu0 0.0
      %3239 = vmatpush2.msra.mxu0 0.0
      %3240 = vmatprep.subr.mxu0 0.0
      %3241 = vmatpush2.msra.mxu0 0.0
      %3242 = vmatprep.subr.mxu0 0.0
      %3243 = vmatpush2.msra.mxu0 0.0
      %3244 = vmatprep.subr.mxu0 0.0
      %3245 = vmatpush2.msra.mxu0 0.0
      %3246 = vmatprep.subr.mxu0 0.0
      %3247 = vmatpush2.msra.mxu0 0.0
      %3248 = vmatprep.mubr.f32.mxu0 0.0
      %3249 = vmatmul.mubr.f32.gmra.mxu0 %v3050
      %v3250 = vpop.f32.mrf.mxu0
      %v3251 = vadd.f32 0.0, %v3250
      %v3252 = vpop.f32.mrf.mxu0
      %3253 = vmatprep.mubr.f32.mxu0 0.0
      %3254 = vmatmul.mubr.f32.gmra.mxu0 %v3053
      %v3255 = vpop.f32.mrf.mxu0
      %v3256 = vadd.f32 0.0, %v3255
      %v3257 = vpop.f32.mrf.mxu0
      %3258 = vmatprep.mubr.f32.mxu0 0.0
      %3259 = vmatmul.mubr.f32.gmra.mxu0 %v3056
      %v3260 = vpop.f32.mrf.mxu0
      %v3261 = vadd.f32 0.0, %v3260
      %v3262 = vpop.f32.mrf.mxu0
      %3263 = vmatprep.mubr.f32.mxu0 0.0
      %3264 = vmatmul.mubr.f32.gmra.mxu0 %v3059
      %v3265 = vpop.f32.mrf.mxu0
      %v3266 = vadd.f32 0.0, %v3265
      %v3267 = vpop.f32.mrf.mxu0
      %3268 = vmatprep.mubr.f32.mxu0 0.0
      %3269 = vmatmul.mubr.f32.gmra.mxu0 %v3062
      %v3270 = vpop.f32.mrf.mxu0
      %v3271 = vadd.f32 0.0, %v3270
      %v3272 = vpop.f32.mrf.mxu0
      %3273 = vmatprep.mubr.f32.mxu0 0.0
      %3274 = vmatmul.mubr.f32.gmra.mxu0 %v3065
      %v3275 = vpop.f32.mrf.mxu0
      %v3276 = vadd.f32 0.0, %v3275
      %v3277 = vpop.f32.mrf.mxu0
      %3278 = vmatprep.mubr.f32.mxu0 0.0
      %3279 = vmatmul.mubr.f32.gmra.mxu0 %v3068
      %v3280 = vpop.f32.mrf.mxu0
      %v3281 = vadd.f32 0.0, %v3280
      %v3282 = vpop.f32.mrf.mxu0
      %3283 = vmatprep.mubr.f32.mxu0 0.0
      %3284 = vmatmul.mubr.f32.gmra.mxu0 %v3071
      %v3285 = vpop.f32.mrf.mxu0
      %v3286 = vadd.f32 0.0, %v3285
      %v3287 = vpop.f32.mrf.mxu0
      %3288 = vmatprep.mubr.f32.mxu0 0.0
      %3289 = vmatmul.mubr.f32.gmra.mxu0 %v3074
      %v3290 = vpop.f32.mrf.mxu0
      %v3291 = vadd.f32 0.0, %v3290
      %v3292 = vpop.f32.mrf.mxu0
      %3293 = vmatprep.mubr.f32.mxu0 0.0
      %3294 = vmatmul.mubr.f32.gmra.mxu0 %v3077
      %v3295 = vpop.f32.mrf.mxu0
      %v3296 = vadd.f32 0.0, %v3295
      %v3297 = vpop.f32.mrf.mxu0
      %3298 = vmatprep.mubr.f32.mxu0 0.0
      %3299 = vmatmul.mubr.f32.gmra.mxu0 %v3080
      %v3300 = vpop.f32.mrf.mxu0
      %v3301 = vadd.f32 0.0, %v3300
      %v3302 = vpop.f32.mrf.mxu0
      %3303 = vmatprep.mubr.f32.mxu0 0.0
      %3304 = vmatmul.mubr.f32.gmra.mxu0 %v3083
      %v3305 = vpop.f32.mrf.mxu0
      %v3306 = vadd.f32 0.0, %v3305
      %v3307 = vpop.f32.mrf.mxu0
      %3308 = vmatprep.mubr.f32.mxu0 0.0
      %3309 = vmatmul.mubr.f32.gmra.mxu0 %v3086
      %v3310 = vpop.f32.mrf.mxu0
      %v3311 = vadd.f32 0.0, %v3310
      %v3312 = vpop.f32.mrf.mxu0
      %3313 = vmatprep.mubr.f32.mxu0 0.0
      %3314 = vmatmul.mubr.f32.gmra.mxu0 %v3089
      %v3315 = vpop.f32.mrf.mxu0
      %v3316 = vadd.f32 0.0, %v3315
      %v3317 = vpop.f32.mrf.mxu0
      %3318 = vmatprep.mubr.f32.mxu0 0.0
      %3319 = vmatmul.mubr.f32.gmra.mxu0 %v3092
      %v3320 = vpop.f32.mrf.mxu0
      %v3321 = vadd.f32 0.0, %v3320
      %v3322 = vpop.f32.mrf.mxu0
      %3323 = vmatprep.mubr.f32.mxu0 0.0
      %3324 = vmatmul.mubr.f32.gmra.mxu0 %v3095
      %v3325 = vpop.f32.mrf.mxu0
      %v3326 = vadd.f32 0.0, %v3325
      %v3327 = vpop.f32.mrf.mxu0
      %3328 = vmatprep.mubr.f32.mxu0 0.0
      %3329 = vmatmul.mubr.f32.gmra.mxu0 %v3098
      %v3330 = vpop.f32.mrf.mxu0
      %v3331 = vadd.f32 0.0, %v3330
      %v3332 = vpop.f32.mrf.mxu0
      %3333 = vmatprep.mubr.f32.mxu0 0.0
      %3334 = vmatmul.mubr.f32.gmra.mxu0 %v3101
      %v3335 = vpop.f32.mrf.mxu0
      %v3336 = vadd.f32 0.0, %v3335
      %v3337 = vpop.f32.mrf.mxu0
      %3338 = vmatprep.mubr.f32.mxu0 0.0
      %3339 = vmatmul.mubr.f32.gmra.mxu0 %v3104
      %v3340 = vpop.f32.mrf.mxu0
      %v3341 = vadd.f32 0.0, %v3340
      %v3342 = vpop.f32.mrf.mxu0
      %3343 = vmatprep.mubr.f32.mxu0 0.0
      %3344 = vmatmul.mubr.f32.gmra.mxu0 %v3107
      %v3345 = vpop.f32.mrf.mxu0
      %v3346 = vadd.f32 0.0, %v3345
      %v3347 = vpop.f32.mrf.mxu0
      %3348 = vmatprep.mubr.f32.mxu0 0.0
      %3349 = vmatmul.mubr.f32.gmra.mxu0 %v3110
      %v3350 = vpop.f32.mrf.mxu0
      %v3351 = vadd.f32 0.0, %v3350
      %v3352 = vpop.f32.mrf.mxu0
      %3353 = vmatprep.mubr.f32.mxu0 0.0
      %3354 = vmatmul.mubr.f32.gmra.mxu0 %v3113
      %v3355 = vpop.f32.mrf.mxu0
      %v3356 = vadd.f32 0.0, %v3355
      %v3357 = vpop.f32.mrf.mxu0
      %3358 = vmatprep.mubr.f32.mxu0 0.0
      %3359 = vmatmul.mubr.f32.gmra.mxu0 %v3116
      %v3360 = vpop.f32.mrf.mxu0
      %v3361 = vadd.f32 0.0, %v3360
      %v3362 = vpop.f32.mrf.mxu0
      %3363 = vmatprep.mubr.f32.mxu0 0.0
      %3364 = vmatmul.mubr.f32.gmra.mxu0 %v3119
      %v3365 = vpop.f32.mrf.mxu0
      %v3366 = vadd.f32 0.0, %v3365
      %v3367 = vpop.f32.mrf.mxu0
      %3368 = vmatprep.mubr.f32.mxu0 0.0
      %3369 = vmatmul.mubr.f32.gmra.mxu0 %v3122
      %v3370 = vpop.f32.mrf.mxu0
      %v3371 = vadd.f32 0.0, %v3370
      %v3372 = vpop.f32.mrf.mxu0
      %3373 = vmatprep.mubr.f32.mxu0 0.0
      %3374 = vmatmul.mubr.f32.gmra.mxu0 %v3125
      %v3375 = vpop.f32.mrf.mxu0
      %v3376 = vadd.f32 0.0, %v3375
      %v3377 = vpop.f32.mrf.mxu0
      %3378 = vmatprep.mubr.f32.mxu0 0.0
      %3379 = vmatmul.mubr.f32.gmra.mxu0 %v3128
      %v3380 = vpop.f32.mrf.mxu0
      %v3381 = vadd.f32 0.0, %v3380
      %v3382 = vpop.f32.mrf.mxu0
      %3383 = vmatprep.mubr.f32.mxu0 0.0
      %3384 = vmatmul.mubr.f32.gmra.mxu0 %v3131
      %v3385 = vpop.f32.mrf.mxu0
      %v3386 = vadd.f32 0.0, %v3385
      %v3387 = vpop.f32.mrf.mxu0
      %3388 = vmatprep.mubr.f32.mxu0 0.0
      %3389 = vmatmul.mubr.f32.gmra.mxu0 %v3134
      %v3390 = vpop.f32.mrf.mxu0
      %v3391 = vadd.f32 0.0, %v3390
      %v3392 = vpop.f32.mrf.mxu0
      %3393 = vmatprep.mubr.f32.mxu0 0.0
      %3394 = vmatmul.mubr.f32.gmra.mxu0 %v3137
      %v3395 = vpop.f32.mrf.mxu0
      %v3396 = vadd.f32 0.0, %v3395
      %v3397 = vpop.f32.mrf.mxu0
      %3398 = vmatprep.mubr.f32.mxu0 0.0
      %3399 = vmatmul.mubr.f32.gmra.mxu0 %v3140
      %v3400 = vpop.f32.mrf.mxu0
      %v3401 = vadd.f32 0.0, %v3400
      %v3402 = vpop.f32.mrf.mxu0
      %3403 = vmatprep.mubr.f32.mxu0 0.0
      %3404 = vmatmul.mubr.f32.gmra.mxu0 %v3143
      %v3405 = vpop.f32.mrf.mxu0
      %v3406 = vadd.f32 0.0, %v3405
      %v3407 = vpop.f32.mrf.mxu0
      %3408 = vmatprep.mubr.f32.mxu0 0.0
      %3409 = vmatmul.mubr.f32.gmra.mxu0 %v3146
      %v3410 = vpop.f32.mrf.mxu0
      %v3411 = vadd.f32 0.0, %v3410
      %v3412 = vpop.f32.mrf.mxu0
      %3413 = vmatprep.mubr.f32.mxu0 0.0
      %3414 = vmatmul.mubr.f32.gmra.mxu0 %v3149
      %v3415 = vpop.f32.mrf.mxu0
      %v3416 = vadd.f32 0.0, %v3415
      %v3417 = vpop.f32.mrf.mxu0
      %3418 = vmatprep.mubr.f32.mxu0 0.0
      %3419 = vmatmul.mubr.f32.gmra.mxu0 %v3152
      %v3420 = vpop.f32.mrf.mxu0
      %v3421 = vadd.f32 0.0, %v3420
      %v3422 = vpop.f32.mrf.mxu0
      %3423 = vmatprep.mubr.f32.mxu0 0.0
      %3424 = vmatmul.mubr.f32.gmra.mxu0 %v3155
      %v3425 = vpop.f32.mrf.mxu0
      %v3426 = vadd.f32 0.0, %v3425
      %v3427 = vpop.f32.mrf.mxu0
      %3428 = vmatprep.mubr.f32.mxu0 0.0
      %3429 = vmatmul.mubr.f32.gmra.mxu0 %v3158
      %v3430 = vpop.f32.mrf.mxu0
      %v3431 = vadd.f32 0.0, %v3430
      %v3432 = vpop.f32.mrf.mxu0
      %3433 = vmatprep.mubr.f32.mxu0 0.0
      %3434 = vmatmul.mubr.f32.gmra.mxu0 %v3161
      %v3435 = vpop.f32.mrf.mxu0
      %v3436 = vadd.f32 0.0, %v3435
      %v3437 = vpop.f32.mrf.mxu0
      %3438 = vmatprep.mubr.f32.mxu0 0.0
      %3439 = vmatmul.mubr.f32.gmra.mxu0 %v3164
      %v3440 = vpop.f32.mrf.mxu0
      %v3441 = vadd.f32 0.0, %v3440
      %v3442 = vpop.f32.mrf.mxu0
      %3443 = vmatprep.mubr.f32.mxu0 0.0
      %3444 = vmatmul.mubr.f32.gmra.mxu0 %v3167
      %v3445 = vpop.f32.mrf.mxu0
      %v3446 = vadd.f32 0.0, %v3445
      %v3447 = vpop.f32.mrf.mxu0
      %3448 = vmatprep.mubr.f32.mxu0 0.0
      %3449 = vmatmul.mubr.f32.gmra.mxu0 %v3170
      %v3450 = vpop.f32.mrf.mxu0
      %v3451 = vadd.f32 0.0, %v3450
      %v3452 = vpop.f32.mrf.mxu0
      %3453 = vmatprep.mubr.f32.mxu0 0.0
      %3454 = vmatmul.mubr.f32.gmra.mxu0 %v3173
      %v3455 = vpop.f32.mrf.mxu0
      %v3456 = vadd.f32 0.0, %v3455
      %v3457 = vpop.f32.mrf.mxu0
      %3458 = vmatprep.mubr.f32.mxu0 0.0
      %3459 = vmatmul.mubr.f32.gmra.mxu0 %v3176
      %v3460 = vpop.f32.mrf.mxu0
      %v3461 = vadd.f32 0.0, %v3460
      %v3462 = vpop.f32.mrf.mxu0
      %3463 = vmatprep.mubr.f32.mxu0 0.0
      %3464 = vmatmul.mubr.f32.gmra.mxu0 %v3179
      %v3465 = vpop.f32.mrf.mxu0
      %v3466 = vadd.f32 0.0, %v3465
      %v3467 = vpop.f32.mrf.mxu0
      %3468 = vmatprep.mubr.f32.mxu0 0.0
      %3469 = vmatmul.mubr.f32.gmra.mxu0 %v3182
      %v3470 = vpop.f32.mrf.mxu0
      %v3471 = vadd.f32 0.0, %v3470
      %v3472 = vpop.f32.mrf.mxu0
      %3473 = vdwg.mxu0
      %v3474 = vadd.f32 %v2957, %v3251
      %v3475 = vadd.f32 %v2958, %v3256
      %v3476 = vadd.f32 %v2959, %v3261
      %v3477 = vadd.f32 %v2960, %v3266
      %v3478 = vadd.f32 %v2961, %v3271
      %v3479 = vadd.f32 %v2962, %v3276
      %v3480 = vadd.f32 %v2963, %v3281
      %v3481 = vadd.f32 %v2964, %v3286
      %v3482 = vadd.f32 %v2965, %v3291
      %v3483 = vadd.f32 %v2966, %v3296
      %v3484 = vadd.f32 %v2967, %v3301
      %v3485 = vadd.f32 %v2968, %v3306
      %v3486 = vadd.f32 %v2969, %v3311
      %v3487 = vadd.f32 %v2970, %v3316
      %v3488 = vadd.f32 %v2971, %v3321
      %v3489 = vadd.f32 %v2972, %v3326
      %v3490 = vadd.f32 %v2973, %v3331
      %v3491 = vadd.f32 %v2974, %v3336
      %v3492 = vadd.f32 %v2975, %v3341
      %v3493 = vadd.f32 %v2976, %v3346
      %v3494 = vadd.f32 %v2977, %v3351
      %v3495 = vadd.f32 %v2978, %v3356
      %v3496 = vadd.f32 %v2979, %v3361
      %v3497 = vadd.f32 %v2980, %v3366
      %v3498 = vadd.f32 %v2981, %v3371
      %v3499 = vadd.f32 %v2982, %v3376
      %v3500 = vadd.f32 %v2983, %v3381
      %v3501 = vadd.f32 %v2984, %v3386
      %v3502 = vadd.f32 %v2985, %v3391
      %v3503 = vadd.f32 %v2986, %v3396
      %v3504 = vadd.f32 %v2987, %v3401
      %v3505 = vadd.f32 %v2988, %v3406
      %v3506 = vadd.f32 %v2989, %v3411
      %v3507 = vadd.f32 %v2990, %v3416
      %v3508 = vadd.f32 %v2991, %v3421
      %v3509 = vadd.f32 %v2992, %v3426
      %v3510 = vadd.f32 %v2993, %v3431
      %v3511 = vadd.f32 %v2994, %v3436
      %v3512 = vadd.f32 %v2995, %v3441
      %v3513 = vadd.f32 %v2996, %v3446
      %v3514 = vadd.f32 %v2997, %v3451
      %v3515 = vadd.f32 %v2998, %v3456
      %v3516 = vadd.f32 %v2999, %v3461
      %v3517 = vadd.f32 %v3000, %v3466
      %v3518 = vadd.f32 %v3001, %v3471
      %v3519 = vld [vmem:[#allocation2 + $0x24] sm:$0xff]
      %v3520 = vld [vmem:[#allocation2 + $0x2c] sm:$0xff]
      %v3521 = vld [vmem:[#allocation2 + $0x34] sm:$0xff]
      %v3522 = vld [vmem:[#allocation2 + $0x3c] sm:$0xff]
      %v3523 = vld [vmem:[#allocation2 + $0x44] sm:$0xff]
      %v3524 = vld [vmem:[#allocation2 + $0x4c] sm:$0xff]
      %v3525 = vld [vmem:[#allocation2 + $0x54] sm:$0xff]
      %v3526 = vld [vmem:[#allocation2 + $0x5c] sm:$0xff]
      %v3527 = vld [vmem:[#allocation2 + $0x64] sm:$0xff]
      %v3528 = vld [vmem:[#allocation2 + $0x6c] sm:$0xff]
      %v3529 = vld [vmem:[#allocation2 + $0x74] sm:$0xff]
      %v3530 = vld [vmem:[#allocation2 + $0x7c] sm:$0xff]
      %v3531 = vld [vmem:[#allocation2 + $0x84] sm:$0xff]
      %v3532 = vld [vmem:[#allocation2 + $0x8c] sm:$0xff]
      %v3533 = vld [vmem:[#allocation2 + $0x94] sm:$0xff]
      %v3534 = vld [vmem:[#allocation2 + $0x9c] sm:$0xff]
      %v3535 = vld [vmem:[#allocation2 + $0xa4] sm:$0xff]
      %v3536 = vld [vmem:[#allocation2 + $0xac] sm:$0xff]
      %v3537 = vld [vmem:[#allocation2 + $0xb4] sm:$0xff]
      %v3538 = vld [vmem:[#allocation2 + $0xbc] sm:$0xff]
      %v3539 = vld [vmem:[#allocation2 + $0xc4] sm:$0xff]
      %v3540 = vld [vmem:[#allocation2 + $0xcc] sm:$0xff]
      %v3541 = vld [vmem:[#allocation2 + $0xd4] sm:$0xff]
      %v3542 = vld [vmem:[#allocation2 + $0xdc] sm:$0xff]
      %v3543 = vld [vmem:[#allocation2 + $0xe4] sm:$0xff]
      %v3544 = vld [vmem:[#allocation2 + $0xec] sm:$0xff]
      %v3545 = vld [vmem:[#allocation2 + $0xf4] sm:$0xff]
      %v3546 = vld [vmem:[#allocation2 + $0xfc] sm:$0xff]
      %v3547 = vld [vmem:[#allocation2 + $0x104] sm:$0xff]
      %v3548 = vld [vmem:[#allocation2 + $0x10c] sm:$0xff]
      %v3549 = vld [vmem:[#allocation2 + $0x114] sm:$0xff]
      %v3550 = vld [vmem:[#allocation2 + $0x11c] sm:$0xff]
      %v3551 = vld [vmem:[#allocation2 + $0x124] sm:$0xff]
      %v3552 = vld [vmem:[#allocation2 + $0x12c] sm:$0xff]
      %v3553 = vld [vmem:[#allocation2 + $0x134] sm:$0xff]
      %v3554 = vld [vmem:[#allocation2 + $0x13c] sm:$0xff]
      %v3555 = vld [vmem:[#allocation2 + $0x144] sm:$0xff]
      %v3556 = vld [vmem:[#allocation2 + $0x14c] sm:$0xff]
      %v3557 = vld [vmem:[#allocation2 + $0x154] sm:$0xff]
      %v3558 = vld [vmem:[#allocation2 + $0x15c] sm:$0xff]
      %v3559 = vld [vmem:[#allocation2 + $0x164] sm:$0xff]
      %v3560 = vld [vmem:[#allocation2 + $0x16c] sm:$0xff]
      %v3561 = vld [vmem:[#allocation2 + $0x174] sm:$0xff]
      %v3562 = vld [vmem:[#allocation2 + $0x17c] sm:$0xff]
      %v3563 = vld [vmem:[#allocation2 + $0x184] sm:$0xff]
      %s3564 = scalar_lea.vmem %s377, 48
      %v3565 = vld [vmem:[%s3564] sm:$0xff]
      %v3567 = vsel %vm452, %v3519, 0
      %v3570 = vsel %vm452, %v3520, 0
      %v3573 = vsel %vm452, %v3521, 0
      %v3576 = vsel %vm452, %v3522, 0
      %v3579 = vsel %vm452, %v3523, 0
      %v3582 = vsel %vm452, %v3524, 0
      %v3585 = vsel %vm452, %v3525, 0
      %v3588 = vsel %vm452, %v3526, 0
      %v3591 = vsel %vm452, %v3527, 0
      %v3594 = vsel %vm452, %v3528, 0
      %v3597 = vsel %vm452, %v3529, 0
      %v3600 = vsel %vm452, %v3530, 0
      %v3603 = vsel %vm452, %v3531, 0
      %v3606 = vsel %vm452, %v3532, 0
      %v3609 = vsel %vm452, %v3533, 0
      %v3612 = vsel %vm452, %v3534, 0
      %v3615 = vsel %vm452, %v3535, 0
      %v3618 = vsel %vm452, %v3536, 0
      %v3621 = vsel %vm452, %v3537, 0
      %v3624 = vsel %vm452, %v3538, 0
      %v3627 = vsel %vm452, %v3539, 0
      %v3630 = vsel %vm452, %v3540, 0
      %v3633 = vsel %vm452, %v3541, 0
      %v3636 = vsel %vm452, %v3542, 0
      %v3639 = vsel %vm452, %v3543, 0
      %v3642 = vsel %vm452, %v3544, 0
      %v3645 = vsel %vm452, %v3545, 0
      %v3648 = vsel %vm452, %v3546, 0
      %v3651 = vsel %vm452, %v3547, 0
      %v3654 = vsel %vm452, %v3548, 0
      %v3657 = vsel %vm452, %v3549, 0
      %v3660 = vsel %vm452, %v3550, 0
      %v3663 = vsel %vm452, %v3551, 0
      %v3666 = vsel %vm452, %v3552, 0
      %v3669 = vsel %vm452, %v3553, 0
      %v3672 = vsel %vm452, %v3554, 0
      %v3675 = vsel %vm452, %v3555, 0
      %v3678 = vsel %vm452, %v3556, 0
      %v3681 = vsel %vm452, %v3557, 0
      %v3684 = vsel %vm452, %v3558, 0
      %v3687 = vsel %vm452, %v3559, 0
      %v3690 = vsel %vm452, %v3560, 0
      %v3693 = vsel %vm452, %v3561, 0
      %v3696 = vsel %vm452, %v3562, 0
      %v3699 = vsel %vm452, %v3563, 0
      %3701 = vmatprep.subr.mxu0 0.0
      %3702 = vmatpush1.msra.mxu0 0.0
      %3703 = vmatprep.subr.mxu0 0.0
      %3704 = vmatpush1.msra.mxu0 0.0
      %3705 = vmatprep.subr.mxu0 0.0
      %3706 = vmatpush1.msra.mxu0 0.0
      %3707 = vmatprep.subr.mxu0 0.0
      %3708 = vmatpush1.msra.mxu0 0.0
      %3709 = vmatprep.subr.mxu0 0.0
      %3710 = vmatpush1.msra.mxu0 0.0
      %3711 = vmatprep.subr.mxu0 0.0
      %3712 = vmatpush1.msra.mxu0 0.0
      %3713 = vmatprep.subr.mxu0 0.0
      %3714 = vmatpush1.msra.mxu0 0.0
      %3715 = vmatprep.subr.mxu0 0.0
      %3716 = vmatpush1.msra.mxu0 0.0
      %3717 = vmatprep.subr.mxu0 0.0
      %3718 = vmatpush1.msra.mxu0 0.0
      %3719 = vmatprep.subr.mxu0 0.0
      %3720 = vmatpush1.msra.mxu0 0.0
      %3721 = vmatprep.subr.mxu0 0.0
      %3722 = vmatpush1.msra.mxu0 0.0
      %3723 = vmatprep.subr.mxu0 0.0
      %3724 = vmatpush1.msra.mxu0 0.0
      %3725 = vmatprep.subr.mxu0 0.0
      %3726 = vmatpush1.msra.mxu0 0.0
      %3727 = vmatprep.subr.mxu0 0.0
      %3728 = vmatpush1.msra.mxu0 0.0
      %3729 = vmatprep.subr.mxu0 0.0
      %3730 = vmatpush1.msra.mxu0 0.0
      %3731 = vmatprep.subr.mxu0 0.0
      %3732 = vmatpush1.msra.mxu0 %v3565
      %3733 = vmatprep.subr.mxu0 0.0
      %3734 = vmatpush2.msra.mxu0 0.0
      %3735 = vmatprep.subr.mxu0 0.0
      %3736 = vmatpush2.msra.mxu0 0.0
      %3737 = vmatprep.subr.mxu0 0.0
      %3738 = vmatpush2.msra.mxu0 0.0
      %3739 = vmatprep.subr.mxu0 0.0
      %3740 = vmatpush2.msra.mxu0 0.0
      %3741 = vmatprep.subr.mxu0 0.0
      %3742 = vmatpush2.msra.mxu0 0.0
      %3743 = vmatprep.subr.mxu0 0.0
      %3744 = vmatpush2.msra.mxu0 0.0
      %3745 = vmatprep.subr.mxu0 0.0
      %3746 = vmatpush2.msra.mxu0 0.0
      %3747 = vmatprep.subr.mxu0 0.0
      %3748 = vmatpush2.msra.mxu0 0.0
      %3749 = vmatprep.subr.mxu0 0.0
      %3750 = vmatpush2.msra.mxu0 0.0
      %3751 = vmatprep.subr.mxu0 0.0
      %3752 = vmatpush2.msra.mxu0 0.0
      %3753 = vmatprep.subr.mxu0 0.0
      %3754 = vmatpush2.msra.mxu0 0.0
      %3755 = vmatprep.subr.mxu0 0.0
      %3756 = vmatpush2.msra.mxu0 0.0
      %3757 = vmatprep.subr.mxu0 0.0
      %3758 = vmatpush2.msra.mxu0 0.0
      %3759 = vmatprep.subr.mxu0 0.0
      %3760 = vmatpush2.msra.mxu0 0.0
      %3761 = vmatprep.subr.mxu0 0.0
      %3762 = vmatpush2.msra.mxu0 0.0
      %3763 = vmatprep.subr.mxu0 0.0
      %3764 = vmatpush2.msra.mxu0 0.0
      %3765 = vmatprep.mubr.f32.mxu0 0.0
      %3766 = vmatmul.mubr.f32.gmra.mxu0 %v3567
      %v3767 = vpop.f32.mrf.mxu0
      %v3768 = vadd.f32 0.0, %v3767
      %v3769 = vpop.f32.mrf.mxu0
      %3770 = vmatprep.mubr.f32.mxu0 0.0
      %3771 = vmatmul.mubr.f32.gmra.mxu0 %v3570
      %v3772 = vpop.f32.mrf.mxu0
      %v3773 = vadd.f32 0.0, %v3772
      %v3774 = vpop.f32.mrf.mxu0
      %3775 = vmatprep.mubr.f32.mxu0 0.0
      %3776 = vmatmul.mubr.f32.gmra.mxu0 %v3573
      %v3777 = vpop.f32.mrf.mxu0
      %v3778 = vadd.f32 0.0, %v3777
      %v3779 = vpop.f32.mrf.mxu0
      %3780 = vmatprep.mubr.f32.mxu0 0.0
      %3781 = vmatmul.mubr.f32.gmra.mxu0 %v3576
      %v3782 = vpop.f32.mrf.mxu0
      %v3783 = vadd.f32 0.0, %v3782
      %v3784 = vpop.f32.mrf.mxu0
      %3785 = vmatprep.mubr.f32.mxu0 0.0
      %3786 = vmatmul.mubr.f32.gmra.mxu0 %v3579
      %v3787 = vpop.f32.mrf.mxu0
      %v3788 = vadd.f32 0.0, %v3787
      %v3789 = vpop.f32.mrf.mxu0
      %3790 = vmatprep.mubr.f32.mxu0 0.0
      %3791 = vmatmul.mubr.f32.gmra.mxu0 %v3582
      %v3792 = vpop.f32.mrf.mxu0
      %v3793 = vadd.f32 0.0, %v3792
      %v3794 = vpop.f32.mrf.mxu0
      %3795 = vmatprep.mubr.f32.mxu0 0.0
      %3796 = vmatmul.mubr.f32.gmra.mxu0 %v3585
      %v3797 = vpop.f32.mrf.mxu0
      %v3798 = vadd.f32 0.0, %v3797
      %v3799 = vpop.f32.mrf.mxu0
      %3800 = vmatprep.mubr.f32.mxu0 0.0
      %3801 = vmatmul.mubr.f32.gmra.mxu0 %v3588
      %v3802 = vpop.f32.mrf.mxu0
      %v3803 = vadd.f32 0.0, %v3802
      %v3804 = vpop.f32.mrf.mxu0
      %3805 = vmatprep.mubr.f32.mxu0 0.0
      %3806 = vmatmul.mubr.f32.gmra.mxu0 %v3591
      %v3807 = vpop.f32.mrf.mxu0
      %v3808 = vadd.f32 0.0, %v3807
      %v3809 = vpop.f32.mrf.mxu0
      %3810 = vmatprep.mubr.f32.mxu0 0.0
      %3811 = vmatmul.mubr.f32.gmra.mxu0 %v3594
      %v3812 = vpop.f32.mrf.mxu0
      %v3813 = vadd.f32 0.0, %v3812
      %v3814 = vpop.f32.mrf.mxu0
      %3815 = vmatprep.mubr.f32.mxu0 0.0
      %3816 = vmatmul.mubr.f32.gmra.mxu0 %v3597
      %v3817 = vpop.f32.mrf.mxu0
      %v3818 = vadd.f32 0.0, %v3817
      %v3819 = vpop.f32.mrf.mxu0
      %3820 = vmatprep.mubr.f32.mxu0 0.0
      %3821 = vmatmul.mubr.f32.gmra.mxu0 %v3600
      %v3822 = vpop.f32.mrf.mxu0
      %v3823 = vadd.f32 0.0, %v3822
      %v3824 = vpop.f32.mrf.mxu0
      %3825 = vmatprep.mubr.f32.mxu0 0.0
      %3826 = vmatmul.mubr.f32.gmra.mxu0 %v3603
      %v3827 = vpop.f32.mrf.mxu0
      %v3828 = vadd.f32 0.0, %v3827
      %v3829 = vpop.f32.mrf.mxu0
      %3830 = vmatprep.mubr.f32.mxu0 0.0
      %3831 = vmatmul.mubr.f32.gmra.mxu0 %v3606
      %v3832 = vpop.f32.mrf.mxu0
      %v3833 = vadd.f32 0.0, %v3832
      %v3834 = vpop.f32.mrf.mxu0
      %3835 = vmatprep.mubr.f32.mxu0 0.0
      %3836 = vmatmul.mubr.f32.gmra.mxu0 %v3609
      %v3837 = vpop.f32.mrf.mxu0
      %v3838 = vadd.f32 0.0, %v3837
      %v3839 = vpop.f32.mrf.mxu0
      %3840 = vmatprep.mubr.f32.mxu0 0.0
      %3841 = vmatmul.mubr.f32.gmra.mxu0 %v3612
      %v3842 = vpop.f32.mrf.mxu0
      %v3843 = vadd.f32 0.0, %v3842
      %v3844 = vpop.f32.mrf.mxu0
      %3845 = vmatprep.mubr.f32.mxu0 0.0
      %3846 = vmatmul.mubr.f32.gmra.mxu0 %v3615
      %v3847 = vpop.f32.mrf.mxu0
      %v3848 = vadd.f32 0.0, %v3847
      %v3849 = vpop.f32.mrf.mxu0
      %3850 = vmatprep.mubr.f32.mxu0 0.0
      %3851 = vmatmul.mubr.f32.gmra.mxu0 %v3618
      %v3852 = vpop.f32.mrf.mxu0
      %v3853 = vadd.f32 0.0, %v3852
      %v3854 = vpop.f32.mrf.mxu0
      %3855 = vmatprep.mubr.f32.mxu0 0.0
      %3856 = vmatmul.mubr.f32.gmra.mxu0 %v3621
      %v3857 = vpop.f32.mrf.mxu0
      %v3858 = vadd.f32 0.0, %v3857
      %v3859 = vpop.f32.mrf.mxu0
      %3860 = vmatprep.mubr.f32.mxu0 0.0
      %3861 = vmatmul.mubr.f32.gmra.mxu0 %v3624
      %v3862 = vpop.f32.mrf.mxu0
      %v3863 = vadd.f32 0.0, %v3862
      %v3864 = vpop.f32.mrf.mxu0
      %3865 = vmatprep.mubr.f32.mxu0 0.0
      %3866 = vmatmul.mubr.f32.gmra.mxu0 %v3627
      %v3867 = vpop.f32.mrf.mxu0
      %v3868 = vadd.f32 0.0, %v3867
      %v3869 = vpop.f32.mrf.mxu0
      %3870 = vmatprep.mubr.f32.mxu0 0.0
      %3871 = vmatmul.mubr.f32.gmra.mxu0 %v3630
      %v3872 = vpop.f32.mrf.mxu0
      %v3873 = vadd.f32 0.0, %v3872
      %v3874 = vpop.f32.mrf.mxu0
      %3875 = vmatprep.mubr.f32.mxu0 0.0
      %3876 = vmatmul.mubr.f32.gmra.mxu0 %v3633
      %v3877 = vpop.f32.mrf.mxu0
      %v3878 = vadd.f32 0.0, %v3877
      %v3879 = vpop.f32.mrf.mxu0
      %3880 = vmatprep.mubr.f32.mxu0 0.0
      %3881 = vmatmul.mubr.f32.gmra.mxu0 %v3636
      %v3882 = vpop.f32.mrf.mxu0
      %v3883 = vadd.f32 0.0, %v3882
      %v3884 = vpop.f32.mrf.mxu0
      %3885 = vmatprep.mubr.f32.mxu0 0.0
      %3886 = vmatmul.mubr.f32.gmra.mxu0 %v3639
      %v3887 = vpop.f32.mrf.mxu0
      %v3888 = vadd.f32 0.0, %v3887
      %v3889 = vpop.f32.mrf.mxu0
      %3890 = vmatprep.mubr.f32.mxu0 0.0
      %3891 = vmatmul.mubr.f32.gmra.mxu0 %v3642
      %v3892 = vpop.f32.mrf.mxu0
      %v3893 = vadd.f32 0.0, %v3892
      %v3894 = vpop.f32.mrf.mxu0
      %3895 = vmatprep.mubr.f32.mxu0 0.0
      %3896 = vmatmul.mubr.f32.gmra.mxu0 %v3645
      %v3897 = vpop.f32.mrf.mxu0
      %v3898 = vadd.f32 0.0, %v3897
      %v3899 = vpop.f32.mrf.mxu0
      %3900 = vmatprep.mubr.f32.mxu0 0.0
      %3901 = vmatmul.mubr.f32.gmra.mxu0 %v3648
      %v3902 = vpop.f32.mrf.mxu0
      %v3903 = vadd.f32 0.0, %v3902
      %v3904 = vpop.f32.mrf.mxu0
      %3905 = vmatprep.mubr.f32.mxu0 0.0
      %3906 = vmatmul.mubr.f32.gmra.mxu0 %v3651
      %v3907 = vpop.f32.mrf.mxu0
      %v3908 = vadd.f32 0.0, %v3907
      %v3909 = vpop.f32.mrf.mxu0
      %3910 = vmatprep.mubr.f32.mxu0 0.0
      %3911 = vmatmul.mubr.f32.gmra.mxu0 %v3654
      %v3912 = vpop.f32.mrf.mxu0
      %v3913 = vadd.f32 0.0, %v3912
      %v3914 = vpop.f32.mrf.mxu0
      %3915 = vmatprep.mubr.f32.mxu0 0.0
      %3916 = vmatmul.mubr.f32.gmra.mxu0 %v3657
      %v3917 = vpop.f32.mrf.mxu0
      %v3918 = vadd.f32 0.0, %v3917
      %v3919 = vpop.f32.mrf.mxu0
      %3920 = vmatprep.mubr.f32.mxu0 0.0
      %3921 = vmatmul.mubr.f32.gmra.mxu0 %v3660
      %v3922 = vpop.f32.mrf.mxu0
      %v3923 = vadd.f32 0.0, %v3922
      %v3924 = vpop.f32.mrf.mxu0
      %3925 = vmatprep.mubr.f32.mxu0 0.0
      %3926 = vmatmul.mubr.f32.gmra.mxu0 %v3663
      %v3927 = vpop.f32.mrf.mxu0
      %v3928 = vadd.f32 0.0, %v3927
      %v3929 = vpop.f32.mrf.mxu0
      %3930 = vmatprep.mubr.f32.mxu0 0.0
      %3931 = vmatmul.mubr.f32.gmra.mxu0 %v3666
      %v3932 = vpop.f32.mrf.mxu0
      %v3933 = vadd.f32 0.0, %v3932
      %v3934 = vpop.f32.mrf.mxu0
      %3935 = vmatprep.mubr.f32.mxu0 0.0
      %3936 = vmatmul.mubr.f32.gmra.mxu0 %v3669
      %v3937 = vpop.f32.mrf.mxu0
      %v3938 = vadd.f32 0.0, %v3937
      %v3939 = vpop.f32.mrf.mxu0
      %3940 = vmatprep.mubr.f32.mxu0 0.0
      %3941 = vmatmul.mubr.f32.gmra.mxu0 %v3672
      %v3942 = vpop.f32.mrf.mxu0
      %v3943 = vadd.f32 0.0, %v3942
      %v3944 = vpop.f32.mrf.mxu0
      %3945 = vmatprep.mubr.f32.mxu0 0.0
      %3946 = vmatmul.mubr.f32.gmra.mxu0 %v3675
      %v3947 = vpop.f32.mrf.mxu0
      %v3948 = vadd.f32 0.0, %v3947
      %v3949 = vpop.f32.mrf.mxu0
      %3950 = vmatprep.mubr.f32.mxu0 0.0
      %3951 = vmatmul.mubr.f32.gmra.mxu0 %v3678
      %v3952 = vpop.f32.mrf.mxu0
      %v3953 = vadd.f32 0.0, %v3952
      %v3954 = vpop.f32.mrf.mxu0
      %3955 = vmatprep.mubr.f32.mxu0 0.0
      %3956 = vmatmul.mubr.f32.gmra.mxu0 %v3681
      %v3957 = vpop.f32.mrf.mxu0
      %v3958 = vadd.f32 0.0, %v3957
      %v3959 = vpop.f32.mrf.mxu0
      %3960 = vmatprep.mubr.f32.mxu0 0.0
      %3961 = vmatmul.mubr.f32.gmra.mxu0 %v3684
      %v3962 = vpop.f32.mrf.mxu0
      %v3963 = vadd.f32 0.0, %v3962
      %v3964 = vpop.f32.mrf.mxu0
      %3965 = vmatprep.mubr.f32.mxu0 0.0
      %3966 = vmatmul.mubr.f32.gmra.mxu0 %v3687
      %v3967 = vpop.f32.mrf.mxu0
      %v3968 = vadd.f32 0.0, %v3967
      %v3969 = vpop.f32.mrf.mxu0
      %3970 = vmatprep.mubr.f32.mxu0 0.0
      %3971 = vmatmul.mubr.f32.gmra.mxu0 %v3690
      %v3972 = vpop.f32.mrf.mxu0
      %v3973 = vadd.f32 0.0, %v3972
      %v3974 = vpop.f32.mrf.mxu0
      %3975 = vmatprep.mubr.f32.mxu0 0.0
      %3976 = vmatmul.mubr.f32.gmra.mxu0 %v3693
      %v3977 = vpop.f32.mrf.mxu0
      %v3978 = vadd.f32 0.0, %v3977
      %v3979 = vpop.f32.mrf.mxu0
      %3980 = vmatprep.mubr.f32.mxu0 0.0
      %3981 = vmatmul.mubr.f32.gmra.mxu0 %v3696
      %v3982 = vpop.f32.mrf.mxu0
      %v3983 = vadd.f32 0.0, %v3982
      %v3984 = vpop.f32.mrf.mxu0
      %3985 = vmatprep.mubr.f32.mxu0 0.0
      %3986 = vmatmul.mubr.f32.gmra.mxu0 %v3699
      %v3987 = vpop.f32.mrf.mxu0
      %v3988 = vadd.f32 0.0, %v3987
      %v3989 = vpop.f32.mrf.mxu0
      %3990 = vdwg.mxu0
      %v3991 = vadd.f32 %v3474, %v3768
      %v3992 = vadd.f32 %v3475, %v3773
      %v3993 = vadd.f32 %v3476, %v3778
      %v3994 = vadd.f32 %v3477, %v3783
      %v3995 = vadd.f32 %v3478, %v3788
      %v3996 = vadd.f32 %v3479, %v3793
      %v3997 = vadd.f32 %v3480, %v3798
      %v3998 = vadd.f32 %v3481, %v3803
      %v3999 = vadd.f32 %v3482, %v3808
      %v4000 = vadd.f32 %v3483, %v3813
      %v4001 = vadd.f32 %v3484, %v3818
      %v4002 = vadd.f32 %v3485, %v3823
      %v4003 = vadd.f32 %v3486, %v3828
      %v4004 = vadd.f32 %v3487, %v3833
      %v4005 = vadd.f32 %v3488, %v3838
      %v4006 = vadd.f32 %v3489, %v3843
      %v4007 = vadd.f32 %v3490, %v3848
      %v4008 = vadd.f32 %v3491, %v3853
      %v4009 = vadd.f32 %v3492, %v3858
      %v4010 = vadd.f32 %v3493, %v3863
      %v4011 = vadd.f32 %v3494, %v3868
      %v4012 = vadd.f32 %v3495, %v3873
      %v4013 = vadd.f32 %v3496, %v3878
      %v4014 = vadd.f32 %v3497, %v3883
      %v4015 = vadd.f32 %v3498, %v3888
      %v4016 = vadd.f32 %v3499, %v3893
      %v4017 = vadd.f32 %v3500, %v3898
      %v4018 = vadd.f32 %v3501, %v3903
      %v4019 = vadd.f32 %v3502, %v3908
      %v4020 = vadd.f32 %v3503, %v3913
      %v4021 = vadd.f32 %v3504, %v3918
      %v4022 = vadd.f32 %v3505, %v3923
      %v4023 = vadd.f32 %v3506, %v3928
      %v4024 = vadd.f32 %v3507, %v3933
      %v4025 = vadd.f32 %v3508, %v3938
      %v4026 = vadd.f32 %v3509, %v3943
      %v4027 = vadd.f32 %v3510, %v3948
      %v4028 = vadd.f32 %v3511, %v3953
      %v4029 = vadd.f32 %v3512, %v3958
      %v4030 = vadd.f32 %v3513, %v3963
      %v4031 = vadd.f32 %v3514, %v3968
      %v4032 = vadd.f32 %v3515, %v3973
      %v4033 = vadd.f32 %v3516, %v3978
      %v4034 = vadd.f32 %v3517, %v3983
      %v4035 = vadd.f32 %v3518, %v3988
      %v4036 = vld [vmem:[#allocation2 + $0x25] sm:$0xff]
      %v4037 = vld [vmem:[#allocation2 + $0x2d] sm:$0xff]
      %v4038 = vld [vmem:[#allocation2 + $0x35] sm:$0xff]
      %v4039 = vld [vmem:[#allocation2 + $0x3d] sm:$0xff]
      %v4040 = vld [vmem:[#allocation2 + $0x45] sm:$0xff]
      %v4041 = vld [vmem:[#allocation2 + $0x4d] sm:$0xff]
      %v4042 = vld [vmem:[#allocation2 + $0x55] sm:$0xff]
      %v4043 = vld [vmem:[#allocation2 + $0x5d] sm:$0xff]
      %v4044 = vld [vmem:[#allocation2 + $0x65] sm:$0xff]
      %v4045 = vld [vmem:[#allocation2 + $0x6d] sm:$0xff]
      %v4046 = vld [vmem:[#allocation2 + $0x75] sm:$0xff]
      %v4047 = vld [vmem:[#allocation2 + $0x7d] sm:$0xff]
      %v4048 = vld [vmem:[#allocation2 + $0x85] sm:$0xff]
      %v4049 = vld [vmem:[#allocation2 + $0x8d] sm:$0xff]
      %v4050 = vld [vmem:[#allocation2 + $0x95] sm:$0xff]
      %v4051 = vld [vmem:[#allocation2 + $0x9d] sm:$0xff]
      %v4052 = vld [vmem:[#allocation2 + $0xa5] sm:$0xff]
      %v4053 = vld [vmem:[#allocation2 + $0xad] sm:$0xff]
      %v4054 = vld [vmem:[#allocation2 + $0xb5] sm:$0xff]
      %v4055 = vld [vmem:[#allocation2 + $0xbd] sm:$0xff]
      %v4056 = vld [vmem:[#allocation2 + $0xc5] sm:$0xff]
      %v4057 = vld [vmem:[#allocation2 + $0xcd] sm:$0xff]
      %v4058 = vld [vmem:[#allocation2 + $0xd5] sm:$0xff]
      %v4059 = vld [vmem:[#allocation2 + $0xdd] sm:$0xff]
      %v4060 = vld [vmem:[#allocation2 + $0xe5] sm:$0xff]
      %v4061 = vld [vmem:[#allocation2 + $0xed] sm:$0xff]
      %v4062 = vld [vmem:[#allocation2 + $0xf5] sm:$0xff]
      %v4063 = vld [vmem:[#allocation2 + $0xfd] sm:$0xff]
      %v4064 = vld [vmem:[#allocation2 + $0x105] sm:$0xff]
      %v4065 = vld [vmem:[#allocation2 + $0x10d] sm:$0xff]
      %v4066 = vld [vmem:[#allocation2 + $0x115] sm:$0xff]
      %v4067 = vld [vmem:[#allocation2 + $0x11d] sm:$0xff]
      %v4068 = vld [vmem:[#allocation2 + $0x125] sm:$0xff]
      %v4069 = vld [vmem:[#allocation2 + $0x12d] sm:$0xff]
      %v4070 = vld [vmem:[#allocation2 + $0x135] sm:$0xff]
      %v4071 = vld [vmem:[#allocation2 + $0x13d] sm:$0xff]
      %v4072 = vld [vmem:[#allocation2 + $0x145] sm:$0xff]
      %v4073 = vld [vmem:[#allocation2 + $0x14d] sm:$0xff]
      %v4074 = vld [vmem:[#allocation2 + $0x155] sm:$0xff]
      %v4075 = vld [vmem:[#allocation2 + $0x15d] sm:$0xff]
      %v4076 = vld [vmem:[#allocation2 + $0x165] sm:$0xff]
      %v4077 = vld [vmem:[#allocation2 + $0x16d] sm:$0xff]
      %v4078 = vld [vmem:[#allocation2 + $0x175] sm:$0xff]
      %v4079 = vld [vmem:[#allocation2 + $0x17d] sm:$0xff]
      %v4080 = vld [vmem:[#allocation2 + $0x185] sm:$0xff]
      %s4081 = scalar_lea.vmem %s377, 56
      %v4082 = vld [vmem:[%s4081] sm:$0xff]
      %v4084 = vsel %vm452, %v4036, 0
      %v4087 = vsel %vm452, %v4037, 0
      %v4090 = vsel %vm452, %v4038, 0
      %v4093 = vsel %vm452, %v4039, 0
      %v4096 = vsel %vm452, %v4040, 0
      %v4099 = vsel %vm452, %v4041, 0
      %v4102 = vsel %vm452, %v4042, 0
      %v4105 = vsel %vm452, %v4043, 0
      %v4108 = vsel %vm452, %v4044, 0
      %v4111 = vsel %vm452, %v4045, 0
      %v4114 = vsel %vm452, %v4046, 0
      %v4117 = vsel %vm452, %v4047, 0
      %v4120 = vsel %vm452, %v4048, 0
      %v4123 = vsel %vm452, %v4049, 0
      %v4126 = vsel %vm452, %v4050, 0
      %v4129 = vsel %vm452, %v4051, 0
      %v4132 = vsel %vm452, %v4052, 0
      %v4135 = vsel %vm452, %v4053, 0
      %v4138 = vsel %vm452, %v4054, 0
      %v4141 = vsel %vm452, %v4055, 0
      %v4144 = vsel %vm452, %v4056, 0
      %v4147 = vsel %vm452, %v4057, 0
      %v4150 = vsel %vm452, %v4058, 0
      %v4153 = vsel %vm452, %v4059, 0
      %v4156 = vsel %vm452, %v4060, 0
      %v4159 = vsel %vm452, %v4061, 0
      %v4162 = vsel %vm452, %v4062, 0
      %v4165 = vsel %vm452, %v4063, 0
      %v4168 = vsel %vm452, %v4064, 0
      %v4171 = vsel %vm452, %v4065, 0
      %v4174 = vsel %vm452, %v4066, 0
      %v4177 = vsel %vm452, %v4067, 0
      %v4180 = vsel %vm452, %v4068, 0
      %v4183 = vsel %vm452, %v4069, 0
      %v4186 = vsel %vm452, %v4070, 0
      %v4189 = vsel %vm452, %v4071, 0
      %v4192 = vsel %vm452, %v4072, 0
      %v4195 = vsel %vm452, %v4073, 0
      %v4198 = vsel %vm452, %v4074, 0
      %v4201 = vsel %vm452, %v4075, 0
      %v4204 = vsel %vm452, %v4076, 0
      %v4207 = vsel %vm452, %v4077, 0
      %v4210 = vsel %vm452, %v4078, 0
      %v4213 = vsel %vm452, %v4079, 0
      %v4216 = vsel %vm452, %v4080, 0
      %4218 = vmatprep.subr.mxu0 0.0
      %4219 = vmatpush1.msra.mxu0 0.0
      %4220 = vmatprep.subr.mxu0 0.0
      %4221 = vmatpush1.msra.mxu0 0.0
      %4222 = vmatprep.subr.mxu0 0.0
      %4223 = vmatpush1.msra.mxu0 0.0
      %4224 = vmatprep.subr.mxu0 0.0
      %4225 = vmatpush1.msra.mxu0 0.0
      %4226 = vmatprep.subr.mxu0 0.0
      %4227 = vmatpush1.msra.mxu0 0.0
      %4228 = vmatprep.subr.mxu0 0.0
      %4229 = vmatpush1.msra.mxu0 0.0
      %4230 = vmatprep.subr.mxu0 0.0
      %4231 = vmatpush1.msra.mxu0 0.0
      %4232 = vmatprep.subr.mxu0 0.0
      %4233 = vmatpush1.msra.mxu0 0.0
      %4234 = vmatprep.subr.mxu0 0.0
      %4235 = vmatpush1.msra.mxu0 0.0
      %4236 = vmatprep.subr.mxu0 0.0
      %4237 = vmatpush1.msra.mxu0 0.0
      %4238 = vmatprep.subr.mxu0 0.0
      %4239 = vmatpush1.msra.mxu0 0.0
      %4240 = vmatprep.subr.mxu0 0.0
      %4241 = vmatpush1.msra.mxu0 0.0
      %4242 = vmatprep.subr.mxu0 0.0
      %4243 = vmatpush1.msra.mxu0 0.0
      %4244 = vmatprep.subr.mxu0 0.0
      %4245 = vmatpush1.msra.mxu0 0.0
      %4246 = vmatprep.subr.mxu0 0.0
      %4247 = vmatpush1.msra.mxu0 0.0
      %4248 = vmatprep.subr.mxu0 0.0
      %4249 = vmatpush1.msra.mxu0 %v4082
      %4250 = vmatprep.subr.mxu0 0.0
      %4251 = vmatpush2.msra.mxu0 0.0
      %4252 = vmatprep.subr.mxu0 0.0
      %4253 = vmatpush2.msra.mxu0 0.0
      %4254 = vmatprep.subr.mxu0 0.0
      %4255 = vmatpush2.msra.mxu0 0.0
      %4256 = vmatprep.subr.mxu0 0.0
      %4257 = vmatpush2.msra.mxu0 0.0
      %4258 = vmatprep.subr.mxu0 0.0
      %4259 = vmatpush2.msra.mxu0 0.0
      %4260 = vmatprep.subr.mxu0 0.0
      %4261 = vmatpush2.msra.mxu0 0.0
      %4262 = vmatprep.subr.mxu0 0.0
      %4263 = vmatpush2.msra.mxu0 0.0
      %4264 = vmatprep.subr.mxu0 0.0
      %4265 = vmatpush2.msra.mxu0 0.0
      %4266 = vmatprep.subr.mxu0 0.0
      %4267 = vmatpush2.msra.mxu0 0.0
      %4268 = vmatprep.subr.mxu0 0.0
      %4269 = vmatpush2.msra.mxu0 0.0
      %4270 = vmatprep.subr.mxu0 0.0
      %4271 = vmatpush2.msra.mxu0 0.0
      %4272 = vmatprep.subr.mxu0 0.0
      %4273 = vmatpush2.msra.mxu0 0.0
      %4274 = vmatprep.subr.mxu0 0.0
      %4275 = vmatpush2.msra.mxu0 0.0
      %4276 = vmatprep.subr.mxu0 0.0
      %4277 = vmatpush2.msra.mxu0 0.0
      %4278 = vmatprep.subr.mxu0 0.0
      %4279 = vmatpush2.msra.mxu0 0.0
      %4280 = vmatprep.subr.mxu0 0.0
      %4281 = vmatpush2.msra.mxu0 0.0
      %4282 = vmatprep.mubr.f32.mxu0 0.0
      %4283 = vmatmul.mubr.f32.gmra.mxu0 %v4084
      %v4284 = vpop.f32.mrf.mxu0
      %v4285 = vadd.f32 0.0, %v4284
      %v4286 = vpop.f32.mrf.mxu0
      %4287 = vmatprep.mubr.f32.mxu0 0.0
      %4288 = vmatmul.mubr.f32.gmra.mxu0 %v4087
      %v4289 = vpop.f32.mrf.mxu0
      %v4290 = vadd.f32 0.0, %v4289
      %v4291 = vpop.f32.mrf.mxu0
      %4292 = vmatprep.mubr.f32.mxu0 0.0
      %4293 = vmatmul.mubr.f32.gmra.mxu0 %v4090
      %v4294 = vpop.f32.mrf.mxu0
      %v4295 = vadd.f32 0.0, %v4294
      %v4296 = vpop.f32.mrf.mxu0
      %4297 = vmatprep.mubr.f32.mxu0 0.0
      %4298 = vmatmul.mubr.f32.gmra.mxu0 %v4093
      %v4299 = vpop.f32.mrf.mxu0
      %v4300 = vadd.f32 0.0, %v4299
      %v4301 = vpop.f32.mrf.mxu0
      %4302 = vmatprep.mubr.f32.mxu0 0.0
      %4303 = vmatmul.mubr.f32.gmra.mxu0 %v4096
      %v4304 = vpop.f32.mrf.mxu0
      %v4305 = vadd.f32 0.0, %v4304
      %v4306 = vpop.f32.mrf.mxu0
      %4307 = vmatprep.mubr.f32.mxu0 0.0
      %4308 = vmatmul.mubr.f32.gmra.mxu0 %v4099
      %v4309 = vpop.f32.mrf.mxu0
      %v4310 = vadd.f32 0.0, %v4309
      %v4311 = vpop.f32.mrf.mxu0
      %4312 = vmatprep.mubr.f32.mxu0 0.0
      %4313 = vmatmul.mubr.f32.gmra.mxu0 %v4102
      %v4314 = vpop.f32.mrf.mxu0
      %v4315 = vadd.f32 0.0, %v4314
      %v4316 = vpop.f32.mrf.mxu0
      %4317 = vmatprep.mubr.f32.mxu0 0.0
      %4318 = vmatmul.mubr.f32.gmra.mxu0 %v4105
      %v4319 = vpop.f32.mrf.mxu0
      %v4320 = vadd.f32 0.0, %v4319
      %v4321 = vpop.f32.mrf.mxu0
      %4322 = vmatprep.mubr.f32.mxu0 0.0
      %4323 = vmatmul.mubr.f32.gmra.mxu0 %v4108
      %v4324 = vpop.f32.mrf.mxu0
      %v4325 = vadd.f32 0.0, %v4324
      %v4326 = vpop.f32.mrf.mxu0
      %4327 = vmatprep.mubr.f32.mxu0 0.0
      %4328 = vmatmul.mubr.f32.gmra.mxu0 %v4111
      %v4329 = vpop.f32.mrf.mxu0
      %v4330 = vadd.f32 0.0, %v4329
      %v4331 = vpop.f32.mrf.mxu0
      %4332 = vmatprep.mubr.f32.mxu0 0.0
      %4333 = vmatmul.mubr.f32.gmra.mxu0 %v4114
      %v4334 = vpop.f32.mrf.mxu0
      %v4335 = vadd.f32 0.0, %v4334
      %v4336 = vpop.f32.mrf.mxu0
      %4337 = vmatprep.mubr.f32.mxu0 0.0
      %4338 = vmatmul.mubr.f32.gmra.mxu0 %v4117
      %v4339 = vpop.f32.mrf.mxu0
      %v4340 = vadd.f32 0.0, %v4339
      %v4341 = vpop.f32.mrf.mxu0
      %4342 = vmatprep.mubr.f32.mxu0 0.0
      %4343 = vmatmul.mubr.f32.gmra.mxu0 %v4120
      %v4344 = vpop.f32.mrf.mxu0
      %v4345 = vadd.f32 0.0, %v4344
      %v4346 = vpop.f32.mrf.mxu0
      %4347 = vmatprep.mubr.f32.mxu0 0.0
      %4348 = vmatmul.mubr.f32.gmra.mxu0 %v4123
      %v4349 = vpop.f32.mrf.mxu0
      %v4350 = vadd.f32 0.0, %v4349
      %v4351 = vpop.f32.mrf.mxu0
      %4352 = vmatprep.mubr.f32.mxu0 0.0
      %4353 = vmatmul.mubr.f32.gmra.mxu0 %v4126
      %v4354 = vpop.f32.mrf.mxu0
      %v4355 = vadd.f32 0.0, %v4354
      %v4356 = vpop.f32.mrf.mxu0
      %4357 = vmatprep.mubr.f32.mxu0 0.0
      %4358 = vmatmul.mubr.f32.gmra.mxu0 %v4129
      %v4359 = vpop.f32.mrf.mxu0
      %v4360 = vadd.f32 0.0, %v4359
      %v4361 = vpop.f32.mrf.mxu0
      %4362 = vmatprep.mubr.f32.mxu0 0.0
      %4363 = vmatmul.mubr.f32.gmra.mxu0 %v4132
      %v4364 = vpop.f32.mrf.mxu0
      %v4365 = vadd.f32 0.0, %v4364
      %v4366 = vpop.f32.mrf.mxu0
      %4367 = vmatprep.mubr.f32.mxu0 0.0
      %4368 = vmatmul.mubr.f32.gmra.mxu0 %v4135
      %v4369 = vpop.f32.mrf.mxu0
      %v4370 = vadd.f32 0.0, %v4369
      %v4371 = vpop.f32.mrf.mxu0
      %4372 = vmatprep.mubr.f32.mxu0 0.0
      %4373 = vmatmul.mubr.f32.gmra.mxu0 %v4138
      %v4374 = vpop.f32.mrf.mxu0
      %v4375 = vadd.f32 0.0, %v4374
      %v4376 = vpop.f32.mrf.mxu0
      %4377 = vmatprep.mubr.f32.mxu0 0.0
      %4378 = vmatmul.mubr.f32.gmra.mxu0 %v4141
      %v4379 = vpop.f32.mrf.mxu0
      %v4380 = vadd.f32 0.0, %v4379
      %v4381 = vpop.f32.mrf.mxu0
      %4382 = vmatprep.mubr.f32.mxu0 0.0
      %4383 = vmatmul.mubr.f32.gmra.mxu0 %v4144
      %v4384 = vpop.f32.mrf.mxu0
      %v4385 = vadd.f32 0.0, %v4384
      %v4386 = vpop.f32.mrf.mxu0
      %4387 = vmatprep.mubr.f32.mxu0 0.0
      %4388 = vmatmul.mubr.f32.gmra.mxu0 %v4147
      %v4389 = vpop.f32.mrf.mxu0
      %v4390 = vadd.f32 0.0, %v4389
      %v4391 = vpop.f32.mrf.mxu0
      %4392 = vmatprep.mubr.f32.mxu0 0.0
      %4393 = vmatmul.mubr.f32.gmra.mxu0 %v4150
      %v4394 = vpop.f32.mrf.mxu0
      %v4395 = vadd.f32 0.0, %v4394
      %v4396 = vpop.f32.mrf.mxu0
      %4397 = vmatprep.mubr.f32.mxu0 0.0
      %4398 = vmatmul.mubr.f32.gmra.mxu0 %v4153
      %v4399 = vpop.f32.mrf.mxu0
      %v4400 = vadd.f32 0.0, %v4399
      %v4401 = vpop.f32.mrf.mxu0
      %4402 = vmatprep.mubr.f32.mxu0 0.0
      %4403 = vmatmul.mubr.f32.gmra.mxu0 %v4156
      %v4404 = vpop.f32.mrf.mxu0
      %v4405 = vadd.f32 0.0, %v4404
      %v4406 = vpop.f32.mrf.mxu0
      %4407 = vmatprep.mubr.f32.mxu0 0.0
      %4408 = vmatmul.mubr.f32.gmra.mxu0 %v4159
      %v4409 = vpop.f32.mrf.mxu0
      %v4410 = vadd.f32 0.0, %v4409
      %v4411 = vpop.f32.mrf.mxu0
      %4412 = vmatprep.mubr.f32.mxu0 0.0
      %4413 = vmatmul.mubr.f32.gmra.mxu0 %v4162
      %v4414 = vpop.f32.mrf.mxu0
      %v4415 = vadd.f32 0.0, %v4414
      %v4416 = vpop.f32.mrf.mxu0
      %4417 = vmatprep.mubr.f32.mxu0 0.0
      %4418 = vmatmul.mubr.f32.gmra.mxu0 %v4165
      %v4419 = vpop.f32.mrf.mxu0
      %v4420 = vadd.f32 0.0, %v4419
      %v4421 = vpop.f32.mrf.mxu0
      %4422 = vmatprep.mubr.f32.mxu0 0.0
      %4423 = vmatmul.mubr.f32.gmra.mxu0 %v4168
      %v4424 = vpop.f32.mrf.mxu0
      %v4425 = vadd.f32 0.0, %v4424
      %v4426 = vpop.f32.mrf.mxu0
      %4427 = vmatprep.mubr.f32.mxu0 0.0
      %4428 = vmatmul.mubr.f32.gmra.mxu0 %v4171
      %v4429 = vpop.f32.mrf.mxu0
      %v4430 = vadd.f32 0.0, %v4429
      %v4431 = vpop.f32.mrf.mxu0
      %4432 = vmatprep.mubr.f32.mxu0 0.0
      %4433 = vmatmul.mubr.f32.gmra.mxu0 %v4174
      %v4434 = vpop.f32.mrf.mxu0
      %v4435 = vadd.f32 0.0, %v4434
      %v4436 = vpop.f32.mrf.mxu0
      %4437 = vmatprep.mubr.f32.mxu0 0.0
      %4438 = vmatmul.mubr.f32.gmra.mxu0 %v4177
      %v4439 = vpop.f32.mrf.mxu0
      %v4440 = vadd.f32 0.0, %v4439
      %v4441 = vpop.f32.mrf.mxu0
      %4442 = vmatprep.mubr.f32.mxu0 0.0
      %4443 = vmatmul.mubr.f32.gmra.mxu0 %v4180
      %v4444 = vpop.f32.mrf.mxu0
      %v4445 = vadd.f32 0.0, %v4444
      %v4446 = vpop.f32.mrf.mxu0
      %4447 = vmatprep.mubr.f32.mxu0 0.0
      %4448 = vmatmul.mubr.f32.gmra.mxu0 %v4183
      %v4449 = vpop.f32.mrf.mxu0
      %v4450 = vadd.f32 0.0, %v4449
      %v4451 = vpop.f32.mrf.mxu0
      %4452 = vmatprep.mubr.f32.mxu0 0.0
      %4453 = vmatmul.mubr.f32.gmra.mxu0 %v4186
      %v4454 = vpop.f32.mrf.mxu0
      %v4455 = vadd.f32 0.0, %v4454
      %v4456 = vpop.f32.mrf.mxu0
      %4457 = vmatprep.mubr.f32.mxu0 0.0
      %4458 = vmatmul.mubr.f32.gmra.mxu0 %v4189
      %v4459 = vpop.f32.mrf.mxu0
      %v4460 = vadd.f32 0.0, %v4459
      %v4461 = vpop.f32.mrf.mxu0
      %4462 = vmatprep.mubr.f32.mxu0 0.0
      %4463 = vmatmul.mubr.f32.gmra.mxu0 %v4192
      %v4464 = vpop.f32.mrf.mxu0
      %v4465 = vadd.f32 0.0, %v4464
      %v4466 = vpop.f32.mrf.mxu0
      %4467 = vmatprep.mubr.f32.mxu0 0.0
      %4468 = vmatmul.mubr.f32.gmra.mxu0 %v4195
      %v4469 = vpop.f32.mrf.mxu0
      %v4470 = vadd.f32 0.0, %v4469
      %v4471 = vpop.f32.mrf.mxu0
      %4472 = vmatprep.mubr.f32.mxu0 0.0
      %4473 = vmatmul.mubr.f32.gmra.mxu0 %v4198
      %v4474 = vpop.f32.mrf.mxu0
      %v4475 = vadd.f32 0.0, %v4474
      %v4476 = vpop.f32.mrf.mxu0
      %4477 = vmatprep.mubr.f32.mxu0 0.0
      %4478 = vmatmul.mubr.f32.gmra.mxu0 %v4201
      %v4479 = vpop.f32.mrf.mxu0
      %v4480 = vadd.f32 0.0, %v4479
      %v4481 = vpop.f32.mrf.mxu0
      %4482 = vmatprep.mubr.f32.mxu0 0.0
      %4483 = vmatmul.mubr.f32.gmra.mxu0 %v4204
      %v4484 = vpop.f32.mrf.mxu0
      %v4485 = vadd.f32 0.0, %v4484
      %v4486 = vpop.f32.mrf.mxu0
      %4487 = vmatprep.mubr.f32.mxu0 0.0
      %4488 = vmatmul.mubr.f32.gmra.mxu0 %v4207
      %v4489 = vpop.f32.mrf.mxu0
      %v4490 = vadd.f32 0.0, %v4489
      %v4491 = vpop.f32.mrf.mxu0
      %4492 = vmatprep.mubr.f32.mxu0 0.0
      %4493 = vmatmul.mubr.f32.gmra.mxu0 %v4210
      %v4494 = vpop.f32.mrf.mxu0
      %v4495 = vadd.f32 0.0, %v4494
      %v4496 = vpop.f32.mrf.mxu0
      %4497 = vmatprep.mubr.f32.mxu0 0.0
      %4498 = vmatmul.mubr.f32.gmra.mxu0 %v4213
      %v4499 = vpop.f32.mrf.mxu0
      %v4500 = vadd.f32 0.0, %v4499
      %v4501 = vpop.f32.mrf.mxu0
      %4502 = vmatprep.mubr.f32.mxu0 0.0
      %4503 = vmatmul.mubr.f32.gmra.mxu0 %v4216
      %v4504 = vpop.f32.mrf.mxu0
      %v4505 = vadd.f32 0.0, %v4504
      %v4506 = vpop.f32.mrf.mxu0
      %4507 = vdwg.mxu0
      %v4508 = vadd.f32 %v3991, %v4285
      %v4509 = vadd.f32 %v3992, %v4290
      %v4510 = vadd.f32 %v3993, %v4295
      %v4511 = vadd.f32 %v3994, %v4300
      %v4512 = vadd.f32 %v3995, %v4305
      %v4513 = vadd.f32 %v3996, %v4310
      %v4514 = vadd.f32 %v3997, %v4315
      %v4515 = vadd.f32 %v3998, %v4320
      %v4516 = vadd.f32 %v3999, %v4325
      %v4517 = vadd.f32 %v4000, %v4330
      %v4518 = vadd.f32 %v4001, %v4335
      %v4519 = vadd.f32 %v4002, %v4340
      %v4520 = vadd.f32 %v4003, %v4345
      %v4521 = vadd.f32 %v4004, %v4350
      %v4522 = vadd.f32 %v4005, %v4355
      %v4523 = vadd.f32 %v4006, %v4360
      %v4524 = vadd.f32 %v4007, %v4365
      %v4525 = vadd.f32 %v4008, %v4370
      %v4526 = vadd.f32 %v4009, %v4375
      %v4527 = vadd.f32 %v4010, %v4380
      %v4528 = vadd.f32 %v4011, %v4385
      %v4529 = vadd.f32 %v4012, %v4390
      %v4530 = vadd.f32 %v4013, %v4395
      %v4531 = vadd.f32 %v4014, %v4400
      %v4532 = vadd.f32 %v4015, %v4405
      %v4533 = vadd.f32 %v4016, %v4410
      %v4534 = vadd.f32 %v4017, %v4415
      %v4535 = vadd.f32 %v4018, %v4420
      %v4536 = vadd.f32 %v4019, %v4425
      %v4537 = vadd.f32 %v4020, %v4430
      %v4538 = vadd.f32 %v4021, %v4435
      %v4539 = vadd.f32 %v4022, %v4440
      %v4540 = vadd.f32 %v4023, %v4445
      %v4541 = vadd.f32 %v4024, %v4450
      %v4542 = vadd.f32 %v4025, %v4455
      %v4543 = vadd.f32 %v4026, %v4460
      %v4544 = vadd.f32 %v4027, %v4465
      %v4545 = vadd.f32 %v4028, %v4470
      %v4546 = vadd.f32 %v4029, %v4475
      %v4547 = vadd.f32 %v4030, %v4480
      %v4548 = vadd.f32 %v4031, %v4485
      %v4549 = vadd.f32 %v4032, %v4490
      %v4550 = vadd.f32 %v4033, %v4495
      %v4551 = vadd.f32 %v4034, %v4500
      %v4552 = vadd.f32 %v4035, %v4505
      %v4553 = vld [vmem:[#allocation2 + $0x26] sm:$0xff]
      %v4554 = vld [vmem:[#allocation2 + $0x2e] sm:$0xff]
      %v4555 = vld [vmem:[#allocation2 + $0x36] sm:$0xff]
      %v4556 = vld [vmem:[#allocation2 + $0x3e] sm:$0xff]
      %v4557 = vld [vmem:[#allocation2 + $0x46] sm:$0xff]
      %v4558 = vld [vmem:[#allocation2 + $0x4e] sm:$0xff]
      %v4559 = vld [vmem:[#allocation2 + $0x56] sm:$0xff]
      %v4560 = vld [vmem:[#allocation2 + $0x5e] sm:$0xff]
      %v4561 = vld [vmem:[#allocation2 + $0x66] sm:$0xff]
      %v4562 = vld [vmem:[#allocation2 + $0x6e] sm:$0xff]
      %v4563 = vld [vmem:[#allocation2 + $0x76] sm:$0xff]
      %v4564 = vld [vmem:[#allocation2 + $0x7e] sm:$0xff]
      %v4565 = vld [vmem:[#allocation2 + $0x86] sm:$0xff]
      %v4566 = vld [vmem:[#allocation2 + $0x8e] sm:$0xff]
      %v4567 = vld [vmem:[#allocation2 + $0x96] sm:$0xff]
      %v4568 = vld [vmem:[#allocation2 + $0x9e] sm:$0xff]
      %v4569 = vld [vmem:[#allocation2 + $0xa6] sm:$0xff]
      %v4570 = vld [vmem:[#allocation2 + $0xae] sm:$0xff]
      %v4571 = vld [vmem:[#allocation2 + $0xb6] sm:$0xff]
      %v4572 = vld [vmem:[#allocation2 + $0xbe] sm:$0xff]
      %v4573 = vld [vmem:[#allocation2 + $0xc6] sm:$0xff]
      %v4574 = vld [vmem:[#allocation2 + $0xce] sm:$0xff]
      %v4575 = vld [vmem:[#allocation2 + $0xd6] sm:$0xff]
      %v4576 = vld [vmem:[#allocation2 + $0xde] sm:$0xff]
      %v4577 = vld [vmem:[#allocation2 + $0xe6] sm:$0xff]
      %v4578 = vld [vmem:[#allocation2 + $0xee] sm:$0xff]
      %v4579 = vld [vmem:[#allocation2 + $0xf6] sm:$0xff]
      %v4580 = vld [vmem:[#allocation2 + $0xfe] sm:$0xff]
      %v4581 = vld [vmem:[#allocation2 + $0x106] sm:$0xff]
      %v4582 = vld [vmem:[#allocation2 + $0x10e] sm:$0xff]
      %v4583 = vld [vmem:[#allocation2 + $0x116] sm:$0xff]
      %v4584 = vld [vmem:[#allocation2 + $0x11e] sm:$0xff]
      %v4585 = vld [vmem:[#allocation2 + $0x126] sm:$0xff]
      %v4586 = vld [vmem:[#allocation2 + $0x12e] sm:$0xff]
      %v4587 = vld [vmem:[#allocation2 + $0x136] sm:$0xff]
      %v4588 = vld [vmem:[#allocation2 + $0x13e] sm:$0xff]
      %v4589 = vld [vmem:[#allocation2 + $0x146] sm:$0xff]
      %v4590 = vld [vmem:[#allocation2 + $0x14e] sm:$0xff]
      %v4591 = vld [vmem:[#allocation2 + $0x156] sm:$0xff]
      %v4592 = vld [vmem:[#allocation2 + $0x15e] sm:$0xff]
      %v4593 = vld [vmem:[#allocation2 + $0x166] sm:$0xff]
      %v4594 = vld [vmem:[#allocation2 + $0x16e] sm:$0xff]
      %v4595 = vld [vmem:[#allocation2 + $0x176] sm:$0xff]
      %v4596 = vld [vmem:[#allocation2 + $0x17e] sm:$0xff]
      %v4597 = vld [vmem:[#allocation2 + $0x186] sm:$0xff]
      %s4598 = scalar_lea.vmem %s377, 64
      %v4599 = vld [vmem:[%s4598] sm:$0xff]
      %v4601 = vsel %vm452, %v4553, 0
      %v4604 = vsel %vm452, %v4554, 0
      %v4607 = vsel %vm452, %v4555, 0
      %v4610 = vsel %vm452, %v4556, 0
      %v4613 = vsel %vm452, %v4557, 0
      %v4616 = vsel %vm452, %v4558, 0
      %v4619 = vsel %vm452, %v4559, 0
      %v4622 = vsel %vm452, %v4560, 0
      %v4625 = vsel %vm452, %v4561, 0
      %v4628 = vsel %vm452, %v4562, 0
      %v4631 = vsel %vm452, %v4563, 0
      %v4634 = vsel %vm452, %v4564, 0
      %v4637 = vsel %vm452, %v4565, 0
      %v4640 = vsel %vm452, %v4566, 0
      %v4643 = vsel %vm452, %v4567, 0
      %v4646 = vsel %vm452, %v4568, 0
      %v4649 = vsel %vm452, %v4569, 0
      %v4652 = vsel %vm452, %v4570, 0
      %v4655 = vsel %vm452, %v4571, 0
      %v4658 = vsel %vm452, %v4572, 0
      %v4661 = vsel %vm452, %v4573, 0
      %v4664 = vsel %vm452, %v4574, 0
      %v4667 = vsel %vm452, %v4575, 0
      %v4670 = vsel %vm452, %v4576, 0
      %v4673 = vsel %vm452, %v4577, 0
      %v4676 = vsel %vm452, %v4578, 0
      %v4679 = vsel %vm452, %v4579, 0
      %v4682 = vsel %vm452, %v4580, 0
      %v4685 = vsel %vm452, %v4581, 0
      %v4688 = vsel %vm452, %v4582, 0
      %v4691 = vsel %vm452, %v4583, 0
      %v4694 = vsel %vm452, %v4584, 0
      %v4697 = vsel %vm452, %v4585, 0
      %v4700 = vsel %vm452, %v4586, 0
      %v4703 = vsel %vm452, %v4587, 0
      %v4706 = vsel %vm452, %v4588, 0
      %v4709 = vsel %vm452, %v4589, 0
      %v4712 = vsel %vm452, %v4590, 0
      %v4715 = vsel %vm452, %v4591, 0
      %v4718 = vsel %vm452, %v4592, 0
      %v4721 = vsel %vm452, %v4593, 0
      %v4724 = vsel %vm452, %v4594, 0
      %v4727 = vsel %vm452, %v4595, 0
      %v4730 = vsel %vm452, %v4596, 0
      %v4733 = vsel %vm452, %v4597, 0
      %4735 = vmatprep.subr.mxu0 0.0
      %4736 = vmatpush1.msra.mxu0 0.0
      %4737 = vmatprep.subr.mxu0 0.0
      %4738 = vmatpush1.msra.mxu0 0.0
      %4739 = vmatprep.subr.mxu0 0.0
      %4740 = vmatpush1.msra.mxu0 0.0
      %4741 = vmatprep.subr.mxu0 0.0
      %4742 = vmatpush1.msra.mxu0 0.0
      %4743 = vmatprep.subr.mxu0 0.0
      %4744 = vmatpush1.msra.mxu0 0.0
      %4745 = vmatprep.subr.mxu0 0.0
      %4746 = vmatpush1.msra.mxu0 0.0
      %4747 = vmatprep.subr.mxu0 0.0
      %4748 = vmatpush1.msra.mxu0 0.0
      %4749 = vmatprep.subr.mxu0 0.0
      %4750 = vmatpush1.msra.mxu0 0.0
      %4751 = vmatprep.subr.mxu0 0.0
      %4752 = vmatpush1.msra.mxu0 0.0
      %4753 = vmatprep.subr.mxu0 0.0
      %4754 = vmatpush1.msra.mxu0 0.0
      %4755 = vmatprep.subr.mxu0 0.0
      %4756 = vmatpush1.msra.mxu0 0.0
      %4757 = vmatprep.subr.mxu0 0.0
      %4758 = vmatpush1.msra.mxu0 0.0
      %4759 = vmatprep.subr.mxu0 0.0
      %4760 = vmatpush1.msra.mxu0 0.0
      %4761 = vmatprep.subr.mxu0 0.0
      %4762 = vmatpush1.msra.mxu0 0.0
      %4763 = vmatprep.subr.mxu0 0.0
      %4764 = vmatpush1.msra.mxu0 0.0
      %4765 = vmatprep.subr.mxu0 0.0
      %4766 = vmatpush1.msra.mxu0 %v4599
      %4767 = vmatprep.subr.mxu0 0.0
      %4768 = vmatpush2.msra.mxu0 0.0
      %4769 = vmatprep.subr.mxu0 0.0
      %4770 = vmatpush2.msra.mxu0 0.0
      %4771 = vmatprep.subr.mxu0 0.0
      %4772 = vmatpush2.msra.mxu0 0.0
      %4773 = vmatprep.subr.mxu0 0.0
      %4774 = vmatpush2.msra.mxu0 0.0
      %4775 = vmatprep.subr.mxu0 0.0
      %4776 = vmatpush2.msra.mxu0 0.0
      %4777 = vmatprep.subr.mxu0 0.0
      %4778 = vmatpush2.msra.mxu0 0.0
      %4779 = vmatprep.subr.mxu0 0.0
      %4780 = vmatpush2.msra.mxu0 0.0
      %4781 = vmatprep.subr.mxu0 0.0
      %4782 = vmatpush2.msra.mxu0 0.0
      %4783 = vmatprep.subr.mxu0 0.0
      %4784 = vmatpush2.msra.mxu0 0.0
      %4785 = vmatprep.subr.mxu0 0.0
      %4786 = vmatpush2.msra.mxu0 0.0
      %4787 = vmatprep.subr.mxu0 0.0
      %4788 = vmatpush2.msra.mxu0 0.0
      %4789 = vmatprep.subr.mxu0 0.0
      %4790 = vmatpush2.msra.mxu0 0.0
      %4791 = vmatprep.subr.mxu0 0.0
      %4792 = vmatpush2.msra.mxu0 0.0
      %4793 = vmatprep.subr.mxu0 0.0
      %4794 = vmatpush2.msra.mxu0 0.0
      %4795 = vmatprep.subr.mxu0 0.0
      %4796 = vmatpush2.msra.mxu0 0.0
      %4797 = vmatprep.subr.mxu0 0.0
      %4798 = vmatpush2.msra.mxu0 0.0
      %4799 = vmatprep.mubr.f32.mxu0 0.0
      %4800 = vmatmul.mubr.f32.gmra.mxu0 %v4601
      %v4801 = vpop.f32.mrf.mxu0
      %v4802 = vadd.f32 0.0, %v4801
      %v4803 = vpop.f32.mrf.mxu0
      %4804 = vmatprep.mubr.f32.mxu0 0.0
      %4805 = vmatmul.mubr.f32.gmra.mxu0 %v4604
      %v4806 = vpop.f32.mrf.mxu0
      %v4807 = vadd.f32 0.0, %v4806
      %v4808 = vpop.f32.mrf.mxu0
      %4809 = vmatprep.mubr.f32.mxu0 0.0
      %4810 = vmatmul.mubr.f32.gmra.mxu0 %v4607
      %v4811 = vpop.f32.mrf.mxu0
      %v4812 = vadd.f32 0.0, %v4811
      %v4813 = vpop.f32.mrf.mxu0
      %4814 = vmatprep.mubr.f32.mxu0 0.0
      %4815 = vmatmul.mubr.f32.gmra.mxu0 %v4610
      %v4816 = vpop.f32.mrf.mxu0
      %v4817 = vadd.f32 0.0, %v4816
      %v4818 = vpop.f32.mrf.mxu0
      %4819 = vmatprep.mubr.f32.mxu0 0.0
      %4820 = vmatmul.mubr.f32.gmra.mxu0 %v4613
      %v4821 = vpop.f32.mrf.mxu0
      %v4822 = vadd.f32 0.0, %v4821
      %v4823 = vpop.f32.mrf.mxu0
      %4824 = vmatprep.mubr.f32.mxu0 0.0
      %4825 = vmatmul.mubr.f32.gmra.mxu0 %v4616
      %v4826 = vpop.f32.mrf.mxu0
      %v4827 = vadd.f32 0.0, %v4826
      %v4828 = vpop.f32.mrf.mxu0
      %4829 = vmatprep.mubr.f32.mxu0 0.0
      %4830 = vmatmul.mubr.f32.gmra.mxu0 %v4619
      %v4831 = vpop.f32.mrf.mxu0
      %v4832 = vadd.f32 0.0, %v4831
      %v4833 = vpop.f32.mrf.mxu0
      %4834 = vmatprep.mubr.f32.mxu0 0.0
      %4835 = vmatmul.mubr.f32.gmra.mxu0 %v4622
      %v4836 = vpop.f32.mrf.mxu0
      %v4837 = vadd.f32 0.0, %v4836
      %v4838 = vpop.f32.mrf.mxu0
      %4839 = vmatprep.mubr.f32.mxu0 0.0
      %4840 = vmatmul.mubr.f32.gmra.mxu0 %v4625
      %v4841 = vpop.f32.mrf.mxu0
      %v4842 = vadd.f32 0.0, %v4841
      %v4843 = vpop.f32.mrf.mxu0
      %4844 = vmatprep.mubr.f32.mxu0 0.0
      %4845 = vmatmul.mubr.f32.gmra.mxu0 %v4628
      %v4846 = vpop.f32.mrf.mxu0
      %v4847 = vadd.f32 0.0, %v4846
      %v4848 = vpop.f32.mrf.mxu0
      %4849 = vmatprep.mubr.f32.mxu0 0.0
      %4850 = vmatmul.mubr.f32.gmra.mxu0 %v4631
      %v4851 = vpop.f32.mrf.mxu0
      %v4852 = vadd.f32 0.0, %v4851
      %v4853 = vpop.f32.mrf.mxu0
      %4854 = vmatprep.mubr.f32.mxu0 0.0
      %4855 = vmatmul.mubr.f32.gmra.mxu0 %v4634
      %v4856 = vpop.f32.mrf.mxu0
      %v4857 = vadd.f32 0.0, %v4856
      %v4858 = vpop.f32.mrf.mxu0
      %4859 = vmatprep.mubr.f32.mxu0 0.0
      %4860 = vmatmul.mubr.f32.gmra.mxu0 %v4637
      %v4861 = vpop.f32.mrf.mxu0
      %v4862 = vadd.f32 0.0, %v4861
      %v4863 = vpop.f32.mrf.mxu0
      %4864 = vmatprep.mubr.f32.mxu0 0.0
      %4865 = vmatmul.mubr.f32.gmra.mxu0 %v4640
      %v4866 = vpop.f32.mrf.mxu0
      %v4867 = vadd.f32 0.0, %v4866
      %v4868 = vpop.f32.mrf.mxu0
      %4869 = vmatprep.mubr.f32.mxu0 0.0
      %4870 = vmatmul.mubr.f32.gmra.mxu0 %v4643
      %v4871 = vpop.f32.mrf.mxu0
      %v4872 = vadd.f32 0.0, %v4871
      %v4873 = vpop.f32.mrf.mxu0
      %4874 = vmatprep.mubr.f32.mxu0 0.0
      %4875 = vmatmul.mubr.f32.gmra.mxu0 %v4646
      %v4876 = vpop.f32.mrf.mxu0
      %v4877 = vadd.f32 0.0, %v4876
      %v4878 = vpop.f32.mrf.mxu0
      %4879 = vmatprep.mubr.f32.mxu0 0.0
      %4880 = vmatmul.mubr.f32.gmra.mxu0 %v4649
      %v4881 = vpop.f32.mrf.mxu0
      %v4882 = vadd.f32 0.0, %v4881
      %v4883 = vpop.f32.mrf.mxu0
      %4884 = vmatprep.mubr.f32.mxu0 0.0
      %4885 = vmatmul.mubr.f32.gmra.mxu0 %v4652
      %v4886 = vpop.f32.mrf.mxu0
      %v4887 = vadd.f32 0.0, %v4886
      %v4888 = vpop.f32.mrf.mxu0
      %4889 = vmatprep.mubr.f32.mxu0 0.0
      %4890 = vmatmul.mubr.f32.gmra.mxu0 %v4655
      %v4891 = vpop.f32.mrf.mxu0
      %v4892 = vadd.f32 0.0, %v4891
      %v4893 = vpop.f32.mrf.mxu0
      %4894 = vmatprep.mubr.f32.mxu0 0.0
      %4895 = vmatmul.mubr.f32.gmra.mxu0 %v4658
      %v4896 = vpop.f32.mrf.mxu0
      %v4897 = vadd.f32 0.0, %v4896
      %v4898 = vpop.f32.mrf.mxu0
      %4899 = vmatprep.mubr.f32.mxu0 0.0
      %4900 = vmatmul.mubr.f32.gmra.mxu0 %v4661
      %v4901 = vpop.f32.mrf.mxu0
      %v4902 = vadd.f32 0.0, %v4901
      %v4903 = vpop.f32.mrf.mxu0
      %4904 = vmatprep.mubr.f32.mxu0 0.0
      %4905 = vmatmul.mubr.f32.gmra.mxu0 %v4664
      %v4906 = vpop.f32.mrf.mxu0
      %v4907 = vadd.f32 0.0, %v4906
      %v4908 = vpop.f32.mrf.mxu0
      %4909 = vmatprep.mubr.f32.mxu0 0.0
      %4910 = vmatmul.mubr.f32.gmra.mxu0 %v4667
      %v4911 = vpop.f32.mrf.mxu0
      %v4912 = vadd.f32 0.0, %v4911
      %v4913 = vpop.f32.mrf.mxu0
      %4914 = vmatprep.mubr.f32.mxu0 0.0
      %4915 = vmatmul.mubr.f32.gmra.mxu0 %v4670
      %v4916 = vpop.f32.mrf.mxu0
      %v4917 = vadd.f32 0.0, %v4916
      %v4918 = vpop.f32.mrf.mxu0
      %4919 = vmatprep.mubr.f32.mxu0 0.0
      %4920 = vmatmul.mubr.f32.gmra.mxu0 %v4673
      %v4921 = vpop.f32.mrf.mxu0
      %v4922 = vadd.f32 0.0, %v4921
      %v4923 = vpop.f32.mrf.mxu0
      %4924 = vmatprep.mubr.f32.mxu0 0.0
      %4925 = vmatmul.mubr.f32.gmra.mxu0 %v4676
      %v4926 = vpop.f32.mrf.mxu0
      %v4927 = vadd.f32 0.0, %v4926
      %v4928 = vpop.f32.mrf.mxu0
      %4929 = vmatprep.mubr.f32.mxu0 0.0
      %4930 = vmatmul.mubr.f32.gmra.mxu0 %v4679
      %v4931 = vpop.f32.mrf.mxu0
      %v4932 = vadd.f32 0.0, %v4931
      %v4933 = vpop.f32.mrf.mxu0
      %4934 = vmatprep.mubr.f32.mxu0 0.0
      %4935 = vmatmul.mubr.f32.gmra.mxu0 %v4682
      %v4936 = vpop.f32.mrf.mxu0
      %v4937 = vadd.f32 0.0, %v4936
      %v4938 = vpop.f32.mrf.mxu0
      %4939 = vmatprep.mubr.f32.mxu0 0.0
      %4940 = vmatmul.mubr.f32.gmra.mxu0 %v4685
      %v4941 = vpop.f32.mrf.mxu0
      %v4942 = vadd.f32 0.0, %v4941
      %v4943 = vpop.f32.mrf.mxu0
      %4944 = vmatprep.mubr.f32.mxu0 0.0
      %4945 = vmatmul.mubr.f32.gmra.mxu0 %v4688
      %v4946 = vpop.f32.mrf.mxu0
      %v4947 = vadd.f32 0.0, %v4946
      %v4948 = vpop.f32.mrf.mxu0
      %4949 = vmatprep.mubr.f32.mxu0 0.0
      %4950 = vmatmul.mubr.f32.gmra.mxu0 %v4691
      %v4951 = vpop.f32.mrf.mxu0
      %v4952 = vadd.f32 0.0, %v4951
      %v4953 = vpop.f32.mrf.mxu0
      %4954 = vmatprep.mubr.f32.mxu0 0.0
      %4955 = vmatmul.mubr.f32.gmra.mxu0 %v4694
      %v4956 = vpop.f32.mrf.mxu0
      %v4957 = vadd.f32 0.0, %v4956
      %v4958 = vpop.f32.mrf.mxu0
      %4959 = vmatprep.mubr.f32.mxu0 0.0
      %4960 = vmatmul.mubr.f32.gmra.mxu0 %v4697
      %v4961 = vpop.f32.mrf.mxu0
      %v4962 = vadd.f32 0.0, %v4961
      %v4963 = vpop.f32.mrf.mxu0
      %4964 = vmatprep.mubr.f32.mxu0 0.0
      %4965 = vmatmul.mubr.f32.gmra.mxu0 %v4700
      %v4966 = vpop.f32.mrf.mxu0
      %v4967 = vadd.f32 0.0, %v4966
      %v4968 = vpop.f32.mrf.mxu0
      %4969 = vmatprep.mubr.f32.mxu0 0.0
      %4970 = vmatmul.mubr.f32.gmra.mxu0 %v4703
      %v4971 = vpop.f32.mrf.mxu0
      %v4972 = vadd.f32 0.0, %v4971
      %v4973 = vpop.f32.mrf.mxu0
      %4974 = vmatprep.mubr.f32.mxu0 0.0
      %4975 = vmatmul.mubr.f32.gmra.mxu0 %v4706
      %v4976 = vpop.f32.mrf.mxu0
      %v4977 = vadd.f32 0.0, %v4976
      %v4978 = vpop.f32.mrf.mxu0
      %4979 = vmatprep.mubr.f32.mxu0 0.0
      %4980 = vmatmul.mubr.f32.gmra.mxu0 %v4709
      %v4981 = vpop.f32.mrf.mxu0
      %v4982 = vadd.f32 0.0, %v4981
      %v4983 = vpop.f32.mrf.mxu0
      %4984 = vmatprep.mubr.f32.mxu0 0.0
      %4985 = vmatmul.mubr.f32.gmra.mxu0 %v4712
      %v4986 = vpop.f32.mrf.mxu0
      %v4987 = vadd.f32 0.0, %v4986
      %v4988 = vpop.f32.mrf.mxu0
      %4989 = vmatprep.mubr.f32.mxu0 0.0
      %4990 = vmatmul.mubr.f32.gmra.mxu0 %v4715
      %v4991 = vpop.f32.mrf.mxu0
      %v4992 = vadd.f32 0.0, %v4991
      %v4993 = vpop.f32.mrf.mxu0
      %4994 = vmatprep.mubr.f32.mxu0 0.0
      %4995 = vmatmul.mubr.f32.gmra.mxu0 %v4718
      %v4996 = vpop.f32.mrf.mxu0
      %v4997 = vadd.f32 0.0, %v4996
      %v4998 = vpop.f32.mrf.mxu0
      %4999 = vmatprep.mubr.f32.mxu0 0.0
      %5000 = vmatmul.mubr.f32.gmra.mxu0 %v4721
      %v5001 = vpop.f32.mrf.mxu0
      %v5002 = vadd.f32 0.0, %v5001
      %v5003 = vpop.f32.mrf.mxu0
      %5004 = vmatprep.mubr.f32.mxu0 0.0
      %5005 = vmatmul.mubr.f32.gmra.mxu0 %v4724
      %v5006 = vpop.f32.mrf.mxu0
      %v5007 = vadd.f32 0.0, %v5006
      %v5008 = vpop.f32.mrf.mxu0
      %5009 = vmatprep.mubr.f32.mxu0 0.0
      %5010 = vmatmul.mubr.f32.gmra.mxu0 %v4727
      %v5011 = vpop.f32.mrf.mxu0
      %v5012 = vadd.f32 0.0, %v5011
      %v5013 = vpop.f32.mrf.mxu0
      %5014 = vmatprep.mubr.f32.mxu0 0.0
      %5015 = vmatmul.mubr.f32.gmra.mxu0 %v4730
      %v5016 = vpop.f32.mrf.mxu0
      %v5017 = vadd.f32 0.0, %v5016
      %v5018 = vpop.f32.mrf.mxu0
      %5019 = vmatprep.mubr.f32.mxu0 0.0
      %5020 = vmatmul.mubr.f32.gmra.mxu0 %v4733
      %v5021 = vpop.f32.mrf.mxu0
      %v5022 = vadd.f32 0.0, %v5021
      %v5023 = vpop.f32.mrf.mxu0
      %5024 = vdwg.mxu0
      %v5025 = vadd.f32 %v4508, %v4802
      %v5026 = vadd.f32 %v4509, %v4807
      %v5027 = vadd.f32 %v4510, %v4812
      %v5028 = vadd.f32 %v4511, %v4817
      %v5029 = vadd.f32 %v4512, %v4822
      %v5030 = vadd.f32 %v4513, %v4827
      %v5031 = vadd.f32 %v4514, %v4832
      %v5032 = vadd.f32 %v4515, %v4837
      %v5033 = vadd.f32 %v4516, %v4842
      %v5034 = vadd.f32 %v4517, %v4847
      %v5035 = vadd.f32 %v4518, %v4852
      %v5036 = vadd.f32 %v4519, %v4857
      %v5037 = vadd.f32 %v4520, %v4862
      %v5038 = vadd.f32 %v4521, %v4867
      %v5039 = vadd.f32 %v4522, %v4872
      %v5040 = vadd.f32 %v4523, %v4877
      %v5041 = vadd.f32 %v4524, %v4882
      %v5042 = vadd.f32 %v4525, %v4887
      %v5043 = vadd.f32 %v4526, %v4892
      %v5044 = vadd.f32 %v4527, %v4897
      %v5045 = vadd.f32 %v4528, %v4902
      %v5046 = vadd.f32 %v4529, %v4907
      %v5047 = vadd.f32 %v4530, %v4912
      %v5048 = vadd.f32 %v4531, %v4917
      %v5049 = vadd.f32 %v4532, %v4922
      %v5050 = vadd.f32 %v4533, %v4927
      %v5051 = vadd.f32 %v4534, %v4932
      %v5052 = vadd.f32 %v4535, %v4937
      %v5053 = vadd.f32 %v4536, %v4942
      %v5054 = vadd.f32 %v4537, %v4947
      %v5055 = vadd.f32 %v4538, %v4952
      %v5056 = vadd.f32 %v4539, %v4957
      %v5057 = vadd.f32 %v4540, %v4962
      %v5058 = vadd.f32 %v4541, %v4967
      %v5059 = vadd.f32 %v4542, %v4972
      %v5060 = vadd.f32 %v4543, %v4977
      %v5061 = vadd.f32 %v4544, %v4982
      %v5062 = vadd.f32 %v4545, %v4987
      %v5063 = vadd.f32 %v4546, %v4992
      %v5064 = vadd.f32 %v4547, %v4997
      %v5065 = vadd.f32 %v4548, %v5002
      %v5066 = vadd.f32 %v4549, %v5007
      %v5067 = vadd.f32 %v4550, %v5012
      %v5068 = vadd.f32 %v4551, %v5017
      %v5069 = vadd.f32 %v4552, %v5022
      %5070 = vst [vmem:[%s391] sm:$0xff] %v5025
      %5071 = vst [vmem:[%s391 + $0x8] sm:$0xff] %v5026
      %5072 = vst [vmem:[%s391 + $0x10] sm:$0xff] %v5027
      %5073 = vst [vmem:[%s391 + $0x18] sm:$0xff] %v5028
      %5074 = vst [vmem:[%s391 + $0x20] sm:$0xff] %v5029
      %5075 = vst [vmem:[%s391 + $0x28] sm:$0xff] %v5030
      %5076 = vst [vmem:[%s391 + $0x30] sm:$0xff] %v5031
      %5077 = vst [vmem:[%s391 + $0x38] sm:$0xff] %v5032
      %5078 = vst [vmem:[%s391 + $0x40] sm:$0xff] %v5033
      %5079 = vst [vmem:[%s391 + $0x48] sm:$0xff] %v5034
      %5080 = vst [vmem:[%s391 + $0x50] sm:$0xff] %v5035
      %5081 = vst [vmem:[%s391 + $0x58] sm:$0xff] %v5036
      %5082 = vst [vmem:[%s391 + $0x60] sm:$0xff] %v5037
      %5083 = vst [vmem:[%s391 + $0x68] sm:$0xff] %v5038
      %5084 = vst [vmem:[%s391 + $0x70] sm:$0xff] %v5039
      %5085 = vst [vmem:[%s391 + $0x78] sm:$0xff] %v5040
      %5086 = vst [vmem:[%s391 + $0x80] sm:$0xff] %v5041
      %5087 = vst [vmem:[%s391 + $0x88] sm:$0xff] %v5042
      %5088 = vst [vmem:[%s391 + $0x90] sm:$0xff] %v5043
      %5089 = vst [vmem:[%s391 + $0x98] sm:$0xff] %v5044
      %5090 = vst [vmem:[%s391 + $0xa0] sm:$0xff] %v5045
      %5091 = vst [vmem:[%s391 + $0xa8] sm:$0xff] %v5046
      %5092 = vst [vmem:[%s391 + $0xb0] sm:$0xff] %v5047
      %5093 = vst [vmem:[%s391 + $0xb8] sm:$0xff] %v5048
      %5094 = vst [vmem:[%s391 + $0xc0] sm:$0xff] %v5049
      %5095 = vst [vmem:[%s391 + $0xc8] sm:$0xff] %v5050
      %5096 = vst [vmem:[%s391 + $0xd0] sm:$0xff] %v5051
      %5097 = vst [vmem:[%s391 + $0xd8] sm:$0xff] %v5052
      %5098 = vst [vmem:[%s391 + $0xe0] sm:$0xff] %v5053
      %5099 = vst [vmem:[%s391 + $0xe8] sm:$0xff] %v5054
      %5100 = vst [vmem:[%s391 + $0xf0] sm:$0xff] %v5055
      %5101 = vst [vmem:[%s391 + $0xf8] sm:$0xff] %v5056
      %5102 = vst [vmem:[%s391 + $0x100] sm:$0xff] %v5057
      %5103 = vst [vmem:[%s391 + $0x108] sm:$0xff] %v5058
      %5104 = vst [vmem:[%s391 + $0x110] sm:$0xff] %v5059
      %5105 = vst [vmem:[%s391 + $0x118] sm:$0xff] %v5060
      %5106 = vst [vmem:[%s391 + $0x120] sm:$0xff] %v5061
      %5107 = vst [vmem:[%s391 + $0x128] sm:$0xff] %v5062
      %5108 = vst [vmem:[%s391 + $0x130] sm:$0xff] %v5063
      %5109 = vst [vmem:[%s391 + $0x138] sm:$0xff] %v5064
      %5110 = vst [vmem:[%s391 + $0x140] sm:$0xff] %v5065
      %5111 = vst [vmem:[%s391 + $0x148] sm:$0xff] %v5066
      %5112 = vst [vmem:[%s391 + $0x150] sm:$0xff] %v5067
      %5113 = vst [vmem:[%s391 + $0x158] sm:$0xff] %v5068
      %5114 = vst [vmem:[%s391 + $0x160] sm:$0xff] %v5069
      %v5115 = vld [vmem:[%s382] sm:$0xff]
      %v5116 = vld [vmem:[%s382 + $0x8] sm:$0xff]
      %v5117 = vld [vmem:[%s382 + $0x10] sm:$0xff]
      %v5118 = vld [vmem:[%s382 + $0x18] sm:$0xff]
      %v5119 = vld [vmem:[%s382 + $0x20] sm:$0xff]
      %v5120 = vld [vmem:[%s382 + $0x28] sm:$0xff]
      %v5121 = vld [vmem:[%s382 + $0x30] sm:$0xff]
      %v5122 = vld [vmem:[%s382 + $0x38] sm:$0xff]
      %v5123 = vld [vmem:[%s382 + $0x40] sm:$0xff]
      %v5124 = vld [vmem:[%s382 + $0x48] sm:$0xff]
      %v5125 = vld [vmem:[%s382 + $0x50] sm:$0xff]
      %v5126 = vld [vmem:[%s382 + $0x58] sm:$0xff]
      %v5127 = vld [vmem:[%s382 + $0x60] sm:$0xff]
      %v5128 = vld [vmem:[%s382 + $0x68] sm:$0xff]
      %v5129 = vld [vmem:[%s382 + $0x70] sm:$0xff]
      %v5130 = vld [vmem:[%s382 + $0x78] sm:$0xff]
      %v5131 = vld [vmem:[%s382 + $0x80] sm:$0xff]
      %v5132 = vld [vmem:[%s382 + $0x88] sm:$0xff]
      %v5133 = vld [vmem:[%s382 + $0x90] sm:$0xff]
      %v5134 = vld [vmem:[%s382 + $0x98] sm:$0xff]
      %v5135 = vld [vmem:[%s382 + $0xa0] sm:$0xff]
      %v5136 = vld [vmem:[%s382 + $0xa8] sm:$0xff]
      %v5137 = vld [vmem:[%s382 + $0xb0] sm:$0xff]
      %v5138 = vld [vmem:[%s382 + $0xb8] sm:$0xff]
      %v5139 = vld [vmem:[%s382 + $0xc0] sm:$0xff]
      %v5140 = vld [vmem:[%s382 + $0xc8] sm:$0xff]
      %v5141 = vld [vmem:[%s382 + $0xd0] sm:$0xff]
      %v5142 = vld [vmem:[%s382 + $0xd8] sm:$0xff]
      %v5143 = vld [vmem:[%s382 + $0xe0] sm:$0xff]
      %v5144 = vld [vmem:[%s382 + $0xe8] sm:$0xff]
      %v5145 = vld [vmem:[%s382 + $0xf0] sm:$0xff]
      %v5146 = vld [vmem:[%s382 + $0xf8] sm:$0xff]
      %v5147 = vld [vmem:[%s382 + $0x100] sm:$0xff]
      %v5148 = vld [vmem:[%s382 + $0x108] sm:$0xff]
      %v5149 = vld [vmem:[%s382 + $0x110] sm:$0xff]
      %v5150 = vld [vmem:[%s382 + $0x118] sm:$0xff]
      %v5151 = vld [vmem:[%s382 + $0x120] sm:$0xff]
      %v5152 = vld [vmem:[%s382 + $0x128] sm:$0xff]
      %v5153 = vld [vmem:[%s382 + $0x130] sm:$0xff]
      %v5154 = vld [vmem:[%s382 + $0x138] sm:$0xff]
      %v5155 = vld [vmem:[%s382 + $0x140] sm:$0xff]
      %v5156 = vld [vmem:[%s382 + $0x148] sm:$0xff]
      %v5157 = vld [vmem:[%s382 + $0x150] sm:$0xff]
      %v5158 = vld [vmem:[%s382 + $0x158] sm:$0xff]
      %v5159 = vld [vmem:[%s382 + $0x160] sm:$0xff]
      %5161 = vset.pattern.permute.xlu0 0
      %5162 = vperm.xlu0 %5161, %v5115
      %v5163 = vpop.permute.xlu0 %5162
      %5166 = vset.pattern.permute.xlu0 0
      %5167 = vperm.xlu0 %5166, %v5116
      %v5168 = vpop.permute.xlu0 %5167
      %5171 = vset.pattern.permute.xlu0 0
      %5172 = vperm.xlu0 %5171, %v5117
      %v5173 = vpop.permute.xlu0 %5172
      %5176 = vset.pattern.permute.xlu0 0
      %5177 = vperm.xlu0 %5176, %v5118
      %v5178 = vpop.permute.xlu0 %5177
      %5181 = vset.pattern.permute.xlu0 0
      %5182 = vperm.xlu0 %5181, %v5119
      %v5183 = vpop.permute.xlu0 %5182
      %5186 = vset.pattern.permute.xlu0 0
      %5187 = vperm.xlu0 %5186, %v5120
      %v5188 = vpop.permute.xlu0 %5187
      %5191 = vset.pattern.permute.xlu0 0
      %5192 = vperm.xlu0 %5191, %v5121
      %v5193 = vpop.permute.xlu0 %5192
      %5196 = vset.pattern.permute.xlu0 0
      %5197 = vperm.xlu0 %5196, %v5122
      %v5198 = vpop.permute.xlu0 %5197
      %5201 = vset.pattern.permute.xlu0 0
      %5202 = vperm.xlu0 %5201, %v5123
      %v5203 = vpop.permute.xlu0 %5202
      %5206 = vset.pattern.permute.xlu0 0
      %5207 = vperm.xlu0 %5206, %v5124
      %v5208 = vpop.permute.xlu0 %5207
      %5211 = vset.pattern.permute.xlu0 0
      %5212 = vperm.xlu0 %5211, %v5125
      %v5213 = vpop.permute.xlu0 %5212
      %5216 = vset.pattern.permute.xlu0 0
      %5217 = vperm.xlu0 %5216, %v5126
      %v5218 = vpop.permute.xlu0 %5217
      %5221 = vset.pattern.permute.xlu0 0
      %5222 = vperm.xlu0 %5221, %v5127
      %v5223 = vpop.permute.xlu0 %5222
      %5226 = vset.pattern.permute.xlu0 0
      %5227 = vperm.xlu0 %5226, %v5128
      %v5228 = vpop.permute.xlu0 %5227
      %5231 = vset.pattern.permute.xlu0 0
      %5232 = vperm.xlu0 %5231, %v5129
      %v5233 = vpop.permute.xlu0 %5232
      %5236 = vset.pattern.permute.xlu0 0
      %5237 = vperm.xlu0 %5236, %v5130
      %v5238 = vpop.permute.xlu0 %5237
      %5241 = vset.pattern.permute.xlu0 0
      %5242 = vperm.xlu0 %5241, %v5131
      %v5243 = vpop.permute.xlu0 %5242
      %5246 = vset.pattern.permute.xlu0 0
      %5247 = vperm.xlu0 %5246, %v5132
      %v5248 = vpop.permute.xlu0 %5247
      %5251 = vset.pattern.permute.xlu0 0
      %5252 = vperm.xlu0 %5251, %v5133
      %v5253 = vpop.permute.xlu0 %5252
      %5256 = vset.pattern.permute.xlu0 0
      %5257 = vperm.xlu0 %5256, %v5134
      %v5258 = vpop.permute.xlu0 %5257
      %5261 = vset.pattern.permute.xlu0 0
      %5262 = vperm.xlu0 %5261, %v5135
      %v5263 = vpop.permute.xlu0 %5262
      %5266 = vset.pattern.permute.xlu0 0
      %5267 = vperm.xlu0 %5266, %v5136
      %v5268 = vpop.permute.xlu0 %5267
      %5271 = vset.pattern.permute.xlu0 0
      %5272 = vperm.xlu0 %5271, %v5137
      %v5273 = vpop.permute.xlu0 %5272
      %5276 = vset.pattern.permute.xlu0 0
      %5277 = vperm.xlu0 %5276, %v5138
      %v5278 = vpop.permute.xlu0 %5277
      %5281 = vset.pattern.permute.xlu0 0
      %5282 = vperm.xlu0 %5281, %v5139
      %v5283 = vpop.permute.xlu0 %5282
      %5286 = vset.pattern.permute.xlu0 0
      %5287 = vperm.xlu0 %5286, %v5140
      %v5288 = vpop.permute.xlu0 %5287
      %5291 = vset.pattern.permute.xlu0 0
      %5292 = vperm.xlu0 %5291, %v5141
      %v5293 = vpop.permute.xlu0 %5292
      %5296 = vset.pattern.permute.xlu0 0
      %5297 = vperm.xlu0 %5296, %v5142
      %v5298 = vpop.permute.xlu0 %5297
      %5301 = vset.pattern.permute.xlu0 0
      %5302 = vperm.xlu0 %5301, %v5143
      %v5303 = vpop.permute.xlu0 %5302
      %5306 = vset.pattern.permute.xlu0 0
      %5307 = vperm.xlu0 %5306, %v5144
      %v5308 = vpop.permute.xlu0 %5307
      %5311 = vset.pattern.permute.xlu0 0
      %5312 = vperm.xlu0 %5311, %v5145
      %v5313 = vpop.permute.xlu0 %5312
      %5316 = vset.pattern.permute.xlu0 0
      %5317 = vperm.xlu0 %5316, %v5146
      %v5318 = vpop.permute.xlu0 %5317
      %5321 = vset.pattern.permute.xlu0 0
      %5322 = vperm.xlu0 %5321, %v5147
      %v5323 = vpop.permute.xlu0 %5322
      %5326 = vset.pattern.permute.xlu0 0
      %5327 = vperm.xlu0 %5326, %v5148
      %v5328 = vpop.permute.xlu0 %5327
      %5331 = vset.pattern.permute.xlu0 0
      %5332 = vperm.xlu0 %5331, %v5149
      %v5333 = vpop.permute.xlu0 %5332
      %5336 = vset.pattern.permute.xlu0 0
      %5337 = vperm.xlu0 %5336, %v5150
      %v5338 = vpop.permute.xlu0 %5337
      %5341 = vset.pattern.permute.xlu0 0
      %5342 = vperm.xlu0 %5341, %v5151
      %v5343 = vpop.permute.xlu0 %5342
      %5346 = vset.pattern.permute.xlu0 0
      %5347 = vperm.xlu0 %5346, %v5152
      %v5348 = vpop.permute.xlu0 %5347
      %5351 = vset.pattern.permute.xlu0 0
      %5352 = vperm.xlu0 %5351, %v5153
      %v5353 = vpop.permute.xlu0 %5352
      %5356 = vset.pattern.permute.xlu0 0
      %5357 = vperm.xlu0 %5356, %v5154
      %v5358 = vpop.permute.xlu0 %5357
      %5361 = vset.pattern.permute.xlu0 0
      %5362 = vperm.xlu0 %5361, %v5155
      %v5363 = vpop.permute.xlu0 %5362
      %5366 = vset.pattern.permute.xlu0 0
      %5367 = vperm.xlu0 %5366, %v5156
      %v5368 = vpop.permute.xlu0 %5367
      %5371 = vset.pattern.permute.xlu0 0
      %5372 = vperm.xlu0 %5371, %v5157
      %v5373 = vpop.permute.xlu0 %5372
      %5376 = vset.pattern.permute.xlu0 0
      %5377 = vperm.xlu0 %5376, %v5158
      %v5378 = vpop.permute.xlu0 %5377
      %5381 = vset.pattern.permute.xlu0 0
      %5382 = vperm.xlu0 %5381, %v5159
      %v5383 = vpop.permute.xlu0 %5382
      %v5385 = vmul.f32 %v5025, %v5163
      %v5386 = vmul.f32 %v5026, %v5168
      %v5387 = vmul.f32 %v5027, %v5173
      %v5388 = vmul.f32 %v5028, %v5178
      %v5389 = vmul.f32 %v5029, %v5183
      %v5390 = vmul.f32 %v5030, %v5188
      %v5391 = vmul.f32 %v5031, %v5193
      %v5392 = vmul.f32 %v5032, %v5198
      %v5393 = vmul.f32 %v5033, %v5203
      %v5394 = vmul.f32 %v5034, %v5208
      %v5395 = vmul.f32 %v5035, %v5213
      %v5396 = vmul.f32 %v5036, %v5218
      %v5397 = vmul.f32 %v5037, %v5223
      %v5398 = vmul.f32 %v5038, %v5228
      %v5399 = vmul.f32 %v5039, %v5233
      %v5400 = vmul.f32 %v5040, %v5238
      %v5401 = vmul.f32 %v5041, %v5243
      %v5402 = vmul.f32 %v5042, %v5248
      %v5403 = vmul.f32 %v5043, %v5253
      %v5404 = vmul.f32 %v5044, %v5258
      %v5405 = vmul.f32 %v5045, %v5263
      %v5406 = vmul.f32 %v5046, %v5268
      %v5407 = vmul.f32 %v5047, %v5273
      %v5408 = vmul.f32 %v5048, %v5278
      %v5409 = vmul.f32 %v5049, %v5283
      %v5410 = vmul.f32 %v5050, %v5288
      %v5411 = vmul.f32 %v5051, %v5293
      %v5412 = vmul.f32 %v5052, %v5298
      %v5413 = vmul.f32 %v5053, %v5303
      %v5414 = vmul.f32 %v5054, %v5308
      %v5415 = vmul.f32 %v5055, %v5313
      %v5416 = vmul.f32 %v5056, %v5318
      %v5417 = vmul.f32 %v5057, %v5323
      %v5418 = vmul.f32 %v5058, %v5328
      %v5419 = vmul.f32 %v5059, %v5333
      %v5420 = vmul.f32 %v5060, %v5338
      %v5421 = vmul.f32 %v5061, %v5343
      %v5422 = vmul.f32 %v5062, %v5348
      %v5423 = vmul.f32 %v5063, %v5353
      %v5424 = vmul.f32 %v5064, %v5358
      %v5425 = vmul.f32 %v5065, %v5363
      %v5426 = vmul.f32 %v5066, %v5368
      %v5427 = vmul.f32 %v5067, %v5373
      %v5428 = vmul.f32 %v5068, %v5378
      %v5429 = vmul.f32 %v5069, %v5383
      %v5430 = vadd.f32 %v5385, %v5386
      %v5431 = vadd.f32 %v5430, %v5387
      %v5432 = vadd.f32 %v5431, %v5388
      %v5433 = vadd.f32 %v5432, %v5389
      %v5434 = vadd.f32 %v5433, %v5390
      %v5435 = vadd.f32 %v5434, %v5391
      %v5436 = vadd.f32 %v5435, %v5392
      %v5437 = vadd.f32 %v5436, %v5393
      %v5438 = vadd.f32 %v5437, %v5394
      %v5439 = vadd.f32 %v5438, %v5395
      %v5440 = vadd.f32 %v5439, %v5396
      %v5441 = vadd.f32 %v5440, %v5397
      %v5442 = vadd.f32 %v5441, %v5398
      %v5443 = vadd.f32 %v5442, %v5399
      %v5444 = vadd.f32 %v5443, %v5400
      %v5445 = vadd.f32 %v5444, %v5401
      %v5446 = vadd.f32 %v5445, %v5402
      %v5447 = vadd.f32 %v5446, %v5403
      %v5448 = vadd.f32 %v5447, %v5404
      %v5449 = vadd.f32 %v5448, %v5405
      %v5450 = vadd.f32 %v5449, %v5406
      %v5451 = vadd.f32 %v5450, %v5407
      %v5452 = vadd.f32 %v5451, %v5408
      %v5453 = vadd.f32 %v5452, %v5409
      %v5454 = vadd.f32 %v5453, %v5410
      %v5455 = vadd.f32 %v5454, %v5411
      %v5456 = vadd.f32 %v5455, %v5412
      %v5457 = vadd.f32 %v5456, %v5413
      %v5458 = vadd.f32 %v5457, %v5414
      %v5459 = vadd.f32 %v5458, %v5415
      %v5460 = vadd.f32 %v5459, %v5416
      %v5461 = vadd.f32 %v5460, %v5417
      %v5462 = vadd.f32 %v5461, %v5418
      %v5463 = vadd.f32 %v5462, %v5419
      %v5464 = vadd.f32 %v5463, %v5420
      %v5465 = vadd.f32 %v5464, %v5421
      %v5466 = vadd.f32 %v5465, %v5422
      %v5467 = vadd.f32 %v5466, %v5423
      %v5468 = vadd.f32 %v5467, %v5424
      %v5469 = vadd.f32 %v5468, %v5425
      %v5470 = vadd.f32 %v5469, %v5426
      %v5471 = vadd.f32 %v5470, %v5427
      %v5472 = vadd.f32 %v5471, %v5428
      %v5473 = vadd.f32 %v5472, %v5429
      %v5474 = vrot.slane %v5473, 4
      %v5475 = vadd.f32 %v5473, %v5474
      %v5476 = vrot.slane %v5475, 2
      %v5477 = vadd.f32 %v5475, %v5476
      %v5478 = vrot.slane %v5477, 1
      %v5479 = vadd.f32 %v5477, %v5478
      %5480 = vst [vmem:[%s399] sm:$0xff] %v5479
      %v5481 = vmul.f32 %v5385, %v5025
      %v5482 = vmul.f32 %v5386, %v5026
      %v5483 = vmul.f32 %v5387, %v5027
      %v5484 = vmul.f32 %v5388, %v5028
      %v5485 = vmul.f32 %v5389, %v5029
      %v5486 = vmul.f32 %v5390, %v5030
      %v5487 = vmul.f32 %v5391, %v5031
      %v5488 = vmul.f32 %v5392, %v5032
      %v5489 = vmul.f32 %v5393, %v5033
      %v5490 = vmul.f32 %v5394, %v5034
      %v5491 = vmul.f32 %v5395, %v5035
      %v5492 = vmul.f32 %v5396, %v5036
      %v5493 = vmul.f32 %v5397, %v5037
      %v5494 = vmul.f32 %v5398, %v5038
      %v5495 = vmul.f32 %v5399, %v5039
      %v5496 = vmul.f32 %v5400, %v5040
      %v5497 = vmul.f32 %v5401, %v5041
      %v5498 = vmul.f32 %v5402, %v5042
      %v5499 = vmul.f32 %v5403, %v5043
      %v5500 = vmul.f32 %v5404, %v5044
      %v5501 = vmul.f32 %v5405, %v5045
      %v5502 = vmul.f32 %v5406, %v5046
      %v5503 = vmul.f32 %v5407, %v5047
      %v5504 = vmul.f32 %v5408, %v5048
      %v5505 = vmul.f32 %v5409, %v5049
      %v5506 = vmul.f32 %v5410, %v5050
      %v5507 = vmul.f32 %v5411, %v5051
      %v5508 = vmul.f32 %v5412, %v5052
      %v5509 = vmul.f32 %v5413, %v5053
      %v5510 = vmul.f32 %v5414, %v5054
      %v5511 = vmul.f32 %v5415, %v5055
      %v5512 = vmul.f32 %v5416, %v5056
      %v5513 = vmul.f32 %v5417, %v5057
      %v5514 = vmul.f32 %v5418, %v5058
      %v5515 = vmul.f32 %v5419, %v5059
      %v5516 = vmul.f32 %v5420, %v5060
      %v5517 = vmul.f32 %v5421, %v5061
      %v5518 = vmul.f32 %v5422, %v5062
      %v5519 = vmul.f32 %v5423, %v5063
      %v5520 = vmul.f32 %v5424, %v5064
      %v5521 = vmul.f32 %v5425, %v5065
      %v5522 = vmul.f32 %v5426, %v5066
      %v5523 = vmul.f32 %v5427, %v5067
      %v5524 = vmul.f32 %v5428, %v5068
      %v5525 = vmul.f32 %v5429, %v5069
      %v5526 = vadd.f32 %v5481, %v5482
      %v5527 = vadd.f32 %v5526, %v5483
      %v5528 = vadd.f32 %v5527, %v5484
      %v5529 = vadd.f32 %v5528, %v5485
      %v5530 = vadd.f32 %v5529, %v5486
      %v5531 = vadd.f32 %v5530, %v5487
      %v5532 = vadd.f32 %v5531, %v5488
      %v5533 = vadd.f32 %v5532, %v5489
      %v5534 = vadd.f32 %v5533, %v5490
      %v5535 = vadd.f32 %v5534, %v5491
      %v5536 = vadd.f32 %v5535, %v5492
      %v5537 = vadd.f32 %v5536, %v5493
      %v5538 = vadd.f32 %v5537, %v5494
      %v5539 = vadd.f32 %v5538, %v5495
      %v5540 = vadd.f32 %v5539, %v5496
      %v5541 = vadd.f32 %v5540, %v5497
      %v5542 = vadd.f32 %v5541, %v5498
      %v5543 = vadd.f32 %v5542, %v5499
      %v5544 = vadd.f32 %v5543, %v5500
      %v5545 = vadd.f32 %v5544, %v5501
      %v5546 = vadd.f32 %v5545, %v5502
      %v5547 = vadd.f32 %v5546, %v5503
      %v5548 = vadd.f32 %v5547, %v5504
      %v5549 = vadd.f32 %v5548, %v5505
      %v5550 = vadd.f32 %v5549, %v5506
      %v5551 = vadd.f32 %v5550, %v5507
      %v5552 = vadd.f32 %v5551, %v5508
      %v5553 = vadd.f32 %v5552, %v5509
      %v5554 = vadd.f32 %v5553, %v5510
      %v5555 = vadd.f32 %v5554, %v5511
      %v5556 = vadd.f32 %v5555, %v5512
      %v5557 = vadd.f32 %v5556, %v5513
      %v5558 = vadd.f32 %v5557, %v5514
      %v5559 = vadd.f32 %v5558, %v5515
      %v5560 = vadd.f32 %v5559, %v5516
      %v5561 = vadd.f32 %v5560, %v5517
      %v5562 = vadd.f32 %v5561, %v5518
      %v5563 = vadd.f32 %v5562, %v5519
      %v5564 = vadd.f32 %v5563, %v5520
      %v5565 = vadd.f32 %v5564, %v5521
      %v5566 = vadd.f32 %v5565, %v5522
      %v5567 = vadd.f32 %v5566, %v5523
      %v5568 = vadd.f32 %v5567, %v5524
      %v5569 = vadd.f32 %v5568, %v5525
      %v5570 = vrot.slane %v5569, 4
      %v5571 = vadd.f32 %v5569, %v5570
      %v5572 = vrot.slane %v5571, 2
      %v5573 = vadd.f32 %v5571, %v5572
      %v5574 = vrot.slane %v5573, 1
      %v5575 = vadd.f32 %v5573, %v5574
      %5576 = vst [vmem:[%s406] sm:$0xff] %v5575
      %s5577 = smul.u32 45, %s22
      %p5578 = scmp.lt.s32.totalorder %s5577, 89
      %s5579 = scalar_select %p5578, %s5577, 89
      %p5580 = scmp.lt.s32.totalorder %s23, 0
      %s5581 = scalar_select %p5580, %s23, 0
      %s5582 = sadd.s32 %s5581, %s5579
      %s5583 = smul.addr %s5582, 8
      %s5584 = scalar_lea.vmem %s4, %s5583
      %p5585 = scmp.lt.s32.totalorder %s22, 1
      %s5586 = scalar_select %p5585, %s22, 1
      %p5587 = scmp.lt.s32.totalorder %s23, 0
      %s5588 = scalar_select %p5587, %s23, 0
      %s5589 = sadd.s32 %s5588, %s5586
      %s5590 = smul.addr %s5589, 8
      %s5591 = scalar_lea.vmem %s5, %s5590
      %p5592 = scmp.lt.s32.totalorder %s22, 1
      %s5593 = scalar_select %p5592, %s22, 1
      %p5594 = scmp.lt.s32.totalorder %s23, 0
      %s5595 = scalar_select %p5594, %s23, 0
      %s5596 = sadd.s32 %s5595, %s5593
      %s5597 = smul.addr %s5596, 8
      %s5598 = scalar_lea.vmem %s6, %s5597
      // Predicated region
      $region37: #{conv_layer_forward.2} parent=35 // pred_check
        %p5599 = pneg %p158
      $region38: #{conv_layer_forward.2} parent=35 // pred_check_branch
        %5601 = sbr.rel (%p5599) target = $region40
      $region39: #{conv_layer_forward.2} parent=35 // pred_region
        %s5602 = smul.u32 45, %s22
      $region40: #{conv_layer_forward.2} parent=35 // pred_fallthru
        _
      // Predicated region
      $region41: #{conv_layer_forward.2} parent=35 // pred_check
        %p5603 = pneg %p186
      $region42: #{conv_layer_forward.2} parent=35 // pred_check_branch
        %5605 = sbr.rel (%p5603) target = $region44
      $region43: #{conv_layer_forward.2} parent=35 // pred_region
        _
      $region44: #{conv_layer_forward.2} parent=35 // pred_fallthru
        _
      // Predicated region
      $region45: #{conv_layer_forward.2} parent=35 // pred_check
        %p5606 = pneg %p214
      $region46: #{conv_layer_forward.2} parent=35 // pred_check_branch
        %5608 = sbr.rel (%p5606) target = $region48
      $region47: #{conv_layer_forward.2} parent=35 // pred_region
        _
      $region48: #{conv_layer_forward.2} parent=35 // pred_fallthru
        _
    $region36: #{conv_layer_forward.2} parent=5 // pred_fallthru
      _
    %p5609 = scmp.le.s32.totalorder 2, %s13
    // Predicated region
    $region49: #{conv_layer_forward.2} parent=5 // pred_check
      %p5610 = pneg %p5609
    $region50: #{conv_layer_forward.2} parent=5 // pred_check_branch
      %5612 = sbr.rel (%p5610) target = $region52
    $region51: #{conv_layer_forward.2} parent=5 // pred_region
      %s5613 = ssub.s32 %s13, 2
      // Predicated region
      $region53: #{conv_layer_forward.2} parent=51 // pred_check
        %p5614 = pneg %p164
      $region54: #{conv_layer_forward.2} parent=51 // pred_check_branch
        %5616 = sbr.rel (%p5614) target = $region56
      $region55: #{conv_layer_forward.2} parent=51 // pred_region
        %s5617 = smul.u32 45, %s24
        %p5618 = scmp.lt.s32.totalorder %s5617, 89
        %s5619 = scalar_select %p5618, %s5617, 89
        %p5620 = scmp.lt.s32.totalorder %s25, 0
        %s5621 = scalar_select %p5620, %s25, 0
        %s5622 = sadd.s32 %s5621, %s5619
        %s5623 = smul.addr %s5622, 8
        %s5624 = scalar_lea.vmem %s4, %s5623
      $region56: #{conv_layer_forward.2} parent=51 // pred_fallthru
        _
      // Predicated region
      $region57: #{conv_layer_forward.2} parent=51 // pred_check
        %p5625 = pneg %p192
      $region58: #{conv_layer_forward.2} parent=51 // pred_check_branch
        %5627 = sbr.rel (%p5625) target = $region60
      $region59: #{conv_layer_forward.2} parent=51 // pred_region
        %p5628 = scmp.lt.s32.totalorder %s24, 1
        %s5629 = scalar_select %p5628, %s24, 1
        %p5630 = scmp.lt.s32.totalorder %s25, 0
        %s5631 = scalar_select %p5630, %s25, 0
        %s5632 = sadd.s32 %s5631, %s5629
        %s5633 = smul.addr %s5632, 8
        %s5634 = scalar_lea.vmem %s5, %s5633
      $region60: #{conv_layer_forward.2} parent=51 // pred_fallthru
        _
      // Predicated region
      $region61: #{conv_layer_forward.2} parent=51 // pred_check
        %p5635 = pneg %p220
      $region62: #{conv_layer_forward.2} parent=51 // pred_check_branch
        %5637 = sbr.rel (%p5635) target = $region64
      $region63: #{conv_layer_forward.2} parent=51 // pred_region
        %p5638 = scmp.lt.s32.totalorder %s24, 1
        %s5639 = scalar_select %p5638, %s24, 1
        %p5640 = scmp.lt.s32.totalorder %s25, 0
        %s5641 = scalar_select %p5640, %s25, 0
        %s5642 = sadd.s32 %s5641, %s5639
        %s5643 = smul.addr %s5642, 8
        %s5644 = scalar_lea.vmem %s6, %s5643
      $region64: #{conv_layer_forward.2} parent=51 // pred_fallthru
        _
    $region52: #{conv_layer_forward.2} parent=5 // pred_fallthru
      _
  $region6: #{conv_layer_forward.2} parent=0 // loop_footer
    %s17 = sadd.s32 1, %s13
  $region7: #{conv_layer_forward.2} parent=0 // loop_footer_branch
    %12 = sbr.rel target = $region3
  $region8: #{conv_layer_forward.2} parent=0 // loop_exit
    _

</llo_original>
